<compile_context>
chip_gen: v5e
topology: v5e:2x2
jax: 0.10.0
libtpu: 0.0.40
codegen_flags: <defaults>
</compile_context>

<pallas_src>
import functools

import jax
import jax.numpy as jnp
from jax import lax
from jax.experimental import pallas as pl
from jax.experimental.pallas import tpu as pltpu


def _im2col_conv3x3(src_ref, patch_ref, w_ref, wm, *, gap, width, span):
    """SAME 3x3 conv over a flat, slack-padded (rows, Cin) f32 scratch.

    Packs the 9 taps into a (span, 9*Cin) bf16 operand in `patch_ref` (one
    masked row-window store per tap) and issues a single MXU matmul against
    the pre-reshaped (9*Cin, Cout) bf16 weights.  Returns f32 (span, Cout).
    """
    cin = src_ref.shape[1]
    for kh in range(3):
        for kw in range(3):
            t = kh * 3 + kw
            start = gap + (kh - 1) * width + (kw - 1)
            win = src_ref[start:start + span, :]          # f32 (span, cin)
            if kw == 0:                                    # kill w==0 wrap reads
                win = win * wm[:, 0:1]
            elif kw == 2:                                  # kill w==W-1 wrap reads
                win = win * wm[:, 1:2]
            patch_ref[:, t * cin:(t + 1) * cin] = win.astype(jnp.bfloat16)
    return jnp.dot(patch_ref[...], w_ref[...],
                   preferred_element_type=jnp.float32)


def basic_block_kernel(x_ref, wm_ref, w1_ref, s1_ref, b1_ref,
                       w2_ref, s2_ref, b2_ref, out_ref,
                       xpad_ref, mid_ref, p1_ref, p2_ref,
                       *, nb, hw, width, gap):
    # x_ref   : (nb*HW, Cin)  f32, nb images flattened & concatenated
    # wm_ref  : (span, 2)     f32 width-boundary 0/1 masks over the packed span
    # w*_ref  : (9*Ci, Co)    bf16 im2col-reshaped conv weights
    # s*/b*   : (1, C)        f32 folded BN scale / bias
    # out_ref : (nb*HW, Cout)
    # xpad/mid: (RB, C) f32 flat scratches, images separated by `gap` zero rows
    # p1/p2   : (span, 9*C) bf16 im2col patch scratches
    cin = x_ref.shape[1]
    cmid = mid_ref.shape[1]
    span = p1_ref.shape[0]
    stride = hw + gap

    # Zero only the slack/gap rows (never overwritten below).  Done every step
    # so the kernel stays correct when the grid is sharded across cores.
    for i in range(nb + 1):
        g0 = i * stride
        xpad_ref[g0:g0 + gap, :] = jnp.zeros((gap, cin), jnp.float32)
        mid_ref[g0:g0 + gap, :] = jnp.zeros((gap, cmid), jnp.float32)

    # In-kernel SAME padding: scatter the nb images into the flat scratch with
    # `gap` zero rows between them (one aligned contiguous store per image).
    for i in range(nb):
        xpad_ref[gap + i * stride: gap + i * stride + hw, :] = \
            x_ref[i * hw:(i + 1) * hw, :]

    wm = wm_ref[...]                                        # (span, 2) f32 0/1

    # ---- conv1 -> bn1 (folded) -> relu ----
    acc1 = _im2col_conv3x3(xpad_ref, p1_ref, w1_ref, wm,
                           gap=gap, width=width, span=span)
    h1 = jnp.maximum(acc1 * s1_ref[...] + b1_ref[...], 0.0)
    for i in range(nb):                                     # drop gap-row garbage
        mid_ref[gap + i * stride: gap + i * stride + hw, :] = \
            h1[i * stride: i * stride + hw, :]

    # ---- conv2 -> bn2 (folded) -> + residual -> relu ----
    acc2 = _im2col_conv3x3(mid_ref, p2_ref, w2_ref, wm,
                           gap=gap, width=width, span=span)
    resid = xpad_ref[gap:gap + span, :]                     # f32 x (zero gap rows)
    o = jnp.maximum(acc2 * s2_ref[...] + b2_ref[...] + resid, 0.0)
    for i in range(nb):
        out_ref[i * hw:(i + 1) * hw, :] = \
            o[i * stride: i * stride + hw, :].astype(out_ref.dtype)


def _pick_batch_block(n, hw, c, gap, budget_bytes=24 * 1024 * 1024):
    """Largest batch block (divisor of n) whose VMEM footprint fits the budget."""
    lane_c = max(((c + 127) // 128) * 128, 128)
    lane_p = max(((9 * c + 127) // 128) * 128, 128)
    best = 1
    for nb in range(1, n + 1):
        if n % nb:
            continue
        rb = gap + nb * (hw + gap)
        span = rb - 2 * gap
        est = (2 * rb * lane_c * 4            # xpad + mid scratches (f32)
               + 2 * span * lane_p * 2        # two bf16 patch scratches
               + 2 * 2 * nb * hw * lane_c * 4)  # double-buffered in/out blocks
        if est <= budget_bytes:
            best = nb
    return best


def basic_block(x_nhwc, w1, scale1, bias1, w2, scale2, bias2):
    """x_nhwc: (N, H, W, Cin) float32.  Returns (N, H, W, Cout)."""
    N, H, W, Cin = x_nhwc.shape
    Cmid = w1.shape[-1]
    Cout = w2.shape[-1]
    assert Cin == Cmid == Cout, \
        "identity residual (downsample=None) requires inplanes == planes"
    HW = H * W
    assert HW % 8 == 0

    gap = ((W + 1 + 7) // 8) * 8              # zero slack between images, >= W+1
    nb = _pick_batch_block(N, HW, Cin, gap)
    grid = N // nb
    stride = HW + gap
    rb = gap + nb * stride
    span = rb - 2 * gap                       # = nb*HW + (nb-1)*gap

    # Flat spatial layout; batch folded into rows (free reshape, no HBM pad).
    x_flat = x_nhwc.reshape(N * HW, Cin)

    # Width-boundary masks over the packed span: col0 kills w==0 rows (kw=0
    # taps), col1 kills w==W-1 rows (kw=2 taps); gap rows are fully masked.
    j = jnp.arange(span, dtype=jnp.int32)
    rel = j % stride
    is_img = rel < HW
    wpos = rel % W
    wmask = jnp.stack([is_img & (wpos != 0), is_img & (wpos != W - 1)],
                      axis=1).astype(jnp.float32)

    # Pre-reshaped im2col weights (row index = (kh*3+kw)*Cin + ci), bf16 MXU.
    w1r = w1.reshape(9 * Cin, Cmid).astype(jnp.bfloat16)
    w2r = w2.reshape(9 * Cmid, Cout).astype(jnp.bfloat16)
    s1 = scale1.reshape(1, Cmid).astype(jnp.float32)
    b1 = bias1.reshape(1, Cmid).astype(jnp.float32)
    s2 = scale2.reshape(1, Cout).astype(jnp.float32)
    b2 = bias2.reshape(1, Cout).astype(jnp.float32)

    kernel = functools.partial(basic_block_kernel, nb=nb, hw=HW, width=W, gap=gap)

    flops = 2 * N * HW * 9 * (Cin * Cmid + Cmid * Cout)
    bytes_accessed = (N * HW * Cin * 4 + N * HW * Cout * 4
                      + (w1r.size + w2r.size) * 2
                      + (s1.size + b1.size + s2.size + b2.size) * 4
                      + wmask.size * 4)

    out_flat = pl.pallas_call(
        kernel,
        out_shape=jax.ShapeDtypeStruct((N * HW, Cout), x_nhwc.dtype),
        grid_spec=pltpu.PrefetchScalarGridSpec(
            num_scalar_prefetch=0,
            grid=(grid,),                               # nb images per step
            in_specs=[
                pl.BlockSpec((nb * HW, Cin), lambda b: (b, 0)),
                pl.BlockSpec((span, 2), lambda b: (0, 0)),
                pl.BlockSpec((9 * Cin, Cmid), lambda b: (0, 0)),
                pl.BlockSpec((1, Cmid), lambda b: (0, 0)),
                pl.BlockSpec((1, Cmid), lambda b: (0, 0)),
                pl.BlockSpec((9 * Cmid, Cout), lambda b: (0, 0)),
                pl.BlockSpec((1, Cout), lambda b: (0, 0)),
                pl.BlockSpec((1, Cout), lambda b: (0, 0)),
            ],
            out_specs=pl.BlockSpec((nb * HW, Cout), lambda b: (b, 0)),
            scratch_shapes=[
                pltpu.VMEM((rb, Cin), jnp.float32),      # padded image scratch
                pltpu.VMEM((rb, Cmid), jnp.float32),     # padded mid scratch
                pltpu.VMEM((span, 9 * Cin), jnp.bfloat16),   # im2col patch #1
                pltpu.VMEM((span, 9 * Cmid), jnp.bfloat16),  # im2col patch #2
            ],
        ),
        compiler_params=pltpu.CompilerParams(
            dimension_semantics=("parallel",),
            vmem_limit_bytes=48 * 1024 * 1024),
        cost_estimate=pl.CostEstimate(flops=flops, transcendentals=0,
                                      bytes_accessed=bytes_accessed),
    )(x_flat, wmask, w1r, s1, b1, w2r, s2, b2)

    return out_flat.reshape(N, H, W, Cout)


def reference_basic_block(x_nhwc, w1, scale1, bias1, w2, scale2, bias2):
    """Pure-JAX reference mirroring the kernel's bf16 operand rounding."""
    f32 = jnp.float32
    xb = x_nhwc.astype(jnp.bfloat16).astype(f32)
    w1b = w1.astype(jnp.bfloat16).astype(f32)
    w2b = w2.astype(jnp.bfloat16).astype(f32)
    dn = lax.conv_dimension_numbers(x_nhwc.shape, w1.shape, ('NHWC', 'HWIO', 'NHWC'))
    y = lax.conv_general_dilated(xb, w1b, (1, 1), 'SAME', dimension_numbers=dn,
                                 precision=lax.Precision.HIGHEST)
    y = jnp.maximum(y * scale1 + bias1, 0.0)
    y = y.astype(jnp.bfloat16).astype(f32)                # mid cast in the kernel
    y = lax.conv_general_dilated(y, w2b, (1, 1), 'SAME', dimension_numbers=dn,
                                 precision=lax.Precision.HIGHEST)
    y = y * scale2 + bias2 + x_nhwc                       # residual in full f32
    return jnp.maximum(y, 0.0)


if __name__ == "__main__":
    key = jax.random.PRNGKey(0)
    N, C, H, W = 2, 4, 16, 16          # inplanes = planes = 4, stride = 1
    planes = C
    eps = 1e-5

    keys = jax.random.split(key, 10)
    # Input in PyTorch NCHW convention.
    x_nchw = jax.random.normal(keys[0], (N, C, H, W), jnp.float32)

    # Conv weights, HWIO layout (PyTorch OIHW would be transposed the same way).
    w1 = 0.1 * jax.random.normal(keys[1], (3, 3, C, planes), jnp.float32)
    w2 = 0.1 * jax.random.normal(keys[2], (3, 3, planes, planes), jnp.float32)

    # BatchNorm params + running stats (inference), folded into scale/bias.
    gamma1 = 1.0 + 0.1 * jax.random.normal(keys[3], (planes,), jnp.float32)
    beta1 = 0.1 * jax.random.normal(keys[4], (planes,), jnp.float32)
    mean1 = 0.1 * jax.random.normal(keys[5], (planes,), jnp.float32)
    var1 = 1.0 + 0.1 * jax.random.uniform(keys[6], (planes,), jnp.float32)
    gamma2 = 1.0 + 0.1 * jax.random.normal(keys[7], (planes,), jnp.float32)
    beta2 = 0.1 * jax.random.normal(keys[8], (planes,), jnp.float32)
    mean2 = 0.1 * jax.random.normal(keys[9], (planes,), jnp.float32)
    var2 = jnp.ones((planes,), jnp.float32)

    scale1 = gamma1 / jnp.sqrt(var1 + eps)
    bias1 = beta1 - mean1 * scale1
    scale2 = gamma2 / jnp.sqrt(var2 + eps)
    bias2 = beta2 - mean2 * scale2

    # NCHW -> NHWC for the TPU kernel.
    x_nhwc = jnp.transpose(x_nchw, (0, 2, 3, 1))

    out = basic_block(x_nhwc, w1, scale1, bias1, w2, scale2, bias2)
    out = jax.block_until_ready(out)

    ref = reference_basic_block(x_nhwc, w1, scale1, bias1, w2, scale2, bias2)
    assert out.shape == (N, H, W, C)
    assert jnp.allclose(out, ref, atol=2e-3, rtol=2e-3), (
        float(jnp.max(jnp.abs(out - ref))))

    print("KERNEL_OK")
</pallas_src>

<mosaic_0001>
module attributes {stable_mosaic.version = 11 : i64} {
  func.func @basic_block_kernel(%arg0: i32, %arg1: memref<512x4xf32, #tpu.memory_space<vmem>>, %arg2: memref<536x2xf32, #tpu.memory_space<vmem>>, %arg3: memref<36x4xbf16, #tpu.memory_space<vmem>>, %arg4: memref<1x4xf32, #tpu.memory_space<vmem>>, %arg5: memref<1x4xf32, #tpu.memory_space<vmem>>, %arg6: memref<36x4xbf16, #tpu.memory_space<vmem>>, %arg7: memref<1x4xf32, #tpu.memory_space<vmem>>, %arg8: memref<1x4xf32, #tpu.memory_space<vmem>>, %arg9: memref<512x4xf32, #tpu.memory_space<vmem>>, %arg10: memref<584x4xf32, #tpu.memory_space<vmem>>, %arg11: memref<584x4xf32, #tpu.memory_space<vmem>>, %arg12: memref<536x36xbf16, #tpu.memory_space<vmem>>, %arg13: memref<536x36xbf16, #tpu.memory_space<vmem>>) attributes {dimension_semantics = [#tpu.dimension_semantics<parallel>], iteration_bounds = array<i64: 1>, scalar_prefetch = 0 : i64, scratch_operands = 4 : i64, tpu.core_type = #tpu.core_type<tc>, window_params = [{transform_indices = @transform_0, window_bounds = array<i64: 512, 4>}, {pipeline_mode = #tpu.pipeline_mode<synchronous>, transform_indices = @transform_1, window_bounds = array<i64: 536, 2>}, {pipeline_mode = #tpu.pipeline_mode<synchronous>, transform_indices = @transform_2, window_bounds = array<i64: 36, 4>}, {pipeline_mode = #tpu.pipeline_mode<synchronous>, transform_indices = @transform_3, window_bounds = array<i64: 1, 4>}, {pipeline_mode = #tpu.pipeline_mode<synchronous>, transform_indices = @transform_4, window_bounds = array<i64: 1, 4>}, {pipeline_mode = #tpu.pipeline_mode<synchronous>, transform_indices = @transform_5, window_bounds = array<i64: 36, 4>}, {pipeline_mode = #tpu.pipeline_mode<synchronous>, transform_indices = @transform_6, window_bounds = array<i64: 1, 4>}, {pipeline_mode = #tpu.pipeline_mode<synchronous>, transform_indices = @transform_7, window_bounds = array<i64: 1, 4>}, {transform_indices = @transform_8, window_bounds = array<i64: 512, 4>}]} {
    %cst = arith.constant 0.000000e+00 : f32
    %0 = vector.broadcast %cst : f32 to vector<24x4xf32>
    %c0 = arith.constant 0 : index
    %c0_0 = arith.constant 0 : index
    %1 = vector.load %arg10[%c0, %c0_0] : memref<584x4xf32, #tpu.memory_space<vmem>>, vector<24x4xf32>
    tpu.vector_store %arg10[%c0, %c0_0], %0 {strides = array<i32>} : memref<584x4xf32, #tpu.memory_space<vmem>>, vector<24x4xf32>,
    %cst_1 = arith.constant 0.000000e+00 : f32
    %2 = vector.broadcast %cst_1 : f32 to vector<24x4xf32>
    %c0_2 = arith.constant 0 : index
    %c0_3 = arith.constant 0 : index
    %3 = vector.load %arg11[%c0_2, %c0_3] : memref<584x4xf32, #tpu.memory_space<vmem>>, vector<24x4xf32>
    tpu.vector_store %arg11[%c0_2, %c0_3], %2 {strides = array<i32>} : memref<584x4xf32, #tpu.memory_space<vmem>>, vector<24x4xf32>,
    %cst_4 = arith.constant 0.000000e+00 : f32
    %4 = vector.broadcast %cst_4 : f32 to vector<24x4xf32>
    %c280 = arith.constant 280 : index
    %c0_5 = arith.constant 0 : index
    %5 = vector.load %arg10[%c280, %c0_5] : memref<584x4xf32, #tpu.memory_space<vmem>>, vector<24x4xf32>
    tpu.vector_store %arg10[%c280, %c0_5], %4 {strides = array<i32>} : memref<584x4xf32, #tpu.memory_space<vmem>>, vector<24x4xf32>,
    %cst_6 = arith.constant 0.000000e+00 : f32
    %6 = vector.broadcast %cst_6 : f32 to vector<24x4xf32>
    %c280_7 = arith.constant 280 : index
    %c0_8 = arith.constant 0 : index
    %7 = vector.load %arg11[%c280_7, %c0_8] : memref<584x4xf32, #tpu.memory_space<vmem>>, vector<24x4xf32>
    tpu.vector_store %arg11[%c280_7, %c0_8], %6 {strides = array<i32>} : memref<584x4xf32, #tpu.memory_space<vmem>>, vector<24x4xf32>,
    %cst_9 = arith.constant 0.000000e+00 : f32
    %8 = vector.broadcast %cst_9 : f32 to vector<24x4xf32>
    %c560 = arith.constant 560 : index
    %c0_10 = arith.constant 0 : index
    %9 = vector.load %arg10[%c560, %c0_10] : memref<584x4xf32, #tpu.memory_space<vmem>>, vector<24x4xf32>
    tpu.vector_store %arg10[%c560, %c0_10], %8 {strides = array<i32>} : memref<584x4xf32, #tpu.memory_space<vmem>>, vector<24x4xf32>,
    %cst_11 = arith.constant 0.000000e+00 : f32
    %10 = vector.broadcast %cst_11 : f32 to vector<24x4xf32>
    %c560_12 = arith.constant 560 : index
    %c0_13 = arith.constant 0 : index
    %11 = vector.load %arg11[%c560_12, %c0_13] : memref<584x4xf32, #tpu.memory_space<vmem>>, vector<24x4xf32>
    tpu.vector_store %arg11[%c560_12, %c0_13], %10 {strides = array<i32>} : memref<584x4xf32, #tpu.memory_space<vmem>>, vector<24x4xf32>,
    %c0_14 = arith.constant 0 : index
    %c0_15 = arith.constant 0 : index
    %12 = vector.load %arg1[%c0_14, %c0_15] : memref<512x4xf32, #tpu.memory_space<vmem>>, vector<256x4xf32>
    %c24 = arith.constant 24 : index
    %c0_16 = arith.constant 0 : index
    %13 = vector.load %arg10[%c24, %c0_16] : memref<584x4xf32, #tpu.memory_space<vmem>>, vector<256x4xf32>
    tpu.vector_store %arg10[%c24, %c0_16], %12 {strides = array<i32>} : memref<584x4xf32, #tpu.memory_space<vmem>>, vector<256x4xf32>,
    %c256 = arith.constant 256 : index
    %c0_17 = arith.constant 0 : index
    %14 = vector.load %arg1[%c256, %c0_17] : memref<512x4xf32, #tpu.memory_space<vmem>>, vector<256x4xf32>
    %c304 = arith.constant 304 : index
    %c0_18 = arith.constant 0 : index
    %15 = vector.load %arg10[%c304, %c0_18] : memref<584x4xf32, #tpu.memory_space<vmem>>, vector<256x4xf32>
    tpu.vector_store %arg10[%c304, %c0_18], %14 {strides = array<i32>} : memref<584x4xf32, #tpu.memory_space<vmem>>, vector<256x4xf32>,
    %c0_19 = arith.constant 0 : index
    %c0_20 = arith.constant 0 : index
    %16 = vector.load %arg2[%c0_19, %c0_20] : memref<536x2xf32, #tpu.memory_space<vmem>>, vector<536x2xf32>
    %c7 = arith.constant 7 : index
    %c0_21 = arith.constant 0 : index
    %17 = vector.load %arg10[%c7, %c0_21] : memref<584x4xf32, #tpu.memory_space<vmem>>, vector<536x4xf32>
    %18 = vector.extract_strided_slice %16 {offsets = [0, 0], sizes = [536, 1], strides = [1, 1]} : vector<536x2xf32> to vector<536x1xf32>
    %19 = vector.broadcast %18 : vector<536x1xf32> to vector<536x4xf32>
    %20 = arith.mulf %17, %19 : vector<536x4xf32>
    %21 = arith.truncf %20 : vector<536x4xf32> to vector<536x4xbf16>
    %c0_22 = arith.constant 0 : index
    %c0_23 = arith.constant 0 : index
    %22 = vector.load %arg12[%c0_22, %c0_23] : memref<536x36xbf16, #tpu.memory_space<vmem>>, vector<536x4xbf16>
    tpu.vector_store %arg12[%c0_22, %c0_23], %21 {strides = array<i32>} : memref<536x36xbf16, #tpu.memory_space<vmem>>, vector<536x4xbf16>,
    %c8 = arith.constant 8 : index
    %c0_24 = arith.constant 0 : index
    %23 = vector.load %arg10[%c8, %c0_24] : memref<584x4xf32, #tpu.memory_space<vmem>>, vector<536x4xf32>
    %24 = arith.truncf %23 : vector<536x4xf32> to vector<536x4xbf16>
    %c0_25 = arith.constant 0 : index
    %c4 = arith.constant 4 : index
    %25 = vector.load %arg12[%c0_25, %c4] : memref<536x36xbf16, #tpu.memory_space<vmem>>, vector<536x4xbf16>
    tpu.vector_store %arg12[%c0_25, %c4], %24 {strides = array<i32>} : memref<536x36xbf16, #tpu.memory_space<vmem>>, vector<536x4xbf16>,
    %c9 = arith.constant 9 : index
    %c0_26 = arith.constant 0 : index
    %26 = vector.load %arg10[%c9, %c0_26] : memref<584x4xf32, #tpu.memory_space<vmem>>, vector<536x4xf32>
    %27 = vector.extract_strided_slice %16 {offsets = [0, 1], sizes = [536, 1], strides = [1, 1]} : vector<536x2xf32> to vector<536x1xf32>
    %28 = vector.broadcast %27 : vector<536x1xf32> to vector<536x4xf32>
    %29 = arith.mulf %26, %28 : vector<536x4xf32>
    %30 = arith.truncf %29 : vector<536x4xf32> to vector<536x4xbf16>
    %c0_27 = arith.constant 0 : index
    %c8_28 = arith.constant 8 : index
    %31 = vector.load %arg12[%c0_27, %c8_28] : memref<536x36xbf16, #tpu.memory_space<vmem>>, vector<536x4xbf16>
    tpu.vector_store %arg12[%c0_27, %c8_28], %30 {strides = array<i32>} : memref<536x36xbf16, #tpu.memory_space<vmem>>, vector<536x4xbf16>,
    %c23 = arith.constant 23 : index
    %c0_29 = arith.constant 0 : index
    %32 = vector.load %arg10[%c23, %c0_29] : memref<584x4xf32, #tpu.memory_space<vmem>>, vector<536x4xf32>
    %33 = vector.extract_strided_slice %16 {offsets = [0, 0], sizes = [536, 1], strides = [1, 1]} : vector<536x2xf32> to vector<536x1xf32>
    %34 = vector.broadcast %33 : vector<536x1xf32> to vector<536x4xf32>
    %35 = arith.mulf %32, %34 : vector<536x4xf32>
    %36 = arith.truncf %35 : vector<536x4xf32> to vector<536x4xbf16>
    %c0_30 = arith.constant 0 : index
    %c12 = arith.constant 12 : index
    %37 = vector.load %arg12[%c0_30, %c12] : memref<536x36xbf16, #tpu.memory_space<vmem>>, vector<536x4xbf16>
    tpu.vector_store %arg12[%c0_30, %c12], %36 {strides = array<i32>} : memref<536x36xbf16, #tpu.memory_space<vmem>>, vector<536x4xbf16>,
    %c24_31 = arith.constant 24 : index
    %c0_32 = arith.constant 0 : index
    %38 = vector.load %arg10[%c24_31, %c0_32] : memref<584x4xf32, #tpu.memory_space<vmem>>, vector<536x4xf32>
    %39 = arith.truncf %38 : vector<536x4xf32> to vector<536x4xbf16>
    %c0_33 = arith.constant 0 : index
    %c16 = arith.constant 16 : index
    %40 = vector.load %arg12[%c0_33, %c16] : memref<536x36xbf16, #tpu.memory_space<vmem>>, vector<536x4xbf16>
    tpu.vector_store %arg12[%c0_33, %c16], %39 {strides = array<i32>} : memref<536x36xbf16, #tpu.memory_space<vmem>>, vector<536x4xbf16>,
    %c25 = arith.constant 25 : index
    %c0_34 = arith.constant 0 : index
    %41 = vector.load %arg10[%c25, %c0_34] : memref<584x4xf32, #tpu.memory_space<vmem>>, vector<536x4xf32>
    %42 = vector.extract_strided_slice %16 {offsets = [0, 1], sizes = [536, 1], strides = [1, 1]} : vector<536x2xf32> to vector<536x1xf32>
    %43 = vector.broadcast %42 : vector<536x1xf32> to vector<536x4xf32>
    %44 = arith.mulf %41, %43 : vector<536x4xf32>
    %45 = arith.truncf %44 : vector<536x4xf32> to vector<536x4xbf16>
    %c0_35 = arith.constant 0 : index
    %c20 = arith.constant 20 : index
    %46 = vector.load %arg12[%c0_35, %c20] : memref<536x36xbf16, #tpu.memory_space<vmem>>, vector<536x4xbf16>
    tpu.vector_store %arg12[%c0_35, %c20], %45 {strides = array<i32>} : memref<536x36xbf16, #tpu.memory_space<vmem>>, vector<536x4xbf16>,
    %c39 = arith.constant 39 : index
    %c0_36 = arith.constant 0 : index
    %47 = vector.load %arg10[%c39, %c0_36] : memref<584x4xf32, #tpu.memory_space<vmem>>, vector<536x4xf32>
    %48 = vector.extract_strided_slice %16 {offsets = [0, 0], sizes = [536, 1], strides = [1, 1]} : vector<536x2xf32> to vector<536x1xf32>
    %49 = vector.broadcast %48 : vector<536x1xf32> to vector<536x4xf32>
    %50 = arith.mulf %47, %49 : vector<536x4xf32>
    %51 = arith.truncf %50 : vector<536x4xf32> to vector<536x4xbf16>
    %c0_37 = arith.constant 0 : index
    %c24_38 = arith.constant 24 : index
    %52 = vector.load %arg12[%c0_37, %c24_38] : memref<536x36xbf16, #tpu.memory_space<vmem>>, vector<536x4xbf16>
    tpu.vector_store %arg12[%c0_37, %c24_38], %51 {strides = array<i32>} : memref<536x36xbf16, #tpu.memory_space<vmem>>, vector<536x4xbf16>,
    %c40 = arith.constant 40 : index
    %c0_39 = arith.constant 0 : index
    %53 = vector.load %arg10[%c40, %c0_39] : memref<584x4xf32, #tpu.memory_space<vmem>>, vector<536x4xf32>
    %54 = arith.truncf %53 : vector<536x4xf32> to vector<536x4xbf16>
    %c0_40 = arith.constant 0 : index
    %c28 = arith.constant 28 : index
    %55 = vector.load %arg12[%c0_40, %c28] : memref<536x36xbf16, #tpu.memory_space<vmem>>, vector<536x4xbf16>
    tpu.vector_store %arg12[%c0_40, %c28], %54 {strides = array<i32>} : memref<536x36xbf16, #tpu.memory_space<vmem>>, vector<536x4xbf16>,
    %c41 = arith.constant 41 : index
    %c0_41 = arith.constant 0 : index
    %56 = vector.load %arg10[%c41, %c0_41] : memref<584x4xf32, #tpu.memory_space<vmem>>, vector<536x4xf32>
    %57 = vector.extract_strided_slice %16 {offsets = [0, 1], sizes = [536, 1], strides = [1, 1]} : vector<536x2xf32> to vector<536x1xf32>
    %58 = vector.broadcast %57 : vector<536x1xf32> to vector<536x4xf32>
    %59 = arith.mulf %56, %58 : vector<536x4xf32>
    %60 = arith.truncf %59 : vector<536x4xf32> to vector<536x4xbf16>
    %c0_42 = arith.constant 0 : index
    %c32 = arith.constant 32 : index
    %61 = vector.load %arg12[%c0_42, %c32] : memref<536x36xbf16, #tpu.memory_space<vmem>>, vector<536x4xbf16>
    tpu.vector_store %arg12[%c0_42, %c32], %60 {strides = array<i32>} : memref<536x36xbf16, #tpu.memory_space<vmem>>, vector<536x4xbf16>,
    %c0_43 = arith.constant 0 : index
    %c0_44 = arith.constant 0 : index
    %62 = vector.load %arg12[%c0_43, %c0_44] : memref<536x36xbf16, #tpu.memory_space<vmem>>, vector<536x36xbf16>
    %c0_45 = arith.constant 0 : index
    %c0_46 = arith.constant 0 : index
    %63 = vector.load %arg3[%c0_45, %c0_46] : memref<36x4xbf16, #tpu.memory_space<vmem>>, vector<36x4xbf16>
    %cst_47 = arith.constant dense<0.000000e+00> : vector<536x4xf32>
    %64 = tpu.matmul %62, %63, %cst_47 {dimension_numbers = #tpu.dot_dimension_numbers<[1], [0], [0], [1], [0, 0, 1, 1], [], []>} : vector<536x36xbf16>, vector<36x4xbf16>, vector<536x4xf32> -> vector<536x4xf32>
    %c0_48 = arith.constant 0 : index
    %c0_49 = arith.constant 0 : index
    %65 = vector.load %arg4[%c0_48, %c0_49] : memref<1x4xf32, #tpu.memory_space<vmem>>, vector<1x4xf32>
    %66 = vector.broadcast %65 : vector<1x4xf32> to vector<536x4xf32>
    %67 = arith.mulf %64, %66 : vector<536x4xf32>
    %c0_50 = arith.constant 0 : index
    %c0_51 = arith.constant 0 : index
    %68 = vector.load %arg5[%c0_50, %c0_51] : memref<1x4xf32, #tpu.memory_space<vmem>>, vector<1x4xf32>
    %69 = vector.broadcast %68 : vector<1x4xf32> to vector<536x4xf32>
    %70 = arith.addf %67, %69 : vector<536x4xf32>
    %cst_52 = arith.constant 0.000000e+00 : f32
    %71 = vector.broadcast %cst_52 : f32 to vector<536x4xf32>
    %72 = arith.maximumf %70, %71 : vector<536x4xf32>
    %73 = vector.extract_strided_slice %72 {offsets = [0, 0], sizes = [256, 4], strides = [1, 1]} : vector<536x4xf32> to vector<256x4xf32>
    %c24_53 = arith.constant 24 : index
    %c0_54 = arith.constant 0 : index
    %74 = vector.load %arg11[%c24_53, %c0_54] : memref<584x4xf32, #tpu.memory_space<vmem>>, vector<256x4xf32>
    tpu.vector_store %arg11[%c24_53, %c0_54], %73 {strides = array<i32>} : memref<584x4xf32, #tpu.memory_space<vmem>>, vector<256x4xf32>,
    %75 = vector.extract_strided_slice %72 {offsets = [280, 0], sizes = [256, 4], strides = [1, 1]} : vector<536x4xf32> to vector<256x4xf32>
    %c304_55 = arith.constant 304 : index
    %c0_56 = arith.constant 0 : index
    %76 = vector.load %arg11[%c304_55, %c0_56] : memref<584x4xf32, #tpu.memory_space<vmem>>, vector<256x4xf32>
    tpu.vector_store %arg11[%c304_55, %c0_56], %75 {strides = array<i32>} : memref<584x4xf32, #tpu.memory_space<vmem>>, vector<256x4xf32>,
    %c7_57 = arith.constant 7 : index
    %c0_58 = arith.constant 0 : index
    %77 = vector.load %arg11[%c7_57, %c0_58] : memref<584x4xf32, #tpu.memory_space<vmem>>, vector<536x4xf32>
    %78 = vector.extract_strided_slice %16 {offsets = [0, 0], sizes = [536, 1], strides = [1, 1]} : vector<536x2xf32> to vector<536x1xf32>
    %79 = vector.broadcast %78 : vector<536x1xf32> to vector<536x4xf32>
    %80 = arith.mulf %77, %79 : vector<536x4xf32>
    %81 = arith.truncf %80 : vector<536x4xf32> to vector<536x4xbf16>
    %c0_59 = arith.constant 0 : index
    %c0_60 = arith.constant 0 : index
    %82 = vector.load %arg13[%c0_59, %c0_60] : memref<536x36xbf16, #tpu.memory_space<vmem>>, vector<536x4xbf16>
    tpu.vector_store %arg13[%c0_59, %c0_60], %81 {strides = array<i32>} : memref<536x36xbf16, #tpu.memory_space<vmem>>, vector<536x4xbf16>,
    %c8_61 = arith.constant 8 : index
    %c0_62 = arith.constant 0 : index
    %83 = vector.load %arg11[%c8_61, %c0_62] : memref<584x4xf32, #tpu.memory_space<vmem>>, vector<536x4xf32>
    %84 = arith.truncf %83 : vector<536x4xf32> to vector<536x4xbf16>
    %c0_63 = arith.constant 0 : index
    %c4_64 = arith.constant 4 : index
    %85 = vector.load %arg13[%c0_63, %c4_64] : memref<536x36xbf16, #tpu.memory_space<vmem>>, vector<536x4xbf16>
    tpu.vector_store %arg13[%c0_63, %c4_64], %84 {strides = array<i32>} : memref<536x36xbf16, #tpu.memory_space<vmem>>, vector<536x4xbf16>,
    %c9_65 = arith.constant 9 : index
    %c0_66 = arith.constant 0 : index
    %86 = vector.load %arg11[%c9_65, %c0_66] : memref<584x4xf32, #tpu.memory_space<vmem>>, vector<536x4xf32>
    %87 = vector.extract_strided_slice %16 {offsets = [0, 1], sizes = [536, 1], strides = [1, 1]} : vector<536x2xf32> to vector<536x1xf32>
    %88 = vector.broadcast %87 : vector<536x1xf32> to vector<536x4xf32>
    %89 = arith.mulf %86, %88 : vector<536x4xf32>
    %90 = arith.truncf %89 : vector<536x4xf32> to vector<536x4xbf16>
    %c0_67 = arith.constant 0 : index
    %c8_68 = arith.constant 8 : index
    %91 = vector.load %arg13[%c0_67, %c8_68] : memref<536x36xbf16, #tpu.memory_space<vmem>>, vector<536x4xbf16>
    tpu.vector_store %arg13[%c0_67, %c8_68], %90 {strides = array<i32>} : memref<536x36xbf16, #tpu.memory_space<vmem>>, vector<536x4xbf16>,
    %c23_69 = arith.constant 23 : index
    %c0_70 = arith.constant 0 : index
    %92 = vector.load %arg11[%c23_69, %c0_70] : memref<584x4xf32, #tpu.memory_space<vmem>>, vector<536x4xf32>
    %93 = vector.extract_strided_slice %16 {offsets = [0, 0], sizes = [536, 1], strides = [1, 1]} : vector<536x2xf32> to vector<536x1xf32>
    %94 = vector.broadcast %93 : vector<536x1xf32> to vector<536x4xf32>
    %95 = arith.mulf %92, %94 : vector<536x4xf32>
    %96 = arith.truncf %95 : vector<536x4xf32> to vector<536x4xbf16>
    %c0_71 = arith.constant 0 : index
    %c12_72 = arith.constant 12 : index
    %97 = vector.load %arg13[%c0_71, %c12_72] : memref<536x36xbf16, #tpu.memory_space<vmem>>, vector<536x4xbf16>
    tpu.vector_store %arg13[%c0_71, %c12_72], %96 {strides = array<i32>} : memref<536x36xbf16, #tpu.memory_space<vmem>>, vector<536x4xbf16>,
    %c24_73 = arith.constant 24 : index
    %c0_74 = arith.constant 0 : index
    %98 = vector.load %arg11[%c24_73, %c0_74] : memref<584x4xf32, #tpu.memory_space<vmem>>, vector<536x4xf32>
    %99 = arith.truncf %98 : vector<536x4xf32> to vector<536x4xbf16>
    %c0_75 = arith.constant 0 : index
    %c16_76 = arith.constant 16 : index
    %100 = vector.load %arg13[%c0_75, %c16_76] : memref<536x36xbf16, #tpu.memory_space<vmem>>, vector<536x4xbf16>
    tpu.vector_store %arg13[%c0_75, %c16_76], %99 {strides = array<i32>} : memref<536x36xbf16, #tpu.memory_space<vmem>>, vector<536x4xbf16>,
    %c25_77 = arith.constant 25 : index
    %c0_78 = arith.constant 0 : index
    %101 = vector.load %arg11[%c25_77, %c0_78] : memref<584x4xf32, #tpu.memory_space<vmem>>, vector<536x4xf32>
    %102 = vector.extract_strided_slice %16 {offsets = [0, 1], sizes = [536, 1], strides = [1, 1]} : vector<536x2xf32> to vector<536x1xf32>
    %103 = vector.broadcast %102 : vector<536x1xf32> to vector<536x4xf32>
    %104 = arith.mulf %101, %103 : vector<536x4xf32>
    %105 = arith.truncf %104 : vector<536x4xf32> to vector<536x4xbf16>
    %c0_79 = arith.constant 0 : index
    %c20_80 = arith.constant 20 : index
    %106 = vector.load %arg13[%c0_79, %c20_80] : memref<536x36xbf16, #tpu.memory_space<vmem>>, vector<536x4xbf16>
    tpu.vector_store %arg13[%c0_79, %c20_80], %105 {strides = array<i32>} : memref<536x36xbf16, #tpu.memory_space<vmem>>, vector<536x4xbf16>,
    %c39_81 = arith.constant 39 : index
    %c0_82 = arith.constant 0 : index
    %107 = vector.load %arg11[%c39_81, %c0_82] : memref<584x4xf32, #tpu.memory_space<vmem>>, vector<536x4xf32>
    %108 = vector.extract_strided_slice %16 {offsets = [0, 0], sizes = [536, 1], strides = [1, 1]} : vector<536x2xf32> to vector<536x1xf32>
    %109 = vector.broadcast %108 : vector<536x1xf32> to vector<536x4xf32>
    %110 = arith.mulf %107, %109 : vector<536x4xf32>
    %111 = arith.truncf %110 : vector<536x4xf32> to vector<536x4xbf16>
    %c0_83 = arith.constant 0 : index
    %c24_84 = arith.constant 24 : index
    %112 = vector.load %arg13[%c0_83, %c24_84] : memref<536x36xbf16, #tpu.memory_space<vmem>>, vector<536x4xbf16>
    tpu.vector_store %arg13[%c0_83, %c24_84], %111 {strides = array<i32>} : memref<536x36xbf16, #tpu.memory_space<vmem>>, vector<536x4xbf16>,
    %c40_85 = arith.constant 40 : index
    %c0_86 = arith.constant 0 : index
    %113 = vector.load %arg11[%c40_85, %c0_86] : memref<584x4xf32, #tpu.memory_space<vmem>>, vector<536x4xf32>
    %114 = arith.truncf %113 : vector<536x4xf32> to vector<536x4xbf16>
    %c0_87 = arith.constant 0 : index
    %c28_88 = arith.constant 28 : index
    %115 = vector.load %arg13[%c0_87, %c28_88] : memref<536x36xbf16, #tpu.memory_space<vmem>>, vector<536x4xbf16>
    tpu.vector_store %arg13[%c0_87, %c28_88], %114 {strides = array<i32>} : memref<536x36xbf16, #tpu.memory_space<vmem>>, vector<536x4xbf16>,
    %c41_89 = arith.constant 41 : index
    %c0_90 = arith.constant 0 : index
    %116 = vector.load %arg11[%c41_89, %c0_90] : memref<584x4xf32, #tpu.memory_space<vmem>>, vector<536x4xf32>
    %117 = vector.extract_strided_slice %16 {offsets = [0, 1], sizes = [536, 1], strides = [1, 1]} : vector<536x2xf32> to vector<536x1xf32>
    %118 = vector.broadcast %117 : vector<536x1xf32> to vector<536x4xf32>
    %119 = arith.mulf %116, %118 : vector<536x4xf32>
    %120 = arith.truncf %119 : vector<536x4xf32> to vector<536x4xbf16>
    %c0_91 = arith.constant 0 : index
    %c32_92 = arith.constant 32 : index
    %121 = vector.load %arg13[%c0_91, %c32_92] : memref<536x36xbf16, #tpu.memory_space<vmem>>, vector<536x4xbf16>
    tpu.vector_store %arg13[%c0_91, %c32_92], %120 {strides = array<i32>} : memref<536x36xbf16, #tpu.memory_space<vmem>>, vector<536x4xbf16>,
    %c0_93 = arith.constant 0 : index
    %c0_94 = arith.constant 0 : index
    %122 = vector.load %arg13[%c0_93, %c0_94] : memref<536x36xbf16, #tpu.memory_space<vmem>>, vector<536x36xbf16>
    %c0_95 = arith.constant 0 : index
    %c0_96 = arith.constant 0 : index
    %123 = vector.load %arg6[%c0_95, %c0_96] : memref<36x4xbf16, #tpu.memory_space<vmem>>, vector<36x4xbf16>
    %cst_97 = arith.constant dense<0.000000e+00> : vector<536x4xf32>
    %124 = tpu.matmul %122, %123, %cst_97 {dimension_numbers = #tpu.dot_dimension_numbers<[1], [0], [0], [1], [0, 0, 1, 1], [], []>} : vector<536x36xbf16>, vector<36x4xbf16>, vector<536x4xf32> -> vector<536x4xf32>
    %c24_98 = arith.constant 24 : index
    %c0_99 = arith.constant 0 : index
    %125 = vector.load %arg10[%c24_98, %c0_99] : memref<584x4xf32, #tpu.memory_space<vmem>>, vector<536x4xf32>
    %c0_100 = arith.constant 0 : index
    %c0_101 = arith.constant 0 : index
    %126 = vector.load %arg7[%c0_100, %c0_101] : memref<1x4xf32, #tpu.memory_space<vmem>>, vector<1x4xf32>
    %127 = vector.broadcast %126 : vector<1x4xf32> to vector<536x4xf32>
    %128 = arith.mulf %124, %127 : vector<536x4xf32>
    %c0_102 = arith.constant 0 : index
    %c0_103 = arith.constant 0 : index
    %129 = vector.load %arg8[%c0_102, %c0_103] : memref<1x4xf32, #tpu.memory_space<vmem>>, vector<1x4xf32>
    %130 = vector.broadcast %129 : vector<1x4xf32> to vector<536x4xf32>
    %131 = arith.addf %128, %130 : vector<536x4xf32>
    %132 = arith.addf %131, %125 : vector<536x4xf32>
    %cst_104 = arith.constant 0.000000e+00 : f32
    %133 = vector.broadcast %cst_104 : f32 to vector<536x4xf32>
    %134 = arith.maximumf %132, %133 : vector<536x4xf32>
    %135 = vector.extract_strided_slice %134 {offsets = [0, 0], sizes = [256, 4], strides = [1, 1]} : vector<536x4xf32> to vector<256x4xf32>
    %c0_105 = arith.constant 0 : index
    %c0_106 = arith.constant 0 : index
    %136 = vector.load %arg9[%c0_105, %c0_106] : memref<512x4xf32, #tpu.memory_space<vmem>>, vector<256x4xf32>
    tpu.vector_store %arg9[%c0_105, %c0_106], %135 {strides = array<i32>} : memref<512x4xf32, #tpu.memory_space<vmem>>, vector<256x4xf32>,
    %137 = vector.extract_strided_slice %134 {offsets = [280, 0], sizes = [256, 4], strides = [1, 1]} : vector<536x4xf32> to vector<256x4xf32>
    %c256_107 = arith.constant 256 : index
    %c0_108 = arith.constant 0 : index
    %138 = vector.load %arg9[%c256_107, %c0_108] : memref<512x4xf32, #tpu.memory_space<vmem>>, vector<256x4xf32>
    tpu.vector_store %arg9[%c256_107, %c0_108], %137 {strides = array<i32>} : memref<512x4xf32, #tpu.memory_space<vmem>>, vector<256x4xf32>,
    return
  }
  func.func @transform_0(%arg0: i32) -> (i32, i32) {
    %c0_i32 = arith.constant 0 : i32
    %c0_i32_0 = arith.constant 0 : i32
    return %arg0, %c0_i32 : i32, i32
  }
  func.func @transform_1(%arg0: i32) -> (i32, i32) {
    %c0_i32 = arith.constant 0 : i32
    %c0_i32_0 = arith.constant 0 : i32
    %c0_i32_1 = arith.constant 0 : i32
    return %c0_i32, %c0_i32_0 : i32, i32
  }
  func.func @transform_2(%arg0: i32) -> (i32, i32) {
    %c0_i32 = arith.constant 0 : i32
    %c0_i32_0 = arith.constant 0 : i32
    %c0_i32_1 = arith.constant 0 : i32
    return %c0_i32, %c0_i32_0 : i32, i32
  }
  func.func @transform_3(%arg0: i32) -> (i32, i32) {
    %c0_i32 = arith.constant 0 : i32
    %c0_i32_0 = arith.constant 0 : i32
    %c0_i32_1 = arith.constant 0 : i32
    return %c0_i32, %c0_i32_0 : i32, i32
  }
  func.func @transform_4(%arg0: i32) -> (i32, i32) {
    %c0_i32 = arith.constant 0 : i32
    %c0_i32_0 = arith.constant 0 : i32
    %c0_i32_1 = arith.constant 0 : i32
    return %c0_i32, %c0_i32_0 : i32, i32
  }
  func.func @transform_5(%arg0: i32) -> (i32, i32) {
    %c0_i32 = arith.constant 0 : i32
    %c0_i32_0 = arith.constant 0 : i32
    %c0_i32_1 = arith.constant 0 : i32
    return %c0_i32, %c0_i32_0 : i32, i32
  }
  func.func @transform_6(%arg0: i32) -> (i32, i32) {
    %c0_i32 = arith.constant 0 : i32
    %c0_i32_0 = arith.constant 0 : i32
    %c0_i32_1 = arith.constant 0 : i32
    return %c0_i32, %c0_i32_0 : i32, i32
  }
  func.func @transform_7(%arg0: i32) -> (i32, i32) {
    %c0_i32 = arith.constant 0 : i32
    %c0_i32_0 = arith.constant 0 : i32
    %c0_i32_1 = arith.constant 0 : i32
    return %c0_i32, %c0_i32_0 : i32, i32
  }
  func.func @transform_8(%arg0: i32) -> (i32, i32) {
    %c0_i32 = arith.constant 0 : i32
    %c0_i32_0 = arith.constant 0 : i32
    return %arg0, %c0_i32 : i32, i32
  }
}

</mosaic_0001>

<llo_original>
// kernel: tpu_custom_call.1
$region0: #{tpu_custom_call.1}
  #allocation0 [shape = 'u32[]', space=smem, size = 0x4, offset = 0x4, fixed_abs, tag = 'smem constant byte address 0x4 - core index']
  #allocation1 [shape = 'u32[72,128]{1,0:T(1,128)}', space=vmem, size = 0x9000, scoped, tag = 'internal scratch']
  #allocation2 [shape = 'f32[584,4]{1,0:T(8,128)}', space=vmem, size = 0x49000, scoped, tag = 'scratch operand']
  #allocation3 [shape = 'f32[584,4]{1,0:T(8,128)}', space=vmem, size = 0x49000, scoped, tag = 'scratch operand']
  #allocation4 [shape = 'bf16[536,36]{1,0:T(8,128)(2,1)}', space=vmem, size = 0x21800, scoped, tag = 'scratch operand']
  #allocation5 [shape = 'bf16[536,36]{1,0:T(8,128)(2,1)}', space=vmem, size = 0x21800, scoped, tag = 'scratch operand']
  %s0 = inlined_call_operand.vmem [shape: f32[512,4], index: 0, kind: input, shape index: {}]
  %s1 = inlined_call_operand.vmem [shape: f32[536,2], index: 1, kind: input, shape index: {}]
  %s2 = inlined_call_operand.vmem [shape: bf16[36,4], index: 2, kind: input, shape index: {}]
  %s3 = inlined_call_operand.vmem [shape: f32[1,4], index: 3, kind: input, shape index: {}]
  %s4 = inlined_call_operand.vmem [shape: f32[1,4], index: 4, kind: input, shape index: {}]
  %s5 = inlined_call_operand.vmem [shape: bf16[36,4], index: 5, kind: input, shape index: {}]
  %s6 = inlined_call_operand.vmem [shape: f32[1,4], index: 6, kind: input, shape index: {}]
  %s7 = inlined_call_operand.vmem [shape: f32[1,4], index: 7, kind: input, shape index: {}]
  %s8 = inlined_call_operand.vmem [shape: f32[512,4], index: 8, kind: output, shape index: {}]
  %s9 = sld [smem:[#allocation0]]
  $region42: #{tpu_custom_call.1} parent=0
    _
  %s11 = ssub.s32 1, %s9
  %s12 = scalar_select 0, %s11, %s9
  // Predicated region
  $region2: #{tpu_custom_call.1} parent=0 // pred_check
    _
  $region3: #{tpu_custom_call.1} parent=0 // pred_check_branch
    %14 = sbr.rel (0) target = $region5
  $region4: #{tpu_custom_call.1} parent=0 // pred_region
    _
  $region5: #{tpu_custom_call.1} parent=0 // pred_fallthru
    _
  // Predicated region
  $region6: #{tpu_custom_call.1} parent=0 // pred_check
    _
  $region7: #{tpu_custom_call.1} parent=0 // pred_check_branch
    %16 = sbr.rel (0) target = $region9
  $region8: #{tpu_custom_call.1} parent=0 // pred_region
    _
  $region9: #{tpu_custom_call.1} parent=0 // pred_fallthru
    _
  // Predicated region
  $region10: #{tpu_custom_call.1} parent=0 // pred_check
    _
  $region11: #{tpu_custom_call.1} parent=0 // pred_check_branch
    %18 = sbr.rel (0) target = $region13
  $region12: #{tpu_custom_call.1} parent=0 // pred_region
    _
  $region13: #{tpu_custom_call.1} parent=0 // pred_fallthru
    _
  // Predicated region
  $region14: #{tpu_custom_call.1} parent=0 // pred_check
    _
  $region15: #{tpu_custom_call.1} parent=0 // pred_check_branch
    %20 = sbr.rel (0) target = $region17
  $region16: #{tpu_custom_call.1} parent=0 // pred_region
    _
  $region17: #{tpu_custom_call.1} parent=0 // pred_fallthru
    _
  // Predicated region
  $region18: #{tpu_custom_call.1} parent=0 // pred_check
    _
  $region19: #{tpu_custom_call.1} parent=0 // pred_check_branch
    %22 = sbr.rel (0) target = $region21
  $region20: #{tpu_custom_call.1} parent=0 // pred_region
    _
  $region21: #{tpu_custom_call.1} parent=0 // pred_fallthru
    _
  // Predicated region
  $region22: #{tpu_custom_call.1} parent=0 // pred_check
    _
  $region23: #{tpu_custom_call.1} parent=0 // pred_check_branch
    %24 = sbr.rel (0) target = $region25
  $region24: #{tpu_custom_call.1} parent=0 // pred_region
    _
  $region25: #{tpu_custom_call.1} parent=0 // pred_fallthru
    _
  // Predicated region
  $region26: #{tpu_custom_call.1} parent=0 // pred_check
    _
  $region27: #{tpu_custom_call.1} parent=0 // pred_check_branch
    %26 = sbr.rel (0) target = $region29
  $region28: #{tpu_custom_call.1} parent=0 // pred_region
    _
  $region29: #{tpu_custom_call.1} parent=0 // pred_fallthru
    _
  // Predicated region
  $region30: #{tpu_custom_call.1} parent=0 // pred_check
    _
  $region31: #{tpu_custom_call.1} parent=0 // pred_check_branch
    %28 = sbr.rel (0) target = $region33
  $region32: #{tpu_custom_call.1} parent=0 // pred_region
    _
  $region33: #{tpu_custom_call.1} parent=0 // pred_fallthru
    _
  %vm30 = vcmask 31744
  %31 = vst.msk [vmem:[#allocation2] sm:$0xff] %vm30, 0.0
  %32 = vst.msk [vmem:[#allocation2 + $0x8] sm:$0xff] %vm30, 0.0
  %33 = vst.msk [vmem:[#allocation2 + $0x10] sm:$0xff] %vm30, 0.0
  %34 = vst.msk [vmem:[#allocation3] sm:$0xff] %vm30, 0.0
  %35 = vst.msk [vmem:[#allocation3 + $0x8] sm:$0xff] %vm30, 0.0
  %36 = vst.msk [vmem:[#allocation3 + $0x10] sm:$0xff] %vm30, 0.0
  %37 = vst.msk [vmem:[#allocation2 + $0x118] sm:$0xff] %vm30, 0.0
  %38 = vst.msk [vmem:[#allocation2 + $0x120] sm:$0xff] %vm30, 0.0
  %39 = vst.msk [vmem:[#allocation2 + $0x128] sm:$0xff] %vm30, 0.0
  %40 = vst.msk [vmem:[#allocation3 + $0x118] sm:$0xff] %vm30, 0.0
  %41 = vst.msk [vmem:[#allocation3 + $0x120] sm:$0xff] %vm30, 0.0
  %42 = vst.msk [vmem:[#allocation3 + $0x128] sm:$0xff] %vm30, 0.0
  %43 = vst.msk [vmem:[#allocation2 + $0x230] sm:$0xff] %vm30, 0.0
  %44 = vst.msk [vmem:[#allocation2 + $0x238] sm:$0xff] %vm30, 0.0
  %45 = vst.msk [vmem:[#allocation2 + $0x240] sm:$0xff] %vm30, 0.0
  %46 = vst.msk [vmem:[#allocation3 + $0x230] sm:$0xff] %vm30, 0.0
  %47 = vst.msk [vmem:[#allocation3 + $0x238] sm:$0xff] %vm30, 0.0
  %48 = vst.msk [vmem:[#allocation3 + $0x240] sm:$0xff] %vm30, 0.0
  %v49 = vld [vmem:[%s0] sm:$0xff]
  %v50 = vld [vmem:[%s0 + $0x8] sm:$0xff]
  %v51 = vld [vmem:[%s0 + $0x10] sm:$0xff]
  %v52 = vld [vmem:[%s0 + $0x18] sm:$0xff]
  %v53 = vld [vmem:[%s0 + $0x20] sm:$0xff]
  %v54 = vld [vmem:[%s0 + $0x28] sm:$0xff]
  %v55 = vld [vmem:[%s0 + $0x30] sm:$0xff]
  %v56 = vld [vmem:[%s0 + $0x38] sm:$0xff]
  %v57 = vld [vmem:[%s0 + $0x40] sm:$0xff]
  %v58 = vld [vmem:[%s0 + $0x48] sm:$0xff]
  %v59 = vld [vmem:[%s0 + $0x50] sm:$0xff]
  %v60 = vld [vmem:[%s0 + $0x58] sm:$0xff]
  %v61 = vld [vmem:[%s0 + $0x60] sm:$0xff]
  %v62 = vld [vmem:[%s0 + $0x68] sm:$0xff]
  %v63 = vld [vmem:[%s0 + $0x70] sm:$0xff]
  %v64 = vld [vmem:[%s0 + $0x78] sm:$0xff]
  %v65 = vld [vmem:[%s0 + $0x80] sm:$0xff]
  %v66 = vld [vmem:[%s0 + $0x88] sm:$0xff]
  %v67 = vld [vmem:[%s0 + $0x90] sm:$0xff]
  %v68 = vld [vmem:[%s0 + $0x98] sm:$0xff]
  %v69 = vld [vmem:[%s0 + $0xa0] sm:$0xff]
  %v70 = vld [vmem:[%s0 + $0xa8] sm:$0xff]
  %v71 = vld [vmem:[%s0 + $0xb0] sm:$0xff]
  %v72 = vld [vmem:[%s0 + $0xb8] sm:$0xff]
  %v73 = vld [vmem:[%s0 + $0xc0] sm:$0xff]
  %v74 = vld [vmem:[%s0 + $0xc8] sm:$0xff]
  %v75 = vld [vmem:[%s0 + $0xd0] sm:$0xff]
  %v76 = vld [vmem:[%s0 + $0xd8] sm:$0xff]
  %v77 = vld [vmem:[%s0 + $0xe0] sm:$0xff]
  %v78 = vld [vmem:[%s0 + $0xe8] sm:$0xff]
  %v79 = vld [vmem:[%s0 + $0xf0] sm:$0xff]
  %v80 = vld [vmem:[%s0 + $0xf8] sm:$0xff]
  %81 = vst.msk [vmem:[#allocation2 + $0x18] sm:$0xff] %vm30, %v49
  %82 = vst.msk [vmem:[#allocation2 + $0x20] sm:$0xff] %vm30, %v50
  %83 = vst.msk [vmem:[#allocation2 + $0x28] sm:$0xff] %vm30, %v51
  %84 = vst.msk [vmem:[#allocation2 + $0x30] sm:$0xff] %vm30, %v52
  %85 = vst.msk [vmem:[#allocation2 + $0x38] sm:$0xff] %vm30, %v53
  %86 = vst.msk [vmem:[#allocation2 + $0x40] sm:$0xff] %vm30, %v54
  %87 = vst.msk [vmem:[#allocation2 + $0x48] sm:$0xff] %vm30, %v55
  %88 = vst.msk [vmem:[#allocation2 + $0x50] sm:$0xff] %vm30, %v56
  %89 = vst.msk [vmem:[#allocation2 + $0x58] sm:$0xff] %vm30, %v57
  %90 = vst.msk [vmem:[#allocation2 + $0x60] sm:$0xff] %vm30, %v58
  %91 = vst.msk [vmem:[#allocation2 + $0x68] sm:$0xff] %vm30, %v59
  %92 = vst.msk [vmem:[#allocation2 + $0x70] sm:$0xff] %vm30, %v60
  %93 = vst.msk [vmem:[#allocation2 + $0x78] sm:$0xff] %vm30, %v61
  %94 = vst.msk [vmem:[#allocation2 + $0x80] sm:$0xff] %vm30, %v62
  %95 = vst.msk [vmem:[#allocation2 + $0x88] sm:$0xff] %vm30, %v63
  %96 = vst.msk [vmem:[#allocation2 + $0x90] sm:$0xff] %vm30, %v64
  %97 = vst.msk [vmem:[#allocation2 + $0x98] sm:$0xff] %vm30, %v65
  %98 = vst.msk [vmem:[#allocation2 + $0xa0] sm:$0xff] %vm30, %v66
  %99 = vst.msk [vmem:[#allocation2 + $0xa8] sm:$0xff] %vm30, %v67
  %100 = vst.msk [vmem:[#allocation2 + $0xb0] sm:$0xff] %vm30, %v68
  %101 = vst.msk [vmem:[#allocation2 + $0xb8] sm:$0xff] %vm30, %v69
  %102 = vst.msk [vmem:[#allocation2 + $0xc0] sm:$0xff] %vm30, %v70
  %103 = vst.msk [vmem:[#allocation2 + $0xc8] sm:$0xff] %vm30, %v71
  %104 = vst.msk [vmem:[#allocation2 + $0xd0] sm:$0xff] %vm30, %v72
  %105 = vst.msk [vmem:[#allocation2 + $0xd8] sm:$0xff] %vm30, %v73
  %106 = vst.msk [vmem:[#allocation2 + $0xe0] sm:$0xff] %vm30, %v74
  %107 = vst.msk [vmem:[#allocation2 + $0xe8] sm:$0xff] %vm30, %v75
  %108 = vst.msk [vmem:[#allocation2 + $0xf0] sm:$0xff] %vm30, %v76
  %109 = vst.msk [vmem:[#allocation2 + $0xf8] sm:$0xff] %vm30, %v77
  %110 = vst.msk [vmem:[#allocation2 + $0x100] sm:$0xff] %vm30, %v78
  %111 = vst.msk [vmem:[#allocation2 + $0x108] sm:$0xff] %vm30, %v79
  %112 = vst.msk [vmem:[#allocation2 + $0x110] sm:$0xff] %vm30, %v80
  %v113 = vld [vmem:[%s0 + $0x100] sm:$0xff]
  %v114 = vld [vmem:[%s0 + $0x108] sm:$0xff]
  %v115 = vld [vmem:[%s0 + $0x110] sm:$0xff]
  %v116 = vld [vmem:[%s0 + $0x118] sm:$0xff]
  %v117 = vld [vmem:[%s0 + $0x120] sm:$0xff]
  %v118 = vld [vmem:[%s0 + $0x128] sm:$0xff]
  %v119 = vld [vmem:[%s0 + $0x130] sm:$0xff]
  %v120 = vld [vmem:[%s0 + $0x138] sm:$0xff]
  %v121 = vld [vmem:[%s0 + $0x140] sm:$0xff]
  %v122 = vld [vmem:[%s0 + $0x148] sm:$0xff]
  %v123 = vld [vmem:[%s0 + $0x150] sm:$0xff]
  %v124 = vld [vmem:[%s0 + $0x158] sm:$0xff]
  %v125 = vld [vmem:[%s0 + $0x160] sm:$0xff]
  %v126 = vld [vmem:[%s0 + $0x168] sm:$0xff]
  %v127 = vld [vmem:[%s0 + $0x170] sm:$0xff]
  %v128 = vld [vmem:[%s0 + $0x178] sm:$0xff]
  %v129 = vld [vmem:[%s0 + $0x180] sm:$0xff]
  %v130 = vld [vmem:[%s0 + $0x188] sm:$0xff]
  %v131 = vld [vmem:[%s0 + $0x190] sm:$0xff]
  %v132 = vld [vmem:[%s0 + $0x198] sm:$0xff]
  %v133 = vld [vmem:[%s0 + $0x1a0] sm:$0xff]
  %v134 = vld [vmem:[%s0 + $0x1a8] sm:$0xff]
  %v135 = vld [vmem:[%s0 + $0x1b0] sm:$0xff]
  %v136 = vld [vmem:[%s0 + $0x1b8] sm:$0xff]
  %v137 = vld [vmem:[%s0 + $0x1c0] sm:$0xff]
  %v138 = vld [vmem:[%s0 + $0x1c8] sm:$0xff]
  %v139 = vld [vmem:[%s0 + $0x1d0] sm:$0xff]
  %v140 = vld [vmem:[%s0 + $0x1d8] sm:$0xff]
  %v141 = vld [vmem:[%s0 + $0x1e0] sm:$0xff]
  %v142 = vld [vmem:[%s0 + $0x1e8] sm:$0xff]
  %v143 = vld [vmem:[%s0 + $0x1f0] sm:$0xff]
  %v144 = vld [vmem:[%s0 + $0x1f8] sm:$0xff]
  %145 = vst.msk [vmem:[#allocation2 + $0x130] sm:$0xff] %vm30, %v113
  %146 = vst.msk [vmem:[#allocation2 + $0x138] sm:$0xff] %vm30, %v114
  %147 = vst.msk [vmem:[#allocation2 + $0x140] sm:$0xff] %vm30, %v115
  %148 = vst.msk [vmem:[#allocation2 + $0x148] sm:$0xff] %vm30, %v116
  %149 = vst.msk [vmem:[#allocation2 + $0x150] sm:$0xff] %vm30, %v117
  %150 = vst.msk [vmem:[#allocation2 + $0x158] sm:$0xff] %vm30, %v118
  %151 = vst.msk [vmem:[#allocation2 + $0x160] sm:$0xff] %vm30, %v119
  %152 = vst.msk [vmem:[#allocation2 + $0x168] sm:$0xff] %vm30, %v120
  %153 = vst.msk [vmem:[#allocation2 + $0x170] sm:$0xff] %vm30, %v121
  %154 = vst.msk [vmem:[#allocation2 + $0x178] sm:$0xff] %vm30, %v122
  %155 = vst.msk [vmem:[#allocation2 + $0x180] sm:$0xff] %vm30, %v123
  %156 = vst.msk [vmem:[#allocation2 + $0x188] sm:$0xff] %vm30, %v124
  %157 = vst.msk [vmem:[#allocation2 + $0x190] sm:$0xff] %vm30, %v125
  %158 = vst.msk [vmem:[#allocation2 + $0x198] sm:$0xff] %vm30, %v126
  %159 = vst.msk [vmem:[#allocation2 + $0x1a0] sm:$0xff] %vm30, %v127
  %160 = vst.msk [vmem:[#allocation2 + $0x1a8] sm:$0xff] %vm30, %v128
  %161 = vst.msk [vmem:[#allocation2 + $0x1b0] sm:$0xff] %vm30, %v129
  %162 = vst.msk [vmem:[#allocation2 + $0x1b8] sm:$0xff] %vm30, %v130
  %163 = vst.msk [vmem:[#allocation2 + $0x1c0] sm:$0xff] %vm30, %v131
  %164 = vst.msk [vmem:[#allocation2 + $0x1c8] sm:$0xff] %vm30, %v132
  %165 = vst.msk [vmem:[#allocation2 + $0x1d0] sm:$0xff] %vm30, %v133
  %166 = vst.msk [vmem:[#allocation2 + $0x1d8] sm:$0xff] %vm30, %v134
  %167 = vst.msk [vmem:[#allocation2 + $0x1e0] sm:$0xff] %vm30, %v135
  %168 = vst.msk [vmem:[#allocation2 + $0x1e8] sm:$0xff] %vm30, %v136
  %169 = vst.msk [vmem:[#allocation2 + $0x1f0] sm:$0xff] %vm30, %v137
  %170 = vst.msk [vmem:[#allocation2 + $0x1f8] sm:$0xff] %vm30, %v138
  %171 = vst.msk [vmem:[#allocation2 + $0x200] sm:$0xff] %vm30, %v139
  %172 = vst.msk [vmem:[#allocation2 + $0x208] sm:$0xff] %vm30, %v140
  %173 = vst.msk [vmem:[#allocation2 + $0x210] sm:$0xff] %vm30, %v141
  %174 = vst.msk [vmem:[#allocation2 + $0x218] sm:$0xff] %vm30, %v142
  %175 = vst.msk [vmem:[#allocation2 + $0x220] sm:$0xff] %vm30, %v143
  %176 = vst.msk [vmem:[#allocation2 + $0x228] sm:$0xff] %vm30, %v144
  %v177 = vld [vmem:[%s1] sm:$0xff]
  %v178 = vld [vmem:[%s1 + $0x8] sm:$0xff]
  %v179 = vld [vmem:[%s1 + $0x10] sm:$0xff]
  %v180 = vld [vmem:[%s1 + $0x18] sm:$0xff]
  %v181 = vld [vmem:[%s1 + $0x20] sm:$0xff]
  %v182 = vld [vmem:[%s1 + $0x28] sm:$0xff]
  %v183 = vld [vmem:[%s1 + $0x30] sm:$0xff]
  %v184 = vld [vmem:[%s1 + $0x38] sm:$0xff]
  %v185 = vld [vmem:[%s1 + $0x40] sm:$0xff]
  %v186 = vld [vmem:[%s1 + $0x48] sm:$0xff]
  %v187 = vld [vmem:[%s1 + $0x50] sm:$0xff]
  %v188 = vld [vmem:[%s1 + $0x58] sm:$0xff]
  %v189 = vld [vmem:[%s1 + $0x60] sm:$0xff]
  %v190 = vld [vmem:[%s1 + $0x68] sm:$0xff]
  %v191 = vld [vmem:[%s1 + $0x70] sm:$0xff]
  %v192 = vld [vmem:[%s1 + $0x78] sm:$0xff]
  %v193 = vld [vmem:[%s1 + $0x80] sm:$0xff]
  %v194 = vld [vmem:[%s1 + $0x88] sm:$0xff]
  %v195 = vld [vmem:[%s1 + $0x90] sm:$0xff]
  %v196 = vld [vmem:[%s1 + $0x98] sm:$0xff]
  %v197 = vld [vmem:[%s1 + $0xa0] sm:$0xff]
  %v198 = vld [vmem:[%s1 + $0xa8] sm:$0xff]
  %v199 = vld [vmem:[%s1 + $0xb0] sm:$0xff]
  %v200 = vld [vmem:[%s1 + $0xb8] sm:$0xff]
  %v201 = vld [vmem:[%s1 + $0xc0] sm:$0xff]
  %v202 = vld [vmem:[%s1 + $0xc8] sm:$0xff]
  %v203 = vld [vmem:[%s1 + $0xd0] sm:$0xff]
  %v204 = vld [vmem:[%s1 + $0xd8] sm:$0xff]
  %v205 = vld [vmem:[%s1 + $0xe0] sm:$0xff]
  %v206 = vld [vmem:[%s1 + $0xe8] sm:$0xff]
  %v207 = vld [vmem:[%s1 + $0xf0] sm:$0xff]
  %v208 = vld [vmem:[%s1 + $0xf8] sm:$0xff]
  %v209 = vld [vmem:[%s1 + $0x100] sm:$0xff]
  %v210 = vld [vmem:[%s1 + $0x108] sm:$0xff]
  %v211 = vld [vmem:[%s1 + $0x110] sm:$0xff]
  %v212 = vld [vmem:[%s1 + $0x118] sm:$0xff]
  %v213 = vld [vmem:[%s1 + $0x120] sm:$0xff]
  %v214 = vld [vmem:[%s1 + $0x128] sm:$0xff]
  %v215 = vld [vmem:[%s1 + $0x130] sm:$0xff]
  %v216 = vld [vmem:[%s1 + $0x138] sm:$0xff]
  %v217 = vld [vmem:[%s1 + $0x140] sm:$0xff]
  %v218 = vld [vmem:[%s1 + $0x148] sm:$0xff]
  %v219 = vld [vmem:[%s1 + $0x150] sm:$0xff]
  %v220 = vld [vmem:[%s1 + $0x158] sm:$0xff]
  %v221 = vld [vmem:[%s1 + $0x160] sm:$0xff]
  %v222 = vld [vmem:[%s1 + $0x168] sm:$0xff]
  %v223 = vld [vmem:[%s1 + $0x170] sm:$0xff]
  %v224 = vld [vmem:[%s1 + $0x178] sm:$0xff]
  %v225 = vld [vmem:[%s1 + $0x180] sm:$0xff]
  %v226 = vld [vmem:[%s1 + $0x188] sm:$0xff]
  %v227 = vld [vmem:[%s1 + $0x190] sm:$0xff]
  %v228 = vld [vmem:[%s1 + $0x198] sm:$0xff]
  %v229 = vld [vmem:[%s1 + $0x1a0] sm:$0xff]
  %v230 = vld [vmem:[%s1 + $0x1a8] sm:$0xff]
  %v231 = vld [vmem:[%s1 + $0x1b0] sm:$0xff]
  %v232 = vld [vmem:[%s1 + $0x1b8] sm:$0xff]
  %v233 = vld [vmem:[%s1 + $0x1c0] sm:$0xff]
  %v234 = vld [vmem:[%s1 + $0x1c8] sm:$0xff]
  %v235 = vld [vmem:[%s1 + $0x1d0] sm:$0xff]
  %v236 = vld [vmem:[%s1 + $0x1d8] sm:$0xff]
  %v237 = vld [vmem:[%s1 + $0x1e0] sm:$0xff]
  %v238 = vld [vmem:[%s1 + $0x1e8] sm:$0xff]
  %v239 = vld [vmem:[%s1 + $0x1f0] sm:$0xff]
  %v240 = vld [vmem:[%s1 + $0x1f8] sm:$0xff]
  %v241 = vld [vmem:[%s1 + $0x200] sm:$0xff]
  %v242 = vld [vmem:[%s1 + $0x208] sm:$0xff]
  %v243 = vld [vmem:[%s1 + $0x210] sm:$0xff]
  %v244 = vld [vmem:[#allocation2 + $0x7] sm:$0xff]
  %v245 = vld [vmem:[#allocation2 + $0xf] sm:$0xff]
  %v246 = vld [vmem:[#allocation2 + $0x17] sm:$0xff]
  %v247 = vld [vmem:[#allocation2 + $0x1f] sm:$0xff]
  %v248 = vld [vmem:[#allocation2 + $0x27] sm:$0xff]
  %v249 = vld [vmem:[#allocation2 + $0x2f] sm:$0xff]
  %v250 = vld [vmem:[#allocation2 + $0x37] sm:$0xff]
  %v251 = vld [vmem:[#allocation2 + $0x3f] sm:$0xff]
  %v252 = vld [vmem:[#allocation2 + $0x47] sm:$0xff]
  %v253 = vld [vmem:[#allocation2 + $0x4f] sm:$0xff]
  %v254 = vld [vmem:[#allocation2 + $0x57] sm:$0xff]
  %v255 = vld [vmem:[#allocation2 + $0x5f] sm:$0xff]
  %v256 = vld [vmem:[#allocation2 + $0x67] sm:$0xff]
  %v257 = vld [vmem:[#allocation2 + $0x6f] sm:$0xff]
  %v258 = vld [vmem:[#allocation2 + $0x77] sm:$0xff]
  %v259 = vld [vmem:[#allocation2 + $0x7f] sm:$0xff]
  %v260 = vld [vmem:[#allocation2 + $0x87] sm:$0xff]
  %v261 = vld [vmem:[#allocation2 + $0x8f] sm:$0xff]
  %v262 = vld [vmem:[#allocation2 + $0x97] sm:$0xff]
  %v263 = vld [vmem:[#allocation2 + $0x9f] sm:$0xff]
  %v264 = vld [vmem:[#allocation2 + $0xa7] sm:$0xff]
  %v265 = vld [vmem:[#allocation2 + $0xaf] sm:$0xff]
  %v266 = vld [vmem:[#allocation2 + $0xb7] sm:$0xff]
  %v267 = vld [vmem:[#allocation2 + $0xbf] sm:$0xff]
  %v268 = vld [vmem:[#allocation2 + $0xc7] sm:$0xff]
  %v269 = vld [vmem:[#allocation2 + $0xcf] sm:$0xff]
  %v270 = vld [vmem:[#allocation2 + $0xd7] sm:$0xff]
  %v271 = vld [vmem:[#allocation2 + $0xdf] sm:$0xff]
  %v272 = vld [vmem:[#allocation2 + $0xe7] sm:$0xff]
  %v273 = vld [vmem:[#allocation2 + $0xef] sm:$0xff]
  %v274 = vld [vmem:[#allocation2 + $0xf7] sm:$0xff]
  %v275 = vld [vmem:[#allocation2 + $0xff] sm:$0xff]
  %v276 = vld [vmem:[#allocation2 + $0x107] sm:$0xff]
  %v277 = vld [vmem:[#allocation2 + $0x10f] sm:$0xff]
  %v278 = vld [vmem:[#allocation2 + $0x117] sm:$0xff]
  %v279 = vld [vmem:[#allocation2 + $0x11f] sm:$0xff]
  %v280 = vld [vmem:[#allocation2 + $0x127] sm:$0xff]
  %v281 = vld [vmem:[#allocation2 + $0x12f] sm:$0xff]
  %v282 = vld [vmem:[#allocation2 + $0x137] sm:$0xff]
  %v283 = vld [vmem:[#allocation2 + $0x13f] sm:$0xff]
  %v284 = vld [vmem:[#allocation2 + $0x147] sm:$0xff]
  %v285 = vld [vmem:[#allocation2 + $0x14f] sm:$0xff]
  %v286 = vld [vmem:[#allocation2 + $0x157] sm:$0xff]
  %v287 = vld [vmem:[#allocation2 + $0x15f] sm:$0xff]
  %v288 = vld [vmem:[#allocation2 + $0x167] sm:$0xff]
  %v289 = vld [vmem:[#allocation2 + $0x16f] sm:$0xff]
  %v290 = vld [vmem:[#allocation2 + $0x177] sm:$0xff]
  %v291 = vld [vmem:[#allocation2 + $0x17f] sm:$0xff]
  %v292 = vld [vmem:[#allocation2 + $0x187] sm:$0xff]
  %v293 = vld [vmem:[#allocation2 + $0x18f] sm:$0xff]
  %v294 = vld [vmem:[#allocation2 + $0x197] sm:$0xff]
  %v295 = vld [vmem:[#allocation2 + $0x19f] sm:$0xff]
  %v296 = vld [vmem:[#allocation2 + $0x1a7] sm:$0xff]
  %v297 = vld [vmem:[#allocation2 + $0x1af] sm:$0xff]
  %v298 = vld [vmem:[#allocation2 + $0x1b7] sm:$0xff]
  %v299 = vld [vmem:[#allocation2 + $0x1bf] sm:$0xff]
  %v300 = vld [vmem:[#allocation2 + $0x1c7] sm:$0xff]
  %v301 = vld [vmem:[#allocation2 + $0x1cf] sm:$0xff]
  %v302 = vld [vmem:[#allocation2 + $0x1d7] sm:$0xff]
  %v303 = vld [vmem:[#allocation2 + $0x1df] sm:$0xff]
  %v304 = vld [vmem:[#allocation2 + $0x1e7] sm:$0xff]
  %v305 = vld [vmem:[#allocation2 + $0x1ef] sm:$0xff]
  %v306 = vld [vmem:[#allocation2 + $0x1f7] sm:$0xff]
  %v307 = vld [vmem:[#allocation2 + $0x1ff] sm:$0xff]
  %v308 = vld [vmem:[#allocation2 + $0x207] sm:$0xff]
  %v309 = vld [vmem:[#allocation2 + $0x20f] sm:$0xff]
  %v310 = vld [vmem:[#allocation2 + $0x217] sm:$0xff]
  %312 = vset.pattern.permute.xlu0 0
  %313 = vperm.xlu0 %312, %v177
  %v314 = vpop.permute.xlu0 %313
  %317 = vset.pattern.permute.xlu0 0
  %318 = vperm.xlu0 %317, %v178
  %v319 = vpop.permute.xlu0 %318
  %322 = vset.pattern.permute.xlu0 0
  %323 = vperm.xlu0 %322, %v179
  %v324 = vpop.permute.xlu0 %323
  %327 = vset.pattern.permute.xlu0 0
  %328 = vperm.xlu0 %327, %v180
  %v329 = vpop.permute.xlu0 %328
  %332 = vset.pattern.permute.xlu0 0
  %333 = vperm.xlu0 %332, %v181
  %v334 = vpop.permute.xlu0 %333
  %337 = vset.pattern.permute.xlu0 0
  %338 = vperm.xlu0 %337, %v182
  %v339 = vpop.permute.xlu0 %338
  %342 = vset.pattern.permute.xlu0 0
  %343 = vperm.xlu0 %342, %v183
  %v344 = vpop.permute.xlu0 %343
  %347 = vset.pattern.permute.xlu0 0
  %348 = vperm.xlu0 %347, %v184
  %v349 = vpop.permute.xlu0 %348
  %352 = vset.pattern.permute.xlu0 0
  %353 = vperm.xlu0 %352, %v185
  %v354 = vpop.permute.xlu0 %353
  %357 = vset.pattern.permute.xlu0 0
  %358 = vperm.xlu0 %357, %v186
  %v359 = vpop.permute.xlu0 %358
  %362 = vset.pattern.permute.xlu0 0
  %363 = vperm.xlu0 %362, %v187
  %v364 = vpop.permute.xlu0 %363
  %367 = vset.pattern.permute.xlu0 0
  %368 = vperm.xlu0 %367, %v188
  %v369 = vpop.permute.xlu0 %368
  %372 = vset.pattern.permute.xlu0 0
  %373 = vperm.xlu0 %372, %v189
  %v374 = vpop.permute.xlu0 %373
  %377 = vset.pattern.permute.xlu0 0
  %378 = vperm.xlu0 %377, %v190
  %v379 = vpop.permute.xlu0 %378
  %382 = vset.pattern.permute.xlu0 0
  %383 = vperm.xlu0 %382, %v191
  %v384 = vpop.permute.xlu0 %383
  %387 = vset.pattern.permute.xlu0 0
  %388 = vperm.xlu0 %387, %v192
  %v389 = vpop.permute.xlu0 %388
  %392 = vset.pattern.permute.xlu0 0
  %393 = vperm.xlu0 %392, %v193
  %v394 = vpop.permute.xlu0 %393
  %397 = vset.pattern.permute.xlu0 0
  %398 = vperm.xlu0 %397, %v194
  %v399 = vpop.permute.xlu0 %398
  %402 = vset.pattern.permute.xlu0 0
  %403 = vperm.xlu0 %402, %v195
  %v404 = vpop.permute.xlu0 %403
  %407 = vset.pattern.permute.xlu0 0
  %408 = vperm.xlu0 %407, %v196
  %v409 = vpop.permute.xlu0 %408
  %412 = vset.pattern.permute.xlu0 0
  %413 = vperm.xlu0 %412, %v197
  %v414 = vpop.permute.xlu0 %413
  %417 = vset.pattern.permute.xlu0 0
  %418 = vperm.xlu0 %417, %v198
  %v419 = vpop.permute.xlu0 %418
  %422 = vset.pattern.permute.xlu0 0
  %423 = vperm.xlu0 %422, %v199
  %v424 = vpop.permute.xlu0 %423
  %427 = vset.pattern.permute.xlu0 0
  %428 = vperm.xlu0 %427, %v200
  %v429 = vpop.permute.xlu0 %428
  %432 = vset.pattern.permute.xlu0 0
  %433 = vperm.xlu0 %432, %v201
  %v434 = vpop.permute.xlu0 %433
  %437 = vset.pattern.permute.xlu0 0
  %438 = vperm.xlu0 %437, %v202
  %v439 = vpop.permute.xlu0 %438
  %442 = vset.pattern.permute.xlu0 0
  %443 = vperm.xlu0 %442, %v203
  %v444 = vpop.permute.xlu0 %443
  %447 = vset.pattern.permute.xlu0 0
  %448 = vperm.xlu0 %447, %v204
  %v449 = vpop.permute.xlu0 %448
  %452 = vset.pattern.permute.xlu0 0
  %453 = vperm.xlu0 %452, %v205
  %v454 = vpop.permute.xlu0 %453
  %457 = vset.pattern.permute.xlu0 0
  %458 = vperm.xlu0 %457, %v206
  %v459 = vpop.permute.xlu0 %458
  %462 = vset.pattern.permute.xlu0 0
  %463 = vperm.xlu0 %462, %v207
  %v464 = vpop.permute.xlu0 %463
  %467 = vset.pattern.permute.xlu0 0
  %468 = vperm.xlu0 %467, %v208
  %v469 = vpop.permute.xlu0 %468
  %472 = vset.pattern.permute.xlu0 0
  %473 = vperm.xlu0 %472, %v209
  %v474 = vpop.permute.xlu0 %473
  %477 = vset.pattern.permute.xlu0 0
  %478 = vperm.xlu0 %477, %v210
  %v479 = vpop.permute.xlu0 %478
  %482 = vset.pattern.permute.xlu0 0
  %483 = vperm.xlu0 %482, %v211
  %v484 = vpop.permute.xlu0 %483
  %487 = vset.pattern.permute.xlu0 0
  %488 = vperm.xlu0 %487, %v212
  %v489 = vpop.permute.xlu0 %488
  %492 = vset.pattern.permute.xlu0 0
  %493 = vperm.xlu0 %492, %v213
  %v494 = vpop.permute.xlu0 %493
  %497 = vset.pattern.permute.xlu0 0
  %498 = vperm.xlu0 %497, %v214
  %v499 = vpop.permute.xlu0 %498
  %502 = vset.pattern.permute.xlu0 0
  %503 = vperm.xlu0 %502, %v215
  %v504 = vpop.permute.xlu0 %503
  %507 = vset.pattern.permute.xlu0 0
  %508 = vperm.xlu0 %507, %v216
  %v509 = vpop.permute.xlu0 %508
  %512 = vset.pattern.permute.xlu0 0
  %513 = vperm.xlu0 %512, %v217
  %v514 = vpop.permute.xlu0 %513
  %517 = vset.pattern.permute.xlu0 0
  %518 = vperm.xlu0 %517, %v218
  %v519 = vpop.permute.xlu0 %518
  %522 = vset.pattern.permute.xlu0 0
  %523 = vperm.xlu0 %522, %v219
  %v524 = vpop.permute.xlu0 %523
  %527 = vset.pattern.permute.xlu0 0
  %528 = vperm.xlu0 %527, %v220
  %v529 = vpop.permute.xlu0 %528
  %532 = vset.pattern.permute.xlu0 0
  %533 = vperm.xlu0 %532, %v221
  %v534 = vpop.permute.xlu0 %533
  %537 = vset.pattern.permute.xlu0 0
  %538 = vperm.xlu0 %537, %v222
  %v539 = vpop.permute.xlu0 %538
  %542 = vset.pattern.permute.xlu0 0
  %543 = vperm.xlu0 %542, %v223
  %v544 = vpop.permute.xlu0 %543
  %547 = vset.pattern.permute.xlu0 0
  %548 = vperm.xlu0 %547, %v224
  %v549 = vpop.permute.xlu0 %548
  %552 = vset.pattern.permute.xlu0 0
  %553 = vperm.xlu0 %552, %v225
  %v554 = vpop.permute.xlu0 %553
  %557 = vset.pattern.permute.xlu0 0
  %558 = vperm.xlu0 %557, %v226
  %v559 = vpop.permute.xlu0 %558
  %562 = vset.pattern.permute.xlu0 0
  %563 = vperm.xlu0 %562, %v227
  %v564 = vpop.permute.xlu0 %563
  %567 = vset.pattern.permute.xlu0 0
  %568 = vperm.xlu0 %567, %v228
  %v569 = vpop.permute.xlu0 %568
  %572 = vset.pattern.permute.xlu0 0
  %573 = vperm.xlu0 %572, %v229
  %v574 = vpop.permute.xlu0 %573
  %577 = vset.pattern.permute.xlu0 0
  %578 = vperm.xlu0 %577, %v230
  %v579 = vpop.permute.xlu0 %578
  %582 = vset.pattern.permute.xlu0 0
  %583 = vperm.xlu0 %582, %v231
  %v584 = vpop.permute.xlu0 %583
  %587 = vset.pattern.permute.xlu0 0
  %588 = vperm.xlu0 %587, %v232
  %v589 = vpop.permute.xlu0 %588
  %592 = vset.pattern.permute.xlu0 0
  %593 = vperm.xlu0 %592, %v233
  %v594 = vpop.permute.xlu0 %593
  %597 = vset.pattern.permute.xlu0 0
  %598 = vperm.xlu0 %597, %v234
  %v599 = vpop.permute.xlu0 %598
  %602 = vset.pattern.permute.xlu0 0
  %603 = vperm.xlu0 %602, %v235
  %v604 = vpop.permute.xlu0 %603
  %607 = vset.pattern.permute.xlu0 0
  %608 = vperm.xlu0 %607, %v236
  %v609 = vpop.permute.xlu0 %608
  %612 = vset.pattern.permute.xlu0 0
  %613 = vperm.xlu0 %612, %v237
  %v614 = vpop.permute.xlu0 %613
  %617 = vset.pattern.permute.xlu0 0
  %618 = vperm.xlu0 %617, %v238
  %v619 = vpop.permute.xlu0 %618
  %622 = vset.pattern.permute.xlu0 0
  %623 = vperm.xlu0 %622, %v239
  %v624 = vpop.permute.xlu0 %623
  %627 = vset.pattern.permute.xlu0 0
  %628 = vperm.xlu0 %627, %v240
  %v629 = vpop.permute.xlu0 %628
  %632 = vset.pattern.permute.xlu0 0
  %633 = vperm.xlu0 %632, %v241
  %v634 = vpop.permute.xlu0 %633
  %637 = vset.pattern.permute.xlu0 0
  %638 = vperm.xlu0 %637, %v242
  %v639 = vpop.permute.xlu0 %638
  %642 = vset.pattern.permute.xlu0 0
  %643 = vperm.xlu0 %642, %v243
  %v644 = vpop.permute.xlu0 %643
  %v646 = vmul.f32 %v244, %v314
  %v647 = vmul.f32 %v245, %v319
  %v648 = vmul.f32 %v246, %v324
  %v649 = vmul.f32 %v247, %v329
  %v650 = vmul.f32 %v248, %v334
  %v651 = vmul.f32 %v249, %v339
  %v652 = vmul.f32 %v250, %v344
  %v653 = vmul.f32 %v251, %v349
  %v654 = vmul.f32 %v252, %v354
  %v655 = vmul.f32 %v253, %v359
  %v656 = vmul.f32 %v254, %v364
  %v657 = vmul.f32 %v255, %v369
  %v658 = vmul.f32 %v256, %v374
  %v659 = vmul.f32 %v257, %v379
  %v660 = vmul.f32 %v258, %v384
  %v661 = vmul.f32 %v259, %v389
  %v662 = vmul.f32 %v260, %v394
  %v663 = vmul.f32 %v261, %v399
  %v664 = vmul.f32 %v262, %v404
  %v665 = vmul.f32 %v263, %v409
  %v666 = vmul.f32 %v264, %v414
  %v667 = vmul.f32 %v265, %v419
  %v668 = vmul.f32 %v266, %v424
  %v669 = vmul.f32 %v267, %v429
  %v670 = vmul.f32 %v268, %v434
  %v671 = vmul.f32 %v269, %v439
  %v672 = vmul.f32 %v270, %v444
  %v673 = vmul.f32 %v271, %v449
  %v674 = vmul.f32 %v272, %v454
  %v675 = vmul.f32 %v273, %v459
  %v676 = vmul.f32 %v274, %v464
  %v677 = vmul.f32 %v275, %v469
  %v678 = vmul.f32 %v276, %v474
  %v679 = vmul.f32 %v277, %v479
  %v680 = vmul.f32 %v278, %v484
  %v681 = vmul.f32 %v279, %v489
  %v682 = vmul.f32 %v280, %v494
  %v683 = vmul.f32 %v281, %v499
  %v684 = vmul.f32 %v282, %v504
  %v685 = vmul.f32 %v283, %v509
  %v686 = vmul.f32 %v284, %v514
  %v687 = vmul.f32 %v285, %v519
  %v688 = vmul.f32 %v286, %v524
  %v689 = vmul.f32 %v287, %v529
  %v690 = vmul.f32 %v288, %v534
  %v691 = vmul.f32 %v289, %v539
  %v692 = vmul.f32 %v290, %v544
  %v693 = vmul.f32 %v291, %v549
  %v694 = vmul.f32 %v292, %v554
  %v695 = vmul.f32 %v293, %v559
  %v696 = vmul.f32 %v294, %v564
  %v697 = vmul.f32 %v295, %v569
  %v698 = vmul.f32 %v296, %v574
  %v699 = vmul.f32 %v297, %v579
  %v700 = vmul.f32 %v298, %v584
  %v701 = vmul.f32 %v299, %v589
  %v702 = vmul.f32 %v300, %v594
  %v703 = vmul.f32 %v301, %v599
  %v704 = vmul.f32 %v302, %v604
  %v705 = vmul.f32 %v303, %v609
  %v706 = vmul.f32 %v304, %v614
  %v707 = vmul.f32 %v305, %v619
  %v708 = vmul.f32 %v306, %v624
  %v709 = vmul.f32 %v307, %v629
  %v710 = vmul.f32 %v308, %v634
  %v711 = vmul.f32 %v309, %v639
  %v712 = vmul.f32 %v310, %v644
  %v713 = vpack.c.bf16 %v646, %v646
  %v714 = vpack.c.bf16 %v647, %v647
  %v715 = vpack.c.bf16 %v648, %v648
  %v716 = vpack.c.bf16 %v649, %v649
  %v717 = vpack.c.bf16 %v650, %v650
  %v718 = vpack.c.bf16 %v651, %v651
  %v719 = vpack.c.bf16 %v652, %v652
  %v720 = vpack.c.bf16 %v653, %v653
  %v721 = vpack.c.bf16 %v654, %v654
  %v722 = vpack.c.bf16 %v655, %v655
  %v723 = vpack.c.bf16 %v656, %v656
  %v724 = vpack.c.bf16 %v657, %v657
  %v725 = vpack.c.bf16 %v658, %v658
  %v726 = vpack.c.bf16 %v659, %v659
  %v727 = vpack.c.bf16 %v660, %v660
  %v728 = vpack.c.bf16 %v661, %v661
  %v729 = vpack.c.bf16 %v662, %v662
  %v730 = vpack.c.bf16 %v663, %v663
  %v731 = vpack.c.bf16 %v664, %v664
  %v732 = vpack.c.bf16 %v665, %v665
  %v733 = vpack.c.bf16 %v666, %v666
  %v734 = vpack.c.bf16 %v667, %v667
  %v735 = vpack.c.bf16 %v668, %v668
  %v736 = vpack.c.bf16 %v669, %v669
  %v737 = vpack.c.bf16 %v670, %v670
  %v738 = vpack.c.bf16 %v671, %v671
  %v739 = vpack.c.bf16 %v672, %v672
  %v740 = vpack.c.bf16 %v673, %v673
  %v741 = vpack.c.bf16 %v674, %v674
  %v742 = vpack.c.bf16 %v675, %v675
  %v743 = vpack.c.bf16 %v676, %v676
  %v744 = vpack.c.bf16 %v677, %v677
  %v745 = vpack.c.bf16 %v678, %v678
  %v746 = vpack.c.bf16 %v679, %v679
  %v747 = vpack.c.bf16 %v680, %v680
  %v748 = vpack.c.bf16 %v681, %v681
  %v749 = vpack.c.bf16 %v682, %v682
  %v750 = vpack.c.bf16 %v683, %v683
  %v751 = vpack.c.bf16 %v684, %v684
  %v752 = vpack.c.bf16 %v685, %v685
  %v753 = vpack.c.bf16 %v686, %v686
  %v754 = vpack.c.bf16 %v687, %v687
  %v755 = vpack.c.bf16 %v688, %v688
  %v756 = vpack.c.bf16 %v689, %v689
  %v757 = vpack.c.bf16 %v690, %v690
  %v758 = vpack.c.bf16 %v691, %v691
  %v759 = vpack.c.bf16 %v692, %v692
  %v760 = vpack.c.bf16 %v693, %v693
  %v761 = vpack.c.bf16 %v694, %v694
  %v762 = vpack.c.bf16 %v695, %v695
  %v763 = vpack.c.bf16 %v696, %v696
  %v764 = vpack.c.bf16 %v697, %v697
  %v765 = vpack.c.bf16 %v698, %v698
  %v766 = vpack.c.bf16 %v699, %v699
  %v767 = vpack.c.bf16 %v700, %v700
  %v768 = vpack.c.bf16 %v701, %v701
  %v769 = vpack.c.bf16 %v702, %v702
  %v770 = vpack.c.bf16 %v703, %v703
  %v771 = vpack.c.bf16 %v704, %v704
  %v772 = vpack.c.bf16 %v705, %v705
  %v773 = vpack.c.bf16 %v706, %v706
  %v774 = vpack.c.bf16 %v707, %v707
  %v775 = vpack.c.bf16 %v708, %v708
  %v776 = vpack.c.bf16 %v709, %v709
  %v777 = vpack.c.bf16 %v710, %v710
  %v778 = vpack.c.bf16 %v711, %v711
  %v779 = vpack.c.bf16 %v712, %v712
  %vm780 = vcmask 27648
  %781 = vst.msk [vmem:[#allocation4] sm:$0xf] %vm780, %v713
  %782 = vst.msk [vmem:[#allocation4 + $0x4] sm:$0xf] %vm780, %v714
  %783 = vst.msk [vmem:[#allocation4 + $0x8] sm:$0xf] %vm780, %v715
  %784 = vst.msk [vmem:[#allocation4 + $0xc] sm:$0xf] %vm780, %v716
  %785 = vst.msk [vmem:[#allocation4 + $0x10] sm:$0xf] %vm780, %v717
  %786 = vst.msk [vmem:[#allocation4 + $0x14] sm:$0xf] %vm780, %v718
  %787 = vst.msk [vmem:[#allocation4 + $0x18] sm:$0xf] %vm780, %v719
  %788 = vst.msk [vmem:[#allocation4 + $0x1c] sm:$0xf] %vm780, %v720
  %789 = vst.msk [vmem:[#allocation4 + $0x20] sm:$0xf] %vm780, %v721
  %790 = vst.msk [vmem:[#allocation4 + $0x24] sm:$0xf] %vm780, %v722
  %791 = vst.msk [vmem:[#allocation4 + $0x28] sm:$0xf] %vm780, %v723
  %792 = vst.msk [vmem:[#allocation4 + $0x2c] sm:$0xf] %vm780, %v724
  %793 = vst.msk [vmem:[#allocation4 + $0x30] sm:$0xf] %vm780, %v725
  %794 = vst.msk [vmem:[#allocation4 + $0x34] sm:$0xf] %vm780, %v726
  %795 = vst.msk [vmem:[#allocation4 + $0x38] sm:$0xf] %vm780, %v727
  %796 = vst.msk [vmem:[#allocation4 + $0x3c] sm:$0xf] %vm780, %v728
  %797 = vst.msk [vmem:[#allocation4 + $0x40] sm:$0xf] %vm780, %v729
  %798 = vst.msk [vmem:[#allocation4 + $0x44] sm:$0xf] %vm780, %v730
  %799 = vst.msk [vmem:[#allocation4 + $0x48] sm:$0xf] %vm780, %v731
  %800 = vst.msk [vmem:[#allocation4 + $0x4c] sm:$0xf] %vm780, %v732
  %801 = vst.msk [vmem:[#allocation4 + $0x50] sm:$0xf] %vm780, %v733
  %802 = vst.msk [vmem:[#allocation4 + $0x54] sm:$0xf] %vm780, %v734
  %803 = vst.msk [vmem:[#allocation4 + $0x58] sm:$0xf] %vm780, %v735
  %804 = vst.msk [vmem:[#allocation4 + $0x5c] sm:$0xf] %vm780, %v736
  %805 = vst.msk [vmem:[#allocation4 + $0x60] sm:$0xf] %vm780, %v737
  %806 = vst.msk [vmem:[#allocation4 + $0x64] sm:$0xf] %vm780, %v738
  %807 = vst.msk [vmem:[#allocation4 + $0x68] sm:$0xf] %vm780, %v739
  %808 = vst.msk [vmem:[#allocation4 + $0x6c] sm:$0xf] %vm780, %v740
  %809 = vst.msk [vmem:[#allocation4 + $0x70] sm:$0xf] %vm780, %v741
  %810 = vst.msk [vmem:[#allocation4 + $0x74] sm:$0xf] %vm780, %v742
  %811 = vst.msk [vmem:[#allocation4 + $0x78] sm:$0xf] %vm780, %v743
  %812 = vst.msk [vmem:[#allocation4 + $0x7c] sm:$0xf] %vm780, %v744
  %813 = vst.msk [vmem:[#allocation4 + $0x80] sm:$0xf] %vm780, %v745
  %814 = vst.msk [vmem:[#allocation4 + $0x84] sm:$0xf] %vm780, %v746
  %815 = vst.msk [vmem:[#allocation4 + $0x88] sm:$0xf] %vm780, %v747
  %816 = vst.msk [vmem:[#allocation4 + $0x8c] sm:$0xf] %vm780, %v748
  %817 = vst.msk [vmem:[#allocation4 + $0x90] sm:$0xf] %vm780, %v749
  %818 = vst.msk [vmem:[#allocation4 + $0x94] sm:$0xf] %vm780, %v750
  %819 = vst.msk [vmem:[#allocation4 + $0x98] sm:$0xf] %vm780, %v751
  %820 = vst.msk [vmem:[#allocation4 + $0x9c] sm:$0xf] %vm780, %v752
  %821 = vst.msk [vmem:[#allocation4 + $0xa0] sm:$0xf] %vm780, %v753
  %822 = vst.msk [vmem:[#allocation4 + $0xa4] sm:$0xf] %vm780, %v754
  %823 = vst.msk [vmem:[#allocation4 + $0xa8] sm:$0xf] %vm780, %v755
  %824 = vst.msk [vmem:[#allocation4 + $0xac] sm:$0xf] %vm780, %v756
  %825 = vst.msk [vmem:[#allocation4 + $0xb0] sm:$0xf] %vm780, %v757
  %826 = vst.msk [vmem:[#allocation4 + $0xb4] sm:$0xf] %vm780, %v758
  %827 = vst.msk [vmem:[#allocation4 + $0xb8] sm:$0xf] %vm780, %v759
  %828 = vst.msk [vmem:[#allocation4 + $0xbc] sm:$0xf] %vm780, %v760
  %829 = vst.msk [vmem:[#allocation4 + $0xc0] sm:$0xf] %vm780, %v761
  %830 = vst.msk [vmem:[#allocation4 + $0xc4] sm:$0xf] %vm780, %v762
  %831 = vst.msk [vmem:[#allocation4 + $0xc8] sm:$0xf] %vm780, %v763
  %832 = vst.msk [vmem:[#allocation4 + $0xcc] sm:$0xf] %vm780, %v764
  %833 = vst.msk [vmem:[#allocation4 + $0xd0] sm:$0xf] %vm780, %v765
  %834 = vst.msk [vmem:[#allocation4 + $0xd4] sm:$0xf] %vm780, %v766
  %835 = vst.msk [vmem:[#allocation4 + $0xd8] sm:$0xf] %vm780, %v767
  %836 = vst.msk [vmem:[#allocation4 + $0xdc] sm:$0xf] %vm780, %v768
  %837 = vst.msk [vmem:[#allocation4 + $0xe0] sm:$0xf] %vm780, %v769
  %838 = vst.msk [vmem:[#allocation4 + $0xe4] sm:$0xf] %vm780, %v770
  %839 = vst.msk [vmem:[#allocation4 + $0xe8] sm:$0xf] %vm780, %v771
  %840 = vst.msk [vmem:[#allocation4 + $0xec] sm:$0xf] %vm780, %v772
  %841 = vst.msk [vmem:[#allocation4 + $0xf0] sm:$0xf] %vm780, %v773
  %842 = vst.msk [vmem:[#allocation4 + $0xf4] sm:$0xf] %vm780, %v774
  %843 = vst.msk [vmem:[#allocation4 + $0xf8] sm:$0xf] %vm780, %v775
  %844 = vst.msk [vmem:[#allocation4 + $0xfc] sm:$0xf] %vm780, %v776
  %845 = vst.msk [vmem:[#allocation4 + $0x100] sm:$0xf] %vm780, %v777
  %846 = vst.msk [vmem:[#allocation4 + $0x104] sm:$0xf] %vm780, %v778
  %847 = vst.msk [vmem:[#allocation4 + $0x108] sm:$0xf] %vm780, %v779
  %v848 = vld [vmem:[#allocation2 + $0x8] sm:$0xff]
  %v849 = vld [vmem:[#allocation2 + $0x10] sm:$0xff]
  %v850 = vld [vmem:[#allocation2 + $0x18] sm:$0xff]
  %v851 = vld [vmem:[#allocation2 + $0x20] sm:$0xff]
  %v852 = vld [vmem:[#allocation2 + $0x28] sm:$0xff]
  %v853 = vld [vmem:[#allocation2 + $0x30] sm:$0xff]
  %v854 = vld [vmem:[#allocation2 + $0x38] sm:$0xff]
  %v855 = vld [vmem:[#allocation2 + $0x40] sm:$0xff]
  %v856 = vld [vmem:[#allocation2 + $0x48] sm:$0xff]
  %v857 = vld [vmem:[#allocation2 + $0x50] sm:$0xff]
  %v858 = vld [vmem:[#allocation2 + $0x58] sm:$0xff]
  %v859 = vld [vmem:[#allocation2 + $0x60] sm:$0xff]
  %v860 = vld [vmem:[#allocation2 + $0x68] sm:$0xff]
  %v861 = vld [vmem:[#allocation2 + $0x70] sm:$0xff]
  %v862 = vld [vmem:[#allocation2 + $0x78] sm:$0xff]
  %v863 = vld [vmem:[#allocation2 + $0x80] sm:$0xff]
  %v864 = vld [vmem:[#allocation2 + $0x88] sm:$0xff]
  %v865 = vld [vmem:[#allocation2 + $0x90] sm:$0xff]
  %v866 = vld [vmem:[#allocation2 + $0x98] sm:$0xff]
  %v867 = vld [vmem:[#allocation2 + $0xa0] sm:$0xff]
  %v868 = vld [vmem:[#allocation2 + $0xa8] sm:$0xff]
  %v869 = vld [vmem:[#allocation2 + $0xb0] sm:$0xff]
  %v870 = vld [vmem:[#allocation2 + $0xb8] sm:$0xff]
  %v871 = vld [vmem:[#allocation2 + $0xc0] sm:$0xff]
  %v872 = vld [vmem:[#allocation2 + $0xc8] sm:$0xff]
  %v873 = vld [vmem:[#allocation2 + $0xd0] sm:$0xff]
  %v874 = vld [vmem:[#allocation2 + $0xd8] sm:$0xff]
  %v875 = vld [vmem:[#allocation2 + $0xe0] sm:$0xff]
  %v876 = vld [vmem:[#allocation2 + $0xe8] sm:$0xff]
  %v877 = vld [vmem:[#allocation2 + $0xf0] sm:$0xff]
  %v878 = vld [vmem:[#allocation2 + $0xf8] sm:$0xff]
  %v879 = vld [vmem:[#allocation2 + $0x100] sm:$0xff]
  %v880 = vld [vmem:[#allocation2 + $0x108] sm:$0xff]
  %v881 = vld [vmem:[#allocation2 + $0x110] sm:$0xff]
  %v882 = vld [vmem:[#allocation2 + $0x118] sm:$0xff]
  %v883 = vld [vmem:[#allocation2 + $0x120] sm:$0xff]
  %v884 = vld [vmem:[#allocation2 + $0x128] sm:$0xff]
  %v885 = vld [vmem:[#allocation2 + $0x130] sm:$0xff]
  %v886 = vld [vmem:[#allocation2 + $0x138] sm:$0xff]
  %v887 = vld [vmem:[#allocation2 + $0x140] sm:$0xff]
  %v888 = vld [vmem:[#allocation2 + $0x148] sm:$0xff]
  %v889 = vld [vmem:[#allocation2 + $0x150] sm:$0xff]
  %v890 = vld [vmem:[#allocation2 + $0x158] sm:$0xff]
  %v891 = vld [vmem:[#allocation2 + $0x160] sm:$0xff]
  %v892 = vld [vmem:[#allocation2 + $0x168] sm:$0xff]
  %v893 = vld [vmem:[#allocation2 + $0x170] sm:$0xff]
  %v894 = vld [vmem:[#allocation2 + $0x178] sm:$0xff]
  %v895 = vld [vmem:[#allocation2 + $0x180] sm:$0xff]
  %v896 = vld [vmem:[#allocation2 + $0x188] sm:$0xff]
  %v897 = vld [vmem:[#allocation2 + $0x190] sm:$0xff]
  %v898 = vld [vmem:[#allocation2 + $0x198] sm:$0xff]
  %v899 = vld [vmem:[#allocation2 + $0x1a0] sm:$0xff]
  %v900 = vld [vmem:[#allocation2 + $0x1a8] sm:$0xff]
  %v901 = vld [vmem:[#allocation2 + $0x1b0] sm:$0xff]
  %v902 = vld [vmem:[#allocation2 + $0x1b8] sm:$0xff]
  %v903 = vld [vmem:[#allocation2 + $0x1c0] sm:$0xff]
  %v904 = vld [vmem:[#allocation2 + $0x1c8] sm:$0xff]
  %v905 = vld [vmem:[#allocation2 + $0x1d0] sm:$0xff]
  %v906 = vld [vmem:[#allocation2 + $0x1d8] sm:$0xff]
  %v907 = vld [vmem:[#allocation2 + $0x1e0] sm:$0xff]
  %v908 = vld [vmem:[#allocation2 + $0x1e8] sm:$0xff]
  %v909 = vld [vmem:[#allocation2 + $0x1f0] sm:$0xff]
  %v910 = vld [vmem:[#allocation2 + $0x1f8] sm:$0xff]
  %v911 = vld [vmem:[#allocation2 + $0x200] sm:$0xff]
  %v912 = vld [vmem:[#allocation2 + $0x208] sm:$0xff]
  %v913 = vld [vmem:[#allocation2 + $0x210] sm:$0xff]
  %v914 = vld [vmem:[#allocation2 + $0x218] sm:$0xff]
  %v915 = vpack.c.bf16 %v848, %v848
  %v916 = vpack.c.bf16 %v849, %v849
  %v917 = vpack.c.bf16 %v850, %v850
  %v918 = vpack.c.bf16 %v851, %v851
  %v919 = vpack.c.bf16 %v852, %v852
  %v920 = vpack.c.bf16 %v853, %v853
  %v921 = vpack.c.bf16 %v854, %v854
  %v922 = vpack.c.bf16 %v855, %v855
  %v923 = vpack.c.bf16 %v856, %v856
  %v924 = vpack.c.bf16 %v857, %v857
  %v925 = vpack.c.bf16 %v858, %v858
  %v926 = vpack.c.bf16 %v859, %v859
  %v927 = vpack.c.bf16 %v860, %v860
  %v928 = vpack.c.bf16 %v861, %v861
  %v929 = vpack.c.bf16 %v862, %v862
  %v930 = vpack.c.bf16 %v863, %v863
  %v931 = vpack.c.bf16 %v864, %v864
  %v932 = vpack.c.bf16 %v865, %v865
  %v933 = vpack.c.bf16 %v866, %v866
  %v934 = vpack.c.bf16 %v867, %v867
  %v935 = vpack.c.bf16 %v868, %v868
  %v936 = vpack.c.bf16 %v869, %v869
  %v937 = vpack.c.bf16 %v870, %v870
  %v938 = vpack.c.bf16 %v871, %v871
  %v939 = vpack.c.bf16 %v872, %v872
  %v940 = vpack.c.bf16 %v873, %v873
  %v941 = vpack.c.bf16 %v874, %v874
  %v942 = vpack.c.bf16 %v875, %v875
  %v943 = vpack.c.bf16 %v876, %v876
  %v944 = vpack.c.bf16 %v877, %v877
  %v945 = vpack.c.bf16 %v878, %v878
  %v946 = vpack.c.bf16 %v879, %v879
  %v947 = vpack.c.bf16 %v880, %v880
  %v948 = vpack.c.bf16 %v881, %v881
  %v949 = vpack.c.bf16 %v882, %v882
  %v950 = vpack.c.bf16 %v883, %v883
  %v951 = vpack.c.bf16 %v884, %v884
  %v952 = vpack.c.bf16 %v885, %v885
  %v953 = vpack.c.bf16 %v886, %v886
  %v954 = vpack.c.bf16 %v887, %v887
  %v955 = vpack.c.bf16 %v888, %v888
  %v956 = vpack.c.bf16 %v889, %v889
  %v957 = vpack.c.bf16 %v890, %v890
  %v958 = vpack.c.bf16 %v891, %v891
  %v959 = vpack.c.bf16 %v892, %v892
  %v960 = vpack.c.bf16 %v893, %v893
  %v961 = vpack.c.bf16 %v894, %v894
  %v962 = vpack.c.bf16 %v895, %v895
  %v963 = vpack.c.bf16 %v896, %v896
  %v964 = vpack.c.bf16 %v897, %v897
  %v965 = vpack.c.bf16 %v898, %v898
  %v966 = vpack.c.bf16 %v899, %v899
  %v967 = vpack.c.bf16 %v900, %v900
  %v968 = vpack.c.bf16 %v901, %v901
  %v969 = vpack.c.bf16 %v902, %v902
  %v970 = vpack.c.bf16 %v903, %v903
  %v971 = vpack.c.bf16 %v904, %v904
  %v972 = vpack.c.bf16 %v905, %v905
  %v973 = vpack.c.bf16 %v906, %v906
  %v974 = vpack.c.bf16 %v907, %v907
  %v975 = vpack.c.bf16 %v908, %v908
  %v976 = vpack.c.bf16 %v909, %v909
  %v977 = vpack.c.bf16 %v910, %v910
  %v978 = vpack.c.bf16 %v911, %v911
  %v979 = vpack.c.bf16 %v912, %v912
  %v980 = vpack.c.bf16 %v913, %v913
  %v981 = vpack.c.bf16 %v914, %v914
  %1049 = vrot.lane.b32.xlu0 %v915, 4
  %v1050 = vpop.permute.xlu0 %1049
  %1051 = vrot.lane.b32.xlu0 %v916, 4
  %v1052 = vpop.permute.xlu0 %1051
  %1053 = vrot.lane.b32.xlu0 %v917, 4
  %v1054 = vpop.permute.xlu0 %1053
  %1055 = vrot.lane.b32.xlu0 %v918, 4
  %v1056 = vpop.permute.xlu0 %1055
  %1057 = vrot.lane.b32.xlu0 %v919, 4
  %v1058 = vpop.permute.xlu0 %1057
  %1059 = vrot.lane.b32.xlu0 %v920, 4
  %v1060 = vpop.permute.xlu0 %1059
  %1061 = vrot.lane.b32.xlu0 %v921, 4
  %v1062 = vpop.permute.xlu0 %1061
  %1063 = vrot.lane.b32.xlu0 %v922, 4
  %v1064 = vpop.permute.xlu0 %1063
  %1065 = vrot.lane.b32.xlu0 %v923, 4
  %v1066 = vpop.permute.xlu0 %1065
  %1067 = vrot.lane.b32.xlu0 %v924, 4
  %v1068 = vpop.permute.xlu0 %1067
  %1069 = vrot.lane.b32.xlu0 %v925, 4
  %v1070 = vpop.permute.xlu0 %1069
  %1071 = vrot.lane.b32.xlu0 %v926, 4
  %v1072 = vpop.permute.xlu0 %1071
  %1073 = vrot.lane.b32.xlu0 %v927, 4
  %v1074 = vpop.permute.xlu0 %1073
  %1075 = vrot.lane.b32.xlu0 %v928, 4
  %v1076 = vpop.permute.xlu0 %1075
  %1077 = vrot.lane.b32.xlu0 %v929, 4
  %v1078 = vpop.permute.xlu0 %1077
  %1079 = vrot.lane.b32.xlu0 %v930, 4
  %v1080 = vpop.permute.xlu0 %1079
  %1081 = vrot.lane.b32.xlu0 %v931, 4
  %v1082 = vpop.permute.xlu0 %1081
  %1083 = vrot.lane.b32.xlu0 %v932, 4
  %v1084 = vpop.permute.xlu0 %1083
  %1085 = vrot.lane.b32.xlu0 %v933, 4
  %v1086 = vpop.permute.xlu0 %1085
  %1087 = vrot.lane.b32.xlu0 %v934, 4
  %v1088 = vpop.permute.xlu0 %1087
  %1089 = vrot.lane.b32.xlu0 %v935, 4
  %v1090 = vpop.permute.xlu0 %1089
  %1091 = vrot.lane.b32.xlu0 %v936, 4
  %v1092 = vpop.permute.xlu0 %1091
  %1093 = vrot.lane.b32.xlu0 %v937, 4
  %v1094 = vpop.permute.xlu0 %1093
  %1095 = vrot.lane.b32.xlu0 %v938, 4
  %v1096 = vpop.permute.xlu0 %1095
  %1097 = vrot.lane.b32.xlu0 %v939, 4
  %v1098 = vpop.permute.xlu0 %1097
  %1099 = vrot.lane.b32.xlu0 %v940, 4
  %v1100 = vpop.permute.xlu0 %1099
  %1101 = vrot.lane.b32.xlu0 %v941, 4
  %v1102 = vpop.permute.xlu0 %1101
  %1103 = vrot.lane.b32.xlu0 %v942, 4
  %v1104 = vpop.permute.xlu0 %1103
  %1105 = vrot.lane.b32.xlu0 %v943, 4
  %v1106 = vpop.permute.xlu0 %1105
  %1107 = vrot.lane.b32.xlu0 %v944, 4
  %v1108 = vpop.permute.xlu0 %1107
  %1109 = vrot.lane.b32.xlu0 %v945, 4
  %v1110 = vpop.permute.xlu0 %1109
  %1111 = vrot.lane.b32.xlu0 %v946, 4
  %v1112 = vpop.permute.xlu0 %1111
  %1113 = vrot.lane.b32.xlu0 %v947, 4
  %v1114 = vpop.permute.xlu0 %1113
  %1115 = vrot.lane.b32.xlu0 %v948, 4
  %v1116 = vpop.permute.xlu0 %1115
  %1117 = vrot.lane.b32.xlu0 %v949, 4
  %v1118 = vpop.permute.xlu0 %1117
  %1119 = vrot.lane.b32.xlu0 %v950, 4
  %v1120 = vpop.permute.xlu0 %1119
  %1121 = vrot.lane.b32.xlu0 %v951, 4
  %v1122 = vpop.permute.xlu0 %1121
  %1123 = vrot.lane.b32.xlu0 %v952, 4
  %v1124 = vpop.permute.xlu0 %1123
  %1125 = vrot.lane.b32.xlu0 %v953, 4
  %v1126 = vpop.permute.xlu0 %1125
  %1127 = vrot.lane.b32.xlu0 %v954, 4
  %v1128 = vpop.permute.xlu0 %1127
  %1129 = vrot.lane.b32.xlu0 %v955, 4
  %v1130 = vpop.permute.xlu0 %1129
  %1131 = vrot.lane.b32.xlu0 %v956, 4
  %v1132 = vpop.permute.xlu0 %1131
  %1133 = vrot.lane.b32.xlu0 %v957, 4
  %v1134 = vpop.permute.xlu0 %1133
  %1135 = vrot.lane.b32.xlu0 %v958, 4
  %v1136 = vpop.permute.xlu0 %1135
  %1137 = vrot.lane.b32.xlu0 %v959, 4
  %v1138 = vpop.permute.xlu0 %1137
  %1139 = vrot.lane.b32.xlu0 %v960, 4
  %v1140 = vpop.permute.xlu0 %1139
  %1141 = vrot.lane.b32.xlu0 %v961, 4
  %v1142 = vpop.permute.xlu0 %1141
  %1143 = vrot.lane.b32.xlu0 %v962, 4
  %v1144 = vpop.permute.xlu0 %1143
  %1145 = vrot.lane.b32.xlu0 %v963, 4
  %v1146 = vpop.permute.xlu0 %1145
  %1147 = vrot.lane.b32.xlu0 %v964, 4
  %v1148 = vpop.permute.xlu0 %1147
  %1149 = vrot.lane.b32.xlu0 %v965, 4
  %v1150 = vpop.permute.xlu0 %1149
  %1151 = vrot.lane.b32.xlu0 %v966, 4
  %v1152 = vpop.permute.xlu0 %1151
  %1153 = vrot.lane.b32.xlu0 %v967, 4
  %v1154 = vpop.permute.xlu0 %1153
  %1155 = vrot.lane.b32.xlu0 %v968, 4
  %v1156 = vpop.permute.xlu0 %1155
  %1157 = vrot.lane.b32.xlu0 %v969, 4
  %v1158 = vpop.permute.xlu0 %1157
  %1159 = vrot.lane.b32.xlu0 %v970, 4
  %v1160 = vpop.permute.xlu0 %1159
  %1161 = vrot.lane.b32.xlu0 %v971, 4
  %v1162 = vpop.permute.xlu0 %1161
  %1163 = vrot.lane.b32.xlu0 %v972, 4
  %v1164 = vpop.permute.xlu0 %1163
  %1165 = vrot.lane.b32.xlu0 %v973, 4
  %v1166 = vpop.permute.xlu0 %1165
  %1167 = vrot.lane.b32.xlu0 %v974, 4
  %v1168 = vpop.permute.xlu0 %1167
  %1169 = vrot.lane.b32.xlu0 %v975, 4
  %v1170 = vpop.permute.xlu0 %1169
  %1171 = vrot.lane.b32.xlu0 %v976, 4
  %v1172 = vpop.permute.xlu0 %1171
  %1173 = vrot.lane.b32.xlu0 %v977, 4
  %v1174 = vpop.permute.xlu0 %1173
  %1175 = vrot.lane.b32.xlu0 %v978, 4
  %v1176 = vpop.permute.xlu0 %1175
  %1177 = vrot.lane.b32.xlu0 %v979, 4
  %v1178 = vpop.permute.xlu0 %1177
  %1179 = vrot.lane.b32.xlu0 %v980, 4
  %v1180 = vpop.permute.xlu0 %1179
  %1181 = vrot.lane.b32.xlu0 %v981, 4
  %v1182 = vpop.permute.xlu0 %1181
  %vm1250 = vcmask 60448
  %1251 = vst.msk [vmem:[#allocation4] sm:$0xf] %vm1250, %v1050
  %1252 = vst.msk [vmem:[#allocation4 + $0x4] sm:$0xf] %vm1250, %v1052
  %1253 = vst.msk [vmem:[#allocation4 + $0x8] sm:$0xf] %vm1250, %v1054
  %1254 = vst.msk [vmem:[#allocation4 + $0xc] sm:$0xf] %vm1250, %v1056
  %1255 = vst.msk [vmem:[#allocation4 + $0x10] sm:$0xf] %vm1250, %v1058
  %1256 = vst.msk [vmem:[#allocation4 + $0x14] sm:$0xf] %vm1250, %v1060
  %1257 = vst.msk [vmem:[#allocation4 + $0x18] sm:$0xf] %vm1250, %v1062
  %1258 = vst.msk [vmem:[#allocation4 + $0x1c] sm:$0xf] %vm1250, %v1064
  %1259 = vst.msk [vmem:[#allocation4 + $0x20] sm:$0xf] %vm1250, %v1066
  %1260 = vst.msk [vmem:[#allocation4 + $0x24] sm:$0xf] %vm1250, %v1068
  %1261 = vst.msk [vmem:[#allocation4 + $0x28] sm:$0xf] %vm1250, %v1070
  %1262 = vst.msk [vmem:[#allocation4 + $0x2c] sm:$0xf] %vm1250, %v1072
  %1263 = vst.msk [vmem:[#allocation4 + $0x30] sm:$0xf] %vm1250, %v1074
  %1264 = vst.msk [vmem:[#allocation4 + $0x34] sm:$0xf] %vm1250, %v1076
  %1265 = vst.msk [vmem:[#allocation4 + $0x38] sm:$0xf] %vm1250, %v1078
  %1266 = vst.msk [vmem:[#allocation4 + $0x3c] sm:$0xf] %vm1250, %v1080
  %1267 = vst.msk [vmem:[#allocation4 + $0x40] sm:$0xf] %vm1250, %v1082
  %1268 = vst.msk [vmem:[#allocation4 + $0x44] sm:$0xf] %vm1250, %v1084
  %1269 = vst.msk [vmem:[#allocation4 + $0x48] sm:$0xf] %vm1250, %v1086
  %1270 = vst.msk [vmem:[#allocation4 + $0x4c] sm:$0xf] %vm1250, %v1088
  %1271 = vst.msk [vmem:[#allocation4 + $0x50] sm:$0xf] %vm1250, %v1090
  %1272 = vst.msk [vmem:[#allocation4 + $0x54] sm:$0xf] %vm1250, %v1092
  %1273 = vst.msk [vmem:[#allocation4 + $0x58] sm:$0xf] %vm1250, %v1094
  %1274 = vst.msk [vmem:[#allocation4 + $0x5c] sm:$0xf] %vm1250, %v1096
  %1275 = vst.msk [vmem:[#allocation4 + $0x60] sm:$0xf] %vm1250, %v1098
  %1276 = vst.msk [vmem:[#allocation4 + $0x64] sm:$0xf] %vm1250, %v1100
  %1277 = vst.msk [vmem:[#allocation4 + $0x68] sm:$0xf] %vm1250, %v1102
  %1278 = vst.msk [vmem:[#allocation4 + $0x6c] sm:$0xf] %vm1250, %v1104
  %1279 = vst.msk [vmem:[#allocation4 + $0x70] sm:$0xf] %vm1250, %v1106
  %1280 = vst.msk [vmem:[#allocation4 + $0x74] sm:$0xf] %vm1250, %v1108
  %1281 = vst.msk [vmem:[#allocation4 + $0x78] sm:$0xf] %vm1250, %v1110
  %1282 = vst.msk [vmem:[#allocation4 + $0x7c] sm:$0xf] %vm1250, %v1112
  %1283 = vst.msk [vmem:[#allocation4 + $0x80] sm:$0xf] %vm1250, %v1114
  %1284 = vst.msk [vmem:[#allocation4 + $0x84] sm:$0xf] %vm1250, %v1116
  %1285 = vst.msk [vmem:[#allocation4 + $0x88] sm:$0xf] %vm1250, %v1118
  %1286 = vst.msk [vmem:[#allocation4 + $0x8c] sm:$0xf] %vm1250, %v1120
  %1287 = vst.msk [vmem:[#allocation4 + $0x90] sm:$0xf] %vm1250, %v1122
  %1288 = vst.msk [vmem:[#allocation4 + $0x94] sm:$0xf] %vm1250, %v1124
  %1289 = vst.msk [vmem:[#allocation4 + $0x98] sm:$0xf] %vm1250, %v1126
  %1290 = vst.msk [vmem:[#allocation4 + $0x9c] sm:$0xf] %vm1250, %v1128
  %1291 = vst.msk [vmem:[#allocation4 + $0xa0] sm:$0xf] %vm1250, %v1130
  %1292 = vst.msk [vmem:[#allocation4 + $0xa4] sm:$0xf] %vm1250, %v1132
  %1293 = vst.msk [vmem:[#allocation4 + $0xa8] sm:$0xf] %vm1250, %v1134
  %1294 = vst.msk [vmem:[#allocation4 + $0xac] sm:$0xf] %vm1250, %v1136
  %1295 = vst.msk [vmem:[#allocation4 + $0xb0] sm:$0xf] %vm1250, %v1138
  %1296 = vst.msk [vmem:[#allocation4 + $0xb4] sm:$0xf] %vm1250, %v1140
  %1297 = vst.msk [vmem:[#allocation4 + $0xb8] sm:$0xf] %vm1250, %v1142
  %1298 = vst.msk [vmem:[#allocation4 + $0xbc] sm:$0xf] %vm1250, %v1144
  %1299 = vst.msk [vmem:[#allocation4 + $0xc0] sm:$0xf] %vm1250, %v1146
  %1300 = vst.msk [vmem:[#allocation4 + $0xc4] sm:$0xf] %vm1250, %v1148
  %1301 = vst.msk [vmem:[#allocation4 + $0xc8] sm:$0xf] %vm1250, %v1150
  %1302 = vst.msk [vmem:[#allocation4 + $0xcc] sm:$0xf] %vm1250, %v1152
  %1303 = vst.msk [vmem:[#allocation4 + $0xd0] sm:$0xf] %vm1250, %v1154
  %1304 = vst.msk [vmem:[#allocation4 + $0xd4] sm:$0xf] %vm1250, %v1156
  %1305 = vst.msk [vmem:[#allocation4 + $0xd8] sm:$0xf] %vm1250, %v1158
  %1306 = vst.msk [vmem:[#allocation4 + $0xdc] sm:$0xf] %vm1250, %v1160
  %1307 = vst.msk [vmem:[#allocation4 + $0xe0] sm:$0xf] %vm1250, %v1162
  %1308 = vst.msk [vmem:[#allocation4 + $0xe4] sm:$0xf] %vm1250, %v1164
  %1309 = vst.msk [vmem:[#allocation4 + $0xe8] sm:$0xf] %vm1250, %v1166
  %1310 = vst.msk [vmem:[#allocation4 + $0xec] sm:$0xf] %vm1250, %v1168
  %1311 = vst.msk [vmem:[#allocation4 + $0xf0] sm:$0xf] %vm1250, %v1170
  %1312 = vst.msk [vmem:[#allocation4 + $0xf4] sm:$0xf] %vm1250, %v1172
  %1313 = vst.msk [vmem:[#allocation4 + $0xf8] sm:$0xf] %vm1250, %v1174
  %1314 = vst.msk [vmem:[#allocation4 + $0xfc] sm:$0xf] %vm1250, %v1176
  %1315 = vst.msk [vmem:[#allocation4 + $0x100] sm:$0xf] %vm1250, %v1178
  %1316 = vst.msk [vmem:[#allocation4 + $0x104] sm:$0xf] %vm1250, %v1180
  %1317 = vst.msk [vmem:[#allocation4 + $0x108] sm:$0xf] %vm1250, %v1182
  %v1318 = vld [vmem:[#allocation2 + $0x9] sm:$0xff]
  %v1319 = vld [vmem:[#allocation2 + $0x11] sm:$0xff]
  %v1320 = vld [vmem:[#allocation2 + $0x19] sm:$0xff]
  %v1321 = vld [vmem:[#allocation2 + $0x21] sm:$0xff]
  %v1322 = vld [vmem:[#allocation2 + $0x29] sm:$0xff]
  %v1323 = vld [vmem:[#allocation2 + $0x31] sm:$0xff]
  %v1324 = vld [vmem:[#allocation2 + $0x39] sm:$0xff]
  %v1325 = vld [vmem:[#allocation2 + $0x41] sm:$0xff]
  %v1326 = vld [vmem:[#allocation2 + $0x49] sm:$0xff]
  %v1327 = vld [vmem:[#allocation2 + $0x51] sm:$0xff]
  %v1328 = vld [vmem:[#allocation2 + $0x59] sm:$0xff]
  %v1329 = vld [vmem:[#allocation2 + $0x61] sm:$0xff]
  %v1330 = vld [vmem:[#allocation2 + $0x69] sm:$0xff]
  %v1331 = vld [vmem:[#allocation2 + $0x71] sm:$0xff]
  %v1332 = vld [vmem:[#allocation2 + $0x79] sm:$0xff]
  %v1333 = vld [vmem:[#allocation2 + $0x81] sm:$0xff]
  %v1334 = vld [vmem:[#allocation2 + $0x89] sm:$0xff]
  %v1335 = vld [vmem:[#allocation2 + $0x91] sm:$0xff]
  %v1336 = vld [vmem:[#allocation2 + $0x99] sm:$0xff]
  %v1337 = vld [vmem:[#allocation2 + $0xa1] sm:$0xff]
  %v1338 = vld [vmem:[#allocation2 + $0xa9] sm:$0xff]
  %v1339 = vld [vmem:[#allocation2 + $0xb1] sm:$0xff]
  %v1340 = vld [vmem:[#allocation2 + $0xb9] sm:$0xff]
  %v1341 = vld [vmem:[#allocation2 + $0xc1] sm:$0xff]
  %v1342 = vld [vmem:[#allocation2 + $0xc9] sm:$0xff]
  %v1343 = vld [vmem:[#allocation2 + $0xd1] sm:$0xff]
  %v1344 = vld [vmem:[#allocation2 + $0xd9] sm:$0xff]
  %v1345 = vld [vmem:[#allocation2 + $0xe1] sm:$0xff]
  %v1346 = vld [vmem:[#allocation2 + $0xe9] sm:$0xff]
  %v1347 = vld [vmem:[#allocation2 + $0xf1] sm:$0xff]
  %v1348 = vld [vmem:[#allocation2 + $0xf9] sm:$0xff]
  %v1349 = vld [vmem:[#allocation2 + $0x101] sm:$0xff]
  %v1350 = vld [vmem:[#allocation2 + $0x109] sm:$0xff]
  %v1351 = vld [vmem:[#allocation2 + $0x111] sm:$0xff]
  %v1352 = vld [vmem:[#allocation2 + $0x119] sm:$0xff]
  %v1353 = vld [vmem:[#allocation2 + $0x121] sm:$0xff]
  %v1354 = vld [vmem:[#allocation2 + $0x129] sm:$0xff]
  %v1355 = vld [vmem:[#allocation2 + $0x131] sm:$0xff]
  %v1356 = vld [vmem:[#allocation2 + $0x139] sm:$0xff]
  %v1357 = vld [vmem:[#allocation2 + $0x141] sm:$0xff]
  %v1358 = vld [vmem:[#allocation2 + $0x149] sm:$0xff]
  %v1359 = vld [vmem:[#allocation2 + $0x151] sm:$0xff]
  %v1360 = vld [vmem:[#allocation2 + $0x159] sm:$0xff]
  %v1361 = vld [vmem:[#allocation2 + $0x161] sm:$0xff]
  %v1362 = vld [vmem:[#allocation2 + $0x169] sm:$0xff]
  %v1363 = vld [vmem:[#allocation2 + $0x171] sm:$0xff]
  %v1364 = vld [vmem:[#allocation2 + $0x179] sm:$0xff]
  %v1365 = vld [vmem:[#allocation2 + $0x181] sm:$0xff]
  %v1366 = vld [vmem:[#allocation2 + $0x189] sm:$0xff]
  %v1367 = vld [vmem:[#allocation2 + $0x191] sm:$0xff]
  %v1368 = vld [vmem:[#allocation2 + $0x199] sm:$0xff]
  %v1369 = vld [vmem:[#allocation2 + $0x1a1] sm:$0xff]
  %v1370 = vld [vmem:[#allocation2 + $0x1a9] sm:$0xff]
  %v1371 = vld [vmem:[#allocation2 + $0x1b1] sm:$0xff]
  %v1372 = vld [vmem:[#allocation2 + $0x1b9] sm:$0xff]
  %v1373 = vld [vmem:[#allocation2 + $0x1c1] sm:$0xff]
  %v1374 = vld [vmem:[#allocation2 + $0x1c9] sm:$0xff]
  %v1375 = vld [vmem:[#allocation2 + $0x1d1] sm:$0xff]
  %v1376 = vld [vmem:[#allocation2 + $0x1d9] sm:$0xff]
  %v1377 = vld [vmem:[#allocation2 + $0x1e1] sm:$0xff]
  %v1378 = vld [vmem:[#allocation2 + $0x1e9] sm:$0xff]
  %v1379 = vld [vmem:[#allocation2 + $0x1f1] sm:$0xff]
  %v1380 = vld [vmem:[#allocation2 + $0x1f9] sm:$0xff]
  %v1381 = vld [vmem:[#allocation2 + $0x201] sm:$0xff]
  %v1382 = vld [vmem:[#allocation2 + $0x209] sm:$0xff]
  %v1383 = vld [vmem:[#allocation2 + $0x211] sm:$0xff]
  %v1384 = vld [vmem:[#allocation2 + $0x219] sm:$0xff]
  %1385 = vset.pattern.permute.xlu0 1
  %1386 = vperm.xlu0 %1385, %v177
  %v1387 = vpop.permute.xlu0 %1386
  %1389 = vset.pattern.permute.xlu0 1
  %1390 = vperm.xlu0 %1389, %v178
  %v1391 = vpop.permute.xlu0 %1390
  %1393 = vset.pattern.permute.xlu0 1
  %1394 = vperm.xlu0 %1393, %v179
  %v1395 = vpop.permute.xlu0 %1394
  %1397 = vset.pattern.permute.xlu0 1
  %1398 = vperm.xlu0 %1397, %v180
  %v1399 = vpop.permute.xlu0 %1398
  %1401 = vset.pattern.permute.xlu0 1
  %1402 = vperm.xlu0 %1401, %v181
  %v1403 = vpop.permute.xlu0 %1402
  %1405 = vset.pattern.permute.xlu0 1
  %1406 = vperm.xlu0 %1405, %v182
  %v1407 = vpop.permute.xlu0 %1406
  %1409 = vset.pattern.permute.xlu0 1
  %1410 = vperm.xlu0 %1409, %v183
  %v1411 = vpop.permute.xlu0 %1410
  %1413 = vset.pattern.permute.xlu0 1
  %1414 = vperm.xlu0 %1413, %v184
  %v1415 = vpop.permute.xlu0 %1414
  %1417 = vset.pattern.permute.xlu0 1
  %1418 = vperm.xlu0 %1417, %v185
  %v1419 = vpop.permute.xlu0 %1418
  %1421 = vset.pattern.permute.xlu0 1
  %1422 = vperm.xlu0 %1421, %v186
  %v1423 = vpop.permute.xlu0 %1422
  %1425 = vset.pattern.permute.xlu0 1
  %1426 = vperm.xlu0 %1425, %v187
  %v1427 = vpop.permute.xlu0 %1426
  %1429 = vset.pattern.permute.xlu0 1
  %1430 = vperm.xlu0 %1429, %v188
  %v1431 = vpop.permute.xlu0 %1430
  %1433 = vset.pattern.permute.xlu0 1
  %1434 = vperm.xlu0 %1433, %v189
  %v1435 = vpop.permute.xlu0 %1434
  %1437 = vset.pattern.permute.xlu0 1
  %1438 = vperm.xlu0 %1437, %v190
  %v1439 = vpop.permute.xlu0 %1438
  %1441 = vset.pattern.permute.xlu0 1
  %1442 = vperm.xlu0 %1441, %v191
  %v1443 = vpop.permute.xlu0 %1442
  %1445 = vset.pattern.permute.xlu0 1
  %1446 = vperm.xlu0 %1445, %v192
  %v1447 = vpop.permute.xlu0 %1446
  %1449 = vset.pattern.permute.xlu0 1
  %1450 = vperm.xlu0 %1449, %v193
  %v1451 = vpop.permute.xlu0 %1450
  %1453 = vset.pattern.permute.xlu0 1
  %1454 = vperm.xlu0 %1453, %v194
  %v1455 = vpop.permute.xlu0 %1454
  %1457 = vset.pattern.permute.xlu0 1
  %1458 = vperm.xlu0 %1457, %v195
  %v1459 = vpop.permute.xlu0 %1458
  %1461 = vset.pattern.permute.xlu0 1
  %1462 = vperm.xlu0 %1461, %v196
  %v1463 = vpop.permute.xlu0 %1462
  %1465 = vset.pattern.permute.xlu0 1
  %1466 = vperm.xlu0 %1465, %v197
  %v1467 = vpop.permute.xlu0 %1466
  %1469 = vset.pattern.permute.xlu0 1
  %1470 = vperm.xlu0 %1469, %v198
  %v1471 = vpop.permute.xlu0 %1470
  %1473 = vset.pattern.permute.xlu0 1
  %1474 = vperm.xlu0 %1473, %v199
  %v1475 = vpop.permute.xlu0 %1474
  %1477 = vset.pattern.permute.xlu0 1
  %1478 = vperm.xlu0 %1477, %v200
  %v1479 = vpop.permute.xlu0 %1478
  %1481 = vset.pattern.permute.xlu0 1
  %1482 = vperm.xlu0 %1481, %v201
  %v1483 = vpop.permute.xlu0 %1482
  %1485 = vset.pattern.permute.xlu0 1
  %1486 = vperm.xlu0 %1485, %v202
  %v1487 = vpop.permute.xlu0 %1486
  %1489 = vset.pattern.permute.xlu0 1
  %1490 = vperm.xlu0 %1489, %v203
  %v1491 = vpop.permute.xlu0 %1490
  %1493 = vset.pattern.permute.xlu0 1
  %1494 = vperm.xlu0 %1493, %v204
  %v1495 = vpop.permute.xlu0 %1494
  %1497 = vset.pattern.permute.xlu0 1
  %1498 = vperm.xlu0 %1497, %v205
  %v1499 = vpop.permute.xlu0 %1498
  %1501 = vset.pattern.permute.xlu0 1
  %1502 = vperm.xlu0 %1501, %v206
  %v1503 = vpop.permute.xlu0 %1502
  %1505 = vset.pattern.permute.xlu0 1
  %1506 = vperm.xlu0 %1505, %v207
  %v1507 = vpop.permute.xlu0 %1506
  %1509 = vset.pattern.permute.xlu0 1
  %1510 = vperm.xlu0 %1509, %v208
  %v1511 = vpop.permute.xlu0 %1510
  %1513 = vset.pattern.permute.xlu0 1
  %1514 = vperm.xlu0 %1513, %v209
  %v1515 = vpop.permute.xlu0 %1514
  %1517 = vset.pattern.permute.xlu0 1
  %1518 = vperm.xlu0 %1517, %v210
  %v1519 = vpop.permute.xlu0 %1518
  %1521 = vset.pattern.permute.xlu0 1
  %1522 = vperm.xlu0 %1521, %v211
  %v1523 = vpop.permute.xlu0 %1522
  %1525 = vset.pattern.permute.xlu0 1
  %1526 = vperm.xlu0 %1525, %v212
  %v1527 = vpop.permute.xlu0 %1526
  %1529 = vset.pattern.permute.xlu0 1
  %1530 = vperm.xlu0 %1529, %v213
  %v1531 = vpop.permute.xlu0 %1530
  %1533 = vset.pattern.permute.xlu0 1
  %1534 = vperm.xlu0 %1533, %v214
  %v1535 = vpop.permute.xlu0 %1534
  %1537 = vset.pattern.permute.xlu0 1
  %1538 = vperm.xlu0 %1537, %v215
  %v1539 = vpop.permute.xlu0 %1538
  %1541 = vset.pattern.permute.xlu0 1
  %1542 = vperm.xlu0 %1541, %v216
  %v1543 = vpop.permute.xlu0 %1542
  %1545 = vset.pattern.permute.xlu0 1
  %1546 = vperm.xlu0 %1545, %v217
  %v1547 = vpop.permute.xlu0 %1546
  %1549 = vset.pattern.permute.xlu0 1
  %1550 = vperm.xlu0 %1549, %v218
  %v1551 = vpop.permute.xlu0 %1550
  %1553 = vset.pattern.permute.xlu0 1
  %1554 = vperm.xlu0 %1553, %v219
  %v1555 = vpop.permute.xlu0 %1554
  %1557 = vset.pattern.permute.xlu0 1
  %1558 = vperm.xlu0 %1557, %v220
  %v1559 = vpop.permute.xlu0 %1558
  %1561 = vset.pattern.permute.xlu0 1
  %1562 = vperm.xlu0 %1561, %v221
  %v1563 = vpop.permute.xlu0 %1562
  %1565 = vset.pattern.permute.xlu0 1
  %1566 = vperm.xlu0 %1565, %v222
  %v1567 = vpop.permute.xlu0 %1566
  %1569 = vset.pattern.permute.xlu0 1
  %1570 = vperm.xlu0 %1569, %v223
  %v1571 = vpop.permute.xlu0 %1570
  %1573 = vset.pattern.permute.xlu0 1
  %1574 = vperm.xlu0 %1573, %v224
  %v1575 = vpop.permute.xlu0 %1574
  %1577 = vset.pattern.permute.xlu0 1
  %1578 = vperm.xlu0 %1577, %v225
  %v1579 = vpop.permute.xlu0 %1578
  %1581 = vset.pattern.permute.xlu0 1
  %1582 = vperm.xlu0 %1581, %v226
  %v1583 = vpop.permute.xlu0 %1582
  %1585 = vset.pattern.permute.xlu0 1
  %1586 = vperm.xlu0 %1585, %v227
  %v1587 = vpop.permute.xlu0 %1586
  %1589 = vset.pattern.permute.xlu0 1
  %1590 = vperm.xlu0 %1589, %v228
  %v1591 = vpop.permute.xlu0 %1590
  %1593 = vset.pattern.permute.xlu0 1
  %1594 = vperm.xlu0 %1593, %v229
  %v1595 = vpop.permute.xlu0 %1594
  %1597 = vset.pattern.permute.xlu0 1
  %1598 = vperm.xlu0 %1597, %v230
  %v1599 = vpop.permute.xlu0 %1598
  %1601 = vset.pattern.permute.xlu0 1
  %1602 = vperm.xlu0 %1601, %v231
  %v1603 = vpop.permute.xlu0 %1602
  %1605 = vset.pattern.permute.xlu0 1
  %1606 = vperm.xlu0 %1605, %v232
  %v1607 = vpop.permute.xlu0 %1606
  %1609 = vset.pattern.permute.xlu0 1
  %1610 = vperm.xlu0 %1609, %v233
  %v1611 = vpop.permute.xlu0 %1610
  %1613 = vset.pattern.permute.xlu0 1
  %1614 = vperm.xlu0 %1613, %v234
  %v1615 = vpop.permute.xlu0 %1614
  %1617 = vset.pattern.permute.xlu0 1
  %1618 = vperm.xlu0 %1617, %v235
  %v1619 = vpop.permute.xlu0 %1618
  %1621 = vset.pattern.permute.xlu0 1
  %1622 = vperm.xlu0 %1621, %v236
  %v1623 = vpop.permute.xlu0 %1622
  %1625 = vset.pattern.permute.xlu0 1
  %1626 = vperm.xlu0 %1625, %v237
  %v1627 = vpop.permute.xlu0 %1626
  %1629 = vset.pattern.permute.xlu0 1
  %1630 = vperm.xlu0 %1629, %v238
  %v1631 = vpop.permute.xlu0 %1630
  %1633 = vset.pattern.permute.xlu0 1
  %1634 = vperm.xlu0 %1633, %v239
  %v1635 = vpop.permute.xlu0 %1634
  %1637 = vset.pattern.permute.xlu0 1
  %1638 = vperm.xlu0 %1637, %v240
  %v1639 = vpop.permute.xlu0 %1638
  %1641 = vset.pattern.permute.xlu0 1
  %1642 = vperm.xlu0 %1641, %v241
  %v1643 = vpop.permute.xlu0 %1642
  %1645 = vset.pattern.permute.xlu0 1
  %1646 = vperm.xlu0 %1645, %v242
  %v1647 = vpop.permute.xlu0 %1646
  %1649 = vset.pattern.permute.xlu0 1
  %1650 = vperm.xlu0 %1649, %v243
  %v1651 = vpop.permute.xlu0 %1650
  %v1653 = vmul.f32 %v1318, %v1387
  %v1654 = vmul.f32 %v1319, %v1391
  %v1655 = vmul.f32 %v1320, %v1395
  %v1656 = vmul.f32 %v1321, %v1399
  %v1657 = vmul.f32 %v1322, %v1403
  %v1658 = vmul.f32 %v1323, %v1407
  %v1659 = vmul.f32 %v1324, %v1411
  %v1660 = vmul.f32 %v1325, %v1415
  %v1661 = vmul.f32 %v1326, %v1419
  %v1662 = vmul.f32 %v1327, %v1423
  %v1663 = vmul.f32 %v1328, %v1427
  %v1664 = vmul.f32 %v1329, %v1431
  %v1665 = vmul.f32 %v1330, %v1435
  %v1666 = vmul.f32 %v1331, %v1439
  %v1667 = vmul.f32 %v1332, %v1443
  %v1668 = vmul.f32 %v1333, %v1447
  %v1669 = vmul.f32 %v1334, %v1451
  %v1670 = vmul.f32 %v1335, %v1455
  %v1671 = vmul.f32 %v1336, %v1459
  %v1672 = vmul.f32 %v1337, %v1463
  %v1673 = vmul.f32 %v1338, %v1467
  %v1674 = vmul.f32 %v1339, %v1471
  %v1675 = vmul.f32 %v1340, %v1475
  %v1676 = vmul.f32 %v1341, %v1479
  %v1677 = vmul.f32 %v1342, %v1483
  %v1678 = vmul.f32 %v1343, %v1487
  %v1679 = vmul.f32 %v1344, %v1491
  %v1680 = vmul.f32 %v1345, %v1495
  %v1681 = vmul.f32 %v1346, %v1499
  %v1682 = vmul.f32 %v1347, %v1503
  %v1683 = vmul.f32 %v1348, %v1507
  %v1684 = vmul.f32 %v1349, %v1511
  %v1685 = vmul.f32 %v1350, %v1515
  %v1686 = vmul.f32 %v1351, %v1519
  %v1687 = vmul.f32 %v1352, %v1523
  %v1688 = vmul.f32 %v1353, %v1527
  %v1689 = vmul.f32 %v1354, %v1531
  %v1690 = vmul.f32 %v1355, %v1535
  %v1691 = vmul.f32 %v1356, %v1539
  %v1692 = vmul.f32 %v1357, %v1543
  %v1693 = vmul.f32 %v1358, %v1547
  %v1694 = vmul.f32 %v1359, %v1551
  %v1695 = vmul.f32 %v1360, %v1555
  %v1696 = vmul.f32 %v1361, %v1559
  %v1697 = vmul.f32 %v1362, %v1563
  %v1698 = vmul.f32 %v1363, %v1567
  %v1699 = vmul.f32 %v1364, %v1571
  %v1700 = vmul.f32 %v1365, %v1575
  %v1701 = vmul.f32 %v1366, %v1579
  %v1702 = vmul.f32 %v1367, %v1583
  %v1703 = vmul.f32 %v1368, %v1587
  %v1704 = vmul.f32 %v1369, %v1591
  %v1705 = vmul.f32 %v1370, %v1595
  %v1706 = vmul.f32 %v1371, %v1599
  %v1707 = vmul.f32 %v1372, %v1603
  %v1708 = vmul.f32 %v1373, %v1607
  %v1709 = vmul.f32 %v1374, %v1611
  %v1710 = vmul.f32 %v1375, %v1615
  %v1711 = vmul.f32 %v1376, %v1619
  %v1712 = vmul.f32 %v1377, %v1623
  %v1713 = vmul.f32 %v1378, %v1627
  %v1714 = vmul.f32 %v1379, %v1631
  %v1715 = vmul.f32 %v1380, %v1635
  %v1716 = vmul.f32 %v1381, %v1639
  %v1717 = vmul.f32 %v1382, %v1643
  %v1718 = vmul.f32 %v1383, %v1647
  %v1719 = vmul.f32 %v1384, %v1651
  %v1720 = vpack.c.bf16 %v1653, %v1653
  %v1721 = vpack.c.bf16 %v1654, %v1654
  %v1722 = vpack.c.bf16 %v1655, %v1655
  %v1723 = vpack.c.bf16 %v1656, %v1656
  %v1724 = vpack.c.bf16 %v1657, %v1657
  %v1725 = vpack.c.bf16 %v1658, %v1658
  %v1726 = vpack.c.bf16 %v1659, %v1659
  %v1727 = vpack.c.bf16 %v1660, %v1660
  %v1728 = vpack.c.bf16 %v1661, %v1661
  %v1729 = vpack.c.bf16 %v1662, %v1662
  %v1730 = vpack.c.bf16 %v1663, %v1663
  %v1731 = vpack.c.bf16 %v1664, %v1664
  %v1732 = vpack.c.bf16 %v1665, %v1665
  %v1733 = vpack.c.bf16 %v1666, %v1666
  %v1734 = vpack.c.bf16 %v1667, %v1667
  %v1735 = vpack.c.bf16 %v1668, %v1668
  %v1736 = vpack.c.bf16 %v1669, %v1669
  %v1737 = vpack.c.bf16 %v1670, %v1670
  %v1738 = vpack.c.bf16 %v1671, %v1671
  %v1739 = vpack.c.bf16 %v1672, %v1672
  %v1740 = vpack.c.bf16 %v1673, %v1673
  %v1741 = vpack.c.bf16 %v1674, %v1674
  %v1742 = vpack.c.bf16 %v1675, %v1675
  %v1743 = vpack.c.bf16 %v1676, %v1676
  %v1744 = vpack.c.bf16 %v1677, %v1677
  %v1745 = vpack.c.bf16 %v1678, %v1678
  %v1746 = vpack.c.bf16 %v1679, %v1679
  %v1747 = vpack.c.bf16 %v1680, %v1680
  %v1748 = vpack.c.bf16 %v1681, %v1681
  %v1749 = vpack.c.bf16 %v1682, %v1682
  %v1750 = vpack.c.bf16 %v1683, %v1683
  %v1751 = vpack.c.bf16 %v1684, %v1684
  %v1752 = vpack.c.bf16 %v1685, %v1685
  %v1753 = vpack.c.bf16 %v1686, %v1686
  %v1754 = vpack.c.bf16 %v1687, %v1687
  %v1755 = vpack.c.bf16 %v1688, %v1688
  %v1756 = vpack.c.bf16 %v1689, %v1689
  %v1757 = vpack.c.bf16 %v1690, %v1690
  %v1758 = vpack.c.bf16 %v1691, %v1691
  %v1759 = vpack.c.bf16 %v1692, %v1692
  %v1760 = vpack.c.bf16 %v1693, %v1693
  %v1761 = vpack.c.bf16 %v1694, %v1694
  %v1762 = vpack.c.bf16 %v1695, %v1695
  %v1763 = vpack.c.bf16 %v1696, %v1696
  %v1764 = vpack.c.bf16 %v1697, %v1697
  %v1765 = vpack.c.bf16 %v1698, %v1698
  %v1766 = vpack.c.bf16 %v1699, %v1699
  %v1767 = vpack.c.bf16 %v1700, %v1700
  %v1768 = vpack.c.bf16 %v1701, %v1701
  %v1769 = vpack.c.bf16 %v1702, %v1702
  %v1770 = vpack.c.bf16 %v1703, %v1703
  %v1771 = vpack.c.bf16 %v1704, %v1704
  %v1772 = vpack.c.bf16 %v1705, %v1705
  %v1773 = vpack.c.bf16 %v1706, %v1706
  %v1774 = vpack.c.bf16 %v1707, %v1707
  %v1775 = vpack.c.bf16 %v1708, %v1708
  %v1776 = vpack.c.bf16 %v1709, %v1709
  %v1777 = vpack.c.bf16 %v1710, %v1710
  %v1778 = vpack.c.bf16 %v1711, %v1711
  %v1779 = vpack.c.bf16 %v1712, %v1712
  %v1780 = vpack.c.bf16 %v1713, %v1713
  %v1781 = vpack.c.bf16 %v1714, %v1714
  %v1782 = vpack.c.bf16 %v1715, %v1715
  %v1783 = vpack.c.bf16 %v1716, %v1716
  %v1784 = vpack.c.bf16 %v1717, %v1717
  %v1785 = vpack.c.bf16 %v1718, %v1718
  %v1786 = vpack.c.bf16 %v1719, %v1719
  %1854 = vrot.lane.b32.xlu0 %v1720, 8
  %v1855 = vpop.permute.xlu0 %1854
  %1856 = vrot.lane.b32.xlu0 %v1721, 8
  %v1857 = vpop.permute.xlu0 %1856
  %1858 = vrot.lane.b32.xlu0 %v1722, 8
  %v1859 = vpop.permute.xlu0 %1858
  %1860 = vrot.lane.b32.xlu0 %v1723, 8
  %v1861 = vpop.permute.xlu0 %1860
  %1862 = vrot.lane.b32.xlu0 %v1724, 8
  %v1863 = vpop.permute.xlu0 %1862
  %1864 = vrot.lane.b32.xlu0 %v1725, 8
  %v1865 = vpop.permute.xlu0 %1864
  %1866 = vrot.lane.b32.xlu0 %v1726, 8
  %v1867 = vpop.permute.xlu0 %1866
  %1868 = vrot.lane.b32.xlu0 %v1727, 8
  %v1869 = vpop.permute.xlu0 %1868
  %1870 = vrot.lane.b32.xlu0 %v1728, 8
  %v1871 = vpop.permute.xlu0 %1870
  %1872 = vrot.lane.b32.xlu0 %v1729, 8
  %v1873 = vpop.permute.xlu0 %1872
  %1874 = vrot.lane.b32.xlu0 %v1730, 8
  %v1875 = vpop.permute.xlu0 %1874
  %1876 = vrot.lane.b32.xlu0 %v1731, 8
  %v1877 = vpop.permute.xlu0 %1876
  %1878 = vrot.lane.b32.xlu0 %v1732, 8
  %v1879 = vpop.permute.xlu0 %1878
  %1880 = vrot.lane.b32.xlu0 %v1733, 8
  %v1881 = vpop.permute.xlu0 %1880
  %1882 = vrot.lane.b32.xlu0 %v1734, 8
  %v1883 = vpop.permute.xlu0 %1882
  %1884 = vrot.lane.b32.xlu0 %v1735, 8
  %v1885 = vpop.permute.xlu0 %1884
  %1886 = vrot.lane.b32.xlu0 %v1736, 8
  %v1887 = vpop.permute.xlu0 %1886
  %1888 = vrot.lane.b32.xlu0 %v1737, 8
  %v1889 = vpop.permute.xlu0 %1888
  %1890 = vrot.lane.b32.xlu0 %v1738, 8
  %v1891 = vpop.permute.xlu0 %1890
  %1892 = vrot.lane.b32.xlu0 %v1739, 8
  %v1893 = vpop.permute.xlu0 %1892
  %1894 = vrot.lane.b32.xlu0 %v1740, 8
  %v1895 = vpop.permute.xlu0 %1894
  %1896 = vrot.lane.b32.xlu0 %v1741, 8
  %v1897 = vpop.permute.xlu0 %1896
  %1898 = vrot.lane.b32.xlu0 %v1742, 8
  %v1899 = vpop.permute.xlu0 %1898
  %1900 = vrot.lane.b32.xlu0 %v1743, 8
  %v1901 = vpop.permute.xlu0 %1900
  %1902 = vrot.lane.b32.xlu0 %v1744, 8
  %v1903 = vpop.permute.xlu0 %1902
  %1904 = vrot.lane.b32.xlu0 %v1745, 8
  %v1905 = vpop.permute.xlu0 %1904
  %1906 = vrot.lane.b32.xlu0 %v1746, 8
  %v1907 = vpop.permute.xlu0 %1906
  %1908 = vrot.lane.b32.xlu0 %v1747, 8
  %v1909 = vpop.permute.xlu0 %1908
  %1910 = vrot.lane.b32.xlu0 %v1748, 8
  %v1911 = vpop.permute.xlu0 %1910
  %1912 = vrot.lane.b32.xlu0 %v1749, 8
  %v1913 = vpop.permute.xlu0 %1912
  %1914 = vrot.lane.b32.xlu0 %v1750, 8
  %v1915 = vpop.permute.xlu0 %1914
  %1916 = vrot.lane.b32.xlu0 %v1751, 8
  %v1917 = vpop.permute.xlu0 %1916
  %1918 = vrot.lane.b32.xlu0 %v1752, 8
  %v1919 = vpop.permute.xlu0 %1918
  %1920 = vrot.lane.b32.xlu0 %v1753, 8
  %v1921 = vpop.permute.xlu0 %1920
  %1922 = vrot.lane.b32.xlu0 %v1754, 8
  %v1923 = vpop.permute.xlu0 %1922
  %1924 = vrot.lane.b32.xlu0 %v1755, 8
  %v1925 = vpop.permute.xlu0 %1924
  %1926 = vrot.lane.b32.xlu0 %v1756, 8
  %v1927 = vpop.permute.xlu0 %1926
  %1928 = vrot.lane.b32.xlu0 %v1757, 8
  %v1929 = vpop.permute.xlu0 %1928
  %1930 = vrot.lane.b32.xlu0 %v1758, 8
  %v1931 = vpop.permute.xlu0 %1930
  %1932 = vrot.lane.b32.xlu0 %v1759, 8
  %v1933 = vpop.permute.xlu0 %1932
  %1934 = vrot.lane.b32.xlu0 %v1760, 8
  %v1935 = vpop.permute.xlu0 %1934
  %1936 = vrot.lane.b32.xlu0 %v1761, 8
  %v1937 = vpop.permute.xlu0 %1936
  %1938 = vrot.lane.b32.xlu0 %v1762, 8
  %v1939 = vpop.permute.xlu0 %1938
  %1940 = vrot.lane.b32.xlu0 %v1763, 8
  %v1941 = vpop.permute.xlu0 %1940
  %1942 = vrot.lane.b32.xlu0 %v1764, 8
  %v1943 = vpop.permute.xlu0 %1942
  %1944 = vrot.lane.b32.xlu0 %v1765, 8
  %v1945 = vpop.permute.xlu0 %1944
  %1946 = vrot.lane.b32.xlu0 %v1766, 8
  %v1947 = vpop.permute.xlu0 %1946
  %1948 = vrot.lane.b32.xlu0 %v1767, 8
  %v1949 = vpop.permute.xlu0 %1948
  %1950 = vrot.lane.b32.xlu0 %v1768, 8
  %v1951 = vpop.permute.xlu0 %1950
  %1952 = vrot.lane.b32.xlu0 %v1769, 8
  %v1953 = vpop.permute.xlu0 %1952
  %1954 = vrot.lane.b32.xlu0 %v1770, 8
  %v1955 = vpop.permute.xlu0 %1954
  %1956 = vrot.lane.b32.xlu0 %v1771, 8
  %v1957 = vpop.permute.xlu0 %1956
  %1958 = vrot.lane.b32.xlu0 %v1772, 8
  %v1959 = vpop.permute.xlu0 %1958
  %1960 = vrot.lane.b32.xlu0 %v1773, 8
  %v1961 = vpop.permute.xlu0 %1960
  %1962 = vrot.lane.b32.xlu0 %v1774, 8
  %v1963 = vpop.permute.xlu0 %1962
  %1964 = vrot.lane.b32.xlu0 %v1775, 8
  %v1965 = vpop.permute.xlu0 %1964
  %1966 = vrot.lane.b32.xlu0 %v1776, 8
  %v1967 = vpop.permute.xlu0 %1966
  %1968 = vrot.lane.b32.xlu0 %v1777, 8
  %v1969 = vpop.permute.xlu0 %1968
  %1970 = vrot.lane.b32.xlu0 %v1778, 8
  %v1971 = vpop.permute.xlu0 %1970
  %1972 = vrot.lane.b32.xlu0 %v1779, 8
  %v1973 = vpop.permute.xlu0 %1972
  %1974 = vrot.lane.b32.xlu0 %v1780, 8
  %v1975 = vpop.permute.xlu0 %1974
  %1976 = vrot.lane.b32.xlu0 %v1781, 8
  %v1977 = vpop.permute.xlu0 %1976
  %1978 = vrot.lane.b32.xlu0 %v1782, 8
  %v1979 = vpop.permute.xlu0 %1978
  %1980 = vrot.lane.b32.xlu0 %v1783, 8
  %v1981 = vpop.permute.xlu0 %1980
  %1982 = vrot.lane.b32.xlu0 %v1784, 8
  %v1983 = vpop.permute.xlu0 %1982
  %1984 = vrot.lane.b32.xlu0 %v1785, 8
  %v1985 = vpop.permute.xlu0 %1984
  %1986 = vrot.lane.b32.xlu0 %v1786, 8
  %v1987 = vpop.permute.xlu0 %1986
  %vm2055 = vcmask 93248
  %2056 = vst.msk [vmem:[#allocation4] sm:$0xf] %vm2055, %v1855
  %2057 = vst.msk [vmem:[#allocation4 + $0x4] sm:$0xf] %vm2055, %v1857
  %2058 = vst.msk [vmem:[#allocation4 + $0x8] sm:$0xf] %vm2055, %v1859
  %2059 = vst.msk [vmem:[#allocation4 + $0xc] sm:$0xf] %vm2055, %v1861
  %2060 = vst.msk [vmem:[#allocation4 + $0x10] sm:$0xf] %vm2055, %v1863
  %2061 = vst.msk [vmem:[#allocation4 + $0x14] sm:$0xf] %vm2055, %v1865
  %2062 = vst.msk [vmem:[#allocation4 + $0x18] sm:$0xf] %vm2055, %v1867
  %2063 = vst.msk [vmem:[#allocation4 + $0x1c] sm:$0xf] %vm2055, %v1869
  %2064 = vst.msk [vmem:[#allocation4 + $0x20] sm:$0xf] %vm2055, %v1871
  %2065 = vst.msk [vmem:[#allocation4 + $0x24] sm:$0xf] %vm2055, %v1873
  %2066 = vst.msk [vmem:[#allocation4 + $0x28] sm:$0xf] %vm2055, %v1875
  %2067 = vst.msk [vmem:[#allocation4 + $0x2c] sm:$0xf] %vm2055, %v1877
  %2068 = vst.msk [vmem:[#allocation4 + $0x30] sm:$0xf] %vm2055, %v1879
  %2069 = vst.msk [vmem:[#allocation4 + $0x34] sm:$0xf] %vm2055, %v1881
  %2070 = vst.msk [vmem:[#allocation4 + $0x38] sm:$0xf] %vm2055, %v1883
  %2071 = vst.msk [vmem:[#allocation4 + $0x3c] sm:$0xf] %vm2055, %v1885
  %2072 = vst.msk [vmem:[#allocation4 + $0x40] sm:$0xf] %vm2055, %v1887
  %2073 = vst.msk [vmem:[#allocation4 + $0x44] sm:$0xf] %vm2055, %v1889
  %2074 = vst.msk [vmem:[#allocation4 + $0x48] sm:$0xf] %vm2055, %v1891
  %2075 = vst.msk [vmem:[#allocation4 + $0x4c] sm:$0xf] %vm2055, %v1893
  %2076 = vst.msk [vmem:[#allocation4 + $0x50] sm:$0xf] %vm2055, %v1895
  %2077 = vst.msk [vmem:[#allocation4 + $0x54] sm:$0xf] %vm2055, %v1897
  %2078 = vst.msk [vmem:[#allocation4 + $0x58] sm:$0xf] %vm2055, %v1899
  %2079 = vst.msk [vmem:[#allocation4 + $0x5c] sm:$0xf] %vm2055, %v1901
  %2080 = vst.msk [vmem:[#allocation4 + $0x60] sm:$0xf] %vm2055, %v1903
  %2081 = vst.msk [vmem:[#allocation4 + $0x64] sm:$0xf] %vm2055, %v1905
  %2082 = vst.msk [vmem:[#allocation4 + $0x68] sm:$0xf] %vm2055, %v1907
  %2083 = vst.msk [vmem:[#allocation4 + $0x6c] sm:$0xf] %vm2055, %v1909
  %2084 = vst.msk [vmem:[#allocation4 + $0x70] sm:$0xf] %vm2055, %v1911
  %2085 = vst.msk [vmem:[#allocation4 + $0x74] sm:$0xf] %vm2055, %v1913
  %2086 = vst.msk [vmem:[#allocation4 + $0x78] sm:$0xf] %vm2055, %v1915
  %2087 = vst.msk [vmem:[#allocation4 + $0x7c] sm:$0xf] %vm2055, %v1917
  %2088 = vst.msk [vmem:[#allocation4 + $0x80] sm:$0xf] %vm2055, %v1919
  %2089 = vst.msk [vmem:[#allocation4 + $0x84] sm:$0xf] %vm2055, %v1921
  %2090 = vst.msk [vmem:[#allocation4 + $0x88] sm:$0xf] %vm2055, %v1923
  %2091 = vst.msk [vmem:[#allocation4 + $0x8c] sm:$0xf] %vm2055, %v1925
  %2092 = vst.msk [vmem:[#allocation4 + $0x90] sm:$0xf] %vm2055, %v1927
  %2093 = vst.msk [vmem:[#allocation4 + $0x94] sm:$0xf] %vm2055, %v1929
  %2094 = vst.msk [vmem:[#allocation4 + $0x98] sm:$0xf] %vm2055, %v1931
  %2095 = vst.msk [vmem:[#allocation4 + $0x9c] sm:$0xf] %vm2055, %v1933
  %2096 = vst.msk [vmem:[#allocation4 + $0xa0] sm:$0xf] %vm2055, %v1935
  %2097 = vst.msk [vmem:[#allocation4 + $0xa4] sm:$0xf] %vm2055, %v1937
  %2098 = vst.msk [vmem:[#allocation4 + $0xa8] sm:$0xf] %vm2055, %v1939
  %2099 = vst.msk [vmem:[#allocation4 + $0xac] sm:$0xf] %vm2055, %v1941
  %2100 = vst.msk [vmem:[#allocation4 + $0xb0] sm:$0xf] %vm2055, %v1943
  %2101 = vst.msk [vmem:[#allocation4 + $0xb4] sm:$0xf] %vm2055, %v1945
  %2102 = vst.msk [vmem:[#allocation4 + $0xb8] sm:$0xf] %vm2055, %v1947
  %2103 = vst.msk [vmem:[#allocation4 + $0xbc] sm:$0xf] %vm2055, %v1949
  %2104 = vst.msk [vmem:[#allocation4 + $0xc0] sm:$0xf] %vm2055, %v1951
  %2105 = vst.msk [vmem:[#allocation4 + $0xc4] sm:$0xf] %vm2055, %v1953
  %2106 = vst.msk [vmem:[#allocation4 + $0xc8] sm:$0xf] %vm2055, %v1955
  %2107 = vst.msk [vmem:[#allocation4 + $0xcc] sm:$0xf] %vm2055, %v1957
  %2108 = vst.msk [vmem:[#allocation4 + $0xd0] sm:$0xf] %vm2055, %v1959
  %2109 = vst.msk [vmem:[#allocation4 + $0xd4] sm:$0xf] %vm2055, %v1961
  %2110 = vst.msk [vmem:[#allocation4 + $0xd8] sm:$0xf] %vm2055, %v1963
  %2111 = vst.msk [vmem:[#allocation4 + $0xdc] sm:$0xf] %vm2055, %v1965
  %2112 = vst.msk [vmem:[#allocation4 + $0xe0] sm:$0xf] %vm2055, %v1967
  %2113 = vst.msk [vmem:[#allocation4 + $0xe4] sm:$0xf] %vm2055, %v1969
  %2114 = vst.msk [vmem:[#allocation4 + $0xe8] sm:$0xf] %vm2055, %v1971
  %2115 = vst.msk [vmem:[#allocation4 + $0xec] sm:$0xf] %vm2055, %v1973
  %2116 = vst.msk [vmem:[#allocation4 + $0xf0] sm:$0xf] %vm2055, %v1975
  %2117 = vst.msk [vmem:[#allocation4 + $0xf4] sm:$0xf] %vm2055, %v1977
  %2118 = vst.msk [vmem:[#allocation4 + $0xf8] sm:$0xf] %vm2055, %v1979
  %2119 = vst.msk [vmem:[#allocation4 + $0xfc] sm:$0xf] %vm2055, %v1981
  %2120 = vst.msk [vmem:[#allocation4 + $0x100] sm:$0xf] %vm2055, %v1983
  %2121 = vst.msk [vmem:[#allocation4 + $0x104] sm:$0xf] %vm2055, %v1985
  %2122 = vst.msk [vmem:[#allocation4 + $0x108] sm:$0xf] %vm2055, %v1987
  %v2123 = vld [vmem:[#allocation2 + $0x17] sm:$0xff]
  %v2124 = vld [vmem:[#allocation2 + $0x1f] sm:$0xff]
  %v2125 = vld [vmem:[#allocation2 + $0x27] sm:$0xff]
  %v2126 = vld [vmem:[#allocation2 + $0x2f] sm:$0xff]
  %v2127 = vld [vmem:[#allocation2 + $0x37] sm:$0xff]
  %v2128 = vld [vmem:[#allocation2 + $0x3f] sm:$0xff]
  %v2129 = vld [vmem:[#allocation2 + $0x47] sm:$0xff]
  %v2130 = vld [vmem:[#allocation2 + $0x4f] sm:$0xff]
  %v2131 = vld [vmem:[#allocation2 + $0x57] sm:$0xff]
  %v2132 = vld [vmem:[#allocation2 + $0x5f] sm:$0xff]
  %v2133 = vld [vmem:[#allocation2 + $0x67] sm:$0xff]
  %v2134 = vld [vmem:[#allocation2 + $0x6f] sm:$0xff]
  %v2135 = vld [vmem:[#allocation2 + $0x77] sm:$0xff]
  %v2136 = vld [vmem:[#allocation2 + $0x7f] sm:$0xff]
  %v2137 = vld [vmem:[#allocation2 + $0x87] sm:$0xff]
  %v2138 = vld [vmem:[#allocation2 + $0x8f] sm:$0xff]
  %v2139 = vld [vmem:[#allocation2 + $0x97] sm:$0xff]
  %v2140 = vld [vmem:[#allocation2 + $0x9f] sm:$0xff]
  %v2141 = vld [vmem:[#allocation2 + $0xa7] sm:$0xff]
  %v2142 = vld [vmem:[#allocation2 + $0xaf] sm:$0xff]
  %v2143 = vld [vmem:[#allocation2 + $0xb7] sm:$0xff]
  %v2144 = vld [vmem:[#allocation2 + $0xbf] sm:$0xff]
  %v2145 = vld [vmem:[#allocation2 + $0xc7] sm:$0xff]
  %v2146 = vld [vmem:[#allocation2 + $0xcf] sm:$0xff]
  %v2147 = vld [vmem:[#allocation2 + $0xd7] sm:$0xff]
  %v2148 = vld [vmem:[#allocation2 + $0xdf] sm:$0xff]
  %v2149 = vld [vmem:[#allocation2 + $0xe7] sm:$0xff]
  %v2150 = vld [vmem:[#allocation2 + $0xef] sm:$0xff]
  %v2151 = vld [vmem:[#allocation2 + $0xf7] sm:$0xff]
  %v2152 = vld [vmem:[#allocation2 + $0xff] sm:$0xff]
  %v2153 = vld [vmem:[#allocation2 + $0x107] sm:$0xff]
  %v2154 = vld [vmem:[#allocation2 + $0x10f] sm:$0xff]
  %v2155 = vld [vmem:[#allocation2 + $0x117] sm:$0xff]
  %v2156 = vld [vmem:[#allocation2 + $0x11f] sm:$0xff]
  %v2157 = vld [vmem:[#allocation2 + $0x127] sm:$0xff]
  %v2158 = vld [vmem:[#allocation2 + $0x12f] sm:$0xff]
  %v2159 = vld [vmem:[#allocation2 + $0x137] sm:$0xff]
  %v2160 = vld [vmem:[#allocation2 + $0x13f] sm:$0xff]
  %v2161 = vld [vmem:[#allocation2 + $0x147] sm:$0xff]
  %v2162 = vld [vmem:[#allocation2 + $0x14f] sm:$0xff]
  %v2163 = vld [vmem:[#allocation2 + $0x157] sm:$0xff]
  %v2164 = vld [vmem:[#allocation2 + $0x15f] sm:$0xff]
  %v2165 = vld [vmem:[#allocation2 + $0x167] sm:$0xff]
  %v2166 = vld [vmem:[#allocation2 + $0x16f] sm:$0xff]
  %v2167 = vld [vmem:[#allocation2 + $0x177] sm:$0xff]
  %v2168 = vld [vmem:[#allocation2 + $0x17f] sm:$0xff]
  %v2169 = vld [vmem:[#allocation2 + $0x187] sm:$0xff]
  %v2170 = vld [vmem:[#allocation2 + $0x18f] sm:$0xff]
  %v2171 = vld [vmem:[#allocation2 + $0x197] sm:$0xff]
  %v2172 = vld [vmem:[#allocation2 + $0x19f] sm:$0xff]
  %v2173 = vld [vmem:[#allocation2 + $0x1a7] sm:$0xff]
  %v2174 = vld [vmem:[#allocation2 + $0x1af] sm:$0xff]
  %v2175 = vld [vmem:[#allocation2 + $0x1b7] sm:$0xff]
  %v2176 = vld [vmem:[#allocation2 + $0x1bf] sm:$0xff]
  %v2177 = vld [vmem:[#allocation2 + $0x1c7] sm:$0xff]
  %v2178 = vld [vmem:[#allocation2 + $0x1cf] sm:$0xff]
  %v2179 = vld [vmem:[#allocation2 + $0x1d7] sm:$0xff]
  %v2180 = vld [vmem:[#allocation2 + $0x1df] sm:$0xff]
  %v2181 = vld [vmem:[#allocation2 + $0x1e7] sm:$0xff]
  %v2182 = vld [vmem:[#allocation2 + $0x1ef] sm:$0xff]
  %v2183 = vld [vmem:[#allocation2 + $0x1f7] sm:$0xff]
  %v2184 = vld [vmem:[#allocation2 + $0x1ff] sm:$0xff]
  %v2185 = vld [vmem:[#allocation2 + $0x207] sm:$0xff]
  %v2186 = vld [vmem:[#allocation2 + $0x20f] sm:$0xff]
  %v2187 = vld [vmem:[#allocation2 + $0x217] sm:$0xff]
  %v2188 = vld [vmem:[#allocation2 + $0x21f] sm:$0xff]
  %v2189 = vld [vmem:[#allocation2 + $0x227] sm:$0xff]
  %v2190 = vmul.f32 %v2123, %v314
  %v2191 = vmul.f32 %v2124, %v319
  %v2192 = vmul.f32 %v2125, %v324
  %v2193 = vmul.f32 %v2126, %v329
  %v2194 = vmul.f32 %v2127, %v334
  %v2195 = vmul.f32 %v2128, %v339
  %v2196 = vmul.f32 %v2129, %v344
  %v2197 = vmul.f32 %v2130, %v349
  %v2198 = vmul.f32 %v2131, %v354
  %v2199 = vmul.f32 %v2132, %v359
  %v2200 = vmul.f32 %v2133, %v364
  %v2201 = vmul.f32 %v2134, %v369
  %v2202 = vmul.f32 %v2135, %v374
  %v2203 = vmul.f32 %v2136, %v379
  %v2204 = vmul.f32 %v2137, %v384
  %v2205 = vmul.f32 %v2138, %v389
  %v2206 = vmul.f32 %v2139, %v394
  %v2207 = vmul.f32 %v2140, %v399
  %v2208 = vmul.f32 %v2141, %v404
  %v2209 = vmul.f32 %v2142, %v409
  %v2210 = vmul.f32 %v2143, %v414
  %v2211 = vmul.f32 %v2144, %v419
  %v2212 = vmul.f32 %v2145, %v424
  %v2213 = vmul.f32 %v2146, %v429
  %v2214 = vmul.f32 %v2147, %v434
  %v2215 = vmul.f32 %v2148, %v439
  %v2216 = vmul.f32 %v2149, %v444
  %v2217 = vmul.f32 %v2150, %v449
  %v2218 = vmul.f32 %v2151, %v454
  %v2219 = vmul.f32 %v2152, %v459
  %v2220 = vmul.f32 %v2153, %v464
  %v2221 = vmul.f32 %v2154, %v469
  %v2222 = vmul.f32 %v2155, %v474
  %v2223 = vmul.f32 %v2156, %v479
  %v2224 = vmul.f32 %v2157, %v484
  %v2225 = vmul.f32 %v2158, %v489
  %v2226 = vmul.f32 %v2159, %v494
  %v2227 = vmul.f32 %v2160, %v499
  %v2228 = vmul.f32 %v2161, %v504
  %v2229 = vmul.f32 %v2162, %v509
  %v2230 = vmul.f32 %v2163, %v514
  %v2231 = vmul.f32 %v2164, %v519
  %v2232 = vmul.f32 %v2165, %v524
  %v2233 = vmul.f32 %v2166, %v529
  %v2234 = vmul.f32 %v2167, %v534
  %v2235 = vmul.f32 %v2168, %v539
  %v2236 = vmul.f32 %v2169, %v544
  %v2237 = vmul.f32 %v2170, %v549
  %v2238 = vmul.f32 %v2171, %v554
  %v2239 = vmul.f32 %v2172, %v559
  %v2240 = vmul.f32 %v2173, %v564
  %v2241 = vmul.f32 %v2174, %v569
  %v2242 = vmul.f32 %v2175, %v574
  %v2243 = vmul.f32 %v2176, %v579
  %v2244 = vmul.f32 %v2177, %v584
  %v2245 = vmul.f32 %v2178, %v589
  %v2246 = vmul.f32 %v2179, %v594
  %v2247 = vmul.f32 %v2180, %v599
  %v2248 = vmul.f32 %v2181, %v604
  %v2249 = vmul.f32 %v2182, %v609
  %v2250 = vmul.f32 %v2183, %v614
  %v2251 = vmul.f32 %v2184, %v619
  %v2252 = vmul.f32 %v2185, %v624
  %v2253 = vmul.f32 %v2186, %v629
  %v2254 = vmul.f32 %v2187, %v634
  %v2255 = vmul.f32 %v2188, %v639
  %v2256 = vmul.f32 %v2189, %v644
  %v2257 = vpack.c.bf16 %v2190, %v2190
  %v2258 = vpack.c.bf16 %v2191, %v2191
  %v2259 = vpack.c.bf16 %v2192, %v2192
  %v2260 = vpack.c.bf16 %v2193, %v2193
  %v2261 = vpack.c.bf16 %v2194, %v2194
  %v2262 = vpack.c.bf16 %v2195, %v2195
  %v2263 = vpack.c.bf16 %v2196, %v2196
  %v2264 = vpack.c.bf16 %v2197, %v2197
  %v2265 = vpack.c.bf16 %v2198, %v2198
  %v2266 = vpack.c.bf16 %v2199, %v2199
  %v2267 = vpack.c.bf16 %v2200, %v2200
  %v2268 = vpack.c.bf16 %v2201, %v2201
  %v2269 = vpack.c.bf16 %v2202, %v2202
  %v2270 = vpack.c.bf16 %v2203, %v2203
  %v2271 = vpack.c.bf16 %v2204, %v2204
  %v2272 = vpack.c.bf16 %v2205, %v2205
  %v2273 = vpack.c.bf16 %v2206, %v2206
  %v2274 = vpack.c.bf16 %v2207, %v2207
  %v2275 = vpack.c.bf16 %v2208, %v2208
  %v2276 = vpack.c.bf16 %v2209, %v2209
  %v2277 = vpack.c.bf16 %v2210, %v2210
  %v2278 = vpack.c.bf16 %v2211, %v2211
  %v2279 = vpack.c.bf16 %v2212, %v2212
  %v2280 = vpack.c.bf16 %v2213, %v2213
  %v2281 = vpack.c.bf16 %v2214, %v2214
  %v2282 = vpack.c.bf16 %v2215, %v2215
  %v2283 = vpack.c.bf16 %v2216, %v2216
  %v2284 = vpack.c.bf16 %v2217, %v2217
  %v2285 = vpack.c.bf16 %v2218, %v2218
  %v2286 = vpack.c.bf16 %v2219, %v2219
  %v2287 = vpack.c.bf16 %v2220, %v2220
  %v2288 = vpack.c.bf16 %v2221, %v2221
  %v2289 = vpack.c.bf16 %v2222, %v2222
  %v2290 = vpack.c.bf16 %v2223, %v2223
  %v2291 = vpack.c.bf16 %v2224, %v2224
  %v2292 = vpack.c.bf16 %v2225, %v2225
  %v2293 = vpack.c.bf16 %v2226, %v2226
  %v2294 = vpack.c.bf16 %v2227, %v2227
  %v2295 = vpack.c.bf16 %v2228, %v2228
  %v2296 = vpack.c.bf16 %v2229, %v2229
  %v2297 = vpack.c.bf16 %v2230, %v2230
  %v2298 = vpack.c.bf16 %v2231, %v2231
  %v2299 = vpack.c.bf16 %v2232, %v2232
  %v2300 = vpack.c.bf16 %v2233, %v2233
  %v2301 = vpack.c.bf16 %v2234, %v2234
  %v2302 = vpack.c.bf16 %v2235, %v2235
  %v2303 = vpack.c.bf16 %v2236, %v2236
  %v2304 = vpack.c.bf16 %v2237, %v2237
  %v2305 = vpack.c.bf16 %v2238, %v2238
  %v2306 = vpack.c.bf16 %v2239, %v2239
  %v2307 = vpack.c.bf16 %v2240, %v2240
  %v2308 = vpack.c.bf16 %v2241, %v2241
  %v2309 = vpack.c.bf16 %v2242, %v2242
  %v2310 = vpack.c.bf16 %v2243, %v2243
  %v2311 = vpack.c.bf16 %v2244, %v2244
  %v2312 = vpack.c.bf16 %v2245, %v2245
  %v2313 = vpack.c.bf16 %v2246, %v2246
  %v2314 = vpack.c.bf16 %v2247, %v2247
  %v2315 = vpack.c.bf16 %v2248, %v2248
  %v2316 = vpack.c.bf16 %v2249, %v2249
  %v2317 = vpack.c.bf16 %v2250, %v2250
  %v2318 = vpack.c.bf16 %v2251, %v2251
  %v2319 = vpack.c.bf16 %v2252, %v2252
  %v2320 = vpack.c.bf16 %v2253, %v2253
  %v2321 = vpack.c.bf16 %v2254, %v2254
  %v2322 = vpack.c.bf16 %v2255, %v2255
  %v2323 = vpack.c.bf16 %v2256, %v2256
  %2391 = vrot.lane.b32.xlu0 %v2257, 12
  %v2392 = vpop.permute.xlu0 %2391
  %2393 = vrot.lane.b32.xlu0 %v2258, 12
  %v2394 = vpop.permute.xlu0 %2393
  %2395 = vrot.lane.b32.xlu0 %v2259, 12
  %v2396 = vpop.permute.xlu0 %2395
  %2397 = vrot.lane.b32.xlu0 %v2260, 12
  %v2398 = vpop.permute.xlu0 %2397
  %2399 = vrot.lane.b32.xlu0 %v2261, 12
  %v2400 = vpop.permute.xlu0 %2399
  %2401 = vrot.lane.b32.xlu0 %v2262, 12
  %v2402 = vpop.permute.xlu0 %2401
  %2403 = vrot.lane.b32.xlu0 %v2263, 12
  %v2404 = vpop.permute.xlu0 %2403
  %2405 = vrot.lane.b32.xlu0 %v2264, 12
  %v2406 = vpop.permute.xlu0 %2405
  %2407 = vrot.lane.b32.xlu0 %v2265, 12
  %v2408 = vpop.permute.xlu0 %2407
  %2409 = vrot.lane.b32.xlu0 %v2266, 12
  %v2410 = vpop.permute.xlu0 %2409
  %2411 = vrot.lane.b32.xlu0 %v2267, 12
  %v2412 = vpop.permute.xlu0 %2411
  %2413 = vrot.lane.b32.xlu0 %v2268, 12
  %v2414 = vpop.permute.xlu0 %2413
  %2415 = vrot.lane.b32.xlu0 %v2269, 12
  %v2416 = vpop.permute.xlu0 %2415
  %2417 = vrot.lane.b32.xlu0 %v2270, 12
  %v2418 = vpop.permute.xlu0 %2417
  %2419 = vrot.lane.b32.xlu0 %v2271, 12
  %v2420 = vpop.permute.xlu0 %2419
  %2421 = vrot.lane.b32.xlu0 %v2272, 12
  %v2422 = vpop.permute.xlu0 %2421
  %2423 = vrot.lane.b32.xlu0 %v2273, 12
  %v2424 = vpop.permute.xlu0 %2423
  %2425 = vrot.lane.b32.xlu0 %v2274, 12
  %v2426 = vpop.permute.xlu0 %2425
  %2427 = vrot.lane.b32.xlu0 %v2275, 12
  %v2428 = vpop.permute.xlu0 %2427
  %2429 = vrot.lane.b32.xlu0 %v2276, 12
  %v2430 = vpop.permute.xlu0 %2429
  %2431 = vrot.lane.b32.xlu0 %v2277, 12
  %v2432 = vpop.permute.xlu0 %2431
  %2433 = vrot.lane.b32.xlu0 %v2278, 12
  %v2434 = vpop.permute.xlu0 %2433
  %2435 = vrot.lane.b32.xlu0 %v2279, 12
  %v2436 = vpop.permute.xlu0 %2435
  %2437 = vrot.lane.b32.xlu0 %v2280, 12
  %v2438 = vpop.permute.xlu0 %2437
  %2439 = vrot.lane.b32.xlu0 %v2281, 12
  %v2440 = vpop.permute.xlu0 %2439
  %2441 = vrot.lane.b32.xlu0 %v2282, 12
  %v2442 = vpop.permute.xlu0 %2441
  %2443 = vrot.lane.b32.xlu0 %v2283, 12
  %v2444 = vpop.permute.xlu0 %2443
  %2445 = vrot.lane.b32.xlu0 %v2284, 12
  %v2446 = vpop.permute.xlu0 %2445
  %2447 = vrot.lane.b32.xlu0 %v2285, 12
  %v2448 = vpop.permute.xlu0 %2447
  %2449 = vrot.lane.b32.xlu0 %v2286, 12
  %v2450 = vpop.permute.xlu0 %2449
  %2451 = vrot.lane.b32.xlu0 %v2287, 12
  %v2452 = vpop.permute.xlu0 %2451
  %2453 = vrot.lane.b32.xlu0 %v2288, 12
  %v2454 = vpop.permute.xlu0 %2453
  %2455 = vrot.lane.b32.xlu0 %v2289, 12
  %v2456 = vpop.permute.xlu0 %2455
  %2457 = vrot.lane.b32.xlu0 %v2290, 12
  %v2458 = vpop.permute.xlu0 %2457
  %2459 = vrot.lane.b32.xlu0 %v2291, 12
  %v2460 = vpop.permute.xlu0 %2459
  %2461 = vrot.lane.b32.xlu0 %v2292, 12
  %v2462 = vpop.permute.xlu0 %2461
  %2463 = vrot.lane.b32.xlu0 %v2293, 12
  %v2464 = vpop.permute.xlu0 %2463
  %2465 = vrot.lane.b32.xlu0 %v2294, 12
  %v2466 = vpop.permute.xlu0 %2465
  %2467 = vrot.lane.b32.xlu0 %v2295, 12
  %v2468 = vpop.permute.xlu0 %2467
  %2469 = vrot.lane.b32.xlu0 %v2296, 12
  %v2470 = vpop.permute.xlu0 %2469
  %2471 = vrot.lane.b32.xlu0 %v2297, 12
  %v2472 = vpop.permute.xlu0 %2471
  %2473 = vrot.lane.b32.xlu0 %v2298, 12
  %v2474 = vpop.permute.xlu0 %2473
  %2475 = vrot.lane.b32.xlu0 %v2299, 12
  %v2476 = vpop.permute.xlu0 %2475
  %2477 = vrot.lane.b32.xlu0 %v2300, 12
  %v2478 = vpop.permute.xlu0 %2477
  %2479 = vrot.lane.b32.xlu0 %v2301, 12
  %v2480 = vpop.permute.xlu0 %2479
  %2481 = vrot.lane.b32.xlu0 %v2302, 12
  %v2482 = vpop.permute.xlu0 %2481
  %2483 = vrot.lane.b32.xlu0 %v2303, 12
  %v2484 = vpop.permute.xlu0 %2483
  %2485 = vrot.lane.b32.xlu0 %v2304, 12
  %v2486 = vpop.permute.xlu0 %2485
  %2487 = vrot.lane.b32.xlu0 %v2305, 12
  %v2488 = vpop.permute.xlu0 %2487
  %2489 = vrot.lane.b32.xlu0 %v2306, 12
  %v2490 = vpop.permute.xlu0 %2489
  %2491 = vrot.lane.b32.xlu0 %v2307, 12
  %v2492 = vpop.permute.xlu0 %2491
  %2493 = vrot.lane.b32.xlu0 %v2308, 12
  %v2494 = vpop.permute.xlu0 %2493
  %2495 = vrot.lane.b32.xlu0 %v2309, 12
  %v2496 = vpop.permute.xlu0 %2495
  %2497 = vrot.lane.b32.xlu0 %v2310, 12
  %v2498 = vpop.permute.xlu0 %2497
  %2499 = vrot.lane.b32.xlu0 %v2311, 12
  %v2500 = vpop.permute.xlu0 %2499
  %2501 = vrot.lane.b32.xlu0 %v2312, 12
  %v2502 = vpop.permute.xlu0 %2501
  %2503 = vrot.lane.b32.xlu0 %v2313, 12
  %v2504 = vpop.permute.xlu0 %2503
  %2505 = vrot.lane.b32.xlu0 %v2314, 12
  %v2506 = vpop.permute.xlu0 %2505
  %2507 = vrot.lane.b32.xlu0 %v2315, 12
  %v2508 = vpop.permute.xlu0 %2507
  %2509 = vrot.lane.b32.xlu0 %v2316, 12
  %v2510 = vpop.permute.xlu0 %2509
  %2511 = vrot.lane.b32.xlu0 %v2317, 12
  %v2512 = vpop.permute.xlu0 %2511
  %2513 = vrot.lane.b32.xlu0 %v2318, 12
  %v2514 = vpop.permute.xlu0 %2513
  %2515 = vrot.lane.b32.xlu0 %v2319, 12
  %v2516 = vpop.permute.xlu0 %2515
  %2517 = vrot.lane.b32.xlu0 %v2320, 12
  %v2518 = vpop.permute.xlu0 %2517
  %2519 = vrot.lane.b32.xlu0 %v2321, 12
  %v2520 = vpop.permute.xlu0 %2519
  %2521 = vrot.lane.b32.xlu0 %v2322, 12
  %v2522 = vpop.permute.xlu0 %2521
  %2523 = vrot.lane.b32.xlu0 %v2323, 12
  %v2524 = vpop.permute.xlu0 %2523
  %vm2592 = vcmask 126048
  %2593 = vst.msk [vmem:[#allocation4] sm:$0xf] %vm2592, %v2392
  %2594 = vst.msk [vmem:[#allocation4 + $0x4] sm:$0xf] %vm2592, %v2394
  %2595 = vst.msk [vmem:[#allocation4 + $0x8] sm:$0xf] %vm2592, %v2396
  %2596 = vst.msk [vmem:[#allocation4 + $0xc] sm:$0xf] %vm2592, %v2398
  %2597 = vst.msk [vmem:[#allocation4 + $0x10] sm:$0xf] %vm2592, %v2400
  %2598 = vst.msk [vmem:[#allocation4 + $0x14] sm:$0xf] %vm2592, %v2402
  %2599 = vst.msk [vmem:[#allocation4 + $0x18] sm:$0xf] %vm2592, %v2404
  %2600 = vst.msk [vmem:[#allocation4 + $0x1c] sm:$0xf] %vm2592, %v2406
  %2601 = vst.msk [vmem:[#allocation4 + $0x20] sm:$0xf] %vm2592, %v2408
  %2602 = vst.msk [vmem:[#allocation4 + $0x24] sm:$0xf] %vm2592, %v2410
  %2603 = vst.msk [vmem:[#allocation4 + $0x28] sm:$0xf] %vm2592, %v2412
  %2604 = vst.msk [vmem:[#allocation4 + $0x2c] sm:$0xf] %vm2592, %v2414
  %2605 = vst.msk [vmem:[#allocation4 + $0x30] sm:$0xf] %vm2592, %v2416
  %2606 = vst.msk [vmem:[#allocation4 + $0x34] sm:$0xf] %vm2592, %v2418
  %2607 = vst.msk [vmem:[#allocation4 + $0x38] sm:$0xf] %vm2592, %v2420
  %2608 = vst.msk [vmem:[#allocation4 + $0x3c] sm:$0xf] %vm2592, %v2422
  %2609 = vst.msk [vmem:[#allocation4 + $0x40] sm:$0xf] %vm2592, %v2424
  %2610 = vst.msk [vmem:[#allocation4 + $0x44] sm:$0xf] %vm2592, %v2426
  %2611 = vst.msk [vmem:[#allocation4 + $0x48] sm:$0xf] %vm2592, %v2428
  %2612 = vst.msk [vmem:[#allocation4 + $0x4c] sm:$0xf] %vm2592, %v2430
  %2613 = vst.msk [vmem:[#allocation4 + $0x50] sm:$0xf] %vm2592, %v2432
  %2614 = vst.msk [vmem:[#allocation4 + $0x54] sm:$0xf] %vm2592, %v2434
  %2615 = vst.msk [vmem:[#allocation4 + $0x58] sm:$0xf] %vm2592, %v2436
  %2616 = vst.msk [vmem:[#allocation4 + $0x5c] sm:$0xf] %vm2592, %v2438
  %2617 = vst.msk [vmem:[#allocation4 + $0x60] sm:$0xf] %vm2592, %v2440
  %2618 = vst.msk [vmem:[#allocation4 + $0x64] sm:$0xf] %vm2592, %v2442
  %2619 = vst.msk [vmem:[#allocation4 + $0x68] sm:$0xf] %vm2592, %v2444
  %2620 = vst.msk [vmem:[#allocation4 + $0x6c] sm:$0xf] %vm2592, %v2446
  %2621 = vst.msk [vmem:[#allocation4 + $0x70] sm:$0xf] %vm2592, %v2448
  %2622 = vst.msk [vmem:[#allocation4 + $0x74] sm:$0xf] %vm2592, %v2450
  %2623 = vst.msk [vmem:[#allocation4 + $0x78] sm:$0xf] %vm2592, %v2452
  %2624 = vst.msk [vmem:[#allocation4 + $0x7c] sm:$0xf] %vm2592, %v2454
  %2625 = vst.msk [vmem:[#allocation4 + $0x80] sm:$0xf] %vm2592, %v2456
  %2626 = vst.msk [vmem:[#allocation4 + $0x84] sm:$0xf] %vm2592, %v2458
  %2627 = vst.msk [vmem:[#allocation4 + $0x88] sm:$0xf] %vm2592, %v2460
  %2628 = vst.msk [vmem:[#allocation4 + $0x8c] sm:$0xf] %vm2592, %v2462
  %2629 = vst.msk [vmem:[#allocation4 + $0x90] sm:$0xf] %vm2592, %v2464
  %2630 = vst.msk [vmem:[#allocation4 + $0x94] sm:$0xf] %vm2592, %v2466
  %2631 = vst.msk [vmem:[#allocation4 + $0x98] sm:$0xf] %vm2592, %v2468
  %2632 = vst.msk [vmem:[#allocation4 + $0x9c] sm:$0xf] %vm2592, %v2470
  %2633 = vst.msk [vmem:[#allocation4 + $0xa0] sm:$0xf] %vm2592, %v2472
  %2634 = vst.msk [vmem:[#allocation4 + $0xa4] sm:$0xf] %vm2592, %v2474
  %2635 = vst.msk [vmem:[#allocation4 + $0xa8] sm:$0xf] %vm2592, %v2476
  %2636 = vst.msk [vmem:[#allocation4 + $0xac] sm:$0xf] %vm2592, %v2478
  %2637 = vst.msk [vmem:[#allocation4 + $0xb0] sm:$0xf] %vm2592, %v2480
  %2638 = vst.msk [vmem:[#allocation4 + $0xb4] sm:$0xf] %vm2592, %v2482
  %2639 = vst.msk [vmem:[#allocation4 + $0xb8] sm:$0xf] %vm2592, %v2484
  %2640 = vst.msk [vmem:[#allocation4 + $0xbc] sm:$0xf] %vm2592, %v2486
  %2641 = vst.msk [vmem:[#allocation4 + $0xc0] sm:$0xf] %vm2592, %v2488
  %2642 = vst.msk [vmem:[#allocation4 + $0xc4] sm:$0xf] %vm2592, %v2490
  %2643 = vst.msk [vmem:[#allocation4 + $0xc8] sm:$0xf] %vm2592, %v2492
  %2644 = vst.msk [vmem:[#allocation4 + $0xcc] sm:$0xf] %vm2592, %v2494
  %2645 = vst.msk [vmem:[#allocation4 + $0xd0] sm:$0xf] %vm2592, %v2496
  %2646 = vst.msk [vmem:[#allocation4 + $0xd4] sm:$0xf] %vm2592, %v2498
  %2647 = vst.msk [vmem:[#allocation4 + $0xd8] sm:$0xf] %vm2592, %v2500
  %2648 = vst.msk [vmem:[#allocation4 + $0xdc] sm:$0xf] %vm2592, %v2502
  %2649 = vst.msk [vmem:[#allocation4 + $0xe0] sm:$0xf] %vm2592, %v2504
  %2650 = vst.msk [vmem:[#allocation4 + $0xe4] sm:$0xf] %vm2592, %v2506
  %2651 = vst.msk [vmem:[#allocation4 + $0xe8] sm:$0xf] %vm2592, %v2508
  %2652 = vst.msk [vmem:[#allocation4 + $0xec] sm:$0xf] %vm2592, %v2510
  %2653 = vst.msk [vmem:[#allocation4 + $0xf0] sm:$0xf] %vm2592, %v2512
  %2654 = vst.msk [vmem:[#allocation4 + $0xf4] sm:$0xf] %vm2592, %v2514
  %2655 = vst.msk [vmem:[#allocation4 + $0xf8] sm:$0xf] %vm2592, %v2516
  %2656 = vst.msk [vmem:[#allocation4 + $0xfc] sm:$0xf] %vm2592, %v2518
  %2657 = vst.msk [vmem:[#allocation4 + $0x100] sm:$0xf] %vm2592, %v2520
  %2658 = vst.msk [vmem:[#allocation4 + $0x104] sm:$0xf] %vm2592, %v2522
  %2659 = vst.msk [vmem:[#allocation4 + $0x108] sm:$0xf] %vm2592, %v2524
  %v2660 = vld [vmem:[#allocation2 + $0x18] sm:$0xff]
  %v2661 = vld [vmem:[#allocation2 + $0x20] sm:$0xff]
  %v2662 = vld [vmem:[#allocation2 + $0x28] sm:$0xff]
  %v2663 = vld [vmem:[#allocation2 + $0x30] sm:$0xff]
  %v2664 = vld [vmem:[#allocation2 + $0x38] sm:$0xff]
  %v2665 = vld [vmem:[#allocation2 + $0x40] sm:$0xff]
  %v2666 = vld [vmem:[#allocation2 + $0x48] sm:$0xff]
  %v2667 = vld [vmem:[#allocation2 + $0x50] sm:$0xff]
  %v2668 = vld [vmem:[#allocation2 + $0x58] sm:$0xff]
  %v2669 = vld [vmem:[#allocation2 + $0x60] sm:$0xff]
  %v2670 = vld [vmem:[#allocation2 + $0x68] sm:$0xff]
  %v2671 = vld [vmem:[#allocation2 + $0x70] sm:$0xff]
  %v2672 = vld [vmem:[#allocation2 + $0x78] sm:$0xff]
  %v2673 = vld [vmem:[#allocation2 + $0x80] sm:$0xff]
  %v2674 = vld [vmem:[#allocation2 + $0x88] sm:$0xff]
  %v2675 = vld [vmem:[#allocation2 + $0x90] sm:$0xff]
  %v2676 = vld [vmem:[#allocation2 + $0x98] sm:$0xff]
  %v2677 = vld [vmem:[#allocation2 + $0xa0] sm:$0xff]
  %v2678 = vld [vmem:[#allocation2 + $0xa8] sm:$0xff]
  %v2679 = vld [vmem:[#allocation2 + $0xb0] sm:$0xff]
  %v2680 = vld [vmem:[#allocation2 + $0xb8] sm:$0xff]
  %v2681 = vld [vmem:[#allocation2 + $0xc0] sm:$0xff]
  %v2682 = vld [vmem:[#allocation2 + $0xc8] sm:$0xff]
  %v2683 = vld [vmem:[#allocation2 + $0xd0] sm:$0xff]
  %v2684 = vld [vmem:[#allocation2 + $0xd8] sm:$0xff]
  %v2685 = vld [vmem:[#allocation2 + $0xe0] sm:$0xff]
  %v2686 = vld [vmem:[#allocation2 + $0xe8] sm:$0xff]
  %v2687 = vld [vmem:[#allocation2 + $0xf0] sm:$0xff]
  %v2688 = vld [vmem:[#allocation2 + $0xf8] sm:$0xff]
  %v2689 = vld [vmem:[#allocation2 + $0x100] sm:$0xff]
  %v2690 = vld [vmem:[#allocation2 + $0x108] sm:$0xff]
  %v2691 = vld [vmem:[#allocation2 + $0x110] sm:$0xff]
  %v2692 = vld [vmem:[#allocation2 + $0x118] sm:$0xff]
  %v2693 = vld [vmem:[#allocation2 + $0x120] sm:$0xff]
  %v2694 = vld [vmem:[#allocation2 + $0x128] sm:$0xff]
  %v2695 = vld [vmem:[#allocation2 + $0x130] sm:$0xff]
  %v2696 = vld [vmem:[#allocation2 + $0x138] sm:$0xff]
  %v2697 = vld [vmem:[#allocation2 + $0x140] sm:$0xff]
  %v2698 = vld [vmem:[#allocation2 + $0x148] sm:$0xff]
  %v2699 = vld [vmem:[#allocation2 + $0x150] sm:$0xff]
  %v2700 = vld [vmem:[#allocation2 + $0x158] sm:$0xff]
  %v2701 = vld [vmem:[#allocation2 + $0x160] sm:$0xff]
  %v2702 = vld [vmem:[#allocation2 + $0x168] sm:$0xff]
  %v2703 = vld [vmem:[#allocation2 + $0x170] sm:$0xff]
  %v2704 = vld [vmem:[#allocation2 + $0x178] sm:$0xff]
  %v2705 = vld [vmem:[#allocation2 + $0x180] sm:$0xff]
  %v2706 = vld [vmem:[#allocation2 + $0x188] sm:$0xff]
  %v2707 = vld [vmem:[#allocation2 + $0x190] sm:$0xff]
  %v2708 = vld [vmem:[#allocation2 + $0x198] sm:$0xff]
  %v2709 = vld [vmem:[#allocation2 + $0x1a0] sm:$0xff]
  %v2710 = vld [vmem:[#allocation2 + $0x1a8] sm:$0xff]
  %v2711 = vld [vmem:[#allocation2 + $0x1b0] sm:$0xff]
  %v2712 = vld [vmem:[#allocation2 + $0x1b8] sm:$0xff]
  %v2713 = vld [vmem:[#allocation2 + $0x1c0] sm:$0xff]
  %v2714 = vld [vmem:[#allocation2 + $0x1c8] sm:$0xff]
  %v2715 = vld [vmem:[#allocation2 + $0x1d0] sm:$0xff]
  %v2716 = vld [vmem:[#allocation2 + $0x1d8] sm:$0xff]
  %v2717 = vld [vmem:[#allocation2 + $0x1e0] sm:$0xff]
  %v2718 = vld [vmem:[#allocation2 + $0x1e8] sm:$0xff]
  %v2719 = vld [vmem:[#allocation2 + $0x1f0] sm:$0xff]
  %v2720 = vld [vmem:[#allocation2 + $0x1f8] sm:$0xff]
  %v2721 = vld [vmem:[#allocation2 + $0x200] sm:$0xff]
  %v2722 = vld [vmem:[#allocation2 + $0x208] sm:$0xff]
  %v2723 = vld [vmem:[#allocation2 + $0x210] sm:$0xff]
  %v2724 = vld [vmem:[#allocation2 + $0x218] sm:$0xff]
  %v2725 = vld [vmem:[#allocation2 + $0x220] sm:$0xff]
  %v2726 = vld [vmem:[#allocation2 + $0x228] sm:$0xff]
  %v2727 = vpack.c.bf16 %v2660, %v2660
  %v2728 = vpack.c.bf16 %v2661, %v2661
  %v2729 = vpack.c.bf16 %v2662, %v2662
  %v2730 = vpack.c.bf16 %v2663, %v2663
  %v2731 = vpack.c.bf16 %v2664, %v2664
  %v2732 = vpack.c.bf16 %v2665, %v2665
  %v2733 = vpack.c.bf16 %v2666, %v2666
  %v2734 = vpack.c.bf16 %v2667, %v2667
  %v2735 = vpack.c.bf16 %v2668, %v2668
  %v2736 = vpack.c.bf16 %v2669, %v2669
  %v2737 = vpack.c.bf16 %v2670, %v2670
  %v2738 = vpack.c.bf16 %v2671, %v2671
  %v2739 = vpack.c.bf16 %v2672, %v2672
  %v2740 = vpack.c.bf16 %v2673, %v2673
  %v2741 = vpack.c.bf16 %v2674, %v2674
  %v2742 = vpack.c.bf16 %v2675, %v2675
  %v2743 = vpack.c.bf16 %v2676, %v2676
  %v2744 = vpack.c.bf16 %v2677, %v2677
  %v2745 = vpack.c.bf16 %v2678, %v2678
  %v2746 = vpack.c.bf16 %v2679, %v2679
  %v2747 = vpack.c.bf16 %v2680, %v2680
  %v2748 = vpack.c.bf16 %v2681, %v2681
  %v2749 = vpack.c.bf16 %v2682, %v2682
  %v2750 = vpack.c.bf16 %v2683, %v2683
  %v2751 = vpack.c.bf16 %v2684, %v2684
  %v2752 = vpack.c.bf16 %v2685, %v2685
  %v2753 = vpack.c.bf16 %v2686, %v2686
  %v2754 = vpack.c.bf16 %v2687, %v2687
  %v2755 = vpack.c.bf16 %v2688, %v2688
  %v2756 = vpack.c.bf16 %v2689, %v2689
  %v2757 = vpack.c.bf16 %v2690, %v2690
  %v2758 = vpack.c.bf16 %v2691, %v2691
  %v2759 = vpack.c.bf16 %v2692, %v2692
  %v2760 = vpack.c.bf16 %v2693, %v2693
  %v2761 = vpack.c.bf16 %v2694, %v2694
  %v2762 = vpack.c.bf16 %v2695, %v2695
  %v2763 = vpack.c.bf16 %v2696, %v2696
  %v2764 = vpack.c.bf16 %v2697, %v2697
  %v2765 = vpack.c.bf16 %v2698, %v2698
  %v2766 = vpack.c.bf16 %v2699, %v2699
  %v2767 = vpack.c.bf16 %v2700, %v2700
  %v2768 = vpack.c.bf16 %v2701, %v2701
  %v2769 = vpack.c.bf16 %v2702, %v2702
  %v2770 = vpack.c.bf16 %v2703, %v2703
  %v2771 = vpack.c.bf16 %v2704, %v2704
  %v2772 = vpack.c.bf16 %v2705, %v2705
  %v2773 = vpack.c.bf16 %v2706, %v2706
  %v2774 = vpack.c.bf16 %v2707, %v2707
  %v2775 = vpack.c.bf16 %v2708, %v2708
  %v2776 = vpack.c.bf16 %v2709, %v2709
  %v2777 = vpack.c.bf16 %v2710, %v2710
  %v2778 = vpack.c.bf16 %v2711, %v2711
  %v2779 = vpack.c.bf16 %v2712, %v2712
  %v2780 = vpack.c.bf16 %v2713, %v2713
  %v2781 = vpack.c.bf16 %v2714, %v2714
  %v2782 = vpack.c.bf16 %v2715, %v2715
  %v2783 = vpack.c.bf16 %v2716, %v2716
  %v2784 = vpack.c.bf16 %v2717, %v2717
  %v2785 = vpack.c.bf16 %v2718, %v2718
  %v2786 = vpack.c.bf16 %v2719, %v2719
  %v2787 = vpack.c.bf16 %v2720, %v2720
  %v2788 = vpack.c.bf16 %v2721, %v2721
  %v2789 = vpack.c.bf16 %v2722, %v2722
  %v2790 = vpack.c.bf16 %v2723, %v2723
  %v2791 = vpack.c.bf16 %v2724, %v2724
  %v2792 = vpack.c.bf16 %v2725, %v2725
  %v2793 = vpack.c.bf16 %v2726, %v2726
  %2861 = vrot.lane.b32.xlu0 %v2727, 16
  %v2862 = vpop.permute.xlu0 %2861
  %2863 = vrot.lane.b32.xlu0 %v2728, 16
  %v2864 = vpop.permute.xlu0 %2863
  %2865 = vrot.lane.b32.xlu0 %v2729, 16
  %v2866 = vpop.permute.xlu0 %2865
  %2867 = vrot.lane.b32.xlu0 %v2730, 16
  %v2868 = vpop.permute.xlu0 %2867
  %2869 = vrot.lane.b32.xlu0 %v2731, 16
  %v2870 = vpop.permute.xlu0 %2869
  %2871 = vrot.lane.b32.xlu0 %v2732, 16
  %v2872 = vpop.permute.xlu0 %2871
  %2873 = vrot.lane.b32.xlu0 %v2733, 16
  %v2874 = vpop.permute.xlu0 %2873
  %2875 = vrot.lane.b32.xlu0 %v2734, 16
  %v2876 = vpop.permute.xlu0 %2875
  %2877 = vrot.lane.b32.xlu0 %v2735, 16
  %v2878 = vpop.permute.xlu0 %2877
  %2879 = vrot.lane.b32.xlu0 %v2736, 16
  %v2880 = vpop.permute.xlu0 %2879
  %2881 = vrot.lane.b32.xlu0 %v2737, 16
  %v2882 = vpop.permute.xlu0 %2881
  %2883 = vrot.lane.b32.xlu0 %v2738, 16
  %v2884 = vpop.permute.xlu0 %2883
  %2885 = vrot.lane.b32.xlu0 %v2739, 16
  %v2886 = vpop.permute.xlu0 %2885
  %2887 = vrot.lane.b32.xlu0 %v2740, 16
  %v2888 = vpop.permute.xlu0 %2887
  %2889 = vrot.lane.b32.xlu0 %v2741, 16
  %v2890 = vpop.permute.xlu0 %2889
  %2891 = vrot.lane.b32.xlu0 %v2742, 16
  %v2892 = vpop.permute.xlu0 %2891
  %2893 = vrot.lane.b32.xlu0 %v2743, 16
  %v2894 = vpop.permute.xlu0 %2893
  %2895 = vrot.lane.b32.xlu0 %v2744, 16
  %v2896 = vpop.permute.xlu0 %2895
  %2897 = vrot.lane.b32.xlu0 %v2745, 16
  %v2898 = vpop.permute.xlu0 %2897
  %2899 = vrot.lane.b32.xlu0 %v2746, 16
  %v2900 = vpop.permute.xlu0 %2899
  %2901 = vrot.lane.b32.xlu0 %v2747, 16
  %v2902 = vpop.permute.xlu0 %2901
  %2903 = vrot.lane.b32.xlu0 %v2748, 16
  %v2904 = vpop.permute.xlu0 %2903
  %2905 = vrot.lane.b32.xlu0 %v2749, 16
  %v2906 = vpop.permute.xlu0 %2905
  %2907 = vrot.lane.b32.xlu0 %v2750, 16
  %v2908 = vpop.permute.xlu0 %2907
  %2909 = vrot.lane.b32.xlu0 %v2751, 16
  %v2910 = vpop.permute.xlu0 %2909
  %2911 = vrot.lane.b32.xlu0 %v2752, 16
  %v2912 = vpop.permute.xlu0 %2911
  %2913 = vrot.lane.b32.xlu0 %v2753, 16
  %v2914 = vpop.permute.xlu0 %2913
  %2915 = vrot.lane.b32.xlu0 %v2754, 16
  %v2916 = vpop.permute.xlu0 %2915
  %2917 = vrot.lane.b32.xlu0 %v2755, 16
  %v2918 = vpop.permute.xlu0 %2917
  %2919 = vrot.lane.b32.xlu0 %v2756, 16
  %v2920 = vpop.permute.xlu0 %2919
  %2921 = vrot.lane.b32.xlu0 %v2757, 16
  %v2922 = vpop.permute.xlu0 %2921
  %2923 = vrot.lane.b32.xlu0 %v2758, 16
  %v2924 = vpop.permute.xlu0 %2923
  %2925 = vrot.lane.b32.xlu0 %v2759, 16
  %v2926 = vpop.permute.xlu0 %2925
  %2927 = vrot.lane.b32.xlu0 %v2760, 16
  %v2928 = vpop.permute.xlu0 %2927
  %2929 = vrot.lane.b32.xlu0 %v2761, 16
  %v2930 = vpop.permute.xlu0 %2929
  %2931 = vrot.lane.b32.xlu0 %v2762, 16
  %v2932 = vpop.permute.xlu0 %2931
  %2933 = vrot.lane.b32.xlu0 %v2763, 16
  %v2934 = vpop.permute.xlu0 %2933
  %2935 = vrot.lane.b32.xlu0 %v2764, 16
  %v2936 = vpop.permute.xlu0 %2935
  %2937 = vrot.lane.b32.xlu0 %v2765, 16
  %v2938 = vpop.permute.xlu0 %2937
  %2939 = vrot.lane.b32.xlu0 %v2766, 16
  %v2940 = vpop.permute.xlu0 %2939
  %2941 = vrot.lane.b32.xlu0 %v2767, 16
  %v2942 = vpop.permute.xlu0 %2941
  %2943 = vrot.lane.b32.xlu0 %v2768, 16
  %v2944 = vpop.permute.xlu0 %2943
  %2945 = vrot.lane.b32.xlu0 %v2769, 16
  %v2946 = vpop.permute.xlu0 %2945
  %2947 = vrot.lane.b32.xlu0 %v2770, 16
  %v2948 = vpop.permute.xlu0 %2947
  %2949 = vrot.lane.b32.xlu0 %v2771, 16
  %v2950 = vpop.permute.xlu0 %2949
  %2951 = vrot.lane.b32.xlu0 %v2772, 16
  %v2952 = vpop.permute.xlu0 %2951
  %2953 = vrot.lane.b32.xlu0 %v2773, 16
  %v2954 = vpop.permute.xlu0 %2953
  %2955 = vrot.lane.b32.xlu0 %v2774, 16
  %v2956 = vpop.permute.xlu0 %2955
  %2957 = vrot.lane.b32.xlu0 %v2775, 16
  %v2958 = vpop.permute.xlu0 %2957
  %2959 = vrot.lane.b32.xlu0 %v2776, 16
  %v2960 = vpop.permute.xlu0 %2959
  %2961 = vrot.lane.b32.xlu0 %v2777, 16
  %v2962 = vpop.permute.xlu0 %2961
  %2963 = vrot.lane.b32.xlu0 %v2778, 16
  %v2964 = vpop.permute.xlu0 %2963
  %2965 = vrot.lane.b32.xlu0 %v2779, 16
  %v2966 = vpop.permute.xlu0 %2965
  %2967 = vrot.lane.b32.xlu0 %v2780, 16
  %v2968 = vpop.permute.xlu0 %2967
  %2969 = vrot.lane.b32.xlu0 %v2781, 16
  %v2970 = vpop.permute.xlu0 %2969
  %2971 = vrot.lane.b32.xlu0 %v2782, 16
  %v2972 = vpop.permute.xlu0 %2971
  %2973 = vrot.lane.b32.xlu0 %v2783, 16
  %v2974 = vpop.permute.xlu0 %2973
  %2975 = vrot.lane.b32.xlu0 %v2784, 16
  %v2976 = vpop.permute.xlu0 %2975
  %2977 = vrot.lane.b32.xlu0 %v2785, 16
  %v2978 = vpop.permute.xlu0 %2977
  %2979 = vrot.lane.b32.xlu0 %v2786, 16
  %v2980 = vpop.permute.xlu0 %2979
  %2981 = vrot.lane.b32.xlu0 %v2787, 16
  %v2982 = vpop.permute.xlu0 %2981
  %2983 = vrot.lane.b32.xlu0 %v2788, 16
  %v2984 = vpop.permute.xlu0 %2983
  %2985 = vrot.lane.b32.xlu0 %v2789, 16
  %v2986 = vpop.permute.xlu0 %2985
  %2987 = vrot.lane.b32.xlu0 %v2790, 16
  %v2988 = vpop.permute.xlu0 %2987
  %2989 = vrot.lane.b32.xlu0 %v2791, 16
  %v2990 = vpop.permute.xlu0 %2989
  %2991 = vrot.lane.b32.xlu0 %v2792, 16
  %v2992 = vpop.permute.xlu0 %2991
  %2993 = vrot.lane.b32.xlu0 %v2793, 16
  %v2994 = vpop.permute.xlu0 %2993
  %vm3062 = vcmask 158848
  %3063 = vst.msk [vmem:[#allocation4] sm:$0xf] %vm3062, %v2862
  %3064 = vst.msk [vmem:[#allocation4 + $0x4] sm:$0xf] %vm3062, %v2864
  %3065 = vst.msk [vmem:[#allocation4 + $0x8] sm:$0xf] %vm3062, %v2866
  %3066 = vst.msk [vmem:[#allocation4 + $0xc] sm:$0xf] %vm3062, %v2868
  %3067 = vst.msk [vmem:[#allocation4 + $0x10] sm:$0xf] %vm3062, %v2870
  %3068 = vst.msk [vmem:[#allocation4 + $0x14] sm:$0xf] %vm3062, %v2872
  %3069 = vst.msk [vmem:[#allocation4 + $0x18] sm:$0xf] %vm3062, %v2874
  %3070 = vst.msk [vmem:[#allocation4 + $0x1c] sm:$0xf] %vm3062, %v2876
  %3071 = vst.msk [vmem:[#allocation4 + $0x20] sm:$0xf] %vm3062, %v2878
  %3072 = vst.msk [vmem:[#allocation4 + $0x24] sm:$0xf] %vm3062, %v2880
  %3073 = vst.msk [vmem:[#allocation4 + $0x28] sm:$0xf] %vm3062, %v2882
  %3074 = vst.msk [vmem:[#allocation4 + $0x2c] sm:$0xf] %vm3062, %v2884
  %3075 = vst.msk [vmem:[#allocation4 + $0x30] sm:$0xf] %vm3062, %v2886
  %3076 = vst.msk [vmem:[#allocation4 + $0x34] sm:$0xf] %vm3062, %v2888
  %3077 = vst.msk [vmem:[#allocation4 + $0x38] sm:$0xf] %vm3062, %v2890
  %3078 = vst.msk [vmem:[#allocation4 + $0x3c] sm:$0xf] %vm3062, %v2892
  %3079 = vst.msk [vmem:[#allocation4 + $0x40] sm:$0xf] %vm3062, %v2894
  %3080 = vst.msk [vmem:[#allocation4 + $0x44] sm:$0xf] %vm3062, %v2896
  %3081 = vst.msk [vmem:[#allocation4 + $0x48] sm:$0xf] %vm3062, %v2898
  %3082 = vst.msk [vmem:[#allocation4 + $0x4c] sm:$0xf] %vm3062, %v2900
  %3083 = vst.msk [vmem:[#allocation4 + $0x50] sm:$0xf] %vm3062, %v2902
  %3084 = vst.msk [vmem:[#allocation4 + $0x54] sm:$0xf] %vm3062, %v2904
  %3085 = vst.msk [vmem:[#allocation4 + $0x58] sm:$0xf] %vm3062, %v2906
  %3086 = vst.msk [vmem:[#allocation4 + $0x5c] sm:$0xf] %vm3062, %v2908
  %3087 = vst.msk [vmem:[#allocation4 + $0x60] sm:$0xf] %vm3062, %v2910
  %3088 = vst.msk [vmem:[#allocation4 + $0x64] sm:$0xf] %vm3062, %v2912
  %3089 = vst.msk [vmem:[#allocation4 + $0x68] sm:$0xf] %vm3062, %v2914
  %3090 = vst.msk [vmem:[#allocation4 + $0x6c] sm:$0xf] %vm3062, %v2916
  %3091 = vst.msk [vmem:[#allocation4 + $0x70] sm:$0xf] %vm3062, %v2918
  %3092 = vst.msk [vmem:[#allocation4 + $0x74] sm:$0xf] %vm3062, %v2920
  %3093 = vst.msk [vmem:[#allocation4 + $0x78] sm:$0xf] %vm3062, %v2922
  %3094 = vst.msk [vmem:[#allocation4 + $0x7c] sm:$0xf] %vm3062, %v2924
  %3095 = vst.msk [vmem:[#allocation4 + $0x80] sm:$0xf] %vm3062, %v2926
  %3096 = vst.msk [vmem:[#allocation4 + $0x84] sm:$0xf] %vm3062, %v2928
  %3097 = vst.msk [vmem:[#allocation4 + $0x88] sm:$0xf] %vm3062, %v2930
  %3098 = vst.msk [vmem:[#allocation4 + $0x8c] sm:$0xf] %vm3062, %v2932
  %3099 = vst.msk [vmem:[#allocation4 + $0x90] sm:$0xf] %vm3062, %v2934
  %3100 = vst.msk [vmem:[#allocation4 + $0x94] sm:$0xf] %vm3062, %v2936
  %3101 = vst.msk [vmem:[#allocation4 + $0x98] sm:$0xf] %vm3062, %v2938
  %3102 = vst.msk [vmem:[#allocation4 + $0x9c] sm:$0xf] %vm3062, %v2940
  %3103 = vst.msk [vmem:[#allocation4 + $0xa0] sm:$0xf] %vm3062, %v2942
  %3104 = vst.msk [vmem:[#allocation4 + $0xa4] sm:$0xf] %vm3062, %v2944
  %3105 = vst.msk [vmem:[#allocation4 + $0xa8] sm:$0xf] %vm3062, %v2946
  %3106 = vst.msk [vmem:[#allocation4 + $0xac] sm:$0xf] %vm3062, %v2948
  %3107 = vst.msk [vmem:[#allocation4 + $0xb0] sm:$0xf] %vm3062, %v2950
  %3108 = vst.msk [vmem:[#allocation4 + $0xb4] sm:$0xf] %vm3062, %v2952
  %3109 = vst.msk [vmem:[#allocation4 + $0xb8] sm:$0xf] %vm3062, %v2954
  %3110 = vst.msk [vmem:[#allocation4 + $0xbc] sm:$0xf] %vm3062, %v2956
  %3111 = vst.msk [vmem:[#allocation4 + $0xc0] sm:$0xf] %vm3062, %v2958
  %3112 = vst.msk [vmem:[#allocation4 + $0xc4] sm:$0xf] %vm3062, %v2960
  %3113 = vst.msk [vmem:[#allocation4 + $0xc8] sm:$0xf] %vm3062, %v2962
  %3114 = vst.msk [vmem:[#allocation4 + $0xcc] sm:$0xf] %vm3062, %v2964
  %3115 = vst.msk [vmem:[#allocation4 + $0xd0] sm:$0xf] %vm3062, %v2966
  %3116 = vst.msk [vmem:[#allocation4 + $0xd4] sm:$0xf] %vm3062, %v2968
  %3117 = vst.msk [vmem:[#allocation4 + $0xd8] sm:$0xf] %vm3062, %v2970
  %3118 = vst.msk [vmem:[#allocation4 + $0xdc] sm:$0xf] %vm3062, %v2972
  %3119 = vst.msk [vmem:[#allocation4 + $0xe0] sm:$0xf] %vm3062, %v2974
  %3120 = vst.msk [vmem:[#allocation4 + $0xe4] sm:$0xf] %vm3062, %v2976
  %3121 = vst.msk [vmem:[#allocation4 + $0xe8] sm:$0xf] %vm3062, %v2978
  %3122 = vst.msk [vmem:[#allocation4 + $0xec] sm:$0xf] %vm3062, %v2980
  %3123 = vst.msk [vmem:[#allocation4 + $0xf0] sm:$0xf] %vm3062, %v2982
  %3124 = vst.msk [vmem:[#allocation4 + $0xf4] sm:$0xf] %vm3062, %v2984
  %3125 = vst.msk [vmem:[#allocation4 + $0xf8] sm:$0xf] %vm3062, %v2986
  %3126 = vst.msk [vmem:[#allocation4 + $0xfc] sm:$0xf] %vm3062, %v2988
  %3127 = vst.msk [vmem:[#allocation4 + $0x100] sm:$0xf] %vm3062, %v2990
  %3128 = vst.msk [vmem:[#allocation4 + $0x104] sm:$0xf] %vm3062, %v2992
  %3129 = vst.msk [vmem:[#allocation4 + $0x108] sm:$0xf] %vm3062, %v2994
  %v3130 = vld [vmem:[#allocation2 + $0x19] sm:$0xff]
  %v3131 = vld [vmem:[#allocation2 + $0x21] sm:$0xff]
  %v3132 = vld [vmem:[#allocation2 + $0x29] sm:$0xff]
  %v3133 = vld [vmem:[#allocation2 + $0x31] sm:$0xff]
  %v3134 = vld [vmem:[#allocation2 + $0x39] sm:$0xff]
  %v3135 = vld [vmem:[#allocation2 + $0x41] sm:$0xff]
  %v3136 = vld [vmem:[#allocation2 + $0x49] sm:$0xff]
  %v3137 = vld [vmem:[#allocation2 + $0x51] sm:$0xff]
  %v3138 = vld [vmem:[#allocation2 + $0x59] sm:$0xff]
  %v3139 = vld [vmem:[#allocation2 + $0x61] sm:$0xff]
  %v3140 = vld [vmem:[#allocation2 + $0x69] sm:$0xff]
  %v3141 = vld [vmem:[#allocation2 + $0x71] sm:$0xff]
  %v3142 = vld [vmem:[#allocation2 + $0x79] sm:$0xff]
  %v3143 = vld [vmem:[#allocation2 + $0x81] sm:$0xff]
  %v3144 = vld [vmem:[#allocation2 + $0x89] sm:$0xff]
  %v3145 = vld [vmem:[#allocation2 + $0x91] sm:$0xff]
  %v3146 = vld [vmem:[#allocation2 + $0x99] sm:$0xff]
  %v3147 = vld [vmem:[#allocation2 + $0xa1] sm:$0xff]
  %v3148 = vld [vmem:[#allocation2 + $0xa9] sm:$0xff]
  %v3149 = vld [vmem:[#allocation2 + $0xb1] sm:$0xff]
  %v3150 = vld [vmem:[#allocation2 + $0xb9] sm:$0xff]
  %v3151 = vld [vmem:[#allocation2 + $0xc1] sm:$0xff]
  %v3152 = vld [vmem:[#allocation2 + $0xc9] sm:$0xff]
  %v3153 = vld [vmem:[#allocation2 + $0xd1] sm:$0xff]
  %v3154 = vld [vmem:[#allocation2 + $0xd9] sm:$0xff]
  %v3155 = vld [vmem:[#allocation2 + $0xe1] sm:$0xff]
  %v3156 = vld [vmem:[#allocation2 + $0xe9] sm:$0xff]
  %v3157 = vld [vmem:[#allocation2 + $0xf1] sm:$0xff]
  %v3158 = vld [vmem:[#allocation2 + $0xf9] sm:$0xff]
  %v3159 = vld [vmem:[#allocation2 + $0x101] sm:$0xff]
  %v3160 = vld [vmem:[#allocation2 + $0x109] sm:$0xff]
  %v3161 = vld [vmem:[#allocation2 + $0x111] sm:$0xff]
  %v3162 = vld [vmem:[#allocation2 + $0x119] sm:$0xff]
  %v3163 = vld [vmem:[#allocation2 + $0x121] sm:$0xff]
  %v3164 = vld [vmem:[#allocation2 + $0x129] sm:$0xff]
  %v3165 = vld [vmem:[#allocation2 + $0x131] sm:$0xff]
  %v3166 = vld [vmem:[#allocation2 + $0x139] sm:$0xff]
  %v3167 = vld [vmem:[#allocation2 + $0x141] sm:$0xff]
  %v3168 = vld [vmem:[#allocation2 + $0x149] sm:$0xff]
  %v3169 = vld [vmem:[#allocation2 + $0x151] sm:$0xff]
  %v3170 = vld [vmem:[#allocation2 + $0x159] sm:$0xff]
  %v3171 = vld [vmem:[#allocation2 + $0x161] sm:$0xff]
  %v3172 = vld [vmem:[#allocation2 + $0x169] sm:$0xff]
  %v3173 = vld [vmem:[#allocation2 + $0x171] sm:$0xff]
  %v3174 = vld [vmem:[#allocation2 + $0x179] sm:$0xff]
  %v3175 = vld [vmem:[#allocation2 + $0x181] sm:$0xff]
  %v3176 = vld [vmem:[#allocation2 + $0x189] sm:$0xff]
  %v3177 = vld [vmem:[#allocation2 + $0x191] sm:$0xff]
  %v3178 = vld [vmem:[#allocation2 + $0x199] sm:$0xff]
  %v3179 = vld [vmem:[#allocation2 + $0x1a1] sm:$0xff]
  %v3180 = vld [vmem:[#allocation2 + $0x1a9] sm:$0xff]
  %v3181 = vld [vmem:[#allocation2 + $0x1b1] sm:$0xff]
  %v3182 = vld [vmem:[#allocation2 + $0x1b9] sm:$0xff]
  %v3183 = vld [vmem:[#allocation2 + $0x1c1] sm:$0xff]
  %v3184 = vld [vmem:[#allocation2 + $0x1c9] sm:$0xff]
  %v3185 = vld [vmem:[#allocation2 + $0x1d1] sm:$0xff]
  %v3186 = vld [vmem:[#allocation2 + $0x1d9] sm:$0xff]
  %v3187 = vld [vmem:[#allocation2 + $0x1e1] sm:$0xff]
  %v3188 = vld [vmem:[#allocation2 + $0x1e9] sm:$0xff]
  %v3189 = vld [vmem:[#allocation2 + $0x1f1] sm:$0xff]
  %v3190 = vld [vmem:[#allocation2 + $0x1f9] sm:$0xff]
  %v3191 = vld [vmem:[#allocation2 + $0x201] sm:$0xff]
  %v3192 = vld [vmem:[#allocation2 + $0x209] sm:$0xff]
  %v3193 = vld [vmem:[#allocation2 + $0x211] sm:$0xff]
  %v3194 = vld [vmem:[#allocation2 + $0x219] sm:$0xff]
  %v3195 = vld [vmem:[#allocation2 + $0x221] sm:$0xff]
  %v3196 = vld [vmem:[#allocation2 + $0x229] sm:$0xff]
  %v3197 = vmul.f32 %v3130, %v1387
  %v3198 = vmul.f32 %v3131, %v1391
  %v3199 = vmul.f32 %v3132, %v1395
  %v3200 = vmul.f32 %v3133, %v1399
  %v3201 = vmul.f32 %v3134, %v1403
  %v3202 = vmul.f32 %v3135, %v1407
  %v3203 = vmul.f32 %v3136, %v1411
  %v3204 = vmul.f32 %v3137, %v1415
  %v3205 = vmul.f32 %v3138, %v1419
  %v3206 = vmul.f32 %v3139, %v1423
  %v3207 = vmul.f32 %v3140, %v1427
  %v3208 = vmul.f32 %v3141, %v1431
  %v3209 = vmul.f32 %v3142, %v1435
  %v3210 = vmul.f32 %v3143, %v1439
  %v3211 = vmul.f32 %v3144, %v1443
  %v3212 = vmul.f32 %v3145, %v1447
  %v3213 = vmul.f32 %v3146, %v1451
  %v3214 = vmul.f32 %v3147, %v1455
  %v3215 = vmul.f32 %v3148, %v1459
  %v3216 = vmul.f32 %v3149, %v1463
  %v3217 = vmul.f32 %v3150, %v1467
  %v3218 = vmul.f32 %v3151, %v1471
  %v3219 = vmul.f32 %v3152, %v1475
  %v3220 = vmul.f32 %v3153, %v1479
  %v3221 = vmul.f32 %v3154, %v1483
  %v3222 = vmul.f32 %v3155, %v1487
  %v3223 = vmul.f32 %v3156, %v1491
  %v3224 = vmul.f32 %v3157, %v1495
  %v3225 = vmul.f32 %v3158, %v1499
  %v3226 = vmul.f32 %v3159, %v1503
  %v3227 = vmul.f32 %v3160, %v1507
  %v3228 = vmul.f32 %v3161, %v1511
  %v3229 = vmul.f32 %v3162, %v1515
  %v3230 = vmul.f32 %v3163, %v1519
  %v3231 = vmul.f32 %v3164, %v1523
  %v3232 = vmul.f32 %v3165, %v1527
  %v3233 = vmul.f32 %v3166, %v1531
  %v3234 = vmul.f32 %v3167, %v1535
  %v3235 = vmul.f32 %v3168, %v1539
  %v3236 = vmul.f32 %v3169, %v1543
  %v3237 = vmul.f32 %v3170, %v1547
  %v3238 = vmul.f32 %v3171, %v1551
  %v3239 = vmul.f32 %v3172, %v1555
  %v3240 = vmul.f32 %v3173, %v1559
  %v3241 = vmul.f32 %v3174, %v1563
  %v3242 = vmul.f32 %v3175, %v1567
  %v3243 = vmul.f32 %v3176, %v1571
  %v3244 = vmul.f32 %v3177, %v1575
  %v3245 = vmul.f32 %v3178, %v1579
  %v3246 = vmul.f32 %v3179, %v1583
  %v3247 = vmul.f32 %v3180, %v1587
  %v3248 = vmul.f32 %v3181, %v1591
  %v3249 = vmul.f32 %v3182, %v1595
  %v3250 = vmul.f32 %v3183, %v1599
  %v3251 = vmul.f32 %v3184, %v1603
  %v3252 = vmul.f32 %v3185, %v1607
  %v3253 = vmul.f32 %v3186, %v1611
  %v3254 = vmul.f32 %v3187, %v1615
  %v3255 = vmul.f32 %v3188, %v1619
  %v3256 = vmul.f32 %v3189, %v1623
  %v3257 = vmul.f32 %v3190, %v1627
  %v3258 = vmul.f32 %v3191, %v1631
  %v3259 = vmul.f32 %v3192, %v1635
  %v3260 = vmul.f32 %v3193, %v1639
  %v3261 = vmul.f32 %v3194, %v1643
  %v3262 = vmul.f32 %v3195, %v1647
  %v3263 = vmul.f32 %v3196, %v1651
  %v3264 = vpack.c.bf16 %v3197, %v3197
  %v3265 = vpack.c.bf16 %v3198, %v3198
  %v3266 = vpack.c.bf16 %v3199, %v3199
  %v3267 = vpack.c.bf16 %v3200, %v3200
  %v3268 = vpack.c.bf16 %v3201, %v3201
  %v3269 = vpack.c.bf16 %v3202, %v3202
  %v3270 = vpack.c.bf16 %v3203, %v3203
  %v3271 = vpack.c.bf16 %v3204, %v3204
  %v3272 = vpack.c.bf16 %v3205, %v3205
  %v3273 = vpack.c.bf16 %v3206, %v3206
  %v3274 = vpack.c.bf16 %v3207, %v3207
  %v3275 = vpack.c.bf16 %v3208, %v3208
  %v3276 = vpack.c.bf16 %v3209, %v3209
  %v3277 = vpack.c.bf16 %v3210, %v3210
  %v3278 = vpack.c.bf16 %v3211, %v3211
  %v3279 = vpack.c.bf16 %v3212, %v3212
  %v3280 = vpack.c.bf16 %v3213, %v3213
  %v3281 = vpack.c.bf16 %v3214, %v3214
  %v3282 = vpack.c.bf16 %v3215, %v3215
  %v3283 = vpack.c.bf16 %v3216, %v3216
  %v3284 = vpack.c.bf16 %v3217, %v3217
  %v3285 = vpack.c.bf16 %v3218, %v3218
  %v3286 = vpack.c.bf16 %v3219, %v3219
  %v3287 = vpack.c.bf16 %v3220, %v3220
  %v3288 = vpack.c.bf16 %v3221, %v3221
  %v3289 = vpack.c.bf16 %v3222, %v3222
  %v3290 = vpack.c.bf16 %v3223, %v3223
  %v3291 = vpack.c.bf16 %v3224, %v3224
  %v3292 = vpack.c.bf16 %v3225, %v3225
  %v3293 = vpack.c.bf16 %v3226, %v3226
  %v3294 = vpack.c.bf16 %v3227, %v3227
  %v3295 = vpack.c.bf16 %v3228, %v3228
  %v3296 = vpack.c.bf16 %v3229, %v3229
  %v3297 = vpack.c.bf16 %v3230, %v3230
  %v3298 = vpack.c.bf16 %v3231, %v3231
  %v3299 = vpack.c.bf16 %v3232, %v3232
  %v3300 = vpack.c.bf16 %v3233, %v3233
  %v3301 = vpack.c.bf16 %v3234, %v3234
  %v3302 = vpack.c.bf16 %v3235, %v3235
  %v3303 = vpack.c.bf16 %v3236, %v3236
  %v3304 = vpack.c.bf16 %v3237, %v3237
  %v3305 = vpack.c.bf16 %v3238, %v3238
  %v3306 = vpack.c.bf16 %v3239, %v3239
  %v3307 = vpack.c.bf16 %v3240, %v3240
  %v3308 = vpack.c.bf16 %v3241, %v3241
  %v3309 = vpack.c.bf16 %v3242, %v3242
  %v3310 = vpack.c.bf16 %v3243, %v3243
  %v3311 = vpack.c.bf16 %v3244, %v3244
  %v3312 = vpack.c.bf16 %v3245, %v3245
  %v3313 = vpack.c.bf16 %v3246, %v3246
  %v3314 = vpack.c.bf16 %v3247, %v3247
  %v3315 = vpack.c.bf16 %v3248, %v3248
  %v3316 = vpack.c.bf16 %v3249, %v3249
  %v3317 = vpack.c.bf16 %v3250, %v3250
  %v3318 = vpack.c.bf16 %v3251, %v3251
  %v3319 = vpack.c.bf16 %v3252, %v3252
  %v3320 = vpack.c.bf16 %v3253, %v3253
  %v3321 = vpack.c.bf16 %v3254, %v3254
  %v3322 = vpack.c.bf16 %v3255, %v3255
  %v3323 = vpack.c.bf16 %v3256, %v3256
  %v3324 = vpack.c.bf16 %v3257, %v3257
  %v3325 = vpack.c.bf16 %v3258, %v3258
  %v3326 = vpack.c.bf16 %v3259, %v3259
  %v3327 = vpack.c.bf16 %v3260, %v3260
  %v3328 = vpack.c.bf16 %v3261, %v3261
  %v3329 = vpack.c.bf16 %v3262, %v3262
  %v3330 = vpack.c.bf16 %v3263, %v3263
  %3398 = vrot.lane.b32.xlu0 %v3264, 20
  %v3399 = vpop.permute.xlu0 %3398
  %3400 = vrot.lane.b32.xlu0 %v3265, 20
  %v3401 = vpop.permute.xlu0 %3400
  %3402 = vrot.lane.b32.xlu0 %v3266, 20
  %v3403 = vpop.permute.xlu0 %3402
  %3404 = vrot.lane.b32.xlu0 %v3267, 20
  %v3405 = vpop.permute.xlu0 %3404
  %3406 = vrot.lane.b32.xlu0 %v3268, 20
  %v3407 = vpop.permute.xlu0 %3406
  %3408 = vrot.lane.b32.xlu0 %v3269, 20
  %v3409 = vpop.permute.xlu0 %3408
  %3410 = vrot.lane.b32.xlu0 %v3270, 20
  %v3411 = vpop.permute.xlu0 %3410
  %3412 = vrot.lane.b32.xlu0 %v3271, 20
  %v3413 = vpop.permute.xlu0 %3412
  %3414 = vrot.lane.b32.xlu0 %v3272, 20
  %v3415 = vpop.permute.xlu0 %3414
  %3416 = vrot.lane.b32.xlu0 %v3273, 20
  %v3417 = vpop.permute.xlu0 %3416
  %3418 = vrot.lane.b32.xlu0 %v3274, 20
  %v3419 = vpop.permute.xlu0 %3418
  %3420 = vrot.lane.b32.xlu0 %v3275, 20
  %v3421 = vpop.permute.xlu0 %3420
  %3422 = vrot.lane.b32.xlu0 %v3276, 20
  %v3423 = vpop.permute.xlu0 %3422
  %3424 = vrot.lane.b32.xlu0 %v3277, 20
  %v3425 = vpop.permute.xlu0 %3424
  %3426 = vrot.lane.b32.xlu0 %v3278, 20
  %v3427 = vpop.permute.xlu0 %3426
  %3428 = vrot.lane.b32.xlu0 %v3279, 20
  %v3429 = vpop.permute.xlu0 %3428
  %3430 = vrot.lane.b32.xlu0 %v3280, 20
  %v3431 = vpop.permute.xlu0 %3430
  %3432 = vrot.lane.b32.xlu0 %v3281, 20
  %v3433 = vpop.permute.xlu0 %3432
  %3434 = vrot.lane.b32.xlu0 %v3282, 20
  %v3435 = vpop.permute.xlu0 %3434
  %3436 = vrot.lane.b32.xlu0 %v3283, 20
  %v3437 = vpop.permute.xlu0 %3436
  %3438 = vrot.lane.b32.xlu0 %v3284, 20
  %v3439 = vpop.permute.xlu0 %3438
  %3440 = vrot.lane.b32.xlu0 %v3285, 20
  %v3441 = vpop.permute.xlu0 %3440
  %3442 = vrot.lane.b32.xlu0 %v3286, 20
  %v3443 = vpop.permute.xlu0 %3442
  %3444 = vrot.lane.b32.xlu0 %v3287, 20
  %v3445 = vpop.permute.xlu0 %3444
  %3446 = vrot.lane.b32.xlu0 %v3288, 20
  %v3447 = vpop.permute.xlu0 %3446
  %3448 = vrot.lane.b32.xlu0 %v3289, 20
  %v3449 = vpop.permute.xlu0 %3448
  %3450 = vrot.lane.b32.xlu0 %v3290, 20
  %v3451 = vpop.permute.xlu0 %3450
  %3452 = vrot.lane.b32.xlu0 %v3291, 20
  %v3453 = vpop.permute.xlu0 %3452
  %3454 = vrot.lane.b32.xlu0 %v3292, 20
  %v3455 = vpop.permute.xlu0 %3454
  %3456 = vrot.lane.b32.xlu0 %v3293, 20
  %v3457 = vpop.permute.xlu0 %3456
  %3458 = vrot.lane.b32.xlu0 %v3294, 20
  %v3459 = vpop.permute.xlu0 %3458
  %3460 = vrot.lane.b32.xlu0 %v3295, 20
  %v3461 = vpop.permute.xlu0 %3460
  %3462 = vrot.lane.b32.xlu0 %v3296, 20
  %v3463 = vpop.permute.xlu0 %3462
  %3464 = vrot.lane.b32.xlu0 %v3297, 20
  %v3465 = vpop.permute.xlu0 %3464
  %3466 = vrot.lane.b32.xlu0 %v3298, 20
  %v3467 = vpop.permute.xlu0 %3466
  %3468 = vrot.lane.b32.xlu0 %v3299, 20
  %v3469 = vpop.permute.xlu0 %3468
  %3470 = vrot.lane.b32.xlu0 %v3300, 20
  %v3471 = vpop.permute.xlu0 %3470
  %3472 = vrot.lane.b32.xlu0 %v3301, 20
  %v3473 = vpop.permute.xlu0 %3472
  %3474 = vrot.lane.b32.xlu0 %v3302, 20
  %v3475 = vpop.permute.xlu0 %3474
  %3476 = vrot.lane.b32.xlu0 %v3303, 20
  %v3477 = vpop.permute.xlu0 %3476
  %3478 = vrot.lane.b32.xlu0 %v3304, 20
  %v3479 = vpop.permute.xlu0 %3478
  %3480 = vrot.lane.b32.xlu0 %v3305, 20
  %v3481 = vpop.permute.xlu0 %3480
  %3482 = vrot.lane.b32.xlu0 %v3306, 20
  %v3483 = vpop.permute.xlu0 %3482
  %3484 = vrot.lane.b32.xlu0 %v3307, 20
  %v3485 = vpop.permute.xlu0 %3484
  %3486 = vrot.lane.b32.xlu0 %v3308, 20
  %v3487 = vpop.permute.xlu0 %3486
  %3488 = vrot.lane.b32.xlu0 %v3309, 20
  %v3489 = vpop.permute.xlu0 %3488
  %3490 = vrot.lane.b32.xlu0 %v3310, 20
  %v3491 = vpop.permute.xlu0 %3490
  %3492 = vrot.lane.b32.xlu0 %v3311, 20
  %v3493 = vpop.permute.xlu0 %3492
  %3494 = vrot.lane.b32.xlu0 %v3312, 20
  %v3495 = vpop.permute.xlu0 %3494
  %3496 = vrot.lane.b32.xlu0 %v3313, 20
  %v3497 = vpop.permute.xlu0 %3496
  %3498 = vrot.lane.b32.xlu0 %v3314, 20
  %v3499 = vpop.permute.xlu0 %3498
  %3500 = vrot.lane.b32.xlu0 %v3315, 20
  %v3501 = vpop.permute.xlu0 %3500
  %3502 = vrot.lane.b32.xlu0 %v3316, 20
  %v3503 = vpop.permute.xlu0 %3502
  %3504 = vrot.lane.b32.xlu0 %v3317, 20
  %v3505 = vpop.permute.xlu0 %3504
  %3506 = vrot.lane.b32.xlu0 %v3318, 20
  %v3507 = vpop.permute.xlu0 %3506
  %3508 = vrot.lane.b32.xlu0 %v3319, 20
  %v3509 = vpop.permute.xlu0 %3508
  %3510 = vrot.lane.b32.xlu0 %v3320, 20
  %v3511 = vpop.permute.xlu0 %3510
  %3512 = vrot.lane.b32.xlu0 %v3321, 20
  %v3513 = vpop.permute.xlu0 %3512
  %3514 = vrot.lane.b32.xlu0 %v3322, 20
  %v3515 = vpop.permute.xlu0 %3514
  %3516 = vrot.lane.b32.xlu0 %v3323, 20
  %v3517 = vpop.permute.xlu0 %3516
  %3518 = vrot.lane.b32.xlu0 %v3324, 20
  %v3519 = vpop.permute.xlu0 %3518
  %3520 = vrot.lane.b32.xlu0 %v3325, 20
  %v3521 = vpop.permute.xlu0 %3520
  %3522 = vrot.lane.b32.xlu0 %v3326, 20
  %v3523 = vpop.permute.xlu0 %3522
  %3524 = vrot.lane.b32.xlu0 %v3327, 20
  %v3525 = vpop.permute.xlu0 %3524
  %3526 = vrot.lane.b32.xlu0 %v3328, 20
  %v3527 = vpop.permute.xlu0 %3526
  %3528 = vrot.lane.b32.xlu0 %v3329, 20
  %v3529 = vpop.permute.xlu0 %3528
  %3530 = vrot.lane.b32.xlu0 %v3330, 20
  %v3531 = vpop.permute.xlu0 %3530
  %vm3599 = vcmask 191648
  %3600 = vst.msk [vmem:[#allocation4] sm:$0xf] %vm3599, %v3399
  %3601 = vst.msk [vmem:[#allocation4 + $0x4] sm:$0xf] %vm3599, %v3401
  %3602 = vst.msk [vmem:[#allocation4 + $0x8] sm:$0xf] %vm3599, %v3403
  %3603 = vst.msk [vmem:[#allocation4 + $0xc] sm:$0xf] %vm3599, %v3405
  %3604 = vst.msk [vmem:[#allocation4 + $0x10] sm:$0xf] %vm3599, %v3407
  %3605 = vst.msk [vmem:[#allocation4 + $0x14] sm:$0xf] %vm3599, %v3409
  %3606 = vst.msk [vmem:[#allocation4 + $0x18] sm:$0xf] %vm3599, %v3411
  %3607 = vst.msk [vmem:[#allocation4 + $0x1c] sm:$0xf] %vm3599, %v3413
  %3608 = vst.msk [vmem:[#allocation4 + $0x20] sm:$0xf] %vm3599, %v3415
  %3609 = vst.msk [vmem:[#allocation4 + $0x24] sm:$0xf] %vm3599, %v3417
  %3610 = vst.msk [vmem:[#allocation4 + $0x28] sm:$0xf] %vm3599, %v3419
  %3611 = vst.msk [vmem:[#allocation4 + $0x2c] sm:$0xf] %vm3599, %v3421
  %3612 = vst.msk [vmem:[#allocation4 + $0x30] sm:$0xf] %vm3599, %v3423
  %3613 = vst.msk [vmem:[#allocation4 + $0x34] sm:$0xf] %vm3599, %v3425
  %3614 = vst.msk [vmem:[#allocation4 + $0x38] sm:$0xf] %vm3599, %v3427
  %3615 = vst.msk [vmem:[#allocation4 + $0x3c] sm:$0xf] %vm3599, %v3429
  %3616 = vst.msk [vmem:[#allocation4 + $0x40] sm:$0xf] %vm3599, %v3431
  %3617 = vst.msk [vmem:[#allocation4 + $0x44] sm:$0xf] %vm3599, %v3433
  %3618 = vst.msk [vmem:[#allocation4 + $0x48] sm:$0xf] %vm3599, %v3435
  %3619 = vst.msk [vmem:[#allocation4 + $0x4c] sm:$0xf] %vm3599, %v3437
  %3620 = vst.msk [vmem:[#allocation4 + $0x50] sm:$0xf] %vm3599, %v3439
  %3621 = vst.msk [vmem:[#allocation4 + $0x54] sm:$0xf] %vm3599, %v3441
  %3622 = vst.msk [vmem:[#allocation4 + $0x58] sm:$0xf] %vm3599, %v3443
  %3623 = vst.msk [vmem:[#allocation4 + $0x5c] sm:$0xf] %vm3599, %v3445
  %3624 = vst.msk [vmem:[#allocation4 + $0x60] sm:$0xf] %vm3599, %v3447
  %3625 = vst.msk [vmem:[#allocation4 + $0x64] sm:$0xf] %vm3599, %v3449
  %3626 = vst.msk [vmem:[#allocation4 + $0x68] sm:$0xf] %vm3599, %v3451
  %3627 = vst.msk [vmem:[#allocation4 + $0x6c] sm:$0xf] %vm3599, %v3453
  %3628 = vst.msk [vmem:[#allocation4 + $0x70] sm:$0xf] %vm3599, %v3455
  %3629 = vst.msk [vmem:[#allocation4 + $0x74] sm:$0xf] %vm3599, %v3457
  %3630 = vst.msk [vmem:[#allocation4 + $0x78] sm:$0xf] %vm3599, %v3459
  %3631 = vst.msk [vmem:[#allocation4 + $0x7c] sm:$0xf] %vm3599, %v3461
  %3632 = vst.msk [vmem:[#allocation4 + $0x80] sm:$0xf] %vm3599, %v3463
  %3633 = vst.msk [vmem:[#allocation4 + $0x84] sm:$0xf] %vm3599, %v3465
  %3634 = vst.msk [vmem:[#allocation4 + $0x88] sm:$0xf] %vm3599, %v3467
  %3635 = vst.msk [vmem:[#allocation4 + $0x8c] sm:$0xf] %vm3599, %v3469
  %3636 = vst.msk [vmem:[#allocation4 + $0x90] sm:$0xf] %vm3599, %v3471
  %3637 = vst.msk [vmem:[#allocation4 + $0x94] sm:$0xf] %vm3599, %v3473
  %3638 = vst.msk [vmem:[#allocation4 + $0x98] sm:$0xf] %vm3599, %v3475
  %3639 = vst.msk [vmem:[#allocation4 + $0x9c] sm:$0xf] %vm3599, %v3477
  %3640 = vst.msk [vmem:[#allocation4 + $0xa0] sm:$0xf] %vm3599, %v3479
  %3641 = vst.msk [vmem:[#allocation4 + $0xa4] sm:$0xf] %vm3599, %v3481
  %3642 = vst.msk [vmem:[#allocation4 + $0xa8] sm:$0xf] %vm3599, %v3483
  %3643 = vst.msk [vmem:[#allocation4 + $0xac] sm:$0xf] %vm3599, %v3485
  %3644 = vst.msk [vmem:[#allocation4 + $0xb0] sm:$0xf] %vm3599, %v3487
  %3645 = vst.msk [vmem:[#allocation4 + $0xb4] sm:$0xf] %vm3599, %v3489
  %3646 = vst.msk [vmem:[#allocation4 + $0xb8] sm:$0xf] %vm3599, %v3491
  %3647 = vst.msk [vmem:[#allocation4 + $0xbc] sm:$0xf] %vm3599, %v3493
  %3648 = vst.msk [vmem:[#allocation4 + $0xc0] sm:$0xf] %vm3599, %v3495
  %3649 = vst.msk [vmem:[#allocation4 + $0xc4] sm:$0xf] %vm3599, %v3497
  %3650 = vst.msk [vmem:[#allocation4 + $0xc8] sm:$0xf] %vm3599, %v3499
  %3651 = vst.msk [vmem:[#allocation4 + $0xcc] sm:$0xf] %vm3599, %v3501
  %3652 = vst.msk [vmem:[#allocation4 + $0xd0] sm:$0xf] %vm3599, %v3503
  %3653 = vst.msk [vmem:[#allocation4 + $0xd4] sm:$0xf] %vm3599, %v3505
  %3654 = vst.msk [vmem:[#allocation4 + $0xd8] sm:$0xf] %vm3599, %v3507
  %3655 = vst.msk [vmem:[#allocation4 + $0xdc] sm:$0xf] %vm3599, %v3509
  %3656 = vst.msk [vmem:[#allocation4 + $0xe0] sm:$0xf] %vm3599, %v3511
  %3657 = vst.msk [vmem:[#allocation4 + $0xe4] sm:$0xf] %vm3599, %v3513
  %3658 = vst.msk [vmem:[#allocation4 + $0xe8] sm:$0xf] %vm3599, %v3515
  %3659 = vst.msk [vmem:[#allocation4 + $0xec] sm:$0xf] %vm3599, %v3517
  %3660 = vst.msk [vmem:[#allocation4 + $0xf0] sm:$0xf] %vm3599, %v3519
  %3661 = vst.msk [vmem:[#allocation4 + $0xf4] sm:$0xf] %vm3599, %v3521
  %3662 = vst.msk [vmem:[#allocation4 + $0xf8] sm:$0xf] %vm3599, %v3523
  %3663 = vst.msk [vmem:[#allocation4 + $0xfc] sm:$0xf] %vm3599, %v3525
  %3664 = vst.msk [vmem:[#allocation4 + $0x100] sm:$0xf] %vm3599, %v3527
  %3665 = vst.msk [vmem:[#allocation4 + $0x104] sm:$0xf] %vm3599, %v3529
  %3666 = vst.msk [vmem:[#allocation4 + $0x108] sm:$0xf] %vm3599, %v3531
  %v3667 = vld [vmem:[#allocation2 + $0x27] sm:$0xff]
  %v3668 = vld [vmem:[#allocation2 + $0x2f] sm:$0xff]
  %v3669 = vld [vmem:[#allocation2 + $0x37] sm:$0xff]
  %v3670 = vld [vmem:[#allocation2 + $0x3f] sm:$0xff]
  %v3671 = vld [vmem:[#allocation2 + $0x47] sm:$0xff]
  %v3672 = vld [vmem:[#allocation2 + $0x4f] sm:$0xff]
  %v3673 = vld [vmem:[#allocation2 + $0x57] sm:$0xff]
  %v3674 = vld [vmem:[#allocation2 + $0x5f] sm:$0xff]
  %v3675 = vld [vmem:[#allocation2 + $0x67] sm:$0xff]
  %v3676 = vld [vmem:[#allocation2 + $0x6f] sm:$0xff]
  %v3677 = vld [vmem:[#allocation2 + $0x77] sm:$0xff]
  %v3678 = vld [vmem:[#allocation2 + $0x7f] sm:$0xff]
  %v3679 = vld [vmem:[#allocation2 + $0x87] sm:$0xff]
  %v3680 = vld [vmem:[#allocation2 + $0x8f] sm:$0xff]
  %v3681 = vld [vmem:[#allocation2 + $0x97] sm:$0xff]
  %v3682 = vld [vmem:[#allocation2 + $0x9f] sm:$0xff]
  %v3683 = vld [vmem:[#allocation2 + $0xa7] sm:$0xff]
  %v3684 = vld [vmem:[#allocation2 + $0xaf] sm:$0xff]
  %v3685 = vld [vmem:[#allocation2 + $0xb7] sm:$0xff]
  %v3686 = vld [vmem:[#allocation2 + $0xbf] sm:$0xff]
  %v3687 = vld [vmem:[#allocation2 + $0xc7] sm:$0xff]
  %v3688 = vld [vmem:[#allocation2 + $0xcf] sm:$0xff]
  %v3689 = vld [vmem:[#allocation2 + $0xd7] sm:$0xff]
  %v3690 = vld [vmem:[#allocation2 + $0xdf] sm:$0xff]
  %v3691 = vld [vmem:[#allocation2 + $0xe7] sm:$0xff]
  %v3692 = vld [vmem:[#allocation2 + $0xef] sm:$0xff]
  %v3693 = vld [vmem:[#allocation2 + $0xf7] sm:$0xff]
  %v3694 = vld [vmem:[#allocation2 + $0xff] sm:$0xff]
  %v3695 = vld [vmem:[#allocation2 + $0x107] sm:$0xff]
  %v3696 = vld [vmem:[#allocation2 + $0x10f] sm:$0xff]
  %v3697 = vld [vmem:[#allocation2 + $0x117] sm:$0xff]
  %v3698 = vld [vmem:[#allocation2 + $0x11f] sm:$0xff]
  %v3699 = vld [vmem:[#allocation2 + $0x127] sm:$0xff]
  %v3700 = vld [vmem:[#allocation2 + $0x12f] sm:$0xff]
  %v3701 = vld [vmem:[#allocation2 + $0x137] sm:$0xff]
  %v3702 = vld [vmem:[#allocation2 + $0x13f] sm:$0xff]
  %v3703 = vld [vmem:[#allocation2 + $0x147] sm:$0xff]
  %v3704 = vld [vmem:[#allocation2 + $0x14f] sm:$0xff]
  %v3705 = vld [vmem:[#allocation2 + $0x157] sm:$0xff]
  %v3706 = vld [vmem:[#allocation2 + $0x15f] sm:$0xff]
  %v3707 = vld [vmem:[#allocation2 + $0x167] sm:$0xff]
  %v3708 = vld [vmem:[#allocation2 + $0x16f] sm:$0xff]
  %v3709 = vld [vmem:[#allocation2 + $0x177] sm:$0xff]
  %v3710 = vld [vmem:[#allocation2 + $0x17f] sm:$0xff]
  %v3711 = vld [vmem:[#allocation2 + $0x187] sm:$0xff]
  %v3712 = vld [vmem:[#allocation2 + $0x18f] sm:$0xff]
  %v3713 = vld [vmem:[#allocation2 + $0x197] sm:$0xff]
  %v3714 = vld [vmem:[#allocation2 + $0x19f] sm:$0xff]
  %v3715 = vld [vmem:[#allocation2 + $0x1a7] sm:$0xff]
  %v3716 = vld [vmem:[#allocation2 + $0x1af] sm:$0xff]
  %v3717 = vld [vmem:[#allocation2 + $0x1b7] sm:$0xff]
  %v3718 = vld [vmem:[#allocation2 + $0x1bf] sm:$0xff]
  %v3719 = vld [vmem:[#allocation2 + $0x1c7] sm:$0xff]
  %v3720 = vld [vmem:[#allocation2 + $0x1cf] sm:$0xff]
  %v3721 = vld [vmem:[#allocation2 + $0x1d7] sm:$0xff]
  %v3722 = vld [vmem:[#allocation2 + $0x1df] sm:$0xff]
  %v3723 = vld [vmem:[#allocation2 + $0x1e7] sm:$0xff]
  %v3724 = vld [vmem:[#allocation2 + $0x1ef] sm:$0xff]
  %v3725 = vld [vmem:[#allocation2 + $0x1f7] sm:$0xff]
  %v3726 = vld [vmem:[#allocation2 + $0x1ff] sm:$0xff]
  %v3727 = vld [vmem:[#allocation2 + $0x207] sm:$0xff]
  %v3728 = vld [vmem:[#allocation2 + $0x20f] sm:$0xff]
  %v3729 = vld [vmem:[#allocation2 + $0x217] sm:$0xff]
  %v3730 = vld [vmem:[#allocation2 + $0x21f] sm:$0xff]
  %v3731 = vld [vmem:[#allocation2 + $0x227] sm:$0xff]
  %v3732 = vld [vmem:[#allocation2 + $0x22f] sm:$0xff]
  %v3733 = vld [vmem:[#allocation2 + $0x237] sm:$0xff]
  %v3734 = vmul.f32 %v3667, %v314
  %v3735 = vmul.f32 %v3668, %v319
  %v3736 = vmul.f32 %v3669, %v324
  %v3737 = vmul.f32 %v3670, %v329
  %v3738 = vmul.f32 %v3671, %v334
  %v3739 = vmul.f32 %v3672, %v339
  %v3740 = vmul.f32 %v3673, %v344
  %v3741 = vmul.f32 %v3674, %v349
  %v3742 = vmul.f32 %v3675, %v354
  %v3743 = vmul.f32 %v3676, %v359
  %v3744 = vmul.f32 %v3677, %v364
  %v3745 = vmul.f32 %v3678, %v369
  %v3746 = vmul.f32 %v3679, %v374
  %v3747 = vmul.f32 %v3680, %v379
  %v3748 = vmul.f32 %v3681, %v384
  %v3749 = vmul.f32 %v3682, %v389
  %v3750 = vmul.f32 %v3683, %v394
  %v3751 = vmul.f32 %v3684, %v399
  %v3752 = vmul.f32 %v3685, %v404
  %v3753 = vmul.f32 %v3686, %v409
  %v3754 = vmul.f32 %v3687, %v414
  %v3755 = vmul.f32 %v3688, %v419
  %v3756 = vmul.f32 %v3689, %v424
  %v3757 = vmul.f32 %v3690, %v429
  %v3758 = vmul.f32 %v3691, %v434
  %v3759 = vmul.f32 %v3692, %v439
  %v3760 = vmul.f32 %v3693, %v444
  %v3761 = vmul.f32 %v3694, %v449
  %v3762 = vmul.f32 %v3695, %v454
  %v3763 = vmul.f32 %v3696, %v459
  %v3764 = vmul.f32 %v3697, %v464
  %v3765 = vmul.f32 %v3698, %v469
  %v3766 = vmul.f32 %v3699, %v474
  %v3767 = vmul.f32 %v3700, %v479
  %v3768 = vmul.f32 %v3701, %v484
  %v3769 = vmul.f32 %v3702, %v489
  %v3770 = vmul.f32 %v3703, %v494
  %v3771 = vmul.f32 %v3704, %v499
  %v3772 = vmul.f32 %v3705, %v504
  %v3773 = vmul.f32 %v3706, %v509
  %v3774 = vmul.f32 %v3707, %v514
  %v3775 = vmul.f32 %v3708, %v519
  %v3776 = vmul.f32 %v3709, %v524
  %v3777 = vmul.f32 %v3710, %v529
  %v3778 = vmul.f32 %v3711, %v534
  %v3779 = vmul.f32 %v3712, %v539
  %v3780 = vmul.f32 %v3713, %v544
  %v3781 = vmul.f32 %v3714, %v549
  %v3782 = vmul.f32 %v3715, %v554
  %v3783 = vmul.f32 %v3716, %v559
  %v3784 = vmul.f32 %v3717, %v564
  %v3785 = vmul.f32 %v3718, %v569
  %v3786 = vmul.f32 %v3719, %v574
  %v3787 = vmul.f32 %v3720, %v579
  %v3788 = vmul.f32 %v3721, %v584
  %v3789 = vmul.f32 %v3722, %v589
  %v3790 = vmul.f32 %v3723, %v594
  %v3791 = vmul.f32 %v3724, %v599
  %v3792 = vmul.f32 %v3725, %v604
  %v3793 = vmul.f32 %v3726, %v609
  %v3794 = vmul.f32 %v3727, %v614
  %v3795 = vmul.f32 %v3728, %v619
  %v3796 = vmul.f32 %v3729, %v624
  %v3797 = vmul.f32 %v3730, %v629
  %v3798 = vmul.f32 %v3731, %v634
  %v3799 = vmul.f32 %v3732, %v639
  %v3800 = vmul.f32 %v3733, %v644
  %v3801 = vpack.c.bf16 %v3734, %v3734
  %v3802 = vpack.c.bf16 %v3735, %v3735
  %v3803 = vpack.c.bf16 %v3736, %v3736
  %v3804 = vpack.c.bf16 %v3737, %v3737
  %v3805 = vpack.c.bf16 %v3738, %v3738
  %v3806 = vpack.c.bf16 %v3739, %v3739
  %v3807 = vpack.c.bf16 %v3740, %v3740
  %v3808 = vpack.c.bf16 %v3741, %v3741
  %v3809 = vpack.c.bf16 %v3742, %v3742
  %v3810 = vpack.c.bf16 %v3743, %v3743
  %v3811 = vpack.c.bf16 %v3744, %v3744
  %v3812 = vpack.c.bf16 %v3745, %v3745
  %v3813 = vpack.c.bf16 %v3746, %v3746
  %v3814 = vpack.c.bf16 %v3747, %v3747
  %v3815 = vpack.c.bf16 %v3748, %v3748
  %v3816 = vpack.c.bf16 %v3749, %v3749
  %v3817 = vpack.c.bf16 %v3750, %v3750
  %v3818 = vpack.c.bf16 %v3751, %v3751
  %v3819 = vpack.c.bf16 %v3752, %v3752
  %v3820 = vpack.c.bf16 %v3753, %v3753
  %v3821 = vpack.c.bf16 %v3754, %v3754
  %v3822 = vpack.c.bf16 %v3755, %v3755
  %v3823 = vpack.c.bf16 %v3756, %v3756
  %v3824 = vpack.c.bf16 %v3757, %v3757
  %v3825 = vpack.c.bf16 %v3758, %v3758
  %v3826 = vpack.c.bf16 %v3759, %v3759
  %v3827 = vpack.c.bf16 %v3760, %v3760
  %v3828 = vpack.c.bf16 %v3761, %v3761
  %v3829 = vpack.c.bf16 %v3762, %v3762
  %v3830 = vpack.c.bf16 %v3763, %v3763
  %v3831 = vpack.c.bf16 %v3764, %v3764
  %v3832 = vpack.c.bf16 %v3765, %v3765
  %v3833 = vpack.c.bf16 %v3766, %v3766
  %v3834 = vpack.c.bf16 %v3767, %v3767
  %v3835 = vpack.c.bf16 %v3768, %v3768
  %v3836 = vpack.c.bf16 %v3769, %v3769
  %v3837 = vpack.c.bf16 %v3770, %v3770
  %v3838 = vpack.c.bf16 %v3771, %v3771
  %v3839 = vpack.c.bf16 %v3772, %v3772
  %v3840 = vpack.c.bf16 %v3773, %v3773
  %v3841 = vpack.c.bf16 %v3774, %v3774
  %v3842 = vpack.c.bf16 %v3775, %v3775
  %v3843 = vpack.c.bf16 %v3776, %v3776
  %v3844 = vpack.c.bf16 %v3777, %v3777
  %v3845 = vpack.c.bf16 %v3778, %v3778
  %v3846 = vpack.c.bf16 %v3779, %v3779
  %v3847 = vpack.c.bf16 %v3780, %v3780
  %v3848 = vpack.c.bf16 %v3781, %v3781
  %v3849 = vpack.c.bf16 %v3782, %v3782
  %v3850 = vpack.c.bf16 %v3783, %v3783
  %v3851 = vpack.c.bf16 %v3784, %v3784
  %v3852 = vpack.c.bf16 %v3785, %v3785
  %v3853 = vpack.c.bf16 %v3786, %v3786
  %v3854 = vpack.c.bf16 %v3787, %v3787
  %v3855 = vpack.c.bf16 %v3788, %v3788
  %v3856 = vpack.c.bf16 %v3789, %v3789
  %v3857 = vpack.c.bf16 %v3790, %v3790
  %v3858 = vpack.c.bf16 %v3791, %v3791
  %v3859 = vpack.c.bf16 %v3792, %v3792
  %v3860 = vpack.c.bf16 %v3793, %v3793
  %v3861 = vpack.c.bf16 %v3794, %v3794
  %v3862 = vpack.c.bf16 %v3795, %v3795
  %v3863 = vpack.c.bf16 %v3796, %v3796
  %v3864 = vpack.c.bf16 %v3797, %v3797
  %v3865 = vpack.c.bf16 %v3798, %v3798
  %v3866 = vpack.c.bf16 %v3799, %v3799
  %v3867 = vpack.c.bf16 %v3800, %v3800
  %3935 = vrot.lane.b32.xlu0 %v3801, 24
  %v3936 = vpop.permute.xlu0 %3935
  %3937 = vrot.lane.b32.xlu0 %v3802, 24
  %v3938 = vpop.permute.xlu0 %3937
  %3939 = vrot.lane.b32.xlu0 %v3803, 24
  %v3940 = vpop.permute.xlu0 %3939
  %3941 = vrot.lane.b32.xlu0 %v3804, 24
  %v3942 = vpop.permute.xlu0 %3941
  %3943 = vrot.lane.b32.xlu0 %v3805, 24
  %v3944 = vpop.permute.xlu0 %3943
  %3945 = vrot.lane.b32.xlu0 %v3806, 24
  %v3946 = vpop.permute.xlu0 %3945
  %3947 = vrot.lane.b32.xlu0 %v3807, 24
  %v3948 = vpop.permute.xlu0 %3947
  %3949 = vrot.lane.b32.xlu0 %v3808, 24
  %v3950 = vpop.permute.xlu0 %3949
  %3951 = vrot.lane.b32.xlu0 %v3809, 24
  %v3952 = vpop.permute.xlu0 %3951
  %3953 = vrot.lane.b32.xlu0 %v3810, 24
  %v3954 = vpop.permute.xlu0 %3953
  %3955 = vrot.lane.b32.xlu0 %v3811, 24
  %v3956 = vpop.permute.xlu0 %3955
  %3957 = vrot.lane.b32.xlu0 %v3812, 24
  %v3958 = vpop.permute.xlu0 %3957
  %3959 = vrot.lane.b32.xlu0 %v3813, 24
  %v3960 = vpop.permute.xlu0 %3959
  %3961 = vrot.lane.b32.xlu0 %v3814, 24
  %v3962 = vpop.permute.xlu0 %3961
  %3963 = vrot.lane.b32.xlu0 %v3815, 24
  %v3964 = vpop.permute.xlu0 %3963
  %3965 = vrot.lane.b32.xlu0 %v3816, 24
  %v3966 = vpop.permute.xlu0 %3965
  %3967 = vrot.lane.b32.xlu0 %v3817, 24
  %v3968 = vpop.permute.xlu0 %3967
  %3969 = vrot.lane.b32.xlu0 %v3818, 24
  %v3970 = vpop.permute.xlu0 %3969
  %3971 = vrot.lane.b32.xlu0 %v3819, 24
  %v3972 = vpop.permute.xlu0 %3971
  %3973 = vrot.lane.b32.xlu0 %v3820, 24
  %v3974 = vpop.permute.xlu0 %3973
  %3975 = vrot.lane.b32.xlu0 %v3821, 24
  %v3976 = vpop.permute.xlu0 %3975
  %3977 = vrot.lane.b32.xlu0 %v3822, 24
  %v3978 = vpop.permute.xlu0 %3977
  %3979 = vrot.lane.b32.xlu0 %v3823, 24
  %v3980 = vpop.permute.xlu0 %3979
  %3981 = vrot.lane.b32.xlu0 %v3824, 24
  %v3982 = vpop.permute.xlu0 %3981
  %3983 = vrot.lane.b32.xlu0 %v3825, 24
  %v3984 = vpop.permute.xlu0 %3983
  %3985 = vrot.lane.b32.xlu0 %v3826, 24
  %v3986 = vpop.permute.xlu0 %3985
  %3987 = vrot.lane.b32.xlu0 %v3827, 24
  %v3988 = vpop.permute.xlu0 %3987
  %3989 = vrot.lane.b32.xlu0 %v3828, 24
  %v3990 = vpop.permute.xlu0 %3989
  %3991 = vrot.lane.b32.xlu0 %v3829, 24
  %v3992 = vpop.permute.xlu0 %3991
  %3993 = vrot.lane.b32.xlu0 %v3830, 24
  %v3994 = vpop.permute.xlu0 %3993
  %3995 = vrot.lane.b32.xlu0 %v3831, 24
  %v3996 = vpop.permute.xlu0 %3995
  %3997 = vrot.lane.b32.xlu0 %v3832, 24
  %v3998 = vpop.permute.xlu0 %3997
  %3999 = vrot.lane.b32.xlu0 %v3833, 24
  %v4000 = vpop.permute.xlu0 %3999
  %4001 = vrot.lane.b32.xlu0 %v3834, 24
  %v4002 = vpop.permute.xlu0 %4001
  %4003 = vrot.lane.b32.xlu0 %v3835, 24
  %v4004 = vpop.permute.xlu0 %4003
  %4005 = vrot.lane.b32.xlu0 %v3836, 24
  %v4006 = vpop.permute.xlu0 %4005
  %4007 = vrot.lane.b32.xlu0 %v3837, 24
  %v4008 = vpop.permute.xlu0 %4007
  %4009 = vrot.lane.b32.xlu0 %v3838, 24
  %v4010 = vpop.permute.xlu0 %4009
  %4011 = vrot.lane.b32.xlu0 %v3839, 24
  %v4012 = vpop.permute.xlu0 %4011
  %4013 = vrot.lane.b32.xlu0 %v3840, 24
  %v4014 = vpop.permute.xlu0 %4013
  %4015 = vrot.lane.b32.xlu0 %v3841, 24
  %v4016 = vpop.permute.xlu0 %4015
  %4017 = vrot.lane.b32.xlu0 %v3842, 24
  %v4018 = vpop.permute.xlu0 %4017
  %4019 = vrot.lane.b32.xlu0 %v3843, 24
  %v4020 = vpop.permute.xlu0 %4019
  %4021 = vrot.lane.b32.xlu0 %v3844, 24
  %v4022 = vpop.permute.xlu0 %4021
  %4023 = vrot.lane.b32.xlu0 %v3845, 24
  %v4024 = vpop.permute.xlu0 %4023
  %4025 = vrot.lane.b32.xlu0 %v3846, 24
  %v4026 = vpop.permute.xlu0 %4025
  %4027 = vrot.lane.b32.xlu0 %v3847, 24
  %v4028 = vpop.permute.xlu0 %4027
  %4029 = vrot.lane.b32.xlu0 %v3848, 24
  %v4030 = vpop.permute.xlu0 %4029
  %4031 = vrot.lane.b32.xlu0 %v3849, 24
  %v4032 = vpop.permute.xlu0 %4031
  %4033 = vrot.lane.b32.xlu0 %v3850, 24
  %v4034 = vpop.permute.xlu0 %4033
  %4035 = vrot.lane.b32.xlu0 %v3851, 24
  %v4036 = vpop.permute.xlu0 %4035
  %4037 = vrot.lane.b32.xlu0 %v3852, 24
  %v4038 = vpop.permute.xlu0 %4037
  %4039 = vrot.lane.b32.xlu0 %v3853, 24
  %v4040 = vpop.permute.xlu0 %4039
  %4041 = vrot.lane.b32.xlu0 %v3854, 24
  %v4042 = vpop.permute.xlu0 %4041
  %4043 = vrot.lane.b32.xlu0 %v3855, 24
  %v4044 = vpop.permute.xlu0 %4043
  %4045 = vrot.lane.b32.xlu0 %v3856, 24
  %v4046 = vpop.permute.xlu0 %4045
  %4047 = vrot.lane.b32.xlu0 %v3857, 24
  %v4048 = vpop.permute.xlu0 %4047
  %4049 = vrot.lane.b32.xlu0 %v3858, 24
  %v4050 = vpop.permute.xlu0 %4049
  %4051 = vrot.lane.b32.xlu0 %v3859, 24
  %v4052 = vpop.permute.xlu0 %4051
  %4053 = vrot.lane.b32.xlu0 %v3860, 24
  %v4054 = vpop.permute.xlu0 %4053
  %4055 = vrot.lane.b32.xlu0 %v3861, 24
  %v4056 = vpop.permute.xlu0 %4055
  %4057 = vrot.lane.b32.xlu0 %v3862, 24
  %v4058 = vpop.permute.xlu0 %4057
  %4059 = vrot.lane.b32.xlu0 %v3863, 24
  %v4060 = vpop.permute.xlu0 %4059
  %4061 = vrot.lane.b32.xlu0 %v3864, 24
  %v4062 = vpop.permute.xlu0 %4061
  %4063 = vrot.lane.b32.xlu0 %v3865, 24
  %v4064 = vpop.permute.xlu0 %4063
  %4065 = vrot.lane.b32.xlu0 %v3866, 24
  %v4066 = vpop.permute.xlu0 %4065
  %4067 = vrot.lane.b32.xlu0 %v3867, 24
  %v4068 = vpop.permute.xlu0 %4067
  %vm4136 = vcmask 224448
  %4137 = vst.msk [vmem:[#allocation4] sm:$0xf] %vm4136, %v3936
  %4138 = vst.msk [vmem:[#allocation4 + $0x4] sm:$0xf] %vm4136, %v3938
  %4139 = vst.msk [vmem:[#allocation4 + $0x8] sm:$0xf] %vm4136, %v3940
  %4140 = vst.msk [vmem:[#allocation4 + $0xc] sm:$0xf] %vm4136, %v3942
  %4141 = vst.msk [vmem:[#allocation4 + $0x10] sm:$0xf] %vm4136, %v3944
  %4142 = vst.msk [vmem:[#allocation4 + $0x14] sm:$0xf] %vm4136, %v3946
  %4143 = vst.msk [vmem:[#allocation4 + $0x18] sm:$0xf] %vm4136, %v3948
  %4144 = vst.msk [vmem:[#allocation4 + $0x1c] sm:$0xf] %vm4136, %v3950
  %4145 = vst.msk [vmem:[#allocation4 + $0x20] sm:$0xf] %vm4136, %v3952
  %4146 = vst.msk [vmem:[#allocation4 + $0x24] sm:$0xf] %vm4136, %v3954
  %4147 = vst.msk [vmem:[#allocation4 + $0x28] sm:$0xf] %vm4136, %v3956
  %4148 = vst.msk [vmem:[#allocation4 + $0x2c] sm:$0xf] %vm4136, %v3958
  %4149 = vst.msk [vmem:[#allocation4 + $0x30] sm:$0xf] %vm4136, %v3960
  %4150 = vst.msk [vmem:[#allocation4 + $0x34] sm:$0xf] %vm4136, %v3962
  %4151 = vst.msk [vmem:[#allocation4 + $0x38] sm:$0xf] %vm4136, %v3964
  %4152 = vst.msk [vmem:[#allocation4 + $0x3c] sm:$0xf] %vm4136, %v3966
  %4153 = vst.msk [vmem:[#allocation4 + $0x40] sm:$0xf] %vm4136, %v3968
  %4154 = vst.msk [vmem:[#allocation4 + $0x44] sm:$0xf] %vm4136, %v3970
  %4155 = vst.msk [vmem:[#allocation4 + $0x48] sm:$0xf] %vm4136, %v3972
  %4156 = vst.msk [vmem:[#allocation4 + $0x4c] sm:$0xf] %vm4136, %v3974
  %4157 = vst.msk [vmem:[#allocation4 + $0x50] sm:$0xf] %vm4136, %v3976
  %4158 = vst.msk [vmem:[#allocation4 + $0x54] sm:$0xf] %vm4136, %v3978
  %4159 = vst.msk [vmem:[#allocation4 + $0x58] sm:$0xf] %vm4136, %v3980
  %4160 = vst.msk [vmem:[#allocation4 + $0x5c] sm:$0xf] %vm4136, %v3982
  %4161 = vst.msk [vmem:[#allocation4 + $0x60] sm:$0xf] %vm4136, %v3984
  %4162 = vst.msk [vmem:[#allocation4 + $0x64] sm:$0xf] %vm4136, %v3986
  %4163 = vst.msk [vmem:[#allocation4 + $0x68] sm:$0xf] %vm4136, %v3988
  %4164 = vst.msk [vmem:[#allocation4 + $0x6c] sm:$0xf] %vm4136, %v3990
  %4165 = vst.msk [vmem:[#allocation4 + $0x70] sm:$0xf] %vm4136, %v3992
  %4166 = vst.msk [vmem:[#allocation4 + $0x74] sm:$0xf] %vm4136, %v3994
  %4167 = vst.msk [vmem:[#allocation4 + $0x78] sm:$0xf] %vm4136, %v3996
  %4168 = vst.msk [vmem:[#allocation4 + $0x7c] sm:$0xf] %vm4136, %v3998
  %4169 = vst.msk [vmem:[#allocation4 + $0x80] sm:$0xf] %vm4136, %v4000
  %4170 = vst.msk [vmem:[#allocation4 + $0x84] sm:$0xf] %vm4136, %v4002
  %4171 = vst.msk [vmem:[#allocation4 + $0x88] sm:$0xf] %vm4136, %v4004
  %4172 = vst.msk [vmem:[#allocation4 + $0x8c] sm:$0xf] %vm4136, %v4006
  %4173 = vst.msk [vmem:[#allocation4 + $0x90] sm:$0xf] %vm4136, %v4008
  %4174 = vst.msk [vmem:[#allocation4 + $0x94] sm:$0xf] %vm4136, %v4010
  %4175 = vst.msk [vmem:[#allocation4 + $0x98] sm:$0xf] %vm4136, %v4012
  %4176 = vst.msk [vmem:[#allocation4 + $0x9c] sm:$0xf] %vm4136, %v4014
  %4177 = vst.msk [vmem:[#allocation4 + $0xa0] sm:$0xf] %vm4136, %v4016
  %4178 = vst.msk [vmem:[#allocation4 + $0xa4] sm:$0xf] %vm4136, %v4018
  %4179 = vst.msk [vmem:[#allocation4 + $0xa8] sm:$0xf] %vm4136, %v4020
  %4180 = vst.msk [vmem:[#allocation4 + $0xac] sm:$0xf] %vm4136, %v4022
  %4181 = vst.msk [vmem:[#allocation4 + $0xb0] sm:$0xf] %vm4136, %v4024
  %4182 = vst.msk [vmem:[#allocation4 + $0xb4] sm:$0xf] %vm4136, %v4026
  %4183 = vst.msk [vmem:[#allocation4 + $0xb8] sm:$0xf] %vm4136, %v4028
  %4184 = vst.msk [vmem:[#allocation4 + $0xbc] sm:$0xf] %vm4136, %v4030
  %4185 = vst.msk [vmem:[#allocation4 + $0xc0] sm:$0xf] %vm4136, %v4032
  %4186 = vst.msk [vmem:[#allocation4 + $0xc4] sm:$0xf] %vm4136, %v4034
  %4187 = vst.msk [vmem:[#allocation4 + $0xc8] sm:$0xf] %vm4136, %v4036
  %4188 = vst.msk [vmem:[#allocation4 + $0xcc] sm:$0xf] %vm4136, %v4038
  %4189 = vst.msk [vmem:[#allocation4 + $0xd0] sm:$0xf] %vm4136, %v4040
  %4190 = vst.msk [vmem:[#allocation4 + $0xd4] sm:$0xf] %vm4136, %v4042
  %4191 = vst.msk [vmem:[#allocation4 + $0xd8] sm:$0xf] %vm4136, %v4044
  %4192 = vst.msk [vmem:[#allocation4 + $0xdc] sm:$0xf] %vm4136, %v4046
  %4193 = vst.msk [vmem:[#allocation4 + $0xe0] sm:$0xf] %vm4136, %v4048
  %4194 = vst.msk [vmem:[#allocation4 + $0xe4] sm:$0xf] %vm4136, %v4050
  %4195 = vst.msk [vmem:[#allocation4 + $0xe8] sm:$0xf] %vm4136, %v4052
  %4196 = vst.msk [vmem:[#allocation4 + $0xec] sm:$0xf] %vm4136, %v4054
  %4197 = vst.msk [vmem:[#allocation4 + $0xf0] sm:$0xf] %vm4136, %v4056
  %4198 = vst.msk [vmem:[#allocation4 + $0xf4] sm:$0xf] %vm4136, %v4058
  %4199 = vst.msk [vmem:[#allocation4 + $0xf8] sm:$0xf] %vm4136, %v4060
  %4200 = vst.msk [vmem:[#allocation4 + $0xfc] sm:$0xf] %vm4136, %v4062
  %4201 = vst.msk [vmem:[#allocation4 + $0x100] sm:$0xf] %vm4136, %v4064
  %4202 = vst.msk [vmem:[#allocation4 + $0x104] sm:$0xf] %vm4136, %v4066
  %4203 = vst.msk [vmem:[#allocation4 + $0x108] sm:$0xf] %vm4136, %v4068
  %v4204 = vld [vmem:[#allocation2 + $0x28] sm:$0xff]
  %v4205 = vld [vmem:[#allocation2 + $0x30] sm:$0xff]
  %v4206 = vld [vmem:[#allocation2 + $0x38] sm:$0xff]
  %v4207 = vld [vmem:[#allocation2 + $0x40] sm:$0xff]
  %v4208 = vld [vmem:[#allocation2 + $0x48] sm:$0xff]
  %v4209 = vld [vmem:[#allocation2 + $0x50] sm:$0xff]
  %v4210 = vld [vmem:[#allocation2 + $0x58] sm:$0xff]
  %v4211 = vld [vmem:[#allocation2 + $0x60] sm:$0xff]
  %v4212 = vld [vmem:[#allocation2 + $0x68] sm:$0xff]
  %v4213 = vld [vmem:[#allocation2 + $0x70] sm:$0xff]
  %v4214 = vld [vmem:[#allocation2 + $0x78] sm:$0xff]
  %v4215 = vld [vmem:[#allocation2 + $0x80] sm:$0xff]
  %v4216 = vld [vmem:[#allocation2 + $0x88] sm:$0xff]
  %v4217 = vld [vmem:[#allocation2 + $0x90] sm:$0xff]
  %v4218 = vld [vmem:[#allocation2 + $0x98] sm:$0xff]
  %v4219 = vld [vmem:[#allocation2 + $0xa0] sm:$0xff]
  %v4220 = vld [vmem:[#allocation2 + $0xa8] sm:$0xff]
  %v4221 = vld [vmem:[#allocation2 + $0xb0] sm:$0xff]
  %v4222 = vld [vmem:[#allocation2 + $0xb8] sm:$0xff]
  %v4223 = vld [vmem:[#allocation2 + $0xc0] sm:$0xff]
  %v4224 = vld [vmem:[#allocation2 + $0xc8] sm:$0xff]
  %v4225 = vld [vmem:[#allocation2 + $0xd0] sm:$0xff]
  %v4226 = vld [vmem:[#allocation2 + $0xd8] sm:$0xff]
  %v4227 = vld [vmem:[#allocation2 + $0xe0] sm:$0xff]
  %v4228 = vld [vmem:[#allocation2 + $0xe8] sm:$0xff]
  %v4229 = vld [vmem:[#allocation2 + $0xf0] sm:$0xff]
  %v4230 = vld [vmem:[#allocation2 + $0xf8] sm:$0xff]
  %v4231 = vld [vmem:[#allocation2 + $0x100] sm:$0xff]
  %v4232 = vld [vmem:[#allocation2 + $0x108] sm:$0xff]
  %v4233 = vld [vmem:[#allocation2 + $0x110] sm:$0xff]
  %v4234 = vld [vmem:[#allocation2 + $0x118] sm:$0xff]
  %v4235 = vld [vmem:[#allocation2 + $0x120] sm:$0xff]
  %v4236 = vld [vmem:[#allocation2 + $0x128] sm:$0xff]
  %v4237 = vld [vmem:[#allocation2 + $0x130] sm:$0xff]
  %v4238 = vld [vmem:[#allocation2 + $0x138] sm:$0xff]
  %v4239 = vld [vmem:[#allocation2 + $0x140] sm:$0xff]
  %v4240 = vld [vmem:[#allocation2 + $0x148] sm:$0xff]
  %v4241 = vld [vmem:[#allocation2 + $0x150] sm:$0xff]
  %v4242 = vld [vmem:[#allocation2 + $0x158] sm:$0xff]
  %v4243 = vld [vmem:[#allocation2 + $0x160] sm:$0xff]
  %v4244 = vld [vmem:[#allocation2 + $0x168] sm:$0xff]
  %v4245 = vld [vmem:[#allocation2 + $0x170] sm:$0xff]
  %v4246 = vld [vmem:[#allocation2 + $0x178] sm:$0xff]
  %v4247 = vld [vmem:[#allocation2 + $0x180] sm:$0xff]
  %v4248 = vld [vmem:[#allocation2 + $0x188] sm:$0xff]
  %v4249 = vld [vmem:[#allocation2 + $0x190] sm:$0xff]
  %v4250 = vld [vmem:[#allocation2 + $0x198] sm:$0xff]
  %v4251 = vld [vmem:[#allocation2 + $0x1a0] sm:$0xff]
  %v4252 = vld [vmem:[#allocation2 + $0x1a8] sm:$0xff]
  %v4253 = vld [vmem:[#allocation2 + $0x1b0] sm:$0xff]
  %v4254 = vld [vmem:[#allocation2 + $0x1b8] sm:$0xff]
  %v4255 = vld [vmem:[#allocation2 + $0x1c0] sm:$0xff]
  %v4256 = vld [vmem:[#allocation2 + $0x1c8] sm:$0xff]
  %v4257 = vld [vmem:[#allocation2 + $0x1d0] sm:$0xff]
  %v4258 = vld [vmem:[#allocation2 + $0x1d8] sm:$0xff]
  %v4259 = vld [vmem:[#allocation2 + $0x1e0] sm:$0xff]
  %v4260 = vld [vmem:[#allocation2 + $0x1e8] sm:$0xff]
  %v4261 = vld [vmem:[#allocation2 + $0x1f0] sm:$0xff]
  %v4262 = vld [vmem:[#allocation2 + $0x1f8] sm:$0xff]
  %v4263 = vld [vmem:[#allocation2 + $0x200] sm:$0xff]
  %v4264 = vld [vmem:[#allocation2 + $0x208] sm:$0xff]
  %v4265 = vld [vmem:[#allocation2 + $0x210] sm:$0xff]
  %v4266 = vld [vmem:[#allocation2 + $0x218] sm:$0xff]
  %v4267 = vld [vmem:[#allocation2 + $0x220] sm:$0xff]
  %v4268 = vld [vmem:[#allocation2 + $0x228] sm:$0xff]
  %v4269 = vld [vmem:[#allocation2 + $0x230] sm:$0xff]
  %v4270 = vld [vmem:[#allocation2 + $0x238] sm:$0xff]
  %v4271 = vpack.c.bf16 %v4204, %v4204
  %v4272 = vpack.c.bf16 %v4205, %v4205
  %v4273 = vpack.c.bf16 %v4206, %v4206
  %v4274 = vpack.c.bf16 %v4207, %v4207
  %v4275 = vpack.c.bf16 %v4208, %v4208
  %v4276 = vpack.c.bf16 %v4209, %v4209
  %v4277 = vpack.c.bf16 %v4210, %v4210
  %v4278 = vpack.c.bf16 %v4211, %v4211
  %v4279 = vpack.c.bf16 %v4212, %v4212
  %v4280 = vpack.c.bf16 %v4213, %v4213
  %v4281 = vpack.c.bf16 %v4214, %v4214
  %v4282 = vpack.c.bf16 %v4215, %v4215
  %v4283 = vpack.c.bf16 %v4216, %v4216
  %v4284 = vpack.c.bf16 %v4217, %v4217
  %v4285 = vpack.c.bf16 %v4218, %v4218
  %v4286 = vpack.c.bf16 %v4219, %v4219
  %v4287 = vpack.c.bf16 %v4220, %v4220
  %v4288 = vpack.c.bf16 %v4221, %v4221
  %v4289 = vpack.c.bf16 %v4222, %v4222
  %v4290 = vpack.c.bf16 %v4223, %v4223
  %v4291 = vpack.c.bf16 %v4224, %v4224
  %v4292 = vpack.c.bf16 %v4225, %v4225
  %v4293 = vpack.c.bf16 %v4226, %v4226
  %v4294 = vpack.c.bf16 %v4227, %v4227
  %v4295 = vpack.c.bf16 %v4228, %v4228
  %v4296 = vpack.c.bf16 %v4229, %v4229
  %v4297 = vpack.c.bf16 %v4230, %v4230
  %v4298 = vpack.c.bf16 %v4231, %v4231
  %v4299 = vpack.c.bf16 %v4232, %v4232
  %v4300 = vpack.c.bf16 %v4233, %v4233
  %v4301 = vpack.c.bf16 %v4234, %v4234
  %v4302 = vpack.c.bf16 %v4235, %v4235
  %v4303 = vpack.c.bf16 %v4236, %v4236
  %v4304 = vpack.c.bf16 %v4237, %v4237
  %v4305 = vpack.c.bf16 %v4238, %v4238
  %v4306 = vpack.c.bf16 %v4239, %v4239
  %v4307 = vpack.c.bf16 %v4240, %v4240
  %v4308 = vpack.c.bf16 %v4241, %v4241
  %v4309 = vpack.c.bf16 %v4242, %v4242
  %v4310 = vpack.c.bf16 %v4243, %v4243
  %v4311 = vpack.c.bf16 %v4244, %v4244
  %v4312 = vpack.c.bf16 %v4245, %v4245
  %v4313 = vpack.c.bf16 %v4246, %v4246
  %v4314 = vpack.c.bf16 %v4247, %v4247
  %v4315 = vpack.c.bf16 %v4248, %v4248
  %v4316 = vpack.c.bf16 %v4249, %v4249
  %v4317 = vpack.c.bf16 %v4250, %v4250
  %v4318 = vpack.c.bf16 %v4251, %v4251
  %v4319 = vpack.c.bf16 %v4252, %v4252
  %v4320 = vpack.c.bf16 %v4253, %v4253
  %v4321 = vpack.c.bf16 %v4254, %v4254
  %v4322 = vpack.c.bf16 %v4255, %v4255
  %v4323 = vpack.c.bf16 %v4256, %v4256
  %v4324 = vpack.c.bf16 %v4257, %v4257
  %v4325 = vpack.c.bf16 %v4258, %v4258
  %v4326 = vpack.c.bf16 %v4259, %v4259
  %v4327 = vpack.c.bf16 %v4260, %v4260
  %v4328 = vpack.c.bf16 %v4261, %v4261
  %v4329 = vpack.c.bf16 %v4262, %v4262
  %v4330 = vpack.c.bf16 %v4263, %v4263
  %v4331 = vpack.c.bf16 %v4264, %v4264
  %v4332 = vpack.c.bf16 %v4265, %v4265
  %v4333 = vpack.c.bf16 %v4266, %v4266
  %v4334 = vpack.c.bf16 %v4267, %v4267
  %v4335 = vpack.c.bf16 %v4268, %v4268
  %v4336 = vpack.c.bf16 %v4269, %v4269
  %v4337 = vpack.c.bf16 %v4270, %v4270
  %4405 = vrot.lane.b32.xlu0 %v4271, 28
  %v4406 = vpop.permute.xlu0 %4405
  %4407 = vrot.lane.b32.xlu0 %v4272, 28
  %v4408 = vpop.permute.xlu0 %4407
  %4409 = vrot.lane.b32.xlu0 %v4273, 28
  %v4410 = vpop.permute.xlu0 %4409
  %4411 = vrot.lane.b32.xlu0 %v4274, 28
  %v4412 = vpop.permute.xlu0 %4411
  %4413 = vrot.lane.b32.xlu0 %v4275, 28
  %v4414 = vpop.permute.xlu0 %4413
  %4415 = vrot.lane.b32.xlu0 %v4276, 28
  %v4416 = vpop.permute.xlu0 %4415
  %4417 = vrot.lane.b32.xlu0 %v4277, 28
  %v4418 = vpop.permute.xlu0 %4417
  %4419 = vrot.lane.b32.xlu0 %v4278, 28
  %v4420 = vpop.permute.xlu0 %4419
  %4421 = vrot.lane.b32.xlu0 %v4279, 28
  %v4422 = vpop.permute.xlu0 %4421
  %4423 = vrot.lane.b32.xlu0 %v4280, 28
  %v4424 = vpop.permute.xlu0 %4423
  %4425 = vrot.lane.b32.xlu0 %v4281, 28
  %v4426 = vpop.permute.xlu0 %4425
  %4427 = vrot.lane.b32.xlu0 %v4282, 28
  %v4428 = vpop.permute.xlu0 %4427
  %4429 = vrot.lane.b32.xlu0 %v4283, 28
  %v4430 = vpop.permute.xlu0 %4429
  %4431 = vrot.lane.b32.xlu0 %v4284, 28
  %v4432 = vpop.permute.xlu0 %4431
  %4433 = vrot.lane.b32.xlu0 %v4285, 28
  %v4434 = vpop.permute.xlu0 %4433
  %4435 = vrot.lane.b32.xlu0 %v4286, 28
  %v4436 = vpop.permute.xlu0 %4435
  %4437 = vrot.lane.b32.xlu0 %v4287, 28
  %v4438 = vpop.permute.xlu0 %4437
  %4439 = vrot.lane.b32.xlu0 %v4288, 28
  %v4440 = vpop.permute.xlu0 %4439
  %4441 = vrot.lane.b32.xlu0 %v4289, 28
  %v4442 = vpop.permute.xlu0 %4441
  %4443 = vrot.lane.b32.xlu0 %v4290, 28
  %v4444 = vpop.permute.xlu0 %4443
  %4445 = vrot.lane.b32.xlu0 %v4291, 28
  %v4446 = vpop.permute.xlu0 %4445
  %4447 = vrot.lane.b32.xlu0 %v4292, 28
  %v4448 = vpop.permute.xlu0 %4447
  %4449 = vrot.lane.b32.xlu0 %v4293, 28
  %v4450 = vpop.permute.xlu0 %4449
  %4451 = vrot.lane.b32.xlu0 %v4294, 28
  %v4452 = vpop.permute.xlu0 %4451
  %4453 = vrot.lane.b32.xlu0 %v4295, 28
  %v4454 = vpop.permute.xlu0 %4453
  %4455 = vrot.lane.b32.xlu0 %v4296, 28
  %v4456 = vpop.permute.xlu0 %4455
  %4457 = vrot.lane.b32.xlu0 %v4297, 28
  %v4458 = vpop.permute.xlu0 %4457
  %4459 = vrot.lane.b32.xlu0 %v4298, 28
  %v4460 = vpop.permute.xlu0 %4459
  %4461 = vrot.lane.b32.xlu0 %v4299, 28
  %v4462 = vpop.permute.xlu0 %4461
  %4463 = vrot.lane.b32.xlu0 %v4300, 28
  %v4464 = vpop.permute.xlu0 %4463
  %4465 = vrot.lane.b32.xlu0 %v4301, 28
  %v4466 = vpop.permute.xlu0 %4465
  %4467 = vrot.lane.b32.xlu0 %v4302, 28
  %v4468 = vpop.permute.xlu0 %4467
  %4469 = vrot.lane.b32.xlu0 %v4303, 28
  %v4470 = vpop.permute.xlu0 %4469
  %4471 = vrot.lane.b32.xlu0 %v4304, 28
  %v4472 = vpop.permute.xlu0 %4471
  %4473 = vrot.lane.b32.xlu0 %v4305, 28
  %v4474 = vpop.permute.xlu0 %4473
  %4475 = vrot.lane.b32.xlu0 %v4306, 28
  %v4476 = vpop.permute.xlu0 %4475
  %4477 = vrot.lane.b32.xlu0 %v4307, 28
  %v4478 = vpop.permute.xlu0 %4477
  %4479 = vrot.lane.b32.xlu0 %v4308, 28
  %v4480 = vpop.permute.xlu0 %4479
  %4481 = vrot.lane.b32.xlu0 %v4309, 28
  %v4482 = vpop.permute.xlu0 %4481
  %4483 = vrot.lane.b32.xlu0 %v4310, 28
  %v4484 = vpop.permute.xlu0 %4483
  %4485 = vrot.lane.b32.xlu0 %v4311, 28
  %v4486 = vpop.permute.xlu0 %4485
  %4487 = vrot.lane.b32.xlu0 %v4312, 28
  %v4488 = vpop.permute.xlu0 %4487
  %4489 = vrot.lane.b32.xlu0 %v4313, 28
  %v4490 = vpop.permute.xlu0 %4489
  %4491 = vrot.lane.b32.xlu0 %v4314, 28
  %v4492 = vpop.permute.xlu0 %4491
  %4493 = vrot.lane.b32.xlu0 %v4315, 28
  %v4494 = vpop.permute.xlu0 %4493
  %4495 = vrot.lane.b32.xlu0 %v4316, 28
  %v4496 = vpop.permute.xlu0 %4495
  %4497 = vrot.lane.b32.xlu0 %v4317, 28
  %v4498 = vpop.permute.xlu0 %4497
  %4499 = vrot.lane.b32.xlu0 %v4318, 28
  %v4500 = vpop.permute.xlu0 %4499
  %4501 = vrot.lane.b32.xlu0 %v4319, 28
  %v4502 = vpop.permute.xlu0 %4501
  %4503 = vrot.lane.b32.xlu0 %v4320, 28
  %v4504 = vpop.permute.xlu0 %4503
  %4505 = vrot.lane.b32.xlu0 %v4321, 28
  %v4506 = vpop.permute.xlu0 %4505
  %4507 = vrot.lane.b32.xlu0 %v4322, 28
  %v4508 = vpop.permute.xlu0 %4507
  %4509 = vrot.lane.b32.xlu0 %v4323, 28
  %v4510 = vpop.permute.xlu0 %4509
  %4511 = vrot.lane.b32.xlu0 %v4324, 28
  %v4512 = vpop.permute.xlu0 %4511
  %4513 = vrot.lane.b32.xlu0 %v4325, 28
  %v4514 = vpop.permute.xlu0 %4513
  %4515 = vrot.lane.b32.xlu0 %v4326, 28
  %v4516 = vpop.permute.xlu0 %4515
  %4517 = vrot.lane.b32.xlu0 %v4327, 28
  %v4518 = vpop.permute.xlu0 %4517
  %4519 = vrot.lane.b32.xlu0 %v4328, 28
  %v4520 = vpop.permute.xlu0 %4519
  %4521 = vrot.lane.b32.xlu0 %v4329, 28
  %v4522 = vpop.permute.xlu0 %4521
  %4523 = vrot.lane.b32.xlu0 %v4330, 28
  %v4524 = vpop.permute.xlu0 %4523
  %4525 = vrot.lane.b32.xlu0 %v4331, 28
  %v4526 = vpop.permute.xlu0 %4525
  %4527 = vrot.lane.b32.xlu0 %v4332, 28
  %v4528 = vpop.permute.xlu0 %4527
  %4529 = vrot.lane.b32.xlu0 %v4333, 28
  %v4530 = vpop.permute.xlu0 %4529
  %4531 = vrot.lane.b32.xlu0 %v4334, 28
  %v4532 = vpop.permute.xlu0 %4531
  %4533 = vrot.lane.b32.xlu0 %v4335, 28
  %v4534 = vpop.permute.xlu0 %4533
  %4535 = vrot.lane.b32.xlu0 %v4336, 28
  %v4536 = vpop.permute.xlu0 %4535
  %4537 = vrot.lane.b32.xlu0 %v4337, 28
  %v4538 = vpop.permute.xlu0 %4537
  %vm4606 = vcmask 257248
  %4607 = vst.msk [vmem:[#allocation4] sm:$0xf] %vm4606, %v4406
  %4608 = vst.msk [vmem:[#allocation4 + $0x4] sm:$0xf] %vm4606, %v4408
  %4609 = vst.msk [vmem:[#allocation4 + $0x8] sm:$0xf] %vm4606, %v4410
  %4610 = vst.msk [vmem:[#allocation4 + $0xc] sm:$0xf] %vm4606, %v4412
  %4611 = vst.msk [vmem:[#allocation4 + $0x10] sm:$0xf] %vm4606, %v4414
  %4612 = vst.msk [vmem:[#allocation4 + $0x14] sm:$0xf] %vm4606, %v4416
  %4613 = vst.msk [vmem:[#allocation4 + $0x18] sm:$0xf] %vm4606, %v4418
  %4614 = vst.msk [vmem:[#allocation4 + $0x1c] sm:$0xf] %vm4606, %v4420
  %4615 = vst.msk [vmem:[#allocation4 + $0x20] sm:$0xf] %vm4606, %v4422
  %4616 = vst.msk [vmem:[#allocation4 + $0x24] sm:$0xf] %vm4606, %v4424
  %4617 = vst.msk [vmem:[#allocation4 + $0x28] sm:$0xf] %vm4606, %v4426
  %4618 = vst.msk [vmem:[#allocation4 + $0x2c] sm:$0xf] %vm4606, %v4428
  %4619 = vst.msk [vmem:[#allocation4 + $0x30] sm:$0xf] %vm4606, %v4430
  %4620 = vst.msk [vmem:[#allocation4 + $0x34] sm:$0xf] %vm4606, %v4432
  %4621 = vst.msk [vmem:[#allocation4 + $0x38] sm:$0xf] %vm4606, %v4434
  %4622 = vst.msk [vmem:[#allocation4 + $0x3c] sm:$0xf] %vm4606, %v4436
  %4623 = vst.msk [vmem:[#allocation4 + $0x40] sm:$0xf] %vm4606, %v4438
  %4624 = vst.msk [vmem:[#allocation4 + $0x44] sm:$0xf] %vm4606, %v4440
  %4625 = vst.msk [vmem:[#allocation4 + $0x48] sm:$0xf] %vm4606, %v4442
  %4626 = vst.msk [vmem:[#allocation4 + $0x4c] sm:$0xf] %vm4606, %v4444
  %4627 = vst.msk [vmem:[#allocation4 + $0x50] sm:$0xf] %vm4606, %v4446
  %4628 = vst.msk [vmem:[#allocation4 + $0x54] sm:$0xf] %vm4606, %v4448
  %4629 = vst.msk [vmem:[#allocation4 + $0x58] sm:$0xf] %vm4606, %v4450
  %4630 = vst.msk [vmem:[#allocation4 + $0x5c] sm:$0xf] %vm4606, %v4452
  %4631 = vst.msk [vmem:[#allocation4 + $0x60] sm:$0xf] %vm4606, %v4454
  %4632 = vst.msk [vmem:[#allocation4 + $0x64] sm:$0xf] %vm4606, %v4456
  %4633 = vst.msk [vmem:[#allocation4 + $0x68] sm:$0xf] %vm4606, %v4458
  %4634 = vst.msk [vmem:[#allocation4 + $0x6c] sm:$0xf] %vm4606, %v4460
  %4635 = vst.msk [vmem:[#allocation4 + $0x70] sm:$0xf] %vm4606, %v4462
  %4636 = vst.msk [vmem:[#allocation4 + $0x74] sm:$0xf] %vm4606, %v4464
  %4637 = vst.msk [vmem:[#allocation4 + $0x78] sm:$0xf] %vm4606, %v4466
  %4638 = vst.msk [vmem:[#allocation4 + $0x7c] sm:$0xf] %vm4606, %v4468
  %4639 = vst.msk [vmem:[#allocation4 + $0x80] sm:$0xf] %vm4606, %v4470
  %4640 = vst.msk [vmem:[#allocation4 + $0x84] sm:$0xf] %vm4606, %v4472
  %4641 = vst.msk [vmem:[#allocation4 + $0x88] sm:$0xf] %vm4606, %v4474
  %4642 = vst.msk [vmem:[#allocation4 + $0x8c] sm:$0xf] %vm4606, %v4476
  %4643 = vst.msk [vmem:[#allocation4 + $0x90] sm:$0xf] %vm4606, %v4478
  %4644 = vst.msk [vmem:[#allocation4 + $0x94] sm:$0xf] %vm4606, %v4480
  %4645 = vst.msk [vmem:[#allocation4 + $0x98] sm:$0xf] %vm4606, %v4482
  %4646 = vst.msk [vmem:[#allocation4 + $0x9c] sm:$0xf] %vm4606, %v4484
  %4647 = vst.msk [vmem:[#allocation4 + $0xa0] sm:$0xf] %vm4606, %v4486
  %4648 = vst.msk [vmem:[#allocation4 + $0xa4] sm:$0xf] %vm4606, %v4488
  %4649 = vst.msk [vmem:[#allocation4 + $0xa8] sm:$0xf] %vm4606, %v4490
  %4650 = vst.msk [vmem:[#allocation4 + $0xac] sm:$0xf] %vm4606, %v4492
  %4651 = vst.msk [vmem:[#allocation4 + $0xb0] sm:$0xf] %vm4606, %v4494
  %4652 = vst.msk [vmem:[#allocation4 + $0xb4] sm:$0xf] %vm4606, %v4496
  %4653 = vst.msk [vmem:[#allocation4 + $0xb8] sm:$0xf] %vm4606, %v4498
  %4654 = vst.msk [vmem:[#allocation4 + $0xbc] sm:$0xf] %vm4606, %v4500
  %4655 = vst.msk [vmem:[#allocation4 + $0xc0] sm:$0xf] %vm4606, %v4502
  %4656 = vst.msk [vmem:[#allocation4 + $0xc4] sm:$0xf] %vm4606, %v4504
  %4657 = vst.msk [vmem:[#allocation4 + $0xc8] sm:$0xf] %vm4606, %v4506
  %4658 = vst.msk [vmem:[#allocation4 + $0xcc] sm:$0xf] %vm4606, %v4508
  %4659 = vst.msk [vmem:[#allocation4 + $0xd0] sm:$0xf] %vm4606, %v4510
  %4660 = vst.msk [vmem:[#allocation4 + $0xd4] sm:$0xf] %vm4606, %v4512
  %4661 = vst.msk [vmem:[#allocation4 + $0xd8] sm:$0xf] %vm4606, %v4514
  %4662 = vst.msk [vmem:[#allocation4 + $0xdc] sm:$0xf] %vm4606, %v4516
  %4663 = vst.msk [vmem:[#allocation4 + $0xe0] sm:$0xf] %vm4606, %v4518
  %4664 = vst.msk [vmem:[#allocation4 + $0xe4] sm:$0xf] %vm4606, %v4520
  %4665 = vst.msk [vmem:[#allocation4 + $0xe8] sm:$0xf] %vm4606, %v4522
  %4666 = vst.msk [vmem:[#allocation4 + $0xec] sm:$0xf] %vm4606, %v4524
  %4667 = vst.msk [vmem:[#allocation4 + $0xf0] sm:$0xf] %vm4606, %v4526
  %4668 = vst.msk [vmem:[#allocation4 + $0xf4] sm:$0xf] %vm4606, %v4528
  %4669 = vst.msk [vmem:[#allocation4 + $0xf8] sm:$0xf] %vm4606, %v4530
  %4670 = vst.msk [vmem:[#allocation4 + $0xfc] sm:$0xf] %vm4606, %v4532
  %4671 = vst.msk [vmem:[#allocation4 + $0x100] sm:$0xf] %vm4606, %v4534
  %4672 = vst.msk [vmem:[#allocation4 + $0x104] sm:$0xf] %vm4606, %v4536
  %4673 = vst.msk [vmem:[#allocation4 + $0x108] sm:$0xf] %vm4606, %v4538
  %v4674 = vld [vmem:[#allocation2 + $0x29] sm:$0xff]
  %v4675 = vld [vmem:[#allocation2 + $0x31] sm:$0xff]
  %v4676 = vld [vmem:[#allocation2 + $0x39] sm:$0xff]
  %v4677 = vld [vmem:[#allocation2 + $0x41] sm:$0xff]
  %v4678 = vld [vmem:[#allocation2 + $0x49] sm:$0xff]
  %v4679 = vld [vmem:[#allocation2 + $0x51] sm:$0xff]
  %v4680 = vld [vmem:[#allocation2 + $0x59] sm:$0xff]
  %v4681 = vld [vmem:[#allocation2 + $0x61] sm:$0xff]
  %v4682 = vld [vmem:[#allocation2 + $0x69] sm:$0xff]
  %v4683 = vld [vmem:[#allocation2 + $0x71] sm:$0xff]
  %v4684 = vld [vmem:[#allocation2 + $0x79] sm:$0xff]
  %v4685 = vld [vmem:[#allocation2 + $0x81] sm:$0xff]
  %v4686 = vld [vmem:[#allocation2 + $0x89] sm:$0xff]
  %v4687 = vld [vmem:[#allocation2 + $0x91] sm:$0xff]
  %v4688 = vld [vmem:[#allocation2 + $0x99] sm:$0xff]
  %v4689 = vld [vmem:[#allocation2 + $0xa1] sm:$0xff]
  %v4690 = vld [vmem:[#allocation2 + $0xa9] sm:$0xff]
  %v4691 = vld [vmem:[#allocation2 + $0xb1] sm:$0xff]
  %v4692 = vld [vmem:[#allocation2 + $0xb9] sm:$0xff]
  %v4693 = vld [vmem:[#allocation2 + $0xc1] sm:$0xff]
  %v4694 = vld [vmem:[#allocation2 + $0xc9] sm:$0xff]
  %v4695 = vld [vmem:[#allocation2 + $0xd1] sm:$0xff]
  %v4696 = vld [vmem:[#allocation2 + $0xd9] sm:$0xff]
  %v4697 = vld [vmem:[#allocation2 + $0xe1] sm:$0xff]
  %v4698 = vld [vmem:[#allocation2 + $0xe9] sm:$0xff]
  %v4699 = vld [vmem:[#allocation2 + $0xf1] sm:$0xff]
  %v4700 = vld [vmem:[#allocation2 + $0xf9] sm:$0xff]
  %v4701 = vld [vmem:[#allocation2 + $0x101] sm:$0xff]
  %v4702 = vld [vmem:[#allocation2 + $0x109] sm:$0xff]
  %v4703 = vld [vmem:[#allocation2 + $0x111] sm:$0xff]
  %v4704 = vld [vmem:[#allocation2 + $0x119] sm:$0xff]
  %v4705 = vld [vmem:[#allocation2 + $0x121] sm:$0xff]
  %v4706 = vld [vmem:[#allocation2 + $0x129] sm:$0xff]
  %v4707 = vld [vmem:[#allocation2 + $0x131] sm:$0xff]
  %v4708 = vld [vmem:[#allocation2 + $0x139] sm:$0xff]
  %v4709 = vld [vmem:[#allocation2 + $0x141] sm:$0xff]
  %v4710 = vld [vmem:[#allocation2 + $0x149] sm:$0xff]
  %v4711 = vld [vmem:[#allocation2 + $0x151] sm:$0xff]
  %v4712 = vld [vmem:[#allocation2 + $0x159] sm:$0xff]
  %v4713 = vld [vmem:[#allocation2 + $0x161] sm:$0xff]
  %v4714 = vld [vmem:[#allocation2 + $0x169] sm:$0xff]
  %v4715 = vld [vmem:[#allocation2 + $0x171] sm:$0xff]
  %v4716 = vld [vmem:[#allocation2 + $0x179] sm:$0xff]
  %v4717 = vld [vmem:[#allocation2 + $0x181] sm:$0xff]
  %v4718 = vld [vmem:[#allocation2 + $0x189] sm:$0xff]
  %v4719 = vld [vmem:[#allocation2 + $0x191] sm:$0xff]
  %v4720 = vld [vmem:[#allocation2 + $0x199] sm:$0xff]
  %v4721 = vld [vmem:[#allocation2 + $0x1a1] sm:$0xff]
  %v4722 = vld [vmem:[#allocation2 + $0x1a9] sm:$0xff]
  %v4723 = vld [vmem:[#allocation2 + $0x1b1] sm:$0xff]
  %v4724 = vld [vmem:[#allocation2 + $0x1b9] sm:$0xff]
  %v4725 = vld [vmem:[#allocation2 + $0x1c1] sm:$0xff]
  %v4726 = vld [vmem:[#allocation2 + $0x1c9] sm:$0xff]
  %v4727 = vld [vmem:[#allocation2 + $0x1d1] sm:$0xff]
  %v4728 = vld [vmem:[#allocation2 + $0x1d9] sm:$0xff]
  %v4729 = vld [vmem:[#allocation2 + $0x1e1] sm:$0xff]
  %v4730 = vld [vmem:[#allocation2 + $0x1e9] sm:$0xff]
  %v4731 = vld [vmem:[#allocation2 + $0x1f1] sm:$0xff]
  %v4732 = vld [vmem:[#allocation2 + $0x1f9] sm:$0xff]
  %v4733 = vld [vmem:[#allocation2 + $0x201] sm:$0xff]
  %v4734 = vld [vmem:[#allocation2 + $0x209] sm:$0xff]
  %v4735 = vld [vmem:[#allocation2 + $0x211] sm:$0xff]
  %v4736 = vld [vmem:[#allocation2 + $0x219] sm:$0xff]
  %v4737 = vld [vmem:[#allocation2 + $0x221] sm:$0xff]
  %v4738 = vld [vmem:[#allocation2 + $0x229] sm:$0xff]
  %v4739 = vld [vmem:[#allocation2 + $0x231] sm:$0xff]
  %v4740 = vld [vmem:[#allocation2 + $0x239] sm:$0xff]
  %v4741 = vmul.f32 %v4674, %v1387
  %v4742 = vmul.f32 %v4675, %v1391
  %v4743 = vmul.f32 %v4676, %v1395
  %v4744 = vmul.f32 %v4677, %v1399
  %v4745 = vmul.f32 %v4678, %v1403
  %v4746 = vmul.f32 %v4679, %v1407
  %v4747 = vmul.f32 %v4680, %v1411
  %v4748 = vmul.f32 %v4681, %v1415
  %v4749 = vmul.f32 %v4682, %v1419
  %v4750 = vmul.f32 %v4683, %v1423
  %v4751 = vmul.f32 %v4684, %v1427
  %v4752 = vmul.f32 %v4685, %v1431
  %v4753 = vmul.f32 %v4686, %v1435
  %v4754 = vmul.f32 %v4687, %v1439
  %v4755 = vmul.f32 %v4688, %v1443
  %v4756 = vmul.f32 %v4689, %v1447
  %v4757 = vmul.f32 %v4690, %v1451
  %v4758 = vmul.f32 %v4691, %v1455
  %v4759 = vmul.f32 %v4692, %v1459
  %v4760 = vmul.f32 %v4693, %v1463
  %v4761 = vmul.f32 %v4694, %v1467
  %v4762 = vmul.f32 %v4695, %v1471
  %v4763 = vmul.f32 %v4696, %v1475
  %v4764 = vmul.f32 %v4697, %v1479
  %v4765 = vmul.f32 %v4698, %v1483
  %v4766 = vmul.f32 %v4699, %v1487
  %v4767 = vmul.f32 %v4700, %v1491
  %v4768 = vmul.f32 %v4701, %v1495
  %v4769 = vmul.f32 %v4702, %v1499
  %v4770 = vmul.f32 %v4703, %v1503
  %v4771 = vmul.f32 %v4704, %v1507
  %v4772 = vmul.f32 %v4705, %v1511
  %v4773 = vmul.f32 %v4706, %v1515
  %v4774 = vmul.f32 %v4707, %v1519
  %v4775 = vmul.f32 %v4708, %v1523
  %v4776 = vmul.f32 %v4709, %v1527
  %v4777 = vmul.f32 %v4710, %v1531
  %v4778 = vmul.f32 %v4711, %v1535
  %v4779 = vmul.f32 %v4712, %v1539
  %v4780 = vmul.f32 %v4713, %v1543
  %v4781 = vmul.f32 %v4714, %v1547
  %v4782 = vmul.f32 %v4715, %v1551
  %v4783 = vmul.f32 %v4716, %v1555
  %v4784 = vmul.f32 %v4717, %v1559
  %v4785 = vmul.f32 %v4718, %v1563
  %v4786 = vmul.f32 %v4719, %v1567
  %v4787 = vmul.f32 %v4720, %v1571
  %v4788 = vmul.f32 %v4721, %v1575
  %v4789 = vmul.f32 %v4722, %v1579
  %v4790 = vmul.f32 %v4723, %v1583
  %v4791 = vmul.f32 %v4724, %v1587
  %v4792 = vmul.f32 %v4725, %v1591
  %v4793 = vmul.f32 %v4726, %v1595
  %v4794 = vmul.f32 %v4727, %v1599
  %v4795 = vmul.f32 %v4728, %v1603
  %v4796 = vmul.f32 %v4729, %v1607
  %v4797 = vmul.f32 %v4730, %v1611
  %v4798 = vmul.f32 %v4731, %v1615
  %v4799 = vmul.f32 %v4732, %v1619
  %v4800 = vmul.f32 %v4733, %v1623
  %v4801 = vmul.f32 %v4734, %v1627
  %v4802 = vmul.f32 %v4735, %v1631
  %v4803 = vmul.f32 %v4736, %v1635
  %v4804 = vmul.f32 %v4737, %v1639
  %v4805 = vmul.f32 %v4738, %v1643
  %v4806 = vmul.f32 %v4739, %v1647
  %v4807 = vmul.f32 %v4740, %v1651
  %v4808 = vpack.c.bf16 %v4741, %v4741
  %v4809 = vpack.c.bf16 %v4742, %v4742
  %v4810 = vpack.c.bf16 %v4743, %v4743
  %v4811 = vpack.c.bf16 %v4744, %v4744
  %v4812 = vpack.c.bf16 %v4745, %v4745
  %v4813 = vpack.c.bf16 %v4746, %v4746
  %v4814 = vpack.c.bf16 %v4747, %v4747
  %v4815 = vpack.c.bf16 %v4748, %v4748
  %v4816 = vpack.c.bf16 %v4749, %v4749
  %v4817 = vpack.c.bf16 %v4750, %v4750
  %v4818 = vpack.c.bf16 %v4751, %v4751
  %v4819 = vpack.c.bf16 %v4752, %v4752
  %v4820 = vpack.c.bf16 %v4753, %v4753
  %v4821 = vpack.c.bf16 %v4754, %v4754
  %v4822 = vpack.c.bf16 %v4755, %v4755
  %v4823 = vpack.c.bf16 %v4756, %v4756
  %v4824 = vpack.c.bf16 %v4757, %v4757
  %v4825 = vpack.c.bf16 %v4758, %v4758
  %v4826 = vpack.c.bf16 %v4759, %v4759
  %v4827 = vpack.c.bf16 %v4760, %v4760
  %v4828 = vpack.c.bf16 %v4761, %v4761
  %v4829 = vpack.c.bf16 %v4762, %v4762
  %v4830 = vpack.c.bf16 %v4763, %v4763
  %v4831 = vpack.c.bf16 %v4764, %v4764
  %v4832 = vpack.c.bf16 %v4765, %v4765
  %v4833 = vpack.c.bf16 %v4766, %v4766
  %v4834 = vpack.c.bf16 %v4767, %v4767
  %v4835 = vpack.c.bf16 %v4768, %v4768
  %v4836 = vpack.c.bf16 %v4769, %v4769
  %v4837 = vpack.c.bf16 %v4770, %v4770
  %v4838 = vpack.c.bf16 %v4771, %v4771
  %v4839 = vpack.c.bf16 %v4772, %v4772
  %v4840 = vpack.c.bf16 %v4773, %v4773
  %v4841 = vpack.c.bf16 %v4774, %v4774
  %v4842 = vpack.c.bf16 %v4775, %v4775
  %v4843 = vpack.c.bf16 %v4776, %v4776
  %v4844 = vpack.c.bf16 %v4777, %v4777
  %v4845 = vpack.c.bf16 %v4778, %v4778
  %v4846 = vpack.c.bf16 %v4779, %v4779
  %v4847 = vpack.c.bf16 %v4780, %v4780
  %v4848 = vpack.c.bf16 %v4781, %v4781
  %v4849 = vpack.c.bf16 %v4782, %v4782
  %v4850 = vpack.c.bf16 %v4783, %v4783
  %v4851 = vpack.c.bf16 %v4784, %v4784
  %v4852 = vpack.c.bf16 %v4785, %v4785
  %v4853 = vpack.c.bf16 %v4786, %v4786
  %v4854 = vpack.c.bf16 %v4787, %v4787
  %v4855 = vpack.c.bf16 %v4788, %v4788
  %v4856 = vpack.c.bf16 %v4789, %v4789
  %v4857 = vpack.c.bf16 %v4790, %v4790
  %v4858 = vpack.c.bf16 %v4791, %v4791
  %v4859 = vpack.c.bf16 %v4792, %v4792
  %v4860 = vpack.c.bf16 %v4793, %v4793
  %v4861 = vpack.c.bf16 %v4794, %v4794
  %v4862 = vpack.c.bf16 %v4795, %v4795
  %v4863 = vpack.c.bf16 %v4796, %v4796
  %v4864 = vpack.c.bf16 %v4797, %v4797
  %v4865 = vpack.c.bf16 %v4798, %v4798
  %v4866 = vpack.c.bf16 %v4799, %v4799
  %v4867 = vpack.c.bf16 %v4800, %v4800
  %v4868 = vpack.c.bf16 %v4801, %v4801
  %v4869 = vpack.c.bf16 %v4802, %v4802
  %v4870 = vpack.c.bf16 %v4803, %v4803
  %v4871 = vpack.c.bf16 %v4804, %v4804
  %v4872 = vpack.c.bf16 %v4805, %v4805
  %v4873 = vpack.c.bf16 %v4806, %v4806
  %v4874 = vpack.c.bf16 %v4807, %v4807
  %4942 = vrot.lane.b32.xlu0 %v4808, 32
  %v4943 = vpop.permute.xlu0 %4942
  %4944 = vrot.lane.b32.xlu0 %v4809, 32
  %v4945 = vpop.permute.xlu0 %4944
  %4946 = vrot.lane.b32.xlu0 %v4810, 32
  %v4947 = vpop.permute.xlu0 %4946
  %4948 = vrot.lane.b32.xlu0 %v4811, 32
  %v4949 = vpop.permute.xlu0 %4948
  %4950 = vrot.lane.b32.xlu0 %v4812, 32
  %v4951 = vpop.permute.xlu0 %4950
  %4952 = vrot.lane.b32.xlu0 %v4813, 32
  %v4953 = vpop.permute.xlu0 %4952
  %4954 = vrot.lane.b32.xlu0 %v4814, 32
  %v4955 = vpop.permute.xlu0 %4954
  %4956 = vrot.lane.b32.xlu0 %v4815, 32
  %v4957 = vpop.permute.xlu0 %4956
  %4958 = vrot.lane.b32.xlu0 %v4816, 32
  %v4959 = vpop.permute.xlu0 %4958
  %4960 = vrot.lane.b32.xlu0 %v4817, 32
  %v4961 = vpop.permute.xlu0 %4960
  %4962 = vrot.lane.b32.xlu0 %v4818, 32
  %v4963 = vpop.permute.xlu0 %4962
  %4964 = vrot.lane.b32.xlu0 %v4819, 32
  %v4965 = vpop.permute.xlu0 %4964
  %4966 = vrot.lane.b32.xlu0 %v4820, 32
  %v4967 = vpop.permute.xlu0 %4966
  %4968 = vrot.lane.b32.xlu0 %v4821, 32
  %v4969 = vpop.permute.xlu0 %4968
  %4970 = vrot.lane.b32.xlu0 %v4822, 32
  %v4971 = vpop.permute.xlu0 %4970
  %4972 = vrot.lane.b32.xlu0 %v4823, 32
  %v4973 = vpop.permute.xlu0 %4972
  %4974 = vrot.lane.b32.xlu0 %v4824, 32
  %v4975 = vpop.permute.xlu0 %4974
  %4976 = vrot.lane.b32.xlu0 %v4825, 32
  %v4977 = vpop.permute.xlu0 %4976
  %4978 = vrot.lane.b32.xlu0 %v4826, 32
  %v4979 = vpop.permute.xlu0 %4978
  %4980 = vrot.lane.b32.xlu0 %v4827, 32
  %v4981 = vpop.permute.xlu0 %4980
  %4982 = vrot.lane.b32.xlu0 %v4828, 32
  %v4983 = vpop.permute.xlu0 %4982
  %4984 = vrot.lane.b32.xlu0 %v4829, 32
  %v4985 = vpop.permute.xlu0 %4984
  %4986 = vrot.lane.b32.xlu0 %v4830, 32
  %v4987 = vpop.permute.xlu0 %4986
  %4988 = vrot.lane.b32.xlu0 %v4831, 32
  %v4989 = vpop.permute.xlu0 %4988
  %4990 = vrot.lane.b32.xlu0 %v4832, 32
  %v4991 = vpop.permute.xlu0 %4990
  %4992 = vrot.lane.b32.xlu0 %v4833, 32
  %v4993 = vpop.permute.xlu0 %4992
  %4994 = vrot.lane.b32.xlu0 %v4834, 32
  %v4995 = vpop.permute.xlu0 %4994
  %4996 = vrot.lane.b32.xlu0 %v4835, 32
  %v4997 = vpop.permute.xlu0 %4996
  %4998 = vrot.lane.b32.xlu0 %v4836, 32
  %v4999 = vpop.permute.xlu0 %4998
  %5000 = vrot.lane.b32.xlu0 %v4837, 32
  %v5001 = vpop.permute.xlu0 %5000
  %5002 = vrot.lane.b32.xlu0 %v4838, 32
  %v5003 = vpop.permute.xlu0 %5002
  %5004 = vrot.lane.b32.xlu0 %v4839, 32
  %v5005 = vpop.permute.xlu0 %5004
  %5006 = vrot.lane.b32.xlu0 %v4840, 32
  %v5007 = vpop.permute.xlu0 %5006
  %5008 = vrot.lane.b32.xlu0 %v4841, 32
  %v5009 = vpop.permute.xlu0 %5008
  %5010 = vrot.lane.b32.xlu0 %v4842, 32
  %v5011 = vpop.permute.xlu0 %5010
  %5012 = vrot.lane.b32.xlu0 %v4843, 32
  %v5013 = vpop.permute.xlu0 %5012
  %5014 = vrot.lane.b32.xlu0 %v4844, 32
  %v5015 = vpop.permute.xlu0 %5014
  %5016 = vrot.lane.b32.xlu0 %v4845, 32
  %v5017 = vpop.permute.xlu0 %5016
  %5018 = vrot.lane.b32.xlu0 %v4846, 32
  %v5019 = vpop.permute.xlu0 %5018
  %5020 = vrot.lane.b32.xlu0 %v4847, 32
  %v5021 = vpop.permute.xlu0 %5020
  %5022 = vrot.lane.b32.xlu0 %v4848, 32
  %v5023 = vpop.permute.xlu0 %5022
  %5024 = vrot.lane.b32.xlu0 %v4849, 32
  %v5025 = vpop.permute.xlu0 %5024
  %5026 = vrot.lane.b32.xlu0 %v4850, 32
  %v5027 = vpop.permute.xlu0 %5026
  %5028 = vrot.lane.b32.xlu0 %v4851, 32
  %v5029 = vpop.permute.xlu0 %5028
  %5030 = vrot.lane.b32.xlu0 %v4852, 32
  %v5031 = vpop.permute.xlu0 %5030
  %5032 = vrot.lane.b32.xlu0 %v4853, 32
  %v5033 = vpop.permute.xlu0 %5032
  %5034 = vrot.lane.b32.xlu0 %v4854, 32
  %v5035 = vpop.permute.xlu0 %5034
  %5036 = vrot.lane.b32.xlu0 %v4855, 32
  %v5037 = vpop.permute.xlu0 %5036
  %5038 = vrot.lane.b32.xlu0 %v4856, 32
  %v5039 = vpop.permute.xlu0 %5038
  %5040 = vrot.lane.b32.xlu0 %v4857, 32
  %v5041 = vpop.permute.xlu0 %5040
  %5042 = vrot.lane.b32.xlu0 %v4858, 32
  %v5043 = vpop.permute.xlu0 %5042
  %5044 = vrot.lane.b32.xlu0 %v4859, 32
  %v5045 = vpop.permute.xlu0 %5044
  %5046 = vrot.lane.b32.xlu0 %v4860, 32
  %v5047 = vpop.permute.xlu0 %5046
  %5048 = vrot.lane.b32.xlu0 %v4861, 32
  %v5049 = vpop.permute.xlu0 %5048
  %5050 = vrot.lane.b32.xlu0 %v4862, 32
  %v5051 = vpop.permute.xlu0 %5050
  %5052 = vrot.lane.b32.xlu0 %v4863, 32
  %v5053 = vpop.permute.xlu0 %5052
  %5054 = vrot.lane.b32.xlu0 %v4864, 32
  %v5055 = vpop.permute.xlu0 %5054
  %5056 = vrot.lane.b32.xlu0 %v4865, 32
  %v5057 = vpop.permute.xlu0 %5056
  %5058 = vrot.lane.b32.xlu0 %v4866, 32
  %v5059 = vpop.permute.xlu0 %5058
  %5060 = vrot.lane.b32.xlu0 %v4867, 32
  %v5061 = vpop.permute.xlu0 %5060
  %5062 = vrot.lane.b32.xlu0 %v4868, 32
  %v5063 = vpop.permute.xlu0 %5062
  %5064 = vrot.lane.b32.xlu0 %v4869, 32
  %v5065 = vpop.permute.xlu0 %5064
  %5066 = vrot.lane.b32.xlu0 %v4870, 32
  %v5067 = vpop.permute.xlu0 %5066
  %5068 = vrot.lane.b32.xlu0 %v4871, 32
  %v5069 = vpop.permute.xlu0 %5068
  %5070 = vrot.lane.b32.xlu0 %v4872, 32
  %v5071 = vpop.permute.xlu0 %5070
  %5072 = vrot.lane.b32.xlu0 %v4873, 32
  %v5073 = vpop.permute.xlu0 %5072
  %5074 = vrot.lane.b32.xlu0 %v4874, 32
  %v5075 = vpop.permute.xlu0 %5074
  %vm5143 = vcmask 290048
  %5144 = vst.msk [vmem:[#allocation4] sm:$0xf] %vm5143, %v4943
  %5145 = vst.msk [vmem:[#allocation4 + $0x4] sm:$0xf] %vm5143, %v4945
  %5146 = vst.msk [vmem:[#allocation4 + $0x8] sm:$0xf] %vm5143, %v4947
  %5147 = vst.msk [vmem:[#allocation4 + $0xc] sm:$0xf] %vm5143, %v4949
  %5148 = vst.msk [vmem:[#allocation4 + $0x10] sm:$0xf] %vm5143, %v4951
  %5149 = vst.msk [vmem:[#allocation4 + $0x14] sm:$0xf] %vm5143, %v4953
  %5150 = vst.msk [vmem:[#allocation4 + $0x18] sm:$0xf] %vm5143, %v4955
  %5151 = vst.msk [vmem:[#allocation4 + $0x1c] sm:$0xf] %vm5143, %v4957
  %5152 = vst.msk [vmem:[#allocation4 + $0x20] sm:$0xf] %vm5143, %v4959
  %5153 = vst.msk [vmem:[#allocation4 + $0x24] sm:$0xf] %vm5143, %v4961
  %5154 = vst.msk [vmem:[#allocation4 + $0x28] sm:$0xf] %vm5143, %v4963
  %5155 = vst.msk [vmem:[#allocation4 + $0x2c] sm:$0xf] %vm5143, %v4965
  %5156 = vst.msk [vmem:[#allocation4 + $0x30] sm:$0xf] %vm5143, %v4967
  %5157 = vst.msk [vmem:[#allocation4 + $0x34] sm:$0xf] %vm5143, %v4969
  %5158 = vst.msk [vmem:[#allocation4 + $0x38] sm:$0xf] %vm5143, %v4971
  %5159 = vst.msk [vmem:[#allocation4 + $0x3c] sm:$0xf] %vm5143, %v4973
  %5160 = vst.msk [vmem:[#allocation4 + $0x40] sm:$0xf] %vm5143, %v4975
  %5161 = vst.msk [vmem:[#allocation4 + $0x44] sm:$0xf] %vm5143, %v4977
  %5162 = vst.msk [vmem:[#allocation4 + $0x48] sm:$0xf] %vm5143, %v4979
  %5163 = vst.msk [vmem:[#allocation4 + $0x4c] sm:$0xf] %vm5143, %v4981
  %5164 = vst.msk [vmem:[#allocation4 + $0x50] sm:$0xf] %vm5143, %v4983
  %5165 = vst.msk [vmem:[#allocation4 + $0x54] sm:$0xf] %vm5143, %v4985
  %5166 = vst.msk [vmem:[#allocation4 + $0x58] sm:$0xf] %vm5143, %v4987
  %5167 = vst.msk [vmem:[#allocation4 + $0x5c] sm:$0xf] %vm5143, %v4989
  %5168 = vst.msk [vmem:[#allocation4 + $0x60] sm:$0xf] %vm5143, %v4991
  %5169 = vst.msk [vmem:[#allocation4 + $0x64] sm:$0xf] %vm5143, %v4993
  %5170 = vst.msk [vmem:[#allocation4 + $0x68] sm:$0xf] %vm5143, %v4995
  %5171 = vst.msk [vmem:[#allocation4 + $0x6c] sm:$0xf] %vm5143, %v4997
  %5172 = vst.msk [vmem:[#allocation4 + $0x70] sm:$0xf] %vm5143, %v4999
  %5173 = vst.msk [vmem:[#allocation4 + $0x74] sm:$0xf] %vm5143, %v5001
  %5174 = vst.msk [vmem:[#allocation4 + $0x78] sm:$0xf] %vm5143, %v5003
  %5175 = vst.msk [vmem:[#allocation4 + $0x7c] sm:$0xf] %vm5143, %v5005
  %5176 = vst.msk [vmem:[#allocation4 + $0x80] sm:$0xf] %vm5143, %v5007
  %5177 = vst.msk [vmem:[#allocation4 + $0x84] sm:$0xf] %vm5143, %v5009
  %5178 = vst.msk [vmem:[#allocation4 + $0x88] sm:$0xf] %vm5143, %v5011
  %5179 = vst.msk [vmem:[#allocation4 + $0x8c] sm:$0xf] %vm5143, %v5013
  %5180 = vst.msk [vmem:[#allocation4 + $0x90] sm:$0xf] %vm5143, %v5015
  %5181 = vst.msk [vmem:[#allocation4 + $0x94] sm:$0xf] %vm5143, %v5017
  %5182 = vst.msk [vmem:[#allocation4 + $0x98] sm:$0xf] %vm5143, %v5019
  %5183 = vst.msk [vmem:[#allocation4 + $0x9c] sm:$0xf] %vm5143, %v5021
  %5184 = vst.msk [vmem:[#allocation4 + $0xa0] sm:$0xf] %vm5143, %v5023
  %5185 = vst.msk [vmem:[#allocation4 + $0xa4] sm:$0xf] %vm5143, %v5025
  %5186 = vst.msk [vmem:[#allocation4 + $0xa8] sm:$0xf] %vm5143, %v5027
  %5187 = vst.msk [vmem:[#allocation4 + $0xac] sm:$0xf] %vm5143, %v5029
  %5188 = vst.msk [vmem:[#allocation4 + $0xb0] sm:$0xf] %vm5143, %v5031
  %5189 = vst.msk [vmem:[#allocation4 + $0xb4] sm:$0xf] %vm5143, %v5033
  %5190 = vst.msk [vmem:[#allocation4 + $0xb8] sm:$0xf] %vm5143, %v5035
  %5191 = vst.msk [vmem:[#allocation4 + $0xbc] sm:$0xf] %vm5143, %v5037
  %5192 = vst.msk [vmem:[#allocation4 + $0xc0] sm:$0xf] %vm5143, %v5039
  %5193 = vst.msk [vmem:[#allocation4 + $0xc4] sm:$0xf] %vm5143, %v5041
  %5194 = vst.msk [vmem:[#allocation4 + $0xc8] sm:$0xf] %vm5143, %v5043
  %5195 = vst.msk [vmem:[#allocation4 + $0xcc] sm:$0xf] %vm5143, %v5045
  %5196 = vst.msk [vmem:[#allocation4 + $0xd0] sm:$0xf] %vm5143, %v5047
  %5197 = vst.msk [vmem:[#allocation4 + $0xd4] sm:$0xf] %vm5143, %v5049
  %5198 = vst.msk [vmem:[#allocation4 + $0xd8] sm:$0xf] %vm5143, %v5051
  %5199 = vst.msk [vmem:[#allocation4 + $0xdc] sm:$0xf] %vm5143, %v5053
  %5200 = vst.msk [vmem:[#allocation4 + $0xe0] sm:$0xf] %vm5143, %v5055
  %5201 = vst.msk [vmem:[#allocation4 + $0xe4] sm:$0xf] %vm5143, %v5057
  %5202 = vst.msk [vmem:[#allocation4 + $0xe8] sm:$0xf] %vm5143, %v5059
  %5203 = vst.msk [vmem:[#allocation4 + $0xec] sm:$0xf] %vm5143, %v5061
  %5204 = vst.msk [vmem:[#allocation4 + $0xf0] sm:$0xf] %vm5143, %v5063
  %5205 = vst.msk [vmem:[#allocation4 + $0xf4] sm:$0xf] %vm5143, %v5065
  %5206 = vst.msk [vmem:[#allocation4 + $0xf8] sm:$0xf] %vm5143, %v5067
  %5207 = vst.msk [vmem:[#allocation4 + $0xfc] sm:$0xf] %vm5143, %v5069
  %5208 = vst.msk [vmem:[#allocation4 + $0x100] sm:$0xf] %vm5143, %v5071
  %5209 = vst.msk [vmem:[#allocation4 + $0x104] sm:$0xf] %vm5143, %v5073
  %5210 = vst.msk [vmem:[#allocation4 + $0x108] sm:$0xf] %vm5143, %v5075
  %v5211 = vld [vmem:[#allocation4] sm:$0xf]
  %v5212 = vld [vmem:[#allocation4 + $0x4] sm:$0xf]
  %v5213 = vld [vmem:[#allocation4 + $0x8] sm:$0xf]
  %v5214 = vld [vmem:[#allocation4 + $0xc] sm:$0xf]
  %v5215 = vld [vmem:[#allocation4 + $0x10] sm:$0xf]
  %v5216 = vld [vmem:[#allocation4 + $0x14] sm:$0xf]
  %v5217 = vld [vmem:[#allocation4 + $0x18] sm:$0xf]
  %v5218 = vld [vmem:[#allocation4 + $0x1c] sm:$0xf]
  %v5219 = vld [vmem:[#allocation4 + $0x20] sm:$0xf]
  %v5220 = vld [vmem:[#allocation4 + $0x24] sm:$0xf]
  %v5221 = vld [vmem:[#allocation4 + $0x28] sm:$0xf]
  %v5222 = vld [vmem:[#allocation4 + $0x2c] sm:$0xf]
  %v5223 = vld [vmem:[#allocation4 + $0x30] sm:$0xf]
  %v5224 = vld [vmem:[#allocation4 + $0x34] sm:$0xf]
  %v5225 = vld [vmem:[#allocation4 + $0x38] sm:$0xf]
  %v5226 = vld [vmem:[#allocation4 + $0x3c] sm:$0xf]
  %v5227 = vld [vmem:[#allocation4 + $0x40] sm:$0xf]
  %v5228 = vld [vmem:[#allocation4 + $0x44] sm:$0xf]
  %v5229 = vld [vmem:[#allocation4 + $0x48] sm:$0xf]
  %v5230 = vld [vmem:[#allocation4 + $0x4c] sm:$0xf]
  %v5231 = vld [vmem:[#allocation4 + $0x50] sm:$0xf]
  %v5232 = vld [vmem:[#allocation4 + $0x54] sm:$0xf]
  %v5233 = vld [vmem:[#allocation4 + $0x58] sm:$0xf]
  %v5234 = vld [vmem:[#allocation4 + $0x5c] sm:$0xf]
  %v5235 = vld [vmem:[#allocation4 + $0x60] sm:$0xf]
  %v5236 = vld [vmem:[#allocation4 + $0x64] sm:$0xf]
  %v5237 = vld [vmem:[#allocation4 + $0x68] sm:$0xf]
  %v5238 = vld [vmem:[#allocation4 + $0x6c] sm:$0xf]
  %v5239 = vld [vmem:[#allocation4 + $0x70] sm:$0xf]
  %v5240 = vld [vmem:[#allocation4 + $0x74] sm:$0xf]
  %v5241 = vld [vmem:[#allocation4 + $0x78] sm:$0xf]
  %v5242 = vld [vmem:[#allocation4 + $0x7c] sm:$0xf]
  %v5243 = vld [vmem:[#allocation4 + $0x80] sm:$0xf]
  %v5244 = vld [vmem:[#allocation4 + $0x84] sm:$0xf]
  %v5245 = vld [vmem:[#allocation4 + $0x88] sm:$0xf]
  %v5246 = vld [vmem:[#allocation4 + $0x8c] sm:$0xf]
  %v5247 = vld [vmem:[#allocation4 + $0x90] sm:$0xf]
  %v5248 = vld [vmem:[#allocation4 + $0x94] sm:$0xf]
  %v5249 = vld [vmem:[#allocation4 + $0x98] sm:$0xf]
  %v5250 = vld [vmem:[#allocation4 + $0x9c] sm:$0xf]
  %v5251 = vld [vmem:[#allocation4 + $0xa0] sm:$0xf]
  %v5252 = vld [vmem:[#allocation4 + $0xa4] sm:$0xf]
  %v5253 = vld [vmem:[#allocation4 + $0xa8] sm:$0xf]
  %v5254 = vld [vmem:[#allocation4 + $0xac] sm:$0xf]
  %v5255 = vld [vmem:[#allocation4 + $0xb0] sm:$0xf]
  %v5256 = vld [vmem:[#allocation4 + $0xb4] sm:$0xf]
  %v5257 = vld [vmem:[#allocation4 + $0xb8] sm:$0xf]
  %v5258 = vld [vmem:[#allocation4 + $0xbc] sm:$0xf]
  %v5259 = vld [vmem:[#allocation4 + $0xc0] sm:$0xf]
  %v5260 = vld [vmem:[#allocation4 + $0xc4] sm:$0xf]
  %v5261 = vld [vmem:[#allocation4 + $0xc8] sm:$0xf]
  %v5262 = vld [vmem:[#allocation4 + $0xcc] sm:$0xf]
  %v5263 = vld [vmem:[#allocation4 + $0xd0] sm:$0xf]
  %v5264 = vld [vmem:[#allocation4 + $0xd4] sm:$0xf]
  %v5265 = vld [vmem:[#allocation4 + $0xd8] sm:$0xf]
  %v5266 = vld [vmem:[#allocation4 + $0xdc] sm:$0xf]
  %v5267 = vld [vmem:[#allocation4 + $0xe0] sm:$0xf]
  %v5268 = vld [vmem:[#allocation4 + $0xe4] sm:$0xf]
  %v5269 = vld [vmem:[#allocation4 + $0xe8] sm:$0xf]
  %v5270 = vld [vmem:[#allocation4 + $0xec] sm:$0xf]
  %v5271 = vld [vmem:[#allocation4 + $0xf0] sm:$0xf]
  %v5272 = vld [vmem:[#allocation4 + $0xf4] sm:$0xf]
  %v5273 = vld [vmem:[#allocation4 + $0xf8] sm:$0xf]
  %v5274 = vld [vmem:[#allocation4 + $0xfc] sm:$0xf]
  %v5275 = vld [vmem:[#allocation4 + $0x100] sm:$0xf]
  %v5276 = vld [vmem:[#allocation4 + $0x104] sm:$0xf]
  %v5277 = vld [vmem:[#allocation4 + $0x108] sm:$0xf]
  %v5278 = vld [vmem:[%s2] sm:$0xf]
  %v5279 = vld [vmem:[%s2 + $0x4] sm:$0xf]
  %v5280 = vld [vmem:[%s2 + $0x8] sm:$0xf]
  %v5281 = vld [vmem:[%s2 + $0xc] sm:$0xf]
  %v5282 = vld [vmem:[%s2 + $0x10] sm:$0x3]
  %v5350 = vunpack.c.l.b16 %v5211
  %v5351 = vunpack.c.l.b16 %v5212
  %v5352 = vunpack.c.l.b16 %v5213
  %v5353 = vunpack.c.l.b16 %v5214
  %v5354 = vunpack.c.l.b16 %v5215
  %v5355 = vunpack.c.l.b16 %v5216
  %v5356 = vunpack.c.l.b16 %v5217
  %v5357 = vunpack.c.l.b16 %v5218
  %v5358 = vunpack.c.l.b16 %v5219
  %v5359 = vunpack.c.l.b16 %v5220
  %v5360 = vunpack.c.l.b16 %v5221
  %v5361 = vunpack.c.l.b16 %v5222
  %v5362 = vunpack.c.l.b16 %v5223
  %v5363 = vunpack.c.l.b16 %v5224
  %v5364 = vunpack.c.l.b16 %v5225
  %v5365 = vunpack.c.l.b16 %v5226
  %v5366 = vunpack.c.l.b16 %v5227
  %v5367 = vunpack.c.l.b16 %v5228
  %v5368 = vunpack.c.l.b16 %v5229
  %v5369 = vunpack.c.l.b16 %v5230
  %v5370 = vunpack.c.l.b16 %v5231
  %v5371 = vunpack.c.l.b16 %v5232
  %v5372 = vunpack.c.l.b16 %v5233
  %v5373 = vunpack.c.l.b16 %v5234
  %v5374 = vunpack.c.l.b16 %v5235
  %v5375 = vunpack.c.l.b16 %v5236
  %v5376 = vunpack.c.l.b16 %v5237
  %v5377 = vunpack.c.l.b16 %v5238
  %v5378 = vunpack.c.l.b16 %v5239
  %v5379 = vunpack.c.l.b16 %v5240
  %v5380 = vunpack.c.l.b16 %v5241
  %v5381 = vunpack.c.l.b16 %v5242
  %v5382 = vunpack.c.l.b16 %v5243
  %v5383 = vunpack.c.l.b16 %v5244
  %v5384 = vunpack.c.l.b16 %v5245
  %v5385 = vunpack.c.l.b16 %v5246
  %v5386 = vunpack.c.l.b16 %v5247
  %v5387 = vunpack.c.l.b16 %v5248
  %v5388 = vunpack.c.l.b16 %v5249
  %v5389 = vunpack.c.l.b16 %v5250
  %v5390 = vunpack.c.l.b16 %v5251
  %v5391 = vunpack.c.l.b16 %v5252
  %v5392 = vunpack.c.l.b16 %v5253
  %v5393 = vunpack.c.l.b16 %v5254
  %v5394 = vunpack.c.l.b16 %v5255
  %v5395 = vunpack.c.l.b16 %v5256
  %v5396 = vunpack.c.l.b16 %v5257
  %v5397 = vunpack.c.l.b16 %v5258
  %v5398 = vunpack.c.l.b16 %v5259
  %v5399 = vunpack.c.l.b16 %v5260
  %v5400 = vunpack.c.l.b16 %v5261
  %v5401 = vunpack.c.l.b16 %v5262
  %v5402 = vunpack.c.l.b16 %v5263
  %v5403 = vunpack.c.l.b16 %v5264
  %v5404 = vunpack.c.l.b16 %v5265
  %v5405 = vunpack.c.l.b16 %v5266
  %v5406 = vunpack.c.l.b16 %v5267
  %v5407 = vunpack.c.l.b16 %v5268
  %v5408 = vunpack.c.l.b16 %v5269
  %v5409 = vunpack.c.l.b16 %v5270
  %v5410 = vunpack.c.l.b16 %v5271
  %v5411 = vunpack.c.l.b16 %v5272
  %v5412 = vunpack.c.l.b16 %v5273
  %v5413 = vunpack.c.l.b16 %v5274
  %v5414 = vunpack.c.l.b16 %v5275
  %v5415 = vunpack.c.l.b16 %v5276
  %v5416 = vunpack.c.l.b16 %v5277
  %v5417 = vpack.c.b16 %v5351, %v5350
  %v5418 = vpack.c.b16 %v5353, %v5352
  %v5419 = vpack.c.b16 %v5355, %v5354
  %v5420 = vpack.c.b16 %v5357, %v5356
  %v5421 = vpack.c.b16 %v5359, %v5358
  %v5422 = vpack.c.b16 %v5361, %v5360
  %v5423 = vpack.c.b16 %v5363, %v5362
  %v5424 = vpack.c.b16 %v5365, %v5364
  %v5425 = vpack.c.b16 %v5367, %v5366
  %v5426 = vpack.c.b16 %v5369, %v5368
  %v5427 = vpack.c.b16 %v5371, %v5370
  %v5428 = vpack.c.b16 %v5373, %v5372
  %v5429 = vpack.c.b16 %v5375, %v5374
  %v5430 = vpack.c.b16 %v5377, %v5376
  %v5431 = vpack.c.b16 %v5379, %v5378
  %v5432 = vpack.c.b16 %v5381, %v5380
  %v5433 = vpack.c.b16 %v5383, %v5382
  %v5434 = vpack.c.b16 %v5385, %v5384
  %v5435 = vpack.c.b16 %v5387, %v5386
  %v5436 = vpack.c.b16 %v5389, %v5388
  %v5437 = vpack.c.b16 %v5391, %v5390
  %v5438 = vpack.c.b16 %v5393, %v5392
  %v5439 = vpack.c.b16 %v5395, %v5394
  %v5440 = vpack.c.b16 %v5397, %v5396
  %v5441 = vpack.c.b16 %v5399, %v5398
  %v5442 = vpack.c.b16 %v5401, %v5400
  %v5443 = vpack.c.b16 %v5403, %v5402
  %v5444 = vpack.c.b16 %v5405, %v5404
  %v5445 = vpack.c.b16 %v5407, %v5406
  %v5446 = vpack.c.b16 %v5409, %v5408
  %v5447 = vpack.c.b16 %v5411, %v5410
  %v5448 = vpack.c.b16 %v5413, %v5412
  %v5449 = vpack.c.b16 %v5415, %v5414
  %v5450 = vpack.c.b16 %v5416, %v5416
  %v5456 = vunpack.c.l.b16 %v5278
  %v5457 = vunpack.c.l.b16 %v5279
  %v5458 = vunpack.c.l.b16 %v5280
  %v5459 = vunpack.c.l.b16 %v5281
  %v5460 = vunpack.c.l.b16 %v5282
  %v5461 = vpack.c.b16 %v5457, %v5456
  %v5462 = vpack.c.b16 %v5459, %v5458
  %v5463 = vpack.c.b16 %v5460, %v5460
  %vm5466 = vcmask 293888
  %v5468 = vsel %vm5466, %v5417, 0
  %v5471 = vsel %vm5466, %v5418, 0
  %v5474 = vsel %vm5466, %v5419, 0
  %v5477 = vsel %vm5466, %v5420, 0
  %v5480 = vsel %vm5466, %v5421, 0
  %v5483 = vsel %vm5466, %v5422, 0
  %v5486 = vsel %vm5466, %v5423, 0
  %v5489 = vsel %vm5466, %v5424, 0
  %v5492 = vsel %vm5466, %v5425, 0
  %v5495 = vsel %vm5466, %v5426, 0
  %v5498 = vsel %vm5466, %v5427, 0
  %v5501 = vsel %vm5466, %v5428, 0
  %v5504 = vsel %vm5466, %v5429, 0
  %v5507 = vsel %vm5466, %v5430, 0
  %v5510 = vsel %vm5466, %v5431, 0
  %v5513 = vsel %vm5466, %v5432, 0
  %v5516 = vsel %vm5466, %v5433, 0
  %v5519 = vsel %vm5466, %v5434, 0
  %v5522 = vsel %vm5466, %v5435, 0
  %v5525 = vsel %vm5466, %v5436, 0
  %v5528 = vsel %vm5466, %v5437, 0
  %v5531 = vsel %vm5466, %v5438, 0
  %v5534 = vsel %vm5466, %v5439, 0
  %v5537 = vsel %vm5466, %v5440, 0
  %v5540 = vsel %vm5466, %v5441, 0
  %v5543 = vsel %vm5466, %v5442, 0
  %v5546 = vsel %vm5466, %v5443, 0
  %v5549 = vsel %vm5466, %v5444, 0
  %v5552 = vsel %vm5466, %v5445, 0
  %v5555 = vsel %vm5466, %v5446, 0
  %v5558 = vsel %vm5466, %v5447, 0
  %v5561 = vsel %vm5466, %v5448, 0
  %v5564 = vsel %vm5466, %v5449, 0
  %v5567 = vsel %vm5466, %v5450, 0
  %vm5569 = vcmask 1041408
  %v5571 = vsel %vm5569, %v5463, 0
  %5573 = vmatpush.bf16.msra.mxu0 0
  %5574 = vmatpush.bf16.msra.mxu0 0
  %5575 = vmatpush.bf16.msra.mxu0 0
  %5576 = vmatpush.bf16.msra.mxu0 0
  %5577 = vmatpush.bf16.msra.mxu0 0
  %5578 = vmatpush.bf16.msra.mxu0 %v5571
  %5579 = vmatpush.bf16.msra.mxu0 %v5462
  %5580 = vmatpush.bf16.msra.mxu0 %v5461
  %5581 = vmatmul.bf16.gmra.mxu0 %v5468
  %v5582 = vpop.f32.mrf.mxu0
  %v5583 = vadd.f32 0.0, %v5582
  %v5584 = vpop.f32.mrf.mxu0
  %v5585 = vadd.f32 0.0, %v5584
  %5586 = vmatmul.bf16.gmra.mxu0 %v5471
  %v5587 = vpop.f32.mrf.mxu0
  %v5588 = vadd.f32 0.0, %v5587
  %v5589 = vpop.f32.mrf.mxu0
  %v5590 = vadd.f32 0.0, %v5589
  %5591 = vmatmul.bf16.gmra.mxu0 %v5474
  %v5592 = vpop.f32.mrf.mxu0
  %v5593 = vadd.f32 0.0, %v5592
  %v5594 = vpop.f32.mrf.mxu0
  %v5595 = vadd.f32 0.0, %v5594
  %5596 = vmatmul.bf16.gmra.mxu0 %v5477
  %v5597 = vpop.f32.mrf.mxu0
  %v5598 = vadd.f32 0.0, %v5597
  %v5599 = vpop.f32.mrf.mxu0
  %v5600 = vadd.f32 0.0, %v5599
  %5601 = vmatmul.bf16.gmra.mxu0 %v5480
  %v5602 = vpop.f32.mrf.mxu0
  %v5603 = vadd.f32 0.0, %v5602
  %v5604 = vpop.f32.mrf.mxu0
  %v5605 = vadd.f32 0.0, %v5604
  %5606 = vmatmul.bf16.gmra.mxu0 %v5483
  %v5607 = vpop.f32.mrf.mxu0
  %v5608 = vadd.f32 0.0, %v5607
  %v5609 = vpop.f32.mrf.mxu0
  %v5610 = vadd.f32 0.0, %v5609
  %5611 = vmatmul.bf16.gmra.mxu0 %v5486
  %v5612 = vpop.f32.mrf.mxu0
  %v5613 = vadd.f32 0.0, %v5612
  %v5614 = vpop.f32.mrf.mxu0
  %v5615 = vadd.f32 0.0, %v5614
  %5616 = vmatmul.bf16.gmra.mxu0 %v5489
  %v5617 = vpop.f32.mrf.mxu0
  %v5618 = vadd.f32 0.0, %v5617
  %v5619 = vpop.f32.mrf.mxu0
  %v5620 = vadd.f32 0.0, %v5619
  %5621 = vmatmul.bf16.gmra.mxu0 %v5492
  %v5622 = vpop.f32.mrf.mxu0
  %v5623 = vadd.f32 0.0, %v5622
  %v5624 = vpop.f32.mrf.mxu0
  %v5625 = vadd.f32 0.0, %v5624
  %5626 = vmatmul.bf16.gmra.mxu0 %v5495
  %v5627 = vpop.f32.mrf.mxu0
  %v5628 = vadd.f32 0.0, %v5627
  %v5629 = vpop.f32.mrf.mxu0
  %v5630 = vadd.f32 0.0, %v5629
  %5631 = vmatmul.bf16.gmra.mxu0 %v5498
  %v5632 = vpop.f32.mrf.mxu0
  %v5633 = vadd.f32 0.0, %v5632
  %v5634 = vpop.f32.mrf.mxu0
  %v5635 = vadd.f32 0.0, %v5634
  %5636 = vmatmul.bf16.gmra.mxu0 %v5501
  %v5637 = vpop.f32.mrf.mxu0
  %v5638 = vadd.f32 0.0, %v5637
  %v5639 = vpop.f32.mrf.mxu0
  %v5640 = vadd.f32 0.0, %v5639
  %5641 = vmatmul.bf16.gmra.mxu0 %v5504
  %v5642 = vpop.f32.mrf.mxu0
  %v5643 = vadd.f32 0.0, %v5642
  %v5644 = vpop.f32.mrf.mxu0
  %v5645 = vadd.f32 0.0, %v5644
  %5646 = vmatmul.bf16.gmra.mxu0 %v5507
  %v5647 = vpop.f32.mrf.mxu0
  %v5648 = vadd.f32 0.0, %v5647
  %v5649 = vpop.f32.mrf.mxu0
  %v5650 = vadd.f32 0.0, %v5649
  %5651 = vmatmul.bf16.gmra.mxu0 %v5510
  %v5652 = vpop.f32.mrf.mxu0
  %v5653 = vadd.f32 0.0, %v5652
  %v5654 = vpop.f32.mrf.mxu0
  %v5655 = vadd.f32 0.0, %v5654
  %5656 = vmatmul.bf16.gmra.mxu0 %v5513
  %v5657 = vpop.f32.mrf.mxu0
  %v5658 = vadd.f32 0.0, %v5657
  %v5659 = vpop.f32.mrf.mxu0
  %v5660 = vadd.f32 0.0, %v5659
  %5661 = vmatmul.bf16.gmra.mxu0 %v5516
  %v5662 = vpop.f32.mrf.mxu0
  %v5663 = vpop.f32.mrf.mxu0
  %5664 = vmatmul.bf16.gmra.mxu0 %v5519
  %v5665 = vpop.f32.mrf.mxu0
  %v5666 = vpop.f32.mrf.mxu0
  %v5667 = vadd.f32 0.0, %v5666
  %5668 = vmatmul.bf16.gmra.mxu0 %v5522
  %v5669 = vpop.f32.mrf.mxu0
  %v5670 = vadd.f32 0.0, %v5669
  %v5671 = vpop.f32.mrf.mxu0
  %v5672 = vadd.f32 0.0, %v5671
  %5673 = vmatmul.bf16.gmra.mxu0 %v5525
  %v5674 = vpop.f32.mrf.mxu0
  %v5675 = vadd.f32 0.0, %v5674
  %v5676 = vpop.f32.mrf.mxu0
  %v5677 = vadd.f32 0.0, %v5676
  %5678 = vmatmul.bf16.gmra.mxu0 %v5528
  %v5679 = vpop.f32.mrf.mxu0
  %v5680 = vadd.f32 0.0, %v5679
  %v5681 = vpop.f32.mrf.mxu0
  %v5682 = vadd.f32 0.0, %v5681
  %5683 = vmatmul.bf16.gmra.mxu0 %v5531
  %v5684 = vpop.f32.mrf.mxu0
  %v5685 = vadd.f32 0.0, %v5684
  %v5686 = vpop.f32.mrf.mxu0
  %v5687 = vadd.f32 0.0, %v5686
  %5688 = vmatmul.bf16.gmra.mxu0 %v5534
  %v5689 = vpop.f32.mrf.mxu0
  %v5690 = vadd.f32 0.0, %v5689
  %v5691 = vpop.f32.mrf.mxu0
  %v5692 = vadd.f32 0.0, %v5691
  %5693 = vmatmul.bf16.gmra.mxu0 %v5537
  %v5694 = vpop.f32.mrf.mxu0
  %v5695 = vadd.f32 0.0, %v5694
  %v5696 = vpop.f32.mrf.mxu0
  %v5697 = vadd.f32 0.0, %v5696
  %5698 = vmatmul.bf16.gmra.mxu0 %v5540
  %v5699 = vpop.f32.mrf.mxu0
  %v5700 = vadd.f32 0.0, %v5699
  %v5701 = vpop.f32.mrf.mxu0
  %v5702 = vadd.f32 0.0, %v5701
  %5703 = vmatmul.bf16.gmra.mxu0 %v5543
  %v5704 = vpop.f32.mrf.mxu0
  %v5705 = vadd.f32 0.0, %v5704
  %v5706 = vpop.f32.mrf.mxu0
  %v5707 = vadd.f32 0.0, %v5706
  %5708 = vmatmul.bf16.gmra.mxu0 %v5546
  %v5709 = vpop.f32.mrf.mxu0
  %v5710 = vadd.f32 0.0, %v5709
  %v5711 = vpop.f32.mrf.mxu0
  %v5712 = vadd.f32 0.0, %v5711
  %5713 = vmatmul.bf16.gmra.mxu0 %v5549
  %v5714 = vpop.f32.mrf.mxu0
  %v5715 = vadd.f32 0.0, %v5714
  %v5716 = vpop.f32.mrf.mxu0
  %v5717 = vadd.f32 0.0, %v5716
  %5718 = vmatmul.bf16.gmra.mxu0 %v5552
  %v5719 = vpop.f32.mrf.mxu0
  %v5720 = vadd.f32 0.0, %v5719
  %v5721 = vpop.f32.mrf.mxu0
  %v5722 = vadd.f32 0.0, %v5721
  %5723 = vmatmul.bf16.gmra.mxu0 %v5555
  %v5724 = vpop.f32.mrf.mxu0
  %v5725 = vadd.f32 0.0, %v5724
  %v5726 = vpop.f32.mrf.mxu0
  %v5727 = vadd.f32 0.0, %v5726
  %5728 = vmatmul.bf16.gmra.mxu0 %v5558
  %v5729 = vpop.f32.mrf.mxu0
  %v5730 = vadd.f32 0.0, %v5729
  %v5731 = vpop.f32.mrf.mxu0
  %v5732 = vadd.f32 0.0, %v5731
  %5733 = vmatmul.bf16.gmra.mxu0 %v5561
  %v5734 = vpop.f32.mrf.mxu0
  %v5735 = vadd.f32 0.0, %v5734
  %v5736 = vpop.f32.mrf.mxu0
  %v5737 = vadd.f32 0.0, %v5736
  %5738 = vmatmul.bf16.gmra.mxu0 %v5564
  %v5739 = vpop.f32.mrf.mxu0
  %v5740 = vadd.f32 0.0, %v5739
  %v5741 = vpop.f32.mrf.mxu0
  %v5742 = vadd.f32 0.0, %v5741
  %5743 = vmatmul.bf16.gmra.mxu0 %v5567
  %v5744 = vpop.f32.mrf.mxu0
  %v5745 = vadd.f32 0.0, %v5744
  %v5746 = vpop.f32.mrf.mxu0
  %5747 = vdwg.mxu0
  %v5748 = vld [vmem:[%s3] sm:$0x1]
  %v5750 = vperm.slane %v5748, 0
  %v5752 = vmul.f32 %v5583, %v5750
  %v5753 = vmul.f32 %v5585, %v5750
  %v5754 = vmul.f32 %v5588, %v5750
  %v5755 = vmul.f32 %v5590, %v5750
  %v5756 = vmul.f32 %v5593, %v5750
  %v5757 = vmul.f32 %v5595, %v5750
  %v5758 = vmul.f32 %v5598, %v5750
  %v5759 = vmul.f32 %v5600, %v5750
  %v5760 = vmul.f32 %v5603, %v5750
  %v5761 = vmul.f32 %v5605, %v5750
  %v5762 = vmul.f32 %v5608, %v5750
  %v5763 = vmul.f32 %v5610, %v5750
  %v5764 = vmul.f32 %v5613, %v5750
  %v5765 = vmul.f32 %v5615, %v5750
  %v5766 = vmul.f32 %v5618, %v5750
  %v5767 = vmul.f32 %v5620, %v5750
  %v5768 = vmul.f32 %v5623, %v5750
  %v5769 = vmul.f32 %v5625, %v5750
  %v5770 = vmul.f32 %v5628, %v5750
  %v5771 = vmul.f32 %v5630, %v5750
  %v5772 = vmul.f32 %v5633, %v5750
  %v5773 = vmul.f32 %v5635, %v5750
  %v5774 = vmul.f32 %v5638, %v5750
  %v5775 = vmul.f32 %v5640, %v5750
  %v5776 = vmul.f32 %v5643, %v5750
  %v5777 = vmul.f32 %v5645, %v5750
  %v5778 = vmul.f32 %v5648, %v5750
  %v5779 = vmul.f32 %v5650, %v5750
  %v5780 = vmul.f32 %v5653, %v5750
  %v5781 = vmul.f32 %v5655, %v5750
  %v5782 = vmul.f32 %v5658, %v5750
  %v5783 = vmul.f32 %v5660, %v5750
  %v5784 = vmul.f32 %v5667, %v5750
  %v5785 = vmul.f32 %v5670, %v5750
  %v5786 = vmul.f32 %v5672, %v5750
  %v5787 = vmul.f32 %v5675, %v5750
  %v5788 = vmul.f32 %v5677, %v5750
  %v5789 = vmul.f32 %v5680, %v5750
  %v5790 = vmul.f32 %v5682, %v5750
  %v5791 = vmul.f32 %v5685, %v5750
  %v5792 = vmul.f32 %v5687, %v5750
  %v5793 = vmul.f32 %v5690, %v5750
  %v5794 = vmul.f32 %v5692, %v5750
  %v5795 = vmul.f32 %v5695, %v5750
  %v5796 = vmul.f32 %v5697, %v5750
  %v5797 = vmul.f32 %v5700, %v5750
  %v5798 = vmul.f32 %v5702, %v5750
  %v5799 = vmul.f32 %v5705, %v5750
  %v5800 = vmul.f32 %v5707, %v5750
  %v5801 = vmul.f32 %v5710, %v5750
  %v5802 = vmul.f32 %v5712, %v5750
  %v5803 = vmul.f32 %v5715, %v5750
  %v5804 = vmul.f32 %v5717, %v5750
  %v5805 = vmul.f32 %v5720, %v5750
  %v5806 = vmul.f32 %v5722, %v5750
  %v5807 = vmul.f32 %v5725, %v5750
  %v5808 = vmul.f32 %v5727, %v5750
  %v5809 = vmul.f32 %v5730, %v5750
  %v5810 = vmul.f32 %v5732, %v5750
  %v5811 = vmul.f32 %v5735, %v5750
  %v5812 = vmul.f32 %v5737, %v5750
  %v5813 = vmul.f32 %v5740, %v5750
  %v5814 = vmul.f32 %v5742, %v5750
  %v5815 = vmul.f32 %v5745, %v5750
  %v5816 = vld [vmem:[%s4] sm:$0x1]
  %v5818 = vperm.slane %v5816, 0
  %v5820 = vadd.f32 %v5752, %v5818
  %v5821 = vadd.f32 %v5753, %v5818
  %v5822 = vadd.f32 %v5754, %v5818
  %v5823 = vadd.f32 %v5755, %v5818
  %v5824 = vadd.f32 %v5756, %v5818
  %v5825 = vadd.f32 %v5757, %v5818
  %v5826 = vadd.f32 %v5758, %v5818
  %v5827 = vadd.f32 %v5759, %v5818
  %v5828 = vadd.f32 %v5760, %v5818
  %v5829 = vadd.f32 %v5761, %v5818
  %v5830 = vadd.f32 %v5762, %v5818
  %v5831 = vadd.f32 %v5763, %v5818
  %v5832 = vadd.f32 %v5764, %v5818
  %v5833 = vadd.f32 %v5765, %v5818
  %v5834 = vadd.f32 %v5766, %v5818
  %v5835 = vadd.f32 %v5767, %v5818
  %v5836 = vadd.f32 %v5768, %v5818
  %v5837 = vadd.f32 %v5769, %v5818
  %v5838 = vadd.f32 %v5770, %v5818
  %v5839 = vadd.f32 %v5771, %v5818
  %v5840 = vadd.f32 %v5772, %v5818
  %v5841 = vadd.f32 %v5773, %v5818
  %v5842 = vadd.f32 %v5774, %v5818
  %v5843 = vadd.f32 %v5775, %v5818
  %v5844 = vadd.f32 %v5776, %v5818
  %v5845 = vadd.f32 %v5777, %v5818
  %v5846 = vadd.f32 %v5778, %v5818
  %v5847 = vadd.f32 %v5779, %v5818
  %v5848 = vadd.f32 %v5780, %v5818
  %v5849 = vadd.f32 %v5781, %v5818
  %v5850 = vadd.f32 %v5782, %v5818
  %v5851 = vadd.f32 %v5783, %v5818
  %v5852 = vadd.f32 %v5784, %v5818
  %v5853 = vadd.f32 %v5785, %v5818
  %v5854 = vadd.f32 %v5786, %v5818
  %v5855 = vadd.f32 %v5787, %v5818
  %v5856 = vadd.f32 %v5788, %v5818
  %v5857 = vadd.f32 %v5789, %v5818
  %v5858 = vadd.f32 %v5790, %v5818
  %v5859 = vadd.f32 %v5791, %v5818
  %v5860 = vadd.f32 %v5792, %v5818
  %v5861 = vadd.f32 %v5793, %v5818
  %v5862 = vadd.f32 %v5794, %v5818
  %v5863 = vadd.f32 %v5795, %v5818
  %v5864 = vadd.f32 %v5796, %v5818
  %v5865 = vadd.f32 %v5797, %v5818
  %v5866 = vadd.f32 %v5798, %v5818
  %v5867 = vadd.f32 %v5799, %v5818
  %v5868 = vadd.f32 %v5800, %v5818
  %v5869 = vadd.f32 %v5801, %v5818
  %v5870 = vadd.f32 %v5802, %v5818
  %v5871 = vadd.f32 %v5803, %v5818
  %v5872 = vadd.f32 %v5804, %v5818
  %v5873 = vadd.f32 %v5805, %v5818
  %v5874 = vadd.f32 %v5806, %v5818
  %v5875 = vadd.f32 %v5807, %v5818
  %v5876 = vadd.f32 %v5808, %v5818
  %v5877 = vadd.f32 %v5809, %v5818
  %v5878 = vadd.f32 %v5810, %v5818
  %v5879 = vadd.f32 %v5811, %v5818
  %v5880 = vadd.f32 %v5812, %v5818
  %v5881 = vadd.f32 %v5813, %v5818
  %v5882 = vadd.f32 %v5814, %v5818
  %v5883 = vadd.f32 %v5815, %v5818
  %v5884 = vmax.f32 %v5820, 0.0
  %v5885 = vmax.f32 %v5821, 0.0
  %v5886 = vmax.f32 %v5822, 0.0
  %v5887 = vmax.f32 %v5823, 0.0
  %v5888 = vmax.f32 %v5824, 0.0
  %v5889 = vmax.f32 %v5825, 0.0
  %v5890 = vmax.f32 %v5826, 0.0
  %v5891 = vmax.f32 %v5827, 0.0
  %v5892 = vmax.f32 %v5828, 0.0
  %v5893 = vmax.f32 %v5829, 0.0
  %v5894 = vmax.f32 %v5830, 0.0
  %v5895 = vmax.f32 %v5831, 0.0
  %v5896 = vmax.f32 %v5832, 0.0
  %v5897 = vmax.f32 %v5833, 0.0
  %v5898 = vmax.f32 %v5834, 0.0
  %v5899 = vmax.f32 %v5835, 0.0
  %v5900 = vmax.f32 %v5836, 0.0
  %v5901 = vmax.f32 %v5837, 0.0
  %v5902 = vmax.f32 %v5838, 0.0
  %v5903 = vmax.f32 %v5839, 0.0
  %v5904 = vmax.f32 %v5840, 0.0
  %v5905 = vmax.f32 %v5841, 0.0
  %v5906 = vmax.f32 %v5842, 0.0
  %v5907 = vmax.f32 %v5843, 0.0
  %v5908 = vmax.f32 %v5844, 0.0
  %v5909 = vmax.f32 %v5845, 0.0
  %v5910 = vmax.f32 %v5846, 0.0
  %v5911 = vmax.f32 %v5847, 0.0
  %v5912 = vmax.f32 %v5848, 0.0
  %v5913 = vmax.f32 %v5849, 0.0
  %v5914 = vmax.f32 %v5850, 0.0
  %v5915 = vmax.f32 %v5851, 0.0
  %v5916 = vmax.f32 %v5852, 0.0
  %v5917 = vmax.f32 %v5853, 0.0
  %v5918 = vmax.f32 %v5854, 0.0
  %v5919 = vmax.f32 %v5855, 0.0
  %v5920 = vmax.f32 %v5856, 0.0
  %v5921 = vmax.f32 %v5857, 0.0
  %v5922 = vmax.f32 %v5858, 0.0
  %v5923 = vmax.f32 %v5859, 0.0
  %v5924 = vmax.f32 %v5860, 0.0
  %v5925 = vmax.f32 %v5861, 0.0
  %v5926 = vmax.f32 %v5862, 0.0
  %v5927 = vmax.f32 %v5863, 0.0
  %v5928 = vmax.f32 %v5864, 0.0
  %v5929 = vmax.f32 %v5865, 0.0
  %v5930 = vmax.f32 %v5866, 0.0
  %v5931 = vmax.f32 %v5867, 0.0
  %v5932 = vmax.f32 %v5868, 0.0
  %v5933 = vmax.f32 %v5869, 0.0
  %v5934 = vmax.f32 %v5870, 0.0
  %v5935 = vmax.f32 %v5871, 0.0
  %v5936 = vmax.f32 %v5872, 0.0
  %v5937 = vmax.f32 %v5873, 0.0
  %v5938 = vmax.f32 %v5874, 0.0
  %v5939 = vmax.f32 %v5875, 0.0
  %v5940 = vmax.f32 %v5876, 0.0
  %v5941 = vmax.f32 %v5877, 0.0
  %v5942 = vmax.f32 %v5878, 0.0
  %v5943 = vmax.f32 %v5879, 0.0
  %v5944 = vmax.f32 %v5880, 0.0
  %v5945 = vmax.f32 %v5881, 0.0
  %v5946 = vmax.f32 %v5882, 0.0
  %v5947 = vmax.f32 %v5883, 0.0
  %5948 = vst.msk [vmem:[#allocation3 + $0x18] sm:$0xff] %vm30, %v5884
  %5949 = vst.msk [vmem:[#allocation3 + $0x20] sm:$0xff] %vm30, %v5885
  %5950 = vst.msk [vmem:[#allocation3 + $0x28] sm:$0xff] %vm30, %v5886
  %5951 = vst.msk [vmem:[#allocation3 + $0x30] sm:$0xff] %vm30, %v5887
  %5952 = vst.msk [vmem:[#allocation3 + $0x38] sm:$0xff] %vm30, %v5888
  %5953 = vst.msk [vmem:[#allocation3 + $0x40] sm:$0xff] %vm30, %v5889
  %5954 = vst.msk [vmem:[#allocation3 + $0x48] sm:$0xff] %vm30, %v5890
  %5955 = vst.msk [vmem:[#allocation3 + $0x50] sm:$0xff] %vm30, %v5891
  %5956 = vst.msk [vmem:[#allocation3 + $0x58] sm:$0xff] %vm30, %v5892
  %5957 = vst.msk [vmem:[#allocation3 + $0x60] sm:$0xff] %vm30, %v5893
  %5958 = vst.msk [vmem:[#allocation3 + $0x68] sm:$0xff] %vm30, %v5894
  %5959 = vst.msk [vmem:[#allocation3 + $0x70] sm:$0xff] %vm30, %v5895
  %5960 = vst.msk [vmem:[#allocation3 + $0x78] sm:$0xff] %vm30, %v5896
  %5961 = vst.msk [vmem:[#allocation3 + $0x80] sm:$0xff] %vm30, %v5897
  %5962 = vst.msk [vmem:[#allocation3 + $0x88] sm:$0xff] %vm30, %v5898
  %5963 = vst.msk [vmem:[#allocation3 + $0x90] sm:$0xff] %vm30, %v5899
  %5964 = vst.msk [vmem:[#allocation3 + $0x98] sm:$0xff] %vm30, %v5900
  %5965 = vst.msk [vmem:[#allocation3 + $0xa0] sm:$0xff] %vm30, %v5901
  %5966 = vst.msk [vmem:[#allocation3 + $0xa8] sm:$0xff] %vm30, %v5902
  %5967 = vst.msk [vmem:[#allocation3 + $0xb0] sm:$0xff] %vm30, %v5903
  %5968 = vst.msk [vmem:[#allocation3 + $0xb8] sm:$0xff] %vm30, %v5904
  %5969 = vst.msk [vmem:[#allocation3 + $0xc0] sm:$0xff] %vm30, %v5905
  %5970 = vst.msk [vmem:[#allocation3 + $0xc8] sm:$0xff] %vm30, %v5906
  %5971 = vst.msk [vmem:[#allocation3 + $0xd0] sm:$0xff] %vm30, %v5907
  %5972 = vst.msk [vmem:[#allocation3 + $0xd8] sm:$0xff] %vm30, %v5908
  %5973 = vst.msk [vmem:[#allocation3 + $0xe0] sm:$0xff] %vm30, %v5909
  %5974 = vst.msk [vmem:[#allocation3 + $0xe8] sm:$0xff] %vm30, %v5910
  %5975 = vst.msk [vmem:[#allocation3 + $0xf0] sm:$0xff] %vm30, %v5911
  %5976 = vst.msk [vmem:[#allocation3 + $0xf8] sm:$0xff] %vm30, %v5912
  %5977 = vst.msk [vmem:[#allocation3 + $0x100] sm:$0xff] %vm30, %v5913
  %5978 = vst.msk [vmem:[#allocation3 + $0x108] sm:$0xff] %vm30, %v5914
  %5979 = vst.msk [vmem:[#allocation3 + $0x110] sm:$0xff] %vm30, %v5915
  %5980 = vst.msk [vmem:[#allocation3 + $0x130] sm:$0xff] %vm30, %v5916
  %5981 = vst.msk [vmem:[#allocation3 + $0x138] sm:$0xff] %vm30, %v5917
  %5982 = vst.msk [vmem:[#allocation3 + $0x140] sm:$0xff] %vm30, %v5918
  %5983 = vst.msk [vmem:[#allocation3 + $0x148] sm:$0xff] %vm30, %v5919
  %5984 = vst.msk [vmem:[#allocation3 + $0x150] sm:$0xff] %vm30, %v5920
  %5985 = vst.msk [vmem:[#allocation3 + $0x158] sm:$0xff] %vm30, %v5921
  %5986 = vst.msk [vmem:[#allocation3 + $0x160] sm:$0xff] %vm30, %v5922
  %5987 = vst.msk [vmem:[#allocation3 + $0x168] sm:$0xff] %vm30, %v5923
  %5988 = vst.msk [vmem:[#allocation3 + $0x170] sm:$0xff] %vm30, %v5924
  %5989 = vst.msk [vmem:[#allocation3 + $0x178] sm:$0xff] %vm30, %v5925
  %5990 = vst.msk [vmem:[#allocation3 + $0x180] sm:$0xff] %vm30, %v5926
  %5991 = vst.msk [vmem:[#allocation3 + $0x188] sm:$0xff] %vm30, %v5927
  %5992 = vst.msk [vmem:[#allocation3 + $0x190] sm:$0xff] %vm30, %v5928
  %5993 = vst.msk [vmem:[#allocation3 + $0x198] sm:$0xff] %vm30, %v5929
  %5994 = vst.msk [vmem:[#allocation3 + $0x1a0] sm:$0xff] %vm30, %v5930
  %5995 = vst.msk [vmem:[#allocation3 + $0x1a8] sm:$0xff] %vm30, %v5931
  %5996 = vst.msk [vmem:[#allocation3 + $0x1b0] sm:$0xff] %vm30, %v5932
  %5997 = vst.msk [vmem:[#allocation3 + $0x1b8] sm:$0xff] %vm30, %v5933
  %5998 = vst.msk [vmem:[#allocation3 + $0x1c0] sm:$0xff] %vm30, %v5934
  %5999 = vst.msk [vmem:[#allocation3 + $0x1c8] sm:$0xff] %vm30, %v5935
  %6000 = vst.msk [vmem:[#allocation3 + $0x1d0] sm:$0xff] %vm30, %v5936
  %6001 = vst.msk [vmem:[#allocation3 + $0x1d8] sm:$0xff] %vm30, %v5937
  %6002 = vst.msk [vmem:[#allocation3 + $0x1e0] sm:$0xff] %vm30, %v5938
  %6003 = vst.msk [vmem:[#allocation3 + $0x1e8] sm:$0xff] %vm30, %v5939
  %6004 = vst.msk [vmem:[#allocation3 + $0x1f0] sm:$0xff] %vm30, %v5940
  %6005 = vst.msk [vmem:[#allocation3 + $0x1f8] sm:$0xff] %vm30, %v5941
  %6006 = vst.msk [vmem:[#allocation3 + $0x200] sm:$0xff] %vm30, %v5942
  %6007 = vst.msk [vmem:[#allocation3 + $0x208] sm:$0xff] %vm30, %v5943
  %6008 = vst.msk [vmem:[#allocation3 + $0x210] sm:$0xff] %vm30, %v5944
  %6009 = vst.msk [vmem:[#allocation3 + $0x218] sm:$0xff] %vm30, %v5945
  %6010 = vst.msk [vmem:[#allocation3 + $0x220] sm:$0xff] %vm30, %v5946
  %6011 = vst.msk [vmem:[#allocation3 + $0x228] sm:$0xff] %vm30, %v5947
  %v6012 = vld [vmem:[#allocation3 + $0x7] sm:$0xff]
  %v6013 = vld [vmem:[#allocation3 + $0xf] sm:$0xff]
  %v6014 = vld [vmem:[#allocation3 + $0x17] sm:$0xff]
  %v6015 = vld [vmem:[#allocation3 + $0x1f] sm:$0xff]
  %v6016 = vld [vmem:[#allocation3 + $0x27] sm:$0xff]
  %v6017 = vld [vmem:[#allocation3 + $0x2f] sm:$0xff]
  %v6018 = vld [vmem:[#allocation3 + $0x37] sm:$0xff]
  %v6019 = vld [vmem:[#allocation3 + $0x3f] sm:$0xff]
  %v6020 = vld [vmem:[#allocation3 + $0x47] sm:$0xff]
  %v6021 = vld [vmem:[#allocation3 + $0x4f] sm:$0xff]
  %v6022 = vld [vmem:[#allocation3 + $0x57] sm:$0xff]
  %v6023 = vld [vmem:[#allocation3 + $0x5f] sm:$0xff]
  %v6024 = vld [vmem:[#allocation3 + $0x67] sm:$0xff]
  %v6025 = vld [vmem:[#allocation3 + $0x6f] sm:$0xff]
  %v6026 = vld [vmem:[#allocation3 + $0x77] sm:$0xff]
  %v6027 = vld [vmem:[#allocation3 + $0x7f] sm:$0xff]
  %v6028 = vld [vmem:[#allocation3 + $0x87] sm:$0xff]
  %v6029 = vld [vmem:[#allocation3 + $0x8f] sm:$0xff]
  %v6030 = vld [vmem:[#allocation3 + $0x97] sm:$0xff]
  %v6031 = vld [vmem:[#allocation3 + $0x9f] sm:$0xff]
  %v6032 = vld [vmem:[#allocation3 + $0xa7] sm:$0xff]
  %v6033 = vld [vmem:[#allocation3 + $0xaf] sm:$0xff]
  %v6034 = vld [vmem:[#allocation3 + $0xb7] sm:$0xff]
  %v6035 = vld [vmem:[#allocation3 + $0xbf] sm:$0xff]
  %v6036 = vld [vmem:[#allocation3 + $0xc7] sm:$0xff]
  %v6037 = vld [vmem:[#allocation3 + $0xcf] sm:$0xff]
  %v6038 = vld [vmem:[#allocation3 + $0xd7] sm:$0xff]
  %v6039 = vld [vmem:[#allocation3 + $0xdf] sm:$0xff]
  %v6040 = vld [vmem:[#allocation3 + $0xe7] sm:$0xff]
  %v6041 = vld [vmem:[#allocation3 + $0xef] sm:$0xff]
  %v6042 = vld [vmem:[#allocation3 + $0xf7] sm:$0xff]
  %v6043 = vld [vmem:[#allocation3 + $0xff] sm:$0xff]
  %v6044 = vld [vmem:[#allocation3 + $0x107] sm:$0xff]
  %v6045 = vld [vmem:[#allocation3 + $0x10f] sm:$0xff]
  %v6046 = vld [vmem:[#allocation3 + $0x117] sm:$0xff]
  %v6047 = vld [vmem:[#allocation3 + $0x11f] sm:$0xff]
  %v6048 = vld [vmem:[#allocation3 + $0x127] sm:$0xff]
  %v6049 = vld [vmem:[#allocation3 + $0x12f] sm:$0xff]
  %v6050 = vld [vmem:[#allocation3 + $0x137] sm:$0xff]
  %v6051 = vld [vmem:[#allocation3 + $0x13f] sm:$0xff]
  %v6052 = vld [vmem:[#allocation3 + $0x147] sm:$0xff]
  %v6053 = vld [vmem:[#allocation3 + $0x14f] sm:$0xff]
  %v6054 = vld [vmem:[#allocation3 + $0x157] sm:$0xff]
  %v6055 = vld [vmem:[#allocation3 + $0x15f] sm:$0xff]
  %v6056 = vld [vmem:[#allocation3 + $0x167] sm:$0xff]
  %v6057 = vld [vmem:[#allocation3 + $0x16f] sm:$0xff]
  %v6058 = vld [vmem:[#allocation3 + $0x177] sm:$0xff]
  %v6059 = vld [vmem:[#allocation3 + $0x17f] sm:$0xff]
  %v6060 = vld [vmem:[#allocation3 + $0x187] sm:$0xff]
  %v6061 = vld [vmem:[#allocation3 + $0x18f] sm:$0xff]
  %v6062 = vld [vmem:[#allocation3 + $0x197] sm:$0xff]
  %v6063 = vld [vmem:[#allocation3 + $0x19f] sm:$0xff]
  %v6064 = vld [vmem:[#allocation3 + $0x1a7] sm:$0xff]
  %v6065 = vld [vmem:[#allocation3 + $0x1af] sm:$0xff]
  %v6066 = vld [vmem:[#allocation3 + $0x1b7] sm:$0xff]
  %v6067 = vld [vmem:[#allocation3 + $0x1bf] sm:$0xff]
  %v6068 = vld [vmem:[#allocation3 + $0x1c7] sm:$0xff]
  %v6069 = vld [vmem:[#allocation3 + $0x1cf] sm:$0xff]
  %v6070 = vld [vmem:[#allocation3 + $0x1d7] sm:$0xff]
  %v6071 = vld [vmem:[#allocation3 + $0x1df] sm:$0xff]
  %v6072 = vld [vmem:[#allocation3 + $0x1e7] sm:$0xff]
  %v6073 = vld [vmem:[#allocation3 + $0x1ef] sm:$0xff]
  %v6074 = vld [vmem:[#allocation3 + $0x1f7] sm:$0xff]
  %v6075 = vld [vmem:[#allocation3 + $0x1ff] sm:$0xff]
  %v6076 = vld [vmem:[#allocation3 + $0x207] sm:$0xff]
  %v6077 = vld [vmem:[#allocation3 + $0x20f] sm:$0xff]
  %v6078 = vld [vmem:[#allocation3 + $0x217] sm:$0xff]
  %v6079 = vmul.f32 %v6012, %v314
  %v6080 = vmul.f32 %v6013, %v319
  %v6081 = vmul.f32 %v6014, %v324
  %v6082 = vmul.f32 %v6015, %v329
  %v6083 = vmul.f32 %v6016, %v334
  %v6084 = vmul.f32 %v6017, %v339
  %v6085 = vmul.f32 %v6018, %v344
  %v6086 = vmul.f32 %v6019, %v349
  %v6087 = vmul.f32 %v6020, %v354
  %v6088 = vmul.f32 %v6021, %v359
  %v6089 = vmul.f32 %v6022, %v364
  %v6090 = vmul.f32 %v6023, %v369
  %v6091 = vmul.f32 %v6024, %v374
  %v6092 = vmul.f32 %v6025, %v379
  %v6093 = vmul.f32 %v6026, %v384
  %v6094 = vmul.f32 %v6027, %v389
  %v6095 = vmul.f32 %v6028, %v394
  %v6096 = vmul.f32 %v6029, %v399
  %v6097 = vmul.f32 %v6030, %v404
  %v6098 = vmul.f32 %v6031, %v409
  %v6099 = vmul.f32 %v6032, %v414
  %v6100 = vmul.f32 %v6033, %v419
  %v6101 = vmul.f32 %v6034, %v424
  %v6102 = vmul.f32 %v6035, %v429
  %v6103 = vmul.f32 %v6036, %v434
  %v6104 = vmul.f32 %v6037, %v439
  %v6105 = vmul.f32 %v6038, %v444
  %v6106 = vmul.f32 %v6039, %v449
  %v6107 = vmul.f32 %v6040, %v454
  %v6108 = vmul.f32 %v6041, %v459
  %v6109 = vmul.f32 %v6042, %v464
  %v6110 = vmul.f32 %v6043, %v469
  %v6111 = vmul.f32 %v6044, %v474
  %v6112 = vmul.f32 %v6045, %v479
  %v6113 = vmul.f32 %v6046, %v484
  %v6114 = vmul.f32 %v6047, %v489
  %v6115 = vmul.f32 %v6048, %v494
  %v6116 = vmul.f32 %v6049, %v499
  %v6117 = vmul.f32 %v6050, %v504
  %v6118 = vmul.f32 %v6051, %v509
  %v6119 = vmul.f32 %v6052, %v514
  %v6120 = vmul.f32 %v6053, %v519
  %v6121 = vmul.f32 %v6054, %v524
  %v6122 = vmul.f32 %v6055, %v529
  %v6123 = vmul.f32 %v6056, %v534
  %v6124 = vmul.f32 %v6057, %v539
  %v6125 = vmul.f32 %v6058, %v544
  %v6126 = vmul.f32 %v6059, %v549
  %v6127 = vmul.f32 %v6060, %v554
  %v6128 = vmul.f32 %v6061, %v559
  %v6129 = vmul.f32 %v6062, %v564
  %v6130 = vmul.f32 %v6063, %v569
  %v6131 = vmul.f32 %v6064, %v574
  %v6132 = vmul.f32 %v6065, %v579
  %v6133 = vmul.f32 %v6066, %v584
  %v6134 = vmul.f32 %v6067, %v589
  %v6135 = vmul.f32 %v6068, %v594
  %v6136 = vmul.f32 %v6069, %v599
  %v6137 = vmul.f32 %v6070, %v604
  %v6138 = vmul.f32 %v6071, %v609
  %v6139 = vmul.f32 %v6072, %v614
  %v6140 = vmul.f32 %v6073, %v619
  %v6141 = vmul.f32 %v6074, %v624
  %v6142 = vmul.f32 %v6075, %v629
  %v6143 = vmul.f32 %v6076, %v634
  %v6144 = vmul.f32 %v6077, %v639
  %v6145 = vmul.f32 %v6078, %v644
  %v6146 = vpack.c.bf16 %v6079, %v6079
  %v6147 = vpack.c.bf16 %v6080, %v6080
  %v6148 = vpack.c.bf16 %v6081, %v6081
  %v6149 = vpack.c.bf16 %v6082, %v6082
  %v6150 = vpack.c.bf16 %v6083, %v6083
  %v6151 = vpack.c.bf16 %v6084, %v6084
  %v6152 = vpack.c.bf16 %v6085, %v6085
  %v6153 = vpack.c.bf16 %v6086, %v6086
  %v6154 = vpack.c.bf16 %v6087, %v6087
  %v6155 = vpack.c.bf16 %v6088, %v6088
  %v6156 = vpack.c.bf16 %v6089, %v6089
  %v6157 = vpack.c.bf16 %v6090, %v6090
  %v6158 = vpack.c.bf16 %v6091, %v6091
  %v6159 = vpack.c.bf16 %v6092, %v6092
  %v6160 = vpack.c.bf16 %v6093, %v6093
  %v6161 = vpack.c.bf16 %v6094, %v6094
  %v6162 = vpack.c.bf16 %v6095, %v6095
  %v6163 = vpack.c.bf16 %v6096, %v6096
  %v6164 = vpack.c.bf16 %v6097, %v6097
  %v6165 = vpack.c.bf16 %v6098, %v6098
  %v6166 = vpack.c.bf16 %v6099, %v6099
  %v6167 = vpack.c.bf16 %v6100, %v6100
  %v6168 = vpack.c.bf16 %v6101, %v6101
  %v6169 = vpack.c.bf16 %v6102, %v6102
  %v6170 = vpack.c.bf16 %v6103, %v6103
  %v6171 = vpack.c.bf16 %v6104, %v6104
  %v6172 = vpack.c.bf16 %v6105, %v6105
  %v6173 = vpack.c.bf16 %v6106, %v6106
  %v6174 = vpack.c.bf16 %v6107, %v6107
  %v6175 = vpack.c.bf16 %v6108, %v6108
  %v6176 = vpack.c.bf16 %v6109, %v6109
  %v6177 = vpack.c.bf16 %v6110, %v6110
  %v6178 = vpack.c.bf16 %v6111, %v6111
  %v6179 = vpack.c.bf16 %v6112, %v6112
  %v6180 = vpack.c.bf16 %v6113, %v6113
  %v6181 = vpack.c.bf16 %v6114, %v6114
  %v6182 = vpack.c.bf16 %v6115, %v6115
  %v6183 = vpack.c.bf16 %v6116, %v6116
  %v6184 = vpack.c.bf16 %v6117, %v6117
  %v6185 = vpack.c.bf16 %v6118, %v6118
  %v6186 = vpack.c.bf16 %v6119, %v6119
  %v6187 = vpack.c.bf16 %v6120, %v6120
  %v6188 = vpack.c.bf16 %v6121, %v6121
  %v6189 = vpack.c.bf16 %v6122, %v6122
  %v6190 = vpack.c.bf16 %v6123, %v6123
  %v6191 = vpack.c.bf16 %v6124, %v6124
  %v6192 = vpack.c.bf16 %v6125, %v6125
  %v6193 = vpack.c.bf16 %v6126, %v6126
  %v6194 = vpack.c.bf16 %v6127, %v6127
  %v6195 = vpack.c.bf16 %v6128, %v6128
  %v6196 = vpack.c.bf16 %v6129, %v6129
  %v6197 = vpack.c.bf16 %v6130, %v6130
  %v6198 = vpack.c.bf16 %v6131, %v6131
  %v6199 = vpack.c.bf16 %v6132, %v6132
  %v6200 = vpack.c.bf16 %v6133, %v6133
  %v6201 = vpack.c.bf16 %v6134, %v6134
  %v6202 = vpack.c.bf16 %v6135, %v6135
  %v6203 = vpack.c.bf16 %v6136, %v6136
  %v6204 = vpack.c.bf16 %v6137, %v6137
  %v6205 = vpack.c.bf16 %v6138, %v6138
  %v6206 = vpack.c.bf16 %v6139, %v6139
  %v6207 = vpack.c.bf16 %v6140, %v6140
  %v6208 = vpack.c.bf16 %v6141, %v6141
  %v6209 = vpack.c.bf16 %v6142, %v6142
  %v6210 = vpack.c.bf16 %v6143, %v6143
  %v6211 = vpack.c.bf16 %v6144, %v6144
  %v6212 = vpack.c.bf16 %v6145, %v6145
  %6213 = vst.msk [vmem:[#allocation5] sm:$0xf] %vm780, %v6146
  %6214 = vst.msk [vmem:[#allocation5 + $0x4] sm:$0xf] %vm780, %v6147
  %6215 = vst.msk [vmem:[#allocation5 + $0x8] sm:$0xf] %vm780, %v6148
  %6216 = vst.msk [vmem:[#allocation5 + $0xc] sm:$0xf] %vm780, %v6149
  %6217 = vst.msk [vmem:[#allocation5 + $0x10] sm:$0xf] %vm780, %v6150
  %6218 = vst.msk [vmem:[#allocation5 + $0x14] sm:$0xf] %vm780, %v6151
  %6219 = vst.msk [vmem:[#allocation5 + $0x18] sm:$0xf] %vm780, %v6152
  %6220 = vst.msk [vmem:[#allocation5 + $0x1c] sm:$0xf] %vm780, %v6153
  %6221 = vst.msk [vmem:[#allocation5 + $0x20] sm:$0xf] %vm780, %v6154
  %6222 = vst.msk [vmem:[#allocation5 + $0x24] sm:$0xf] %vm780, %v6155
  %6223 = vst.msk [vmem:[#allocation5 + $0x28] sm:$0xf] %vm780, %v6156
  %6224 = vst.msk [vmem:[#allocation5 + $0x2c] sm:$0xf] %vm780, %v6157
  %6225 = vst.msk [vmem:[#allocation5 + $0x30] sm:$0xf] %vm780, %v6158
  %6226 = vst.msk [vmem:[#allocation5 + $0x34] sm:$0xf] %vm780, %v6159
  %6227 = vst.msk [vmem:[#allocation5 + $0x38] sm:$0xf] %vm780, %v6160
  %6228 = vst.msk [vmem:[#allocation5 + $0x3c] sm:$0xf] %vm780, %v6161
  %6229 = vst.msk [vmem:[#allocation5 + $0x40] sm:$0xf] %vm780, %v6162
  %6230 = vst.msk [vmem:[#allocation5 + $0x44] sm:$0xf] %vm780, %v6163
  %6231 = vst.msk [vmem:[#allocation5 + $0x48] sm:$0xf] %vm780, %v6164
  %6232 = vst.msk [vmem:[#allocation5 + $0x4c] sm:$0xf] %vm780, %v6165
  %6233 = vst.msk [vmem:[#allocation5 + $0x50] sm:$0xf] %vm780, %v6166
  %6234 = vst.msk [vmem:[#allocation5 + $0x54] sm:$0xf] %vm780, %v6167
  %6235 = vst.msk [vmem:[#allocation5 + $0x58] sm:$0xf] %vm780, %v6168
  %6236 = vst.msk [vmem:[#allocation5 + $0x5c] sm:$0xf] %vm780, %v6169
  %6237 = vst.msk [vmem:[#allocation5 + $0x60] sm:$0xf] %vm780, %v6170
  %6238 = vst.msk [vmem:[#allocation5 + $0x64] sm:$0xf] %vm780, %v6171
  %6239 = vst.msk [vmem:[#allocation5 + $0x68] sm:$0xf] %vm780, %v6172
  %6240 = vst.msk [vmem:[#allocation5 + $0x6c] sm:$0xf] %vm780, %v6173
  %6241 = vst.msk [vmem:[#allocation5 + $0x70] sm:$0xf] %vm780, %v6174
  %6242 = vst.msk [vmem:[#allocation5 + $0x74] sm:$0xf] %vm780, %v6175
  %6243 = vst.msk [vmem:[#allocation5 + $0x78] sm:$0xf] %vm780, %v6176
  %6244 = vst.msk [vmem:[#allocation5 + $0x7c] sm:$0xf] %vm780, %v6177
  %6245 = vst.msk [vmem:[#allocation5 + $0x80] sm:$0xf] %vm780, %v6178
  %6246 = vst.msk [vmem:[#allocation5 + $0x84] sm:$0xf] %vm780, %v6179
  %6247 = vst.msk [vmem:[#allocation5 + $0x88] sm:$0xf] %vm780, %v6180
  %6248 = vst.msk [vmem:[#allocation5 + $0x8c] sm:$0xf] %vm780, %v6181
  %6249 = vst.msk [vmem:[#allocation5 + $0x90] sm:$0xf] %vm780, %v6182
  %6250 = vst.msk [vmem:[#allocation5 + $0x94] sm:$0xf] %vm780, %v6183
  %6251 = vst.msk [vmem:[#allocation5 + $0x98] sm:$0xf] %vm780, %v6184
  %6252 = vst.msk [vmem:[#allocation5 + $0x9c] sm:$0xf] %vm780, %v6185
  %6253 = vst.msk [vmem:[#allocation5 + $0xa0] sm:$0xf] %vm780, %v6186
  %6254 = vst.msk [vmem:[#allocation5 + $0xa4] sm:$0xf] %vm780, %v6187
  %6255 = vst.msk [vmem:[#allocation5 + $0xa8] sm:$0xf] %vm780, %v6188
  %6256 = vst.msk [vmem:[#allocation5 + $0xac] sm:$0xf] %vm780, %v6189
  %6257 = vst.msk [vmem:[#allocation5 + $0xb0] sm:$0xf] %vm780, %v6190
  %6258 = vst.msk [vmem:[#allocation5 + $0xb4] sm:$0xf] %vm780, %v6191
  %6259 = vst.msk [vmem:[#allocation5 + $0xb8] sm:$0xf] %vm780, %v6192
  %6260 = vst.msk [vmem:[#allocation5 + $0xbc] sm:$0xf] %vm780, %v6193
  %6261 = vst.msk [vmem:[#allocation5 + $0xc0] sm:$0xf] %vm780, %v6194
  %6262 = vst.msk [vmem:[#allocation5 + $0xc4] sm:$0xf] %vm780, %v6195
  %6263 = vst.msk [vmem:[#allocation5 + $0xc8] sm:$0xf] %vm780, %v6196
  %6264 = vst.msk [vmem:[#allocation5 + $0xcc] sm:$0xf] %vm780, %v6197
  %6265 = vst.msk [vmem:[#allocation5 + $0xd0] sm:$0xf] %vm780, %v6198
  %6266 = vst.msk [vmem:[#allocation5 + $0xd4] sm:$0xf] %vm780, %v6199
  %6267 = vst.msk [vmem:[#allocation5 + $0xd8] sm:$0xf] %vm780, %v6200
  %6268 = vst.msk [vmem:[#allocation5 + $0xdc] sm:$0xf] %vm780, %v6201
  %6269 = vst.msk [vmem:[#allocation5 + $0xe0] sm:$0xf] %vm780, %v6202
  %6270 = vst.msk [vmem:[#allocation5 + $0xe4] sm:$0xf] %vm780, %v6203
  %6271 = vst.msk [vmem:[#allocation5 + $0xe8] sm:$0xf] %vm780, %v6204
  %6272 = vst.msk [vmem:[#allocation5 + $0xec] sm:$0xf] %vm780, %v6205
  %6273 = vst.msk [vmem:[#allocation5 + $0xf0] sm:$0xf] %vm780, %v6206
  %6274 = vst.msk [vmem:[#allocation5 + $0xf4] sm:$0xf] %vm780, %v6207
  %6275 = vst.msk [vmem:[#allocation5 + $0xf8] sm:$0xf] %vm780, %v6208
  %6276 = vst.msk [vmem:[#allocation5 + $0xfc] sm:$0xf] %vm780, %v6209
  %6277 = vst.msk [vmem:[#allocation5 + $0x100] sm:$0xf] %vm780, %v6210
  %6278 = vst.msk [vmem:[#allocation5 + $0x104] sm:$0xf] %vm780, %v6211
  %6279 = vst.msk [vmem:[#allocation5 + $0x108] sm:$0xf] %vm780, %v6212
  %v6280 = vld [vmem:[#allocation3 + $0x8] sm:$0xff]
  %v6281 = vld [vmem:[#allocation3 + $0x10] sm:$0xff]
  %v6282 = vld [vmem:[#allocation3 + $0x18] sm:$0xff]
  %v6283 = vld [vmem:[#allocation3 + $0x20] sm:$0xff]
  %v6284 = vld [vmem:[#allocation3 + $0x28] sm:$0xff]
  %v6285 = vld [vmem:[#allocation3 + $0x30] sm:$0xff]
  %v6286 = vld [vmem:[#allocation3 + $0x38] sm:$0xff]
  %v6287 = vld [vmem:[#allocation3 + $0x40] sm:$0xff]
  %v6288 = vld [vmem:[#allocation3 + $0x48] sm:$0xff]
  %v6289 = vld [vmem:[#allocation3 + $0x50] sm:$0xff]
  %v6290 = vld [vmem:[#allocation3 + $0x58] sm:$0xff]
  %v6291 = vld [vmem:[#allocation3 + $0x60] sm:$0xff]
  %v6292 = vld [vmem:[#allocation3 + $0x68] sm:$0xff]
  %v6293 = vld [vmem:[#allocation3 + $0x70] sm:$0xff]
  %v6294 = vld [vmem:[#allocation3 + $0x78] sm:$0xff]
  %v6295 = vld [vmem:[#allocation3 + $0x80] sm:$0xff]
  %v6296 = vld [vmem:[#allocation3 + $0x88] sm:$0xff]
  %v6297 = vld [vmem:[#allocation3 + $0x90] sm:$0xff]
  %v6298 = vld [vmem:[#allocation3 + $0x98] sm:$0xff]
  %v6299 = vld [vmem:[#allocation3 + $0xa0] sm:$0xff]
  %v6300 = vld [vmem:[#allocation3 + $0xa8] sm:$0xff]
  %v6301 = vld [vmem:[#allocation3 + $0xb0] sm:$0xff]
  %v6302 = vld [vmem:[#allocation3 + $0xb8] sm:$0xff]
  %v6303 = vld [vmem:[#allocation3 + $0xc0] sm:$0xff]
  %v6304 = vld [vmem:[#allocation3 + $0xc8] sm:$0xff]
  %v6305 = vld [vmem:[#allocation3 + $0xd0] sm:$0xff]
  %v6306 = vld [vmem:[#allocation3 + $0xd8] sm:$0xff]
  %v6307 = vld [vmem:[#allocation3 + $0xe0] sm:$0xff]
  %v6308 = vld [vmem:[#allocation3 + $0xe8] sm:$0xff]
  %v6309 = vld [vmem:[#allocation3 + $0xf0] sm:$0xff]
  %v6310 = vld [vmem:[#allocation3 + $0xf8] sm:$0xff]
  %v6311 = vld [vmem:[#allocation3 + $0x100] sm:$0xff]
  %v6312 = vld [vmem:[#allocation3 + $0x108] sm:$0xff]
  %v6313 = vld [vmem:[#allocation3 + $0x110] sm:$0xff]
  %v6314 = vld [vmem:[#allocation3 + $0x118] sm:$0xff]
  %v6315 = vld [vmem:[#allocation3 + $0x120] sm:$0xff]
  %v6316 = vld [vmem:[#allocation3 + $0x128] sm:$0xff]
  %v6317 = vld [vmem:[#allocation3 + $0x130] sm:$0xff]
  %v6318 = vld [vmem:[#allocation3 + $0x138] sm:$0xff]
  %v6319 = vld [vmem:[#allocation3 + $0x140] sm:$0xff]
  %v6320 = vld [vmem:[#allocation3 + $0x148] sm:$0xff]
  %v6321 = vld [vmem:[#allocation3 + $0x150] sm:$0xff]
  %v6322 = vld [vmem:[#allocation3 + $0x158] sm:$0xff]
  %v6323 = vld [vmem:[#allocation3 + $0x160] sm:$0xff]
  %v6324 = vld [vmem:[#allocation3 + $0x168] sm:$0xff]
  %v6325 = vld [vmem:[#allocation3 + $0x170] sm:$0xff]
  %v6326 = vld [vmem:[#allocation3 + $0x178] sm:$0xff]
  %v6327 = vld [vmem:[#allocation3 + $0x180] sm:$0xff]
  %v6328 = vld [vmem:[#allocation3 + $0x188] sm:$0xff]
  %v6329 = vld [vmem:[#allocation3 + $0x190] sm:$0xff]
  %v6330 = vld [vmem:[#allocation3 + $0x198] sm:$0xff]
  %v6331 = vld [vmem:[#allocation3 + $0x1a0] sm:$0xff]
  %v6332 = vld [vmem:[#allocation3 + $0x1a8] sm:$0xff]
  %v6333 = vld [vmem:[#allocation3 + $0x1b0] sm:$0xff]
  %v6334 = vld [vmem:[#allocation3 + $0x1b8] sm:$0xff]
  %v6335 = vld [vmem:[#allocation3 + $0x1c0] sm:$0xff]
  %v6336 = vld [vmem:[#allocation3 + $0x1c8] sm:$0xff]
  %v6337 = vld [vmem:[#allocation3 + $0x1d0] sm:$0xff]
  %v6338 = vld [vmem:[#allocation3 + $0x1d8] sm:$0xff]
  %v6339 = vld [vmem:[#allocation3 + $0x1e0] sm:$0xff]
  %v6340 = vld [vmem:[#allocation3 + $0x1e8] sm:$0xff]
  %v6341 = vld [vmem:[#allocation3 + $0x1f0] sm:$0xff]
  %v6342 = vld [vmem:[#allocation3 + $0x1f8] sm:$0xff]
  %v6343 = vld [vmem:[#allocation3 + $0x200] sm:$0xff]
  %v6344 = vld [vmem:[#allocation3 + $0x208] sm:$0xff]
  %v6345 = vld [vmem:[#allocation3 + $0x210] sm:$0xff]
  %v6346 = vld [vmem:[#allocation3 + $0x218] sm:$0xff]
  %v6347 = vpack.c.bf16 %v6280, %v6280
  %v6348 = vpack.c.bf16 %v6281, %v6281
  %v6349 = vpack.c.bf16 %v6282, %v6282
  %v6350 = vpack.c.bf16 %v6283, %v6283
  %v6351 = vpack.c.bf16 %v6284, %v6284
  %v6352 = vpack.c.bf16 %v6285, %v6285
  %v6353 = vpack.c.bf16 %v6286, %v6286
  %v6354 = vpack.c.bf16 %v6287, %v6287
  %v6355 = vpack.c.bf16 %v6288, %v6288
  %v6356 = vpack.c.bf16 %v6289, %v6289
  %v6357 = vpack.c.bf16 %v6290, %v6290
  %v6358 = vpack.c.bf16 %v6291, %v6291
  %v6359 = vpack.c.bf16 %v6292, %v6292
  %v6360 = vpack.c.bf16 %v6293, %v6293
  %v6361 = vpack.c.bf16 %v6294, %v6294
  %v6362 = vpack.c.bf16 %v6295, %v6295
  %v6363 = vpack.c.bf16 %v6296, %v6296
  %v6364 = vpack.c.bf16 %v6297, %v6297
  %v6365 = vpack.c.bf16 %v6298, %v6298
  %v6366 = vpack.c.bf16 %v6299, %v6299
  %v6367 = vpack.c.bf16 %v6300, %v6300
  %v6368 = vpack.c.bf16 %v6301, %v6301
  %v6369 = vpack.c.bf16 %v6302, %v6302
  %v6370 = vpack.c.bf16 %v6303, %v6303
  %v6371 = vpack.c.bf16 %v6304, %v6304
  %v6372 = vpack.c.bf16 %v6305, %v6305
  %v6373 = vpack.c.bf16 %v6306, %v6306
  %v6374 = vpack.c.bf16 %v6307, %v6307
  %v6375 = vpack.c.bf16 %v6308, %v6308
  %v6376 = vpack.c.bf16 %v6309, %v6309
  %v6377 = vpack.c.bf16 %v6310, %v6310
  %v6378 = vpack.c.bf16 %v6311, %v6311
  %v6379 = vpack.c.bf16 %v6312, %v6312
  %v6380 = vpack.c.bf16 %v6313, %v6313
  %v6381 = vpack.c.bf16 %v6314, %v6314
  %v6382 = vpack.c.bf16 %v6315, %v6315
  %v6383 = vpack.c.bf16 %v6316, %v6316
  %v6384 = vpack.c.bf16 %v6317, %v6317
  %v6385 = vpack.c.bf16 %v6318, %v6318
  %v6386 = vpack.c.bf16 %v6319, %v6319
  %v6387 = vpack.c.bf16 %v6320, %v6320
  %v6388 = vpack.c.bf16 %v6321, %v6321
  %v6389 = vpack.c.bf16 %v6322, %v6322
  %v6390 = vpack.c.bf16 %v6323, %v6323
  %v6391 = vpack.c.bf16 %v6324, %v6324
  %v6392 = vpack.c.bf16 %v6325, %v6325
  %v6393 = vpack.c.bf16 %v6326, %v6326
  %v6394 = vpack.c.bf16 %v6327, %v6327
  %v6395 = vpack.c.bf16 %v6328, %v6328
  %v6396 = vpack.c.bf16 %v6329, %v6329
  %v6397 = vpack.c.bf16 %v6330, %v6330
  %v6398 = vpack.c.bf16 %v6331, %v6331
  %v6399 = vpack.c.bf16 %v6332, %v6332
  %v6400 = vpack.c.bf16 %v6333, %v6333
  %v6401 = vpack.c.bf16 %v6334, %v6334
  %v6402 = vpack.c.bf16 %v6335, %v6335
  %v6403 = vpack.c.bf16 %v6336, %v6336
  %v6404 = vpack.c.bf16 %v6337, %v6337
  %v6405 = vpack.c.bf16 %v6338, %v6338
  %v6406 = vpack.c.bf16 %v6339, %v6339
  %v6407 = vpack.c.bf16 %v6340, %v6340
  %v6408 = vpack.c.bf16 %v6341, %v6341
  %v6409 = vpack.c.bf16 %v6342, %v6342
  %v6410 = vpack.c.bf16 %v6343, %v6343
  %v6411 = vpack.c.bf16 %v6344, %v6344
  %v6412 = vpack.c.bf16 %v6345, %v6345
  %v6413 = vpack.c.bf16 %v6346, %v6346
  %6481 = vrot.lane.b32.xlu0 %v6347, 4
  %v6482 = vpop.permute.xlu0 %6481
  %6483 = vrot.lane.b32.xlu0 %v6348, 4
  %v6484 = vpop.permute.xlu0 %6483
  %6485 = vrot.lane.b32.xlu0 %v6349, 4
  %v6486 = vpop.permute.xlu0 %6485
  %6487 = vrot.lane.b32.xlu0 %v6350, 4
  %v6488 = vpop.permute.xlu0 %6487
  %6489 = vrot.lane.b32.xlu0 %v6351, 4
  %v6490 = vpop.permute.xlu0 %6489
  %6491 = vrot.lane.b32.xlu0 %v6352, 4
  %v6492 = vpop.permute.xlu0 %6491
  %6493 = vrot.lane.b32.xlu0 %v6353, 4
  %v6494 = vpop.permute.xlu0 %6493
  %6495 = vrot.lane.b32.xlu0 %v6354, 4
  %v6496 = vpop.permute.xlu0 %6495
  %6497 = vrot.lane.b32.xlu0 %v6355, 4
  %v6498 = vpop.permute.xlu0 %6497
  %6499 = vrot.lane.b32.xlu0 %v6356, 4
  %v6500 = vpop.permute.xlu0 %6499
  %6501 = vrot.lane.b32.xlu0 %v6357, 4
  %v6502 = vpop.permute.xlu0 %6501
  %6503 = vrot.lane.b32.xlu0 %v6358, 4
  %v6504 = vpop.permute.xlu0 %6503
  %6505 = vrot.lane.b32.xlu0 %v6359, 4
  %v6506 = vpop.permute.xlu0 %6505
  %6507 = vrot.lane.b32.xlu0 %v6360, 4
  %v6508 = vpop.permute.xlu0 %6507
  %6509 = vrot.lane.b32.xlu0 %v6361, 4
  %v6510 = vpop.permute.xlu0 %6509
  %6511 = vrot.lane.b32.xlu0 %v6362, 4
  %v6512 = vpop.permute.xlu0 %6511
  %6513 = vrot.lane.b32.xlu0 %v6363, 4
  %v6514 = vpop.permute.xlu0 %6513
  %6515 = vrot.lane.b32.xlu0 %v6364, 4
  %v6516 = vpop.permute.xlu0 %6515
  %6517 = vrot.lane.b32.xlu0 %v6365, 4
  %v6518 = vpop.permute.xlu0 %6517
  %6519 = vrot.lane.b32.xlu0 %v6366, 4
  %v6520 = vpop.permute.xlu0 %6519
  %6521 = vrot.lane.b32.xlu0 %v6367, 4
  %v6522 = vpop.permute.xlu0 %6521
  %6523 = vrot.lane.b32.xlu0 %v6368, 4
  %v6524 = vpop.permute.xlu0 %6523
  %6525 = vrot.lane.b32.xlu0 %v6369, 4
  %v6526 = vpop.permute.xlu0 %6525
  %6527 = vrot.lane.b32.xlu0 %v6370, 4
  %v6528 = vpop.permute.xlu0 %6527
  %6529 = vrot.lane.b32.xlu0 %v6371, 4
  %v6530 = vpop.permute.xlu0 %6529
  %6531 = vrot.lane.b32.xlu0 %v6372, 4
  %v6532 = vpop.permute.xlu0 %6531
  %6533 = vrot.lane.b32.xlu0 %v6373, 4
  %v6534 = vpop.permute.xlu0 %6533
  %6535 = vrot.lane.b32.xlu0 %v6374, 4
  %v6536 = vpop.permute.xlu0 %6535
  %6537 = vrot.lane.b32.xlu0 %v6375, 4
  %v6538 = vpop.permute.xlu0 %6537
  %6539 = vrot.lane.b32.xlu0 %v6376, 4
  %v6540 = vpop.permute.xlu0 %6539
  %6541 = vrot.lane.b32.xlu0 %v6377, 4
  %v6542 = vpop.permute.xlu0 %6541
  %6543 = vrot.lane.b32.xlu0 %v6378, 4
  %v6544 = vpop.permute.xlu0 %6543
  %6545 = vrot.lane.b32.xlu0 %v6379, 4
  %v6546 = vpop.permute.xlu0 %6545
  %6547 = vrot.lane.b32.xlu0 %v6380, 4
  %v6548 = vpop.permute.xlu0 %6547
  %6549 = vrot.lane.b32.xlu0 %v6381, 4
  %v6550 = vpop.permute.xlu0 %6549
  %6551 = vrot.lane.b32.xlu0 %v6382, 4
  %v6552 = vpop.permute.xlu0 %6551
  %6553 = vrot.lane.b32.xlu0 %v6383, 4
  %v6554 = vpop.permute.xlu0 %6553
  %6555 = vrot.lane.b32.xlu0 %v6384, 4
  %v6556 = vpop.permute.xlu0 %6555
  %6557 = vrot.lane.b32.xlu0 %v6385, 4
  %v6558 = vpop.permute.xlu0 %6557
  %6559 = vrot.lane.b32.xlu0 %v6386, 4
  %v6560 = vpop.permute.xlu0 %6559
  %6561 = vrot.lane.b32.xlu0 %v6387, 4
  %v6562 = vpop.permute.xlu0 %6561
  %6563 = vrot.lane.b32.xlu0 %v6388, 4
  %v6564 = vpop.permute.xlu0 %6563
  %6565 = vrot.lane.b32.xlu0 %v6389, 4
  %v6566 = vpop.permute.xlu0 %6565
  %6567 = vrot.lane.b32.xlu0 %v6390, 4
  %v6568 = vpop.permute.xlu0 %6567
  %6569 = vrot.lane.b32.xlu0 %v6391, 4
  %v6570 = vpop.permute.xlu0 %6569
  %6571 = vrot.lane.b32.xlu0 %v6392, 4
  %v6572 = vpop.permute.xlu0 %6571
  %6573 = vrot.lane.b32.xlu0 %v6393, 4
  %v6574 = vpop.permute.xlu0 %6573
  %6575 = vrot.lane.b32.xlu0 %v6394, 4
  %v6576 = vpop.permute.xlu0 %6575
  %6577 = vrot.lane.b32.xlu0 %v6395, 4
  %v6578 = vpop.permute.xlu0 %6577
  %6579 = vrot.lane.b32.xlu0 %v6396, 4
  %v6580 = vpop.permute.xlu0 %6579
  %6581 = vrot.lane.b32.xlu0 %v6397, 4
  %v6582 = vpop.permute.xlu0 %6581
  %6583 = vrot.lane.b32.xlu0 %v6398, 4
  %v6584 = vpop.permute.xlu0 %6583
  %6585 = vrot.lane.b32.xlu0 %v6399, 4
  %v6586 = vpop.permute.xlu0 %6585
  %6587 = vrot.lane.b32.xlu0 %v6400, 4
  %v6588 = vpop.permute.xlu0 %6587
  %6589 = vrot.lane.b32.xlu0 %v6401, 4
  %v6590 = vpop.permute.xlu0 %6589
  %6591 = vrot.lane.b32.xlu0 %v6402, 4
  %v6592 = vpop.permute.xlu0 %6591
  %6593 = vrot.lane.b32.xlu0 %v6403, 4
  %v6594 = vpop.permute.xlu0 %6593
  %6595 = vrot.lane.b32.xlu0 %v6404, 4
  %v6596 = vpop.permute.xlu0 %6595
  %6597 = vrot.lane.b32.xlu0 %v6405, 4
  %v6598 = vpop.permute.xlu0 %6597
  %6599 = vrot.lane.b32.xlu0 %v6406, 4
  %v6600 = vpop.permute.xlu0 %6599
  %6601 = vrot.lane.b32.xlu0 %v6407, 4
  %v6602 = vpop.permute.xlu0 %6601
  %6603 = vrot.lane.b32.xlu0 %v6408, 4
  %v6604 = vpop.permute.xlu0 %6603
  %6605 = vrot.lane.b32.xlu0 %v6409, 4
  %v6606 = vpop.permute.xlu0 %6605
  %6607 = vrot.lane.b32.xlu0 %v6410, 4
  %v6608 = vpop.permute.xlu0 %6607
  %6609 = vrot.lane.b32.xlu0 %v6411, 4
  %v6610 = vpop.permute.xlu0 %6609
  %6611 = vrot.lane.b32.xlu0 %v6412, 4
  %v6612 = vpop.permute.xlu0 %6611
  %6613 = vrot.lane.b32.xlu0 %v6413, 4
  %v6614 = vpop.permute.xlu0 %6613
  %6682 = vst.msk [vmem:[#allocation5] sm:$0xf] %vm1250, %v6482
  %6683 = vst.msk [vmem:[#allocation5 + $0x4] sm:$0xf] %vm1250, %v6484
  %6684 = vst.msk [vmem:[#allocation5 + $0x8] sm:$0xf] %vm1250, %v6486
  %6685 = vst.msk [vmem:[#allocation5 + $0xc] sm:$0xf] %vm1250, %v6488
  %6686 = vst.msk [vmem:[#allocation5 + $0x10] sm:$0xf] %vm1250, %v6490
  %6687 = vst.msk [vmem:[#allocation5 + $0x14] sm:$0xf] %vm1250, %v6492
  %6688 = vst.msk [vmem:[#allocation5 + $0x18] sm:$0xf] %vm1250, %v6494
  %6689 = vst.msk [vmem:[#allocation5 + $0x1c] sm:$0xf] %vm1250, %v6496
  %6690 = vst.msk [vmem:[#allocation5 + $0x20] sm:$0xf] %vm1250, %v6498
  %6691 = vst.msk [vmem:[#allocation5 + $0x24] sm:$0xf] %vm1250, %v6500
  %6692 = vst.msk [vmem:[#allocation5 + $0x28] sm:$0xf] %vm1250, %v6502
  %6693 = vst.msk [vmem:[#allocation5 + $0x2c] sm:$0xf] %vm1250, %v6504
  %6694 = vst.msk [vmem:[#allocation5 + $0x30] sm:$0xf] %vm1250, %v6506
  %6695 = vst.msk [vmem:[#allocation5 + $0x34] sm:$0xf] %vm1250, %v6508
  %6696 = vst.msk [vmem:[#allocation5 + $0x38] sm:$0xf] %vm1250, %v6510
  %6697 = vst.msk [vmem:[#allocation5 + $0x3c] sm:$0xf] %vm1250, %v6512
  %6698 = vst.msk [vmem:[#allocation5 + $0x40] sm:$0xf] %vm1250, %v6514
  %6699 = vst.msk [vmem:[#allocation5 + $0x44] sm:$0xf] %vm1250, %v6516
  %6700 = vst.msk [vmem:[#allocation5 + $0x48] sm:$0xf] %vm1250, %v6518
  %6701 = vst.msk [vmem:[#allocation5 + $0x4c] sm:$0xf] %vm1250, %v6520
  %6702 = vst.msk [vmem:[#allocation5 + $0x50] sm:$0xf] %vm1250, %v6522
  %6703 = vst.msk [vmem:[#allocation5 + $0x54] sm:$0xf] %vm1250, %v6524
  %6704 = vst.msk [vmem:[#allocation5 + $0x58] sm:$0xf] %vm1250, %v6526
  %6705 = vst.msk [vmem:[#allocation5 + $0x5c] sm:$0xf] %vm1250, %v6528
  %6706 = vst.msk [vmem:[#allocation5 + $0x60] sm:$0xf] %vm1250, %v6530
  %6707 = vst.msk [vmem:[#allocation5 + $0x64] sm:$0xf] %vm1250, %v6532
  %6708 = vst.msk [vmem:[#allocation5 + $0x68] sm:$0xf] %vm1250, %v6534
  %6709 = vst.msk [vmem:[#allocation5 + $0x6c] sm:$0xf] %vm1250, %v6536
  %6710 = vst.msk [vmem:[#allocation5 + $0x70] sm:$0xf] %vm1250, %v6538
  %6711 = vst.msk [vmem:[#allocation5 + $0x74] sm:$0xf] %vm1250, %v6540
  %6712 = vst.msk [vmem:[#allocation5 + $0x78] sm:$0xf] %vm1250, %v6542
  %6713 = vst.msk [vmem:[#allocation5 + $0x7c] sm:$0xf] %vm1250, %v6544
  %6714 = vst.msk [vmem:[#allocation5 + $0x80] sm:$0xf] %vm1250, %v6546
  %6715 = vst.msk [vmem:[#allocation5 + $0x84] sm:$0xf] %vm1250, %v6548
  %6716 = vst.msk [vmem:[#allocation5 + $0x88] sm:$0xf] %vm1250, %v6550
  %6717 = vst.msk [vmem:[#allocation5 + $0x8c] sm:$0xf] %vm1250, %v6552
  %6718 = vst.msk [vmem:[#allocation5 + $0x90] sm:$0xf] %vm1250, %v6554
  %6719 = vst.msk [vmem:[#allocation5 + $0x94] sm:$0xf] %vm1250, %v6556
  %6720 = vst.msk [vmem:[#allocation5 + $0x98] sm:$0xf] %vm1250, %v6558
  %6721 = vst.msk [vmem:[#allocation5 + $0x9c] sm:$0xf] %vm1250, %v6560
  %6722 = vst.msk [vmem:[#allocation5 + $0xa0] sm:$0xf] %vm1250, %v6562
  %6723 = vst.msk [vmem:[#allocation5 + $0xa4] sm:$0xf] %vm1250, %v6564
  %6724 = vst.msk [vmem:[#allocation5 + $0xa8] sm:$0xf] %vm1250, %v6566
  %6725 = vst.msk [vmem:[#allocation5 + $0xac] sm:$0xf] %vm1250, %v6568
  %6726 = vst.msk [vmem:[#allocation5 + $0xb0] sm:$0xf] %vm1250, %v6570
  %6727 = vst.msk [vmem:[#allocation5 + $0xb4] sm:$0xf] %vm1250, %v6572
  %6728 = vst.msk [vmem:[#allocation5 + $0xb8] sm:$0xf] %vm1250, %v6574
  %6729 = vst.msk [vmem:[#allocation5 + $0xbc] sm:$0xf] %vm1250, %v6576
  %6730 = vst.msk [vmem:[#allocation5 + $0xc0] sm:$0xf] %vm1250, %v6578
  %6731 = vst.msk [vmem:[#allocation5 + $0xc4] sm:$0xf] %vm1250, %v6580
  %6732 = vst.msk [vmem:[#allocation5 + $0xc8] sm:$0xf] %vm1250, %v6582
  %6733 = vst.msk [vmem:[#allocation5 + $0xcc] sm:$0xf] %vm1250, %v6584
  %6734 = vst.msk [vmem:[#allocation5 + $0xd0] sm:$0xf] %vm1250, %v6586
  %6735 = vst.msk [vmem:[#allocation5 + $0xd4] sm:$0xf] %vm1250, %v6588
  %6736 = vst.msk [vmem:[#allocation5 + $0xd8] sm:$0xf] %vm1250, %v6590
  %6737 = vst.msk [vmem:[#allocation5 + $0xdc] sm:$0xf] %vm1250, %v6592
  %6738 = vst.msk [vmem:[#allocation5 + $0xe0] sm:$0xf] %vm1250, %v6594
  %6739 = vst.msk [vmem:[#allocation5 + $0xe4] sm:$0xf] %vm1250, %v6596
  %6740 = vst.msk [vmem:[#allocation5 + $0xe8] sm:$0xf] %vm1250, %v6598
  %6741 = vst.msk [vmem:[#allocation5 + $0xec] sm:$0xf] %vm1250, %v6600
  %6742 = vst.msk [vmem:[#allocation5 + $0xf0] sm:$0xf] %vm1250, %v6602
  %6743 = vst.msk [vmem:[#allocation5 + $0xf4] sm:$0xf] %vm1250, %v6604
  %6744 = vst.msk [vmem:[#allocation5 + $0xf8] sm:$0xf] %vm1250, %v6606
  %6745 = vst.msk [vmem:[#allocation5 + $0xfc] sm:$0xf] %vm1250, %v6608
  %6746 = vst.msk [vmem:[#allocation5 + $0x100] sm:$0xf] %vm1250, %v6610
  %6747 = vst.msk [vmem:[#allocation5 + $0x104] sm:$0xf] %vm1250, %v6612
  %6748 = vst.msk [vmem:[#allocation5 + $0x108] sm:$0xf] %vm1250, %v6614
  %v6749 = vld [vmem:[#allocation3 + $0x9] sm:$0xff]
  %v6750 = vld [vmem:[#allocation3 + $0x11] sm:$0xff]
  %v6751 = vld [vmem:[#allocation3 + $0x19] sm:$0xff]
  %v6752 = vld [vmem:[#allocation3 + $0x21] sm:$0xff]
  %v6753 = vld [vmem:[#allocation3 + $0x29] sm:$0xff]
  %v6754 = vld [vmem:[#allocation3 + $0x31] sm:$0xff]
  %v6755 = vld [vmem:[#allocation3 + $0x39] sm:$0xff]
  %v6756 = vld [vmem:[#allocation3 + $0x41] sm:$0xff]
  %v6757 = vld [vmem:[#allocation3 + $0x49] sm:$0xff]
  %v6758 = vld [vmem:[#allocation3 + $0x51] sm:$0xff]
  %v6759 = vld [vmem:[#allocation3 + $0x59] sm:$0xff]
  %v6760 = vld [vmem:[#allocation3 + $0x61] sm:$0xff]
  %v6761 = vld [vmem:[#allocation3 + $0x69] sm:$0xff]
  %v6762 = vld [vmem:[#allocation3 + $0x71] sm:$0xff]
  %v6763 = vld [vmem:[#allocation3 + $0x79] sm:$0xff]
  %v6764 = vld [vmem:[#allocation3 + $0x81] sm:$0xff]
  %v6765 = vld [vmem:[#allocation3 + $0x89] sm:$0xff]
  %v6766 = vld [vmem:[#allocation3 + $0x91] sm:$0xff]
  %v6767 = vld [vmem:[#allocation3 + $0x99] sm:$0xff]
  %v6768 = vld [vmem:[#allocation3 + $0xa1] sm:$0xff]
  %v6769 = vld [vmem:[#allocation3 + $0xa9] sm:$0xff]
  %v6770 = vld [vmem:[#allocation3 + $0xb1] sm:$0xff]
  %v6771 = vld [vmem:[#allocation3 + $0xb9] sm:$0xff]
  %v6772 = vld [vmem:[#allocation3 + $0xc1] sm:$0xff]
  %v6773 = vld [vmem:[#allocation3 + $0xc9] sm:$0xff]
  %v6774 = vld [vmem:[#allocation3 + $0xd1] sm:$0xff]
  %v6775 = vld [vmem:[#allocation3 + $0xd9] sm:$0xff]
  %v6776 = vld [vmem:[#allocation3 + $0xe1] sm:$0xff]
  %v6777 = vld [vmem:[#allocation3 + $0xe9] sm:$0xff]
  %v6778 = vld [vmem:[#allocation3 + $0xf1] sm:$0xff]
  %v6779 = vld [vmem:[#allocation3 + $0xf9] sm:$0xff]
  %v6780 = vld [vmem:[#allocation3 + $0x101] sm:$0xff]
  %v6781 = vld [vmem:[#allocation3 + $0x109] sm:$0xff]
  %v6782 = vld [vmem:[#allocation3 + $0x111] sm:$0xff]
  %v6783 = vld [vmem:[#allocation3 + $0x119] sm:$0xff]
  %v6784 = vld [vmem:[#allocation3 + $0x121] sm:$0xff]
  %v6785 = vld [vmem:[#allocation3 + $0x129] sm:$0xff]
  %v6786 = vld [vmem:[#allocation3 + $0x131] sm:$0xff]
  %v6787 = vld [vmem:[#allocation3 + $0x139] sm:$0xff]
  %v6788 = vld [vmem:[#allocation3 + $0x141] sm:$0xff]
  %v6789 = vld [vmem:[#allocation3 + $0x149] sm:$0xff]
  %v6790 = vld [vmem:[#allocation3 + $0x151] sm:$0xff]
  %v6791 = vld [vmem:[#allocation3 + $0x159] sm:$0xff]
  %v6792 = vld [vmem:[#allocation3 + $0x161] sm:$0xff]
  %v6793 = vld [vmem:[#allocation3 + $0x169] sm:$0xff]
  %v6794 = vld [vmem:[#allocation3 + $0x171] sm:$0xff]
  %v6795 = vld [vmem:[#allocation3 + $0x179] sm:$0xff]
  %v6796 = vld [vmem:[#allocation3 + $0x181] sm:$0xff]
  %v6797 = vld [vmem:[#allocation3 + $0x189] sm:$0xff]
  %v6798 = vld [vmem:[#allocation3 + $0x191] sm:$0xff]
  %v6799 = vld [vmem:[#allocation3 + $0x199] sm:$0xff]
  %v6800 = vld [vmem:[#allocation3 + $0x1a1] sm:$0xff]
  %v6801 = vld [vmem:[#allocation3 + $0x1a9] sm:$0xff]
  %v6802 = vld [vmem:[#allocation3 + $0x1b1] sm:$0xff]
  %v6803 = vld [vmem:[#allocation3 + $0x1b9] sm:$0xff]
  %v6804 = vld [vmem:[#allocation3 + $0x1c1] sm:$0xff]
  %v6805 = vld [vmem:[#allocation3 + $0x1c9] sm:$0xff]
  %v6806 = vld [vmem:[#allocation3 + $0x1d1] sm:$0xff]
  %v6807 = vld [vmem:[#allocation3 + $0x1d9] sm:$0xff]
  %v6808 = vld [vmem:[#allocation3 + $0x1e1] sm:$0xff]
  %v6809 = vld [vmem:[#allocation3 + $0x1e9] sm:$0xff]
  %v6810 = vld [vmem:[#allocation3 + $0x1f1] sm:$0xff]
  %v6811 = vld [vmem:[#allocation3 + $0x1f9] sm:$0xff]
  %v6812 = vld [vmem:[#allocation3 + $0x201] sm:$0xff]
  %v6813 = vld [vmem:[#allocation3 + $0x209] sm:$0xff]
  %v6814 = vld [vmem:[#allocation3 + $0x211] sm:$0xff]
  %v6815 = vld [vmem:[#allocation3 + $0x219] sm:$0xff]
  %v6816 = vmul.f32 %v6749, %v1387
  %v6817 = vmul.f32 %v6750, %v1391
  %v6818 = vmul.f32 %v6751, %v1395
  %v6819 = vmul.f32 %v6752, %v1399
  %v6820 = vmul.f32 %v6753, %v1403
  %v6821 = vmul.f32 %v6754, %v1407
  %v6822 = vmul.f32 %v6755, %v1411
  %v6823 = vmul.f32 %v6756, %v1415
  %v6824 = vmul.f32 %v6757, %v1419
  %v6825 = vmul.f32 %v6758, %v1423
  %v6826 = vmul.f32 %v6759, %v1427
  %v6827 = vmul.f32 %v6760, %v1431
  %v6828 = vmul.f32 %v6761, %v1435
  %v6829 = vmul.f32 %v6762, %v1439
  %v6830 = vmul.f32 %v6763, %v1443
  %v6831 = vmul.f32 %v6764, %v1447
  %v6832 = vmul.f32 %v6765, %v1451
  %v6833 = vmul.f32 %v6766, %v1455
  %v6834 = vmul.f32 %v6767, %v1459
  %v6835 = vmul.f32 %v6768, %v1463
  %v6836 = vmul.f32 %v6769, %v1467
  %v6837 = vmul.f32 %v6770, %v1471
  %v6838 = vmul.f32 %v6771, %v1475
  %v6839 = vmul.f32 %v6772, %v1479
  %v6840 = vmul.f32 %v6773, %v1483
  %v6841 = vmul.f32 %v6774, %v1487
  %v6842 = vmul.f32 %v6775, %v1491
  %v6843 = vmul.f32 %v6776, %v1495
  %v6844 = vmul.f32 %v6777, %v1499
  %v6845 = vmul.f32 %v6778, %v1503
  %v6846 = vmul.f32 %v6779, %v1507
  %v6847 = vmul.f32 %v6780, %v1511
  %v6848 = vmul.f32 %v6781, %v1515
  %v6849 = vmul.f32 %v6782, %v1519
  %v6850 = vmul.f32 %v6783, %v1523
  %v6851 = vmul.f32 %v6784, %v1527
  %v6852 = vmul.f32 %v6785, %v1531
  %v6853 = vmul.f32 %v6786, %v1535
  %v6854 = vmul.f32 %v6787, %v1539
  %v6855 = vmul.f32 %v6788, %v1543
  %v6856 = vmul.f32 %v6789, %v1547
  %v6857 = vmul.f32 %v6790, %v1551
  %v6858 = vmul.f32 %v6791, %v1555
  %v6859 = vmul.f32 %v6792, %v1559
  %v6860 = vmul.f32 %v6793, %v1563
  %v6861 = vmul.f32 %v6794, %v1567
  %v6862 = vmul.f32 %v6795, %v1571
  %v6863 = vmul.f32 %v6796, %v1575
  %v6864 = vmul.f32 %v6797, %v1579
  %v6865 = vmul.f32 %v6798, %v1583
  %v6866 = vmul.f32 %v6799, %v1587
  %v6867 = vmul.f32 %v6800, %v1591
  %v6868 = vmul.f32 %v6801, %v1595
  %v6869 = vmul.f32 %v6802, %v1599
  %v6870 = vmul.f32 %v6803, %v1603
  %v6871 = vmul.f32 %v6804, %v1607
  %v6872 = vmul.f32 %v6805, %v1611
  %v6873 = vmul.f32 %v6806, %v1615
  %v6874 = vmul.f32 %v6807, %v1619
  %v6875 = vmul.f32 %v6808, %v1623
  %v6876 = vmul.f32 %v6809, %v1627
  %v6877 = vmul.f32 %v6810, %v1631
  %v6878 = vmul.f32 %v6811, %v1635
  %v6879 = vmul.f32 %v6812, %v1639
  %v6880 = vmul.f32 %v6813, %v1643
  %v6881 = vmul.f32 %v6814, %v1647
  %v6882 = vmul.f32 %v6815, %v1651
  %v6883 = vpack.c.bf16 %v6816, %v6816
  %v6884 = vpack.c.bf16 %v6817, %v6817
  %v6885 = vpack.c.bf16 %v6818, %v6818
  %v6886 = vpack.c.bf16 %v6819, %v6819
  %v6887 = vpack.c.bf16 %v6820, %v6820
  %v6888 = vpack.c.bf16 %v6821, %v6821
  %v6889 = vpack.c.bf16 %v6822, %v6822
  %v6890 = vpack.c.bf16 %v6823, %v6823
  %v6891 = vpack.c.bf16 %v6824, %v6824
  %v6892 = vpack.c.bf16 %v6825, %v6825
  %v6893 = vpack.c.bf16 %v6826, %v6826
  %v6894 = vpack.c.bf16 %v6827, %v6827
  %v6895 = vpack.c.bf16 %v6828, %v6828
  %v6896 = vpack.c.bf16 %v6829, %v6829
  %v6897 = vpack.c.bf16 %v6830, %v6830
  %v6898 = vpack.c.bf16 %v6831, %v6831
  %v6899 = vpack.c.bf16 %v6832, %v6832
  %v6900 = vpack.c.bf16 %v6833, %v6833
  %v6901 = vpack.c.bf16 %v6834, %v6834
  %v6902 = vpack.c.bf16 %v6835, %v6835
  %v6903 = vpack.c.bf16 %v6836, %v6836
  %v6904 = vpack.c.bf16 %v6837, %v6837
  %v6905 = vpack.c.bf16 %v6838, %v6838
  %v6906 = vpack.c.bf16 %v6839, %v6839
  %v6907 = vpack.c.bf16 %v6840, %v6840
  %v6908 = vpack.c.bf16 %v6841, %v6841
  %v6909 = vpack.c.bf16 %v6842, %v6842
  %v6910 = vpack.c.bf16 %v6843, %v6843
  %v6911 = vpack.c.bf16 %v6844, %v6844
  %v6912 = vpack.c.bf16 %v6845, %v6845
  %v6913 = vpack.c.bf16 %v6846, %v6846
  %v6914 = vpack.c.bf16 %v6847, %v6847
  %v6915 = vpack.c.bf16 %v6848, %v6848
  %v6916 = vpack.c.bf16 %v6849, %v6849
  %v6917 = vpack.c.bf16 %v6850, %v6850
  %v6918 = vpack.c.bf16 %v6851, %v6851
  %v6919 = vpack.c.bf16 %v6852, %v6852
  %v6920 = vpack.c.bf16 %v6853, %v6853
  %v6921 = vpack.c.bf16 %v6854, %v6854
  %v6922 = vpack.c.bf16 %v6855, %v6855
  %v6923 = vpack.c.bf16 %v6856, %v6856
  %v6924 = vpack.c.bf16 %v6857, %v6857
  %v6925 = vpack.c.bf16 %v6858, %v6858
  %v6926 = vpack.c.bf16 %v6859, %v6859
  %v6927 = vpack.c.bf16 %v6860, %v6860
  %v6928 = vpack.c.bf16 %v6861, %v6861
  %v6929 = vpack.c.bf16 %v6862, %v6862
  %v6930 = vpack.c.bf16 %v6863, %v6863
  %v6931 = vpack.c.bf16 %v6864, %v6864
  %v6932 = vpack.c.bf16 %v6865, %v6865
  %v6933 = vpack.c.bf16 %v6866, %v6866
  %v6934 = vpack.c.bf16 %v6867, %v6867
  %v6935 = vpack.c.bf16 %v6868, %v6868
  %v6936 = vpack.c.bf16 %v6869, %v6869
  %v6937 = vpack.c.bf16 %v6870, %v6870
  %v6938 = vpack.c.bf16 %v6871, %v6871
  %v6939 = vpack.c.bf16 %v6872, %v6872
  %v6940 = vpack.c.bf16 %v6873, %v6873
  %v6941 = vpack.c.bf16 %v6874, %v6874
  %v6942 = vpack.c.bf16 %v6875, %v6875
  %v6943 = vpack.c.bf16 %v6876, %v6876
  %v6944 = vpack.c.bf16 %v6877, %v6877
  %v6945 = vpack.c.bf16 %v6878, %v6878
  %v6946 = vpack.c.bf16 %v6879, %v6879
  %v6947 = vpack.c.bf16 %v6880, %v6880
  %v6948 = vpack.c.bf16 %v6881, %v6881
  %v6949 = vpack.c.bf16 %v6882, %v6882
  %7017 = vrot.lane.b32.xlu0 %v6883, 8
  %v7018 = vpop.permute.xlu0 %7017
  %7019 = vrot.lane.b32.xlu0 %v6884, 8
  %v7020 = vpop.permute.xlu0 %7019
  %7021 = vrot.lane.b32.xlu0 %v6885, 8
  %v7022 = vpop.permute.xlu0 %7021
  %7023 = vrot.lane.b32.xlu0 %v6886, 8
  %v7024 = vpop.permute.xlu0 %7023
  %7025 = vrot.lane.b32.xlu0 %v6887, 8
  %v7026 = vpop.permute.xlu0 %7025
  %7027 = vrot.lane.b32.xlu0 %v6888, 8
  %v7028 = vpop.permute.xlu0 %7027
  %7029 = vrot.lane.b32.xlu0 %v6889, 8
  %v7030 = vpop.permute.xlu0 %7029
  %7031 = vrot.lane.b32.xlu0 %v6890, 8
  %v7032 = vpop.permute.xlu0 %7031
  %7033 = vrot.lane.b32.xlu0 %v6891, 8
  %v7034 = vpop.permute.xlu0 %7033
  %7035 = vrot.lane.b32.xlu0 %v6892, 8
  %v7036 = vpop.permute.xlu0 %7035
  %7037 = vrot.lane.b32.xlu0 %v6893, 8
  %v7038 = vpop.permute.xlu0 %7037
  %7039 = vrot.lane.b32.xlu0 %v6894, 8
  %v7040 = vpop.permute.xlu0 %7039
  %7041 = vrot.lane.b32.xlu0 %v6895, 8
  %v7042 = vpop.permute.xlu0 %7041
  %7043 = vrot.lane.b32.xlu0 %v6896, 8
  %v7044 = vpop.permute.xlu0 %7043
  %7045 = vrot.lane.b32.xlu0 %v6897, 8
  %v7046 = vpop.permute.xlu0 %7045
  %7047 = vrot.lane.b32.xlu0 %v6898, 8
  %v7048 = vpop.permute.xlu0 %7047
  %7049 = vrot.lane.b32.xlu0 %v6899, 8
  %v7050 = vpop.permute.xlu0 %7049
  %7051 = vrot.lane.b32.xlu0 %v6900, 8
  %v7052 = vpop.permute.xlu0 %7051
  %7053 = vrot.lane.b32.xlu0 %v6901, 8
  %v7054 = vpop.permute.xlu0 %7053
  %7055 = vrot.lane.b32.xlu0 %v6902, 8
  %v7056 = vpop.permute.xlu0 %7055
  %7057 = vrot.lane.b32.xlu0 %v6903, 8
  %v7058 = vpop.permute.xlu0 %7057
  %7059 = vrot.lane.b32.xlu0 %v6904, 8
  %v7060 = vpop.permute.xlu0 %7059
  %7061 = vrot.lane.b32.xlu0 %v6905, 8
  %v7062 = vpop.permute.xlu0 %7061
  %7063 = vrot.lane.b32.xlu0 %v6906, 8
  %v7064 = vpop.permute.xlu0 %7063
  %7065 = vrot.lane.b32.xlu0 %v6907, 8
  %v7066 = vpop.permute.xlu0 %7065
  %7067 = vrot.lane.b32.xlu0 %v6908, 8
  %v7068 = vpop.permute.xlu0 %7067
  %7069 = vrot.lane.b32.xlu0 %v6909, 8
  %v7070 = vpop.permute.xlu0 %7069
  %7071 = vrot.lane.b32.xlu0 %v6910, 8
  %v7072 = vpop.permute.xlu0 %7071
  %7073 = vrot.lane.b32.xlu0 %v6911, 8
  %v7074 = vpop.permute.xlu0 %7073
  %7075 = vrot.lane.b32.xlu0 %v6912, 8
  %v7076 = vpop.permute.xlu0 %7075
  %7077 = vrot.lane.b32.xlu0 %v6913, 8
  %v7078 = vpop.permute.xlu0 %7077
  %7079 = vrot.lane.b32.xlu0 %v6914, 8
  %v7080 = vpop.permute.xlu0 %7079
  %7081 = vrot.lane.b32.xlu0 %v6915, 8
  %v7082 = vpop.permute.xlu0 %7081
  %7083 = vrot.lane.b32.xlu0 %v6916, 8
  %v7084 = vpop.permute.xlu0 %7083
  %7085 = vrot.lane.b32.xlu0 %v6917, 8
  %v7086 = vpop.permute.xlu0 %7085
  %7087 = vrot.lane.b32.xlu0 %v6918, 8
  %v7088 = vpop.permute.xlu0 %7087
  %7089 = vrot.lane.b32.xlu0 %v6919, 8
  %v7090 = vpop.permute.xlu0 %7089
  %7091 = vrot.lane.b32.xlu0 %v6920, 8
  %v7092 = vpop.permute.xlu0 %7091
  %7093 = vrot.lane.b32.xlu0 %v6921, 8
  %v7094 = vpop.permute.xlu0 %7093
  %7095 = vrot.lane.b32.xlu0 %v6922, 8
  %v7096 = vpop.permute.xlu0 %7095
  %7097 = vrot.lane.b32.xlu0 %v6923, 8
  %v7098 = vpop.permute.xlu0 %7097
  %7099 = vrot.lane.b32.xlu0 %v6924, 8
  %v7100 = vpop.permute.xlu0 %7099
  %7101 = vrot.lane.b32.xlu0 %v6925, 8
  %v7102 = vpop.permute.xlu0 %7101
  %7103 = vrot.lane.b32.xlu0 %v6926, 8
  %v7104 = vpop.permute.xlu0 %7103
  %7105 = vrot.lane.b32.xlu0 %v6927, 8
  %v7106 = vpop.permute.xlu0 %7105
  %7107 = vrot.lane.b32.xlu0 %v6928, 8
  %v7108 = vpop.permute.xlu0 %7107
  %7109 = vrot.lane.b32.xlu0 %v6929, 8
  %v7110 = vpop.permute.xlu0 %7109
  %7111 = vrot.lane.b32.xlu0 %v6930, 8
  %v7112 = vpop.permute.xlu0 %7111
  %7113 = vrot.lane.b32.xlu0 %v6931, 8
  %v7114 = vpop.permute.xlu0 %7113
  %7115 = vrot.lane.b32.xlu0 %v6932, 8
  %v7116 = vpop.permute.xlu0 %7115
  %7117 = vrot.lane.b32.xlu0 %v6933, 8
  %v7118 = vpop.permute.xlu0 %7117
  %7119 = vrot.lane.b32.xlu0 %v6934, 8
  %v7120 = vpop.permute.xlu0 %7119
  %7121 = vrot.lane.b32.xlu0 %v6935, 8
  %v7122 = vpop.permute.xlu0 %7121
  %7123 = vrot.lane.b32.xlu0 %v6936, 8
  %v7124 = vpop.permute.xlu0 %7123
  %7125 = vrot.lane.b32.xlu0 %v6937, 8
  %v7126 = vpop.permute.xlu0 %7125
  %7127 = vrot.lane.b32.xlu0 %v6938, 8
  %v7128 = vpop.permute.xlu0 %7127
  %7129 = vrot.lane.b32.xlu0 %v6939, 8
  %v7130 = vpop.permute.xlu0 %7129
  %7131 = vrot.lane.b32.xlu0 %v6940, 8
  %v7132 = vpop.permute.xlu0 %7131
  %7133 = vrot.lane.b32.xlu0 %v6941, 8
  %v7134 = vpop.permute.xlu0 %7133
  %7135 = vrot.lane.b32.xlu0 %v6942, 8
  %v7136 = vpop.permute.xlu0 %7135
  %7137 = vrot.lane.b32.xlu0 %v6943, 8
  %v7138 = vpop.permute.xlu0 %7137
  %7139 = vrot.lane.b32.xlu0 %v6944, 8
  %v7140 = vpop.permute.xlu0 %7139
  %7141 = vrot.lane.b32.xlu0 %v6945, 8
  %v7142 = vpop.permute.xlu0 %7141
  %7143 = vrot.lane.b32.xlu0 %v6946, 8
  %v7144 = vpop.permute.xlu0 %7143
  %7145 = vrot.lane.b32.xlu0 %v6947, 8
  %v7146 = vpop.permute.xlu0 %7145
  %7147 = vrot.lane.b32.xlu0 %v6948, 8
  %v7148 = vpop.permute.xlu0 %7147
  %7149 = vrot.lane.b32.xlu0 %v6949, 8
  %v7150 = vpop.permute.xlu0 %7149
  %7218 = vst.msk [vmem:[#allocation5] sm:$0xf] %vm2055, %v7018
  %7219 = vst.msk [vmem:[#allocation5 + $0x4] sm:$0xf] %vm2055, %v7020
  %7220 = vst.msk [vmem:[#allocation5 + $0x8] sm:$0xf] %vm2055, %v7022
  %7221 = vst.msk [vmem:[#allocation5 + $0xc] sm:$0xf] %vm2055, %v7024
  %7222 = vst.msk [vmem:[#allocation5 + $0x10] sm:$0xf] %vm2055, %v7026
  %7223 = vst.msk [vmem:[#allocation5 + $0x14] sm:$0xf] %vm2055, %v7028
  %7224 = vst.msk [vmem:[#allocation5 + $0x18] sm:$0xf] %vm2055, %v7030
  %7225 = vst.msk [vmem:[#allocation5 + $0x1c] sm:$0xf] %vm2055, %v7032
  %7226 = vst.msk [vmem:[#allocation5 + $0x20] sm:$0xf] %vm2055, %v7034
  %7227 = vst.msk [vmem:[#allocation5 + $0x24] sm:$0xf] %vm2055, %v7036
  %7228 = vst.msk [vmem:[#allocation5 + $0x28] sm:$0xf] %vm2055, %v7038
  %7229 = vst.msk [vmem:[#allocation5 + $0x2c] sm:$0xf] %vm2055, %v7040
  %7230 = vst.msk [vmem:[#allocation5 + $0x30] sm:$0xf] %vm2055, %v7042
  %7231 = vst.msk [vmem:[#allocation5 + $0x34] sm:$0xf] %vm2055, %v7044
  %7232 = vst.msk [vmem:[#allocation5 + $0x38] sm:$0xf] %vm2055, %v7046
  %7233 = vst.msk [vmem:[#allocation5 + $0x3c] sm:$0xf] %vm2055, %v7048
  %7234 = vst.msk [vmem:[#allocation5 + $0x40] sm:$0xf] %vm2055, %v7050
  %7235 = vst.msk [vmem:[#allocation5 + $0x44] sm:$0xf] %vm2055, %v7052
  %7236 = vst.msk [vmem:[#allocation5 + $0x48] sm:$0xf] %vm2055, %v7054
  %7237 = vst.msk [vmem:[#allocation5 + $0x4c] sm:$0xf] %vm2055, %v7056
  %7238 = vst.msk [vmem:[#allocation5 + $0x50] sm:$0xf] %vm2055, %v7058
  %7239 = vst.msk [vmem:[#allocation5 + $0x54] sm:$0xf] %vm2055, %v7060
  %7240 = vst.msk [vmem:[#allocation5 + $0x58] sm:$0xf] %vm2055, %v7062
  %7241 = vst.msk [vmem:[#allocation5 + $0x5c] sm:$0xf] %vm2055, %v7064
  %7242 = vst.msk [vmem:[#allocation5 + $0x60] sm:$0xf] %vm2055, %v7066
  %7243 = vst.msk [vmem:[#allocation5 + $0x64] sm:$0xf] %vm2055, %v7068
  %7244 = vst.msk [vmem:[#allocation5 + $0x68] sm:$0xf] %vm2055, %v7070
  %7245 = vst.msk [vmem:[#allocation5 + $0x6c] sm:$0xf] %vm2055, %v7072
  %7246 = vst.msk [vmem:[#allocation5 + $0x70] sm:$0xf] %vm2055, %v7074
  %7247 = vst.msk [vmem:[#allocation5 + $0x74] sm:$0xf] %vm2055, %v7076
  %7248 = vst.msk [vmem:[#allocation5 + $0x78] sm:$0xf] %vm2055, %v7078
  %7249 = vst.msk [vmem:[#allocation5 + $0x7c] sm:$0xf] %vm2055, %v7080
  %7250 = vst.msk [vmem:[#allocation5 + $0x80] sm:$0xf] %vm2055, %v7082
  %7251 = vst.msk [vmem:[#allocation5 + $0x84] sm:$0xf] %vm2055, %v7084
  %7252 = vst.msk [vmem:[#allocation5 + $0x88] sm:$0xf] %vm2055, %v7086
  %7253 = vst.msk [vmem:[#allocation5 + $0x8c] sm:$0xf] %vm2055, %v7088
  %7254 = vst.msk [vmem:[#allocation5 + $0x90] sm:$0xf] %vm2055, %v7090
  %7255 = vst.msk [vmem:[#allocation5 + $0x94] sm:$0xf] %vm2055, %v7092
  %7256 = vst.msk [vmem:[#allocation5 + $0x98] sm:$0xf] %vm2055, %v7094
  %7257 = vst.msk [vmem:[#allocation5 + $0x9c] sm:$0xf] %vm2055, %v7096
  %7258 = vst.msk [vmem:[#allocation5 + $0xa0] sm:$0xf] %vm2055, %v7098
  %7259 = vst.msk [vmem:[#allocation5 + $0xa4] sm:$0xf] %vm2055, %v7100
  %7260 = vst.msk [vmem:[#allocation5 + $0xa8] sm:$0xf] %vm2055, %v7102
  %7261 = vst.msk [vmem:[#allocation5 + $0xac] sm:$0xf] %vm2055, %v7104
  %7262 = vst.msk [vmem:[#allocation5 + $0xb0] sm:$0xf] %vm2055, %v7106
  %7263 = vst.msk [vmem:[#allocation5 + $0xb4] sm:$0xf] %vm2055, %v7108
  %7264 = vst.msk [vmem:[#allocation5 + $0xb8] sm:$0xf] %vm2055, %v7110
  %7265 = vst.msk [vmem:[#allocation5 + $0xbc] sm:$0xf] %vm2055, %v7112
  %7266 = vst.msk [vmem:[#allocation5 + $0xc0] sm:$0xf] %vm2055, %v7114
  %7267 = vst.msk [vmem:[#allocation5 + $0xc4] sm:$0xf] %vm2055, %v7116
  %7268 = vst.msk [vmem:[#allocation5 + $0xc8] sm:$0xf] %vm2055, %v7118
  %7269 = vst.msk [vmem:[#allocation5 + $0xcc] sm:$0xf] %vm2055, %v7120
  %7270 = vst.msk [vmem:[#allocation5 + $0xd0] sm:$0xf] %vm2055, %v7122
  %7271 = vst.msk [vmem:[#allocation5 + $0xd4] sm:$0xf] %vm2055, %v7124
  %7272 = vst.msk [vmem:[#allocation5 + $0xd8] sm:$0xf] %vm2055, %v7126
  %7273 = vst.msk [vmem:[#allocation5 + $0xdc] sm:$0xf] %vm2055, %v7128
  %7274 = vst.msk [vmem:[#allocation5 + $0xe0] sm:$0xf] %vm2055, %v7130
  %7275 = vst.msk [vmem:[#allocation5 + $0xe4] sm:$0xf] %vm2055, %v7132
  %7276 = vst.msk [vmem:[#allocation5 + $0xe8] sm:$0xf] %vm2055, %v7134
  %7277 = vst.msk [vmem:[#allocation5 + $0xec] sm:$0xf] %vm2055, %v7136
  %7278 = vst.msk [vmem:[#allocation5 + $0xf0] sm:$0xf] %vm2055, %v7138
  %7279 = vst.msk [vmem:[#allocation5 + $0xf4] sm:$0xf] %vm2055, %v7140
  %7280 = vst.msk [vmem:[#allocation5 + $0xf8] sm:$0xf] %vm2055, %v7142
  %7281 = vst.msk [vmem:[#allocation5 + $0xfc] sm:$0xf] %vm2055, %v7144
  %7282 = vst.msk [vmem:[#allocation5 + $0x100] sm:$0xf] %vm2055, %v7146
  %7283 = vst.msk [vmem:[#allocation5 + $0x104] sm:$0xf] %vm2055, %v7148
  %7284 = vst.msk [vmem:[#allocation5 + $0x108] sm:$0xf] %vm2055, %v7150
  %v7285 = vld [vmem:[#allocation3 + $0x17] sm:$0xff]
  %v7286 = vld [vmem:[#allocation3 + $0x1f] sm:$0xff]
  %v7287 = vld [vmem:[#allocation3 + $0x27] sm:$0xff]
  %v7288 = vld [vmem:[#allocation3 + $0x2f] sm:$0xff]
  %v7289 = vld [vmem:[#allocation3 + $0x37] sm:$0xff]
  %v7290 = vld [vmem:[#allocation3 + $0x3f] sm:$0xff]
  %v7291 = vld [vmem:[#allocation3 + $0x47] sm:$0xff]
  %v7292 = vld [vmem:[#allocation3 + $0x4f] sm:$0xff]
  %v7293 = vld [vmem:[#allocation3 + $0x57] sm:$0xff]
  %v7294 = vld [vmem:[#allocation3 + $0x5f] sm:$0xff]
  %v7295 = vld [vmem:[#allocation3 + $0x67] sm:$0xff]
  %v7296 = vld [vmem:[#allocation3 + $0x6f] sm:$0xff]
  %v7297 = vld [vmem:[#allocation3 + $0x77] sm:$0xff]
  %v7298 = vld [vmem:[#allocation3 + $0x7f] sm:$0xff]
  %v7299 = vld [vmem:[#allocation3 + $0x87] sm:$0xff]
  %v7300 = vld [vmem:[#allocation3 + $0x8f] sm:$0xff]
  %v7301 = vld [vmem:[#allocation3 + $0x97] sm:$0xff]
  %v7302 = vld [vmem:[#allocation3 + $0x9f] sm:$0xff]
  %v7303 = vld [vmem:[#allocation3 + $0xa7] sm:$0xff]
  %v7304 = vld [vmem:[#allocation3 + $0xaf] sm:$0xff]
  %v7305 = vld [vmem:[#allocation3 + $0xb7] sm:$0xff]
  %v7306 = vld [vmem:[#allocation3 + $0xbf] sm:$0xff]
  %v7307 = vld [vmem:[#allocation3 + $0xc7] sm:$0xff]
  %v7308 = vld [vmem:[#allocation3 + $0xcf] sm:$0xff]
  %v7309 = vld [vmem:[#allocation3 + $0xd7] sm:$0xff]
  %v7310 = vld [vmem:[#allocation3 + $0xdf] sm:$0xff]
  %v7311 = vld [vmem:[#allocation3 + $0xe7] sm:$0xff]
  %v7312 = vld [vmem:[#allocation3 + $0xef] sm:$0xff]
  %v7313 = vld [vmem:[#allocation3 + $0xf7] sm:$0xff]
  %v7314 = vld [vmem:[#allocation3 + $0xff] sm:$0xff]
  %v7315 = vld [vmem:[#allocation3 + $0x107] sm:$0xff]
  %v7316 = vld [vmem:[#allocation3 + $0x10f] sm:$0xff]
  %v7317 = vld [vmem:[#allocation3 + $0x117] sm:$0xff]
  %v7318 = vld [vmem:[#allocation3 + $0x11f] sm:$0xff]
  %v7319 = vld [vmem:[#allocation3 + $0x127] sm:$0xff]
  %v7320 = vld [vmem:[#allocation3 + $0x12f] sm:$0xff]
  %v7321 = vld [vmem:[#allocation3 + $0x137] sm:$0xff]
  %v7322 = vld [vmem:[#allocation3 + $0x13f] sm:$0xff]
  %v7323 = vld [vmem:[#allocation3 + $0x147] sm:$0xff]
  %v7324 = vld [vmem:[#allocation3 + $0x14f] sm:$0xff]
  %v7325 = vld [vmem:[#allocation3 + $0x157] sm:$0xff]
  %v7326 = vld [vmem:[#allocation3 + $0x15f] sm:$0xff]
  %v7327 = vld [vmem:[#allocation3 + $0x167] sm:$0xff]
  %v7328 = vld [vmem:[#allocation3 + $0x16f] sm:$0xff]
  %v7329 = vld [vmem:[#allocation3 + $0x177] sm:$0xff]
  %v7330 = vld [vmem:[#allocation3 + $0x17f] sm:$0xff]
  %v7331 = vld [vmem:[#allocation3 + $0x187] sm:$0xff]
  %v7332 = vld [vmem:[#allocation3 + $0x18f] sm:$0xff]
  %v7333 = vld [vmem:[#allocation3 + $0x197] sm:$0xff]
  %v7334 = vld [vmem:[#allocation3 + $0x19f] sm:$0xff]
  %v7335 = vld [vmem:[#allocation3 + $0x1a7] sm:$0xff]
  %v7336 = vld [vmem:[#allocation3 + $0x1af] sm:$0xff]
  %v7337 = vld [vmem:[#allocation3 + $0x1b7] sm:$0xff]
  %v7338 = vld [vmem:[#allocation3 + $0x1bf] sm:$0xff]
  %v7339 = vld [vmem:[#allocation3 + $0x1c7] sm:$0xff]
  %v7340 = vld [vmem:[#allocation3 + $0x1cf] sm:$0xff]
  %v7341 = vld [vmem:[#allocation3 + $0x1d7] sm:$0xff]
  %v7342 = vld [vmem:[#allocation3 + $0x1df] sm:$0xff]
  %v7343 = vld [vmem:[#allocation3 + $0x1e7] sm:$0xff]
  %v7344 = vld [vmem:[#allocation3 + $0x1ef] sm:$0xff]
  %v7345 = vld [vmem:[#allocation3 + $0x1f7] sm:$0xff]
  %v7346 = vld [vmem:[#allocation3 + $0x1ff] sm:$0xff]
  %v7347 = vld [vmem:[#allocation3 + $0x207] sm:$0xff]
  %v7348 = vld [vmem:[#allocation3 + $0x20f] sm:$0xff]
  %v7349 = vld [vmem:[#allocation3 + $0x217] sm:$0xff]
  %v7350 = vld [vmem:[#allocation3 + $0x21f] sm:$0xff]
  %v7351 = vld [vmem:[#allocation3 + $0x227] sm:$0xff]
  %v7352 = vmul.f32 %v7285, %v314
  %v7353 = vmul.f32 %v7286, %v319
  %v7354 = vmul.f32 %v7287, %v324
  %v7355 = vmul.f32 %v7288, %v329
  %v7356 = vmul.f32 %v7289, %v334
  %v7357 = vmul.f32 %v7290, %v339
  %v7358 = vmul.f32 %v7291, %v344
  %v7359 = vmul.f32 %v7292, %v349
  %v7360 = vmul.f32 %v7293, %v354
  %v7361 = vmul.f32 %v7294, %v359
  %v7362 = vmul.f32 %v7295, %v364
  %v7363 = vmul.f32 %v7296, %v369
  %v7364 = vmul.f32 %v7297, %v374
  %v7365 = vmul.f32 %v7298, %v379
  %v7366 = vmul.f32 %v7299, %v384
  %v7367 = vmul.f32 %v7300, %v389
  %v7368 = vmul.f32 %v7301, %v394
  %v7369 = vmul.f32 %v7302, %v399
  %v7370 = vmul.f32 %v7303, %v404
  %v7371 = vmul.f32 %v7304, %v409
  %v7372 = vmul.f32 %v7305, %v414
  %v7373 = vmul.f32 %v7306, %v419
  %v7374 = vmul.f32 %v7307, %v424
  %v7375 = vmul.f32 %v7308, %v429
  %v7376 = vmul.f32 %v7309, %v434
  %v7377 = vmul.f32 %v7310, %v439
  %v7378 = vmul.f32 %v7311, %v444
  %v7379 = vmul.f32 %v7312, %v449
  %v7380 = vmul.f32 %v7313, %v454
  %v7381 = vmul.f32 %v7314, %v459
  %v7382 = vmul.f32 %v7315, %v464
  %v7383 = vmul.f32 %v7316, %v469
  %v7384 = vmul.f32 %v7317, %v474
  %v7385 = vmul.f32 %v7318, %v479
  %v7386 = vmul.f32 %v7319, %v484
  %v7387 = vmul.f32 %v7320, %v489
  %v7388 = vmul.f32 %v7321, %v494
  %v7389 = vmul.f32 %v7322, %v499
  %v7390 = vmul.f32 %v7323, %v504
  %v7391 = vmul.f32 %v7324, %v509
  %v7392 = vmul.f32 %v7325, %v514
  %v7393 = vmul.f32 %v7326, %v519
  %v7394 = vmul.f32 %v7327, %v524
  %v7395 = vmul.f32 %v7328, %v529
  %v7396 = vmul.f32 %v7329, %v534
  %v7397 = vmul.f32 %v7330, %v539
  %v7398 = vmul.f32 %v7331, %v544
  %v7399 = vmul.f32 %v7332, %v549
  %v7400 = vmul.f32 %v7333, %v554
  %v7401 = vmul.f32 %v7334, %v559
  %v7402 = vmul.f32 %v7335, %v564
  %v7403 = vmul.f32 %v7336, %v569
  %v7404 = vmul.f32 %v7337, %v574
  %v7405 = vmul.f32 %v7338, %v579
  %v7406 = vmul.f32 %v7339, %v584
  %v7407 = vmul.f32 %v7340, %v589
  %v7408 = vmul.f32 %v7341, %v594
  %v7409 = vmul.f32 %v7342, %v599
  %v7410 = vmul.f32 %v7343, %v604
  %v7411 = vmul.f32 %v7344, %v609
  %v7412 = vmul.f32 %v7345, %v614
  %v7413 = vmul.f32 %v7346, %v619
  %v7414 = vmul.f32 %v7347, %v624
  %v7415 = vmul.f32 %v7348, %v629
  %v7416 = vmul.f32 %v7349, %v634
  %v7417 = vmul.f32 %v7350, %v639
  %v7418 = vmul.f32 %v7351, %v644
  %v7419 = vpack.c.bf16 %v7352, %v7352
  %v7420 = vpack.c.bf16 %v7353, %v7353
  %v7421 = vpack.c.bf16 %v7354, %v7354
  %v7422 = vpack.c.bf16 %v7355, %v7355
  %v7423 = vpack.c.bf16 %v7356, %v7356
  %v7424 = vpack.c.bf16 %v7357, %v7357
  %v7425 = vpack.c.bf16 %v7358, %v7358
  %v7426 = vpack.c.bf16 %v7359, %v7359
  %v7427 = vpack.c.bf16 %v7360, %v7360
  %v7428 = vpack.c.bf16 %v7361, %v7361
  %v7429 = vpack.c.bf16 %v7362, %v7362
  %v7430 = vpack.c.bf16 %v7363, %v7363
  %v7431 = vpack.c.bf16 %v7364, %v7364
  %v7432 = vpack.c.bf16 %v7365, %v7365
  %v7433 = vpack.c.bf16 %v7366, %v7366
  %v7434 = vpack.c.bf16 %v7367, %v7367
  %v7435 = vpack.c.bf16 %v7368, %v7368
  %v7436 = vpack.c.bf16 %v7369, %v7369
  %v7437 = vpack.c.bf16 %v7370, %v7370
  %v7438 = vpack.c.bf16 %v7371, %v7371
  %v7439 = vpack.c.bf16 %v7372, %v7372
  %v7440 = vpack.c.bf16 %v7373, %v7373
  %v7441 = vpack.c.bf16 %v7374, %v7374
  %v7442 = vpack.c.bf16 %v7375, %v7375
  %v7443 = vpack.c.bf16 %v7376, %v7376
  %v7444 = vpack.c.bf16 %v7377, %v7377
  %v7445 = vpack.c.bf16 %v7378, %v7378
  %v7446 = vpack.c.bf16 %v7379, %v7379
  %v7447 = vpack.c.bf16 %v7380, %v7380
  %v7448 = vpack.c.bf16 %v7381, %v7381
  %v7449 = vpack.c.bf16 %v7382, %v7382
  %v7450 = vpack.c.bf16 %v7383, %v7383
  %v7451 = vpack.c.bf16 %v7384, %v7384
  %v7452 = vpack.c.bf16 %v7385, %v7385
  %v7453 = vpack.c.bf16 %v7386, %v7386
  %v7454 = vpack.c.bf16 %v7387, %v7387
  %v7455 = vpack.c.bf16 %v7388, %v7388
  %v7456 = vpack.c.bf16 %v7389, %v7389
  %v7457 = vpack.c.bf16 %v7390, %v7390
  %v7458 = vpack.c.bf16 %v7391, %v7391
  %v7459 = vpack.c.bf16 %v7392, %v7392
  %v7460 = vpack.c.bf16 %v7393, %v7393
  %v7461 = vpack.c.bf16 %v7394, %v7394
  %v7462 = vpack.c.bf16 %v7395, %v7395
  %v7463 = vpack.c.bf16 %v7396, %v7396
  %v7464 = vpack.c.bf16 %v7397, %v7397
  %v7465 = vpack.c.bf16 %v7398, %v7398
  %v7466 = vpack.c.bf16 %v7399, %v7399
  %v7467 = vpack.c.bf16 %v7400, %v7400
  %v7468 = vpack.c.bf16 %v7401, %v7401
  %v7469 = vpack.c.bf16 %v7402, %v7402
  %v7470 = vpack.c.bf16 %v7403, %v7403
  %v7471 = vpack.c.bf16 %v7404, %v7404
  %v7472 = vpack.c.bf16 %v7405, %v7405
  %v7473 = vpack.c.bf16 %v7406, %v7406
  %v7474 = vpack.c.bf16 %v7407, %v7407
  %v7475 = vpack.c.bf16 %v7408, %v7408
  %v7476 = vpack.c.bf16 %v7409, %v7409
  %v7477 = vpack.c.bf16 %v7410, %v7410
  %v7478 = vpack.c.bf16 %v7411, %v7411
  %v7479 = vpack.c.bf16 %v7412, %v7412
  %v7480 = vpack.c.bf16 %v7413, %v7413
  %v7481 = vpack.c.bf16 %v7414, %v7414
  %v7482 = vpack.c.bf16 %v7415, %v7415
  %v7483 = vpack.c.bf16 %v7416, %v7416
  %v7484 = vpack.c.bf16 %v7417, %v7417
  %v7485 = vpack.c.bf16 %v7418, %v7418
  %7553 = vrot.lane.b32.xlu0 %v7419, 12
  %v7554 = vpop.permute.xlu0 %7553
  %7555 = vrot.lane.b32.xlu0 %v7420, 12
  %v7556 = vpop.permute.xlu0 %7555
  %7557 = vrot.lane.b32.xlu0 %v7421, 12
  %v7558 = vpop.permute.xlu0 %7557
  %7559 = vrot.lane.b32.xlu0 %v7422, 12
  %v7560 = vpop.permute.xlu0 %7559
  %7561 = vrot.lane.b32.xlu0 %v7423, 12
  %v7562 = vpop.permute.xlu0 %7561
  %7563 = vrot.lane.b32.xlu0 %v7424, 12
  %v7564 = vpop.permute.xlu0 %7563
  %7565 = vrot.lane.b32.xlu0 %v7425, 12
  %v7566 = vpop.permute.xlu0 %7565
  %7567 = vrot.lane.b32.xlu0 %v7426, 12
  %v7568 = vpop.permute.xlu0 %7567
  %7569 = vrot.lane.b32.xlu0 %v7427, 12
  %v7570 = vpop.permute.xlu0 %7569
  %7571 = vrot.lane.b32.xlu0 %v7428, 12
  %v7572 = vpop.permute.xlu0 %7571
  %7573 = vrot.lane.b32.xlu0 %v7429, 12
  %v7574 = vpop.permute.xlu0 %7573
  %7575 = vrot.lane.b32.xlu0 %v7430, 12
  %v7576 = vpop.permute.xlu0 %7575
  %7577 = vrot.lane.b32.xlu0 %v7431, 12
  %v7578 = vpop.permute.xlu0 %7577
  %7579 = vrot.lane.b32.xlu0 %v7432, 12
  %v7580 = vpop.permute.xlu0 %7579
  %7581 = vrot.lane.b32.xlu0 %v7433, 12
  %v7582 = vpop.permute.xlu0 %7581
  %7583 = vrot.lane.b32.xlu0 %v7434, 12
  %v7584 = vpop.permute.xlu0 %7583
  %7585 = vrot.lane.b32.xlu0 %v7435, 12
  %v7586 = vpop.permute.xlu0 %7585
  %7587 = vrot.lane.b32.xlu0 %v7436, 12
  %v7588 = vpop.permute.xlu0 %7587
  %7589 = vrot.lane.b32.xlu0 %v7437, 12
  %v7590 = vpop.permute.xlu0 %7589
  %7591 = vrot.lane.b32.xlu0 %v7438, 12
  %v7592 = vpop.permute.xlu0 %7591
  %7593 = vrot.lane.b32.xlu0 %v7439, 12
  %v7594 = vpop.permute.xlu0 %7593
  %7595 = vrot.lane.b32.xlu0 %v7440, 12
  %v7596 = vpop.permute.xlu0 %7595
  %7597 = vrot.lane.b32.xlu0 %v7441, 12
  %v7598 = vpop.permute.xlu0 %7597
  %7599 = vrot.lane.b32.xlu0 %v7442, 12
  %v7600 = vpop.permute.xlu0 %7599
  %7601 = vrot.lane.b32.xlu0 %v7443, 12
  %v7602 = vpop.permute.xlu0 %7601
  %7603 = vrot.lane.b32.xlu0 %v7444, 12
  %v7604 = vpop.permute.xlu0 %7603
  %7605 = vrot.lane.b32.xlu0 %v7445, 12
  %v7606 = vpop.permute.xlu0 %7605
  %7607 = vrot.lane.b32.xlu0 %v7446, 12
  %v7608 = vpop.permute.xlu0 %7607
  %7609 = vrot.lane.b32.xlu0 %v7447, 12
  %v7610 = vpop.permute.xlu0 %7609
  %7611 = vrot.lane.b32.xlu0 %v7448, 12
  %v7612 = vpop.permute.xlu0 %7611
  %7613 = vrot.lane.b32.xlu0 %v7449, 12
  %v7614 = vpop.permute.xlu0 %7613
  %7615 = vrot.lane.b32.xlu0 %v7450, 12
  %v7616 = vpop.permute.xlu0 %7615
  %7617 = vrot.lane.b32.xlu0 %v7451, 12
  %v7618 = vpop.permute.xlu0 %7617
  %7619 = vrot.lane.b32.xlu0 %v7452, 12
  %v7620 = vpop.permute.xlu0 %7619
  %7621 = vrot.lane.b32.xlu0 %v7453, 12
  %v7622 = vpop.permute.xlu0 %7621
  %7623 = vrot.lane.b32.xlu0 %v7454, 12
  %v7624 = vpop.permute.xlu0 %7623
  %7625 = vrot.lane.b32.xlu0 %v7455, 12
  %v7626 = vpop.permute.xlu0 %7625
  %7627 = vrot.lane.b32.xlu0 %v7456, 12
  %v7628 = vpop.permute.xlu0 %7627
  %7629 = vrot.lane.b32.xlu0 %v7457, 12
  %v7630 = vpop.permute.xlu0 %7629
  %7631 = vrot.lane.b32.xlu0 %v7458, 12
  %v7632 = vpop.permute.xlu0 %7631
  %7633 = vrot.lane.b32.xlu0 %v7459, 12
  %v7634 = vpop.permute.xlu0 %7633
  %7635 = vrot.lane.b32.xlu0 %v7460, 12
  %v7636 = vpop.permute.xlu0 %7635
  %7637 = vrot.lane.b32.xlu0 %v7461, 12
  %v7638 = vpop.permute.xlu0 %7637
  %7639 = vrot.lane.b32.xlu0 %v7462, 12
  %v7640 = vpop.permute.xlu0 %7639
  %7641 = vrot.lane.b32.xlu0 %v7463, 12
  %v7642 = vpop.permute.xlu0 %7641
  %7643 = vrot.lane.b32.xlu0 %v7464, 12
  %v7644 = vpop.permute.xlu0 %7643
  %7645 = vrot.lane.b32.xlu0 %v7465, 12
  %v7646 = vpop.permute.xlu0 %7645
  %7647 = vrot.lane.b32.xlu0 %v7466, 12
  %v7648 = vpop.permute.xlu0 %7647
  %7649 = vrot.lane.b32.xlu0 %v7467, 12
  %v7650 = vpop.permute.xlu0 %7649
  %7651 = vrot.lane.b32.xlu0 %v7468, 12
  %v7652 = vpop.permute.xlu0 %7651
  %7653 = vrot.lane.b32.xlu0 %v7469, 12
  %v7654 = vpop.permute.xlu0 %7653
  %7655 = vrot.lane.b32.xlu0 %v7470, 12
  %v7656 = vpop.permute.xlu0 %7655
  %7657 = vrot.lane.b32.xlu0 %v7471, 12
  %v7658 = vpop.permute.xlu0 %7657
  %7659 = vrot.lane.b32.xlu0 %v7472, 12
  %v7660 = vpop.permute.xlu0 %7659
  %7661 = vrot.lane.b32.xlu0 %v7473, 12
  %v7662 = vpop.permute.xlu0 %7661
  %7663 = vrot.lane.b32.xlu0 %v7474, 12
  %v7664 = vpop.permute.xlu0 %7663
  %7665 = vrot.lane.b32.xlu0 %v7475, 12
  %v7666 = vpop.permute.xlu0 %7665
  %7667 = vrot.lane.b32.xlu0 %v7476, 12
  %v7668 = vpop.permute.xlu0 %7667
  %7669 = vrot.lane.b32.xlu0 %v7477, 12
  %v7670 = vpop.permute.xlu0 %7669
  %7671 = vrot.lane.b32.xlu0 %v7478, 12
  %v7672 = vpop.permute.xlu0 %7671
  %7673 = vrot.lane.b32.xlu0 %v7479, 12
  %v7674 = vpop.permute.xlu0 %7673
  %7675 = vrot.lane.b32.xlu0 %v7480, 12
  %v7676 = vpop.permute.xlu0 %7675
  %7677 = vrot.lane.b32.xlu0 %v7481, 12
  %v7678 = vpop.permute.xlu0 %7677
  %7679 = vrot.lane.b32.xlu0 %v7482, 12
  %v7680 = vpop.permute.xlu0 %7679
  %7681 = vrot.lane.b32.xlu0 %v7483, 12
  %v7682 = vpop.permute.xlu0 %7681
  %7683 = vrot.lane.b32.xlu0 %v7484, 12
  %v7684 = vpop.permute.xlu0 %7683
  %7685 = vrot.lane.b32.xlu0 %v7485, 12
  %v7686 = vpop.permute.xlu0 %7685
  %7754 = vst.msk [vmem:[#allocation5] sm:$0xf] %vm2592, %v7554
  %7755 = vst.msk [vmem:[#allocation5 + $0x4] sm:$0xf] %vm2592, %v7556
  %7756 = vst.msk [vmem:[#allocation5 + $0x8] sm:$0xf] %vm2592, %v7558
  %7757 = vst.msk [vmem:[#allocation5 + $0xc] sm:$0xf] %vm2592, %v7560
  %7758 = vst.msk [vmem:[#allocation5 + $0x10] sm:$0xf] %vm2592, %v7562
  %7759 = vst.msk [vmem:[#allocation5 + $0x14] sm:$0xf] %vm2592, %v7564
  %7760 = vst.msk [vmem:[#allocation5 + $0x18] sm:$0xf] %vm2592, %v7566
  %7761 = vst.msk [vmem:[#allocation5 + $0x1c] sm:$0xf] %vm2592, %v7568
  %7762 = vst.msk [vmem:[#allocation5 + $0x20] sm:$0xf] %vm2592, %v7570
  %7763 = vst.msk [vmem:[#allocation5 + $0x24] sm:$0xf] %vm2592, %v7572
  %7764 = vst.msk [vmem:[#allocation5 + $0x28] sm:$0xf] %vm2592, %v7574
  %7765 = vst.msk [vmem:[#allocation5 + $0x2c] sm:$0xf] %vm2592, %v7576
  %7766 = vst.msk [vmem:[#allocation5 + $0x30] sm:$0xf] %vm2592, %v7578
  %7767 = vst.msk [vmem:[#allocation5 + $0x34] sm:$0xf] %vm2592, %v7580
  %7768 = vst.msk [vmem:[#allocation5 + $0x38] sm:$0xf] %vm2592, %v7582
  %7769 = vst.msk [vmem:[#allocation5 + $0x3c] sm:$0xf] %vm2592, %v7584
  %7770 = vst.msk [vmem:[#allocation5 + $0x40] sm:$0xf] %vm2592, %v7586
  %7771 = vst.msk [vmem:[#allocation5 + $0x44] sm:$0xf] %vm2592, %v7588
  %7772 = vst.msk [vmem:[#allocation5 + $0x48] sm:$0xf] %vm2592, %v7590
  %7773 = vst.msk [vmem:[#allocation5 + $0x4c] sm:$0xf] %vm2592, %v7592
  %7774 = vst.msk [vmem:[#allocation5 + $0x50] sm:$0xf] %vm2592, %v7594
  %7775 = vst.msk [vmem:[#allocation5 + $0x54] sm:$0xf] %vm2592, %v7596
  %7776 = vst.msk [vmem:[#allocation5 + $0x58] sm:$0xf] %vm2592, %v7598
  %7777 = vst.msk [vmem:[#allocation5 + $0x5c] sm:$0xf] %vm2592, %v7600
  %7778 = vst.msk [vmem:[#allocation5 + $0x60] sm:$0xf] %vm2592, %v7602
  %7779 = vst.msk [vmem:[#allocation5 + $0x64] sm:$0xf] %vm2592, %v7604
  %7780 = vst.msk [vmem:[#allocation5 + $0x68] sm:$0xf] %vm2592, %v7606
  %7781 = vst.msk [vmem:[#allocation5 + $0x6c] sm:$0xf] %vm2592, %v7608
  %7782 = vst.msk [vmem:[#allocation5 + $0x70] sm:$0xf] %vm2592, %v7610
  %7783 = vst.msk [vmem:[#allocation5 + $0x74] sm:$0xf] %vm2592, %v7612
  %7784 = vst.msk [vmem:[#allocation5 + $0x78] sm:$0xf] %vm2592, %v7614
  %7785 = vst.msk [vmem:[#allocation5 + $0x7c] sm:$0xf] %vm2592, %v7616
  %7786 = vst.msk [vmem:[#allocation5 + $0x80] sm:$0xf] %vm2592, %v7618
  %7787 = vst.msk [vmem:[#allocation5 + $0x84] sm:$0xf] %vm2592, %v7620
  %7788 = vst.msk [vmem:[#allocation5 + $0x88] sm:$0xf] %vm2592, %v7622
  %7789 = vst.msk [vmem:[#allocation5 + $0x8c] sm:$0xf] %vm2592, %v7624
  %7790 = vst.msk [vmem:[#allocation5 + $0x90] sm:$0xf] %vm2592, %v7626
  %7791 = vst.msk [vmem:[#allocation5 + $0x94] sm:$0xf] %vm2592, %v7628
  %7792 = vst.msk [vmem:[#allocation5 + $0x98] sm:$0xf] %vm2592, %v7630
  %7793 = vst.msk [vmem:[#allocation5 + $0x9c] sm:$0xf] %vm2592, %v7632
  %7794 = vst.msk [vmem:[#allocation5 + $0xa0] sm:$0xf] %vm2592, %v7634
  %7795 = vst.msk [vmem:[#allocation5 + $0xa4] sm:$0xf] %vm2592, %v7636
  %7796 = vst.msk [vmem:[#allocation5 + $0xa8] sm:$0xf] %vm2592, %v7638
  %7797 = vst.msk [vmem:[#allocation5 + $0xac] sm:$0xf] %vm2592, %v7640
  %7798 = vst.msk [vmem:[#allocation5 + $0xb0] sm:$0xf] %vm2592, %v7642
  %7799 = vst.msk [vmem:[#allocation5 + $0xb4] sm:$0xf] %vm2592, %v7644
  %7800 = vst.msk [vmem:[#allocation5 + $0xb8] sm:$0xf] %vm2592, %v7646
  %7801 = vst.msk [vmem:[#allocation5 + $0xbc] sm:$0xf] %vm2592, %v7648
  %7802 = vst.msk [vmem:[#allocation5 + $0xc0] sm:$0xf] %vm2592, %v7650
  %7803 = vst.msk [vmem:[#allocation5 + $0xc4] sm:$0xf] %vm2592, %v7652
  %7804 = vst.msk [vmem:[#allocation5 + $0xc8] sm:$0xf] %vm2592, %v7654
  %7805 = vst.msk [vmem:[#allocation5 + $0xcc] sm:$0xf] %vm2592, %v7656
  %7806 = vst.msk [vmem:[#allocation5 + $0xd0] sm:$0xf] %vm2592, %v7658
  %7807 = vst.msk [vmem:[#allocation5 + $0xd4] sm:$0xf] %vm2592, %v7660
  %7808 = vst.msk [vmem:[#allocation5 + $0xd8] sm:$0xf] %vm2592, %v7662
  %7809 = vst.msk [vmem:[#allocation5 + $0xdc] sm:$0xf] %vm2592, %v7664
  %7810 = vst.msk [vmem:[#allocation5 + $0xe0] sm:$0xf] %vm2592, %v7666
  %7811 = vst.msk [vmem:[#allocation5 + $0xe4] sm:$0xf] %vm2592, %v7668
  %7812 = vst.msk [vmem:[#allocation5 + $0xe8] sm:$0xf] %vm2592, %v7670
  %7813 = vst.msk [vmem:[#allocation5 + $0xec] sm:$0xf] %vm2592, %v7672
  %7814 = vst.msk [vmem:[#allocation5 + $0xf0] sm:$0xf] %vm2592, %v7674
  %7815 = vst.msk [vmem:[#allocation5 + $0xf4] sm:$0xf] %vm2592, %v7676
  %7816 = vst.msk [vmem:[#allocation5 + $0xf8] sm:$0xf] %vm2592, %v7678
  %7817 = vst.msk [vmem:[#allocation5 + $0xfc] sm:$0xf] %vm2592, %v7680
  %7818 = vst.msk [vmem:[#allocation5 + $0x100] sm:$0xf] %vm2592, %v7682
  %7819 = vst.msk [vmem:[#allocation5 + $0x104] sm:$0xf] %vm2592, %v7684
  %7820 = vst.msk [vmem:[#allocation5 + $0x108] sm:$0xf] %vm2592, %v7686
  %v7821 = vld [vmem:[#allocation3 + $0x18] sm:$0xff]
  %v7822 = vld [vmem:[#allocation3 + $0x20] sm:$0xff]
  %v7823 = vld [vmem:[#allocation3 + $0x28] sm:$0xff]
  %v7824 = vld [vmem:[#allocation3 + $0x30] sm:$0xff]
  %v7825 = vld [vmem:[#allocation3 + $0x38] sm:$0xff]
  %v7826 = vld [vmem:[#allocation3 + $0x40] sm:$0xff]
  %v7827 = vld [vmem:[#allocation3 + $0x48] sm:$0xff]
  %v7828 = vld [vmem:[#allocation3 + $0x50] sm:$0xff]
  %v7829 = vld [vmem:[#allocation3 + $0x58] sm:$0xff]
  %v7830 = vld [vmem:[#allocation3 + $0x60] sm:$0xff]
  %v7831 = vld [vmem:[#allocation3 + $0x68] sm:$0xff]
  %v7832 = vld [vmem:[#allocation3 + $0x70] sm:$0xff]
  %v7833 = vld [vmem:[#allocation3 + $0x78] sm:$0xff]
  %v7834 = vld [vmem:[#allocation3 + $0x80] sm:$0xff]
  %v7835 = vld [vmem:[#allocation3 + $0x88] sm:$0xff]
  %v7836 = vld [vmem:[#allocation3 + $0x90] sm:$0xff]
  %v7837 = vld [vmem:[#allocation3 + $0x98] sm:$0xff]
  %v7838 = vld [vmem:[#allocation3 + $0xa0] sm:$0xff]
  %v7839 = vld [vmem:[#allocation3 + $0xa8] sm:$0xff]
  %v7840 = vld [vmem:[#allocation3 + $0xb0] sm:$0xff]
  %v7841 = vld [vmem:[#allocation3 + $0xb8] sm:$0xff]
  %v7842 = vld [vmem:[#allocation3 + $0xc0] sm:$0xff]
  %v7843 = vld [vmem:[#allocation3 + $0xc8] sm:$0xff]
  %v7844 = vld [vmem:[#allocation3 + $0xd0] sm:$0xff]
  %v7845 = vld [vmem:[#allocation3 + $0xd8] sm:$0xff]
  %v7846 = vld [vmem:[#allocation3 + $0xe0] sm:$0xff]
  %v7847 = vld [vmem:[#allocation3 + $0xe8] sm:$0xff]
  %v7848 = vld [vmem:[#allocation3 + $0xf0] sm:$0xff]
  %v7849 = vld [vmem:[#allocation3 + $0xf8] sm:$0xff]
  %v7850 = vld [vmem:[#allocation3 + $0x100] sm:$0xff]
  %v7851 = vld [vmem:[#allocation3 + $0x108] sm:$0xff]
  %v7852 = vld [vmem:[#allocation3 + $0x110] sm:$0xff]
  %v7853 = vld [vmem:[#allocation3 + $0x118] sm:$0xff]
  %v7854 = vld [vmem:[#allocation3 + $0x120] sm:$0xff]
  %v7855 = vld [vmem:[#allocation3 + $0x128] sm:$0xff]
  %v7856 = vld [vmem:[#allocation3 + $0x130] sm:$0xff]
  %v7857 = vld [vmem:[#allocation3 + $0x138] sm:$0xff]
  %v7858 = vld [vmem:[#allocation3 + $0x140] sm:$0xff]
  %v7859 = vld [vmem:[#allocation3 + $0x148] sm:$0xff]
  %v7860 = vld [vmem:[#allocation3 + $0x150] sm:$0xff]
  %v7861 = vld [vmem:[#allocation3 + $0x158] sm:$0xff]
  %v7862 = vld [vmem:[#allocation3 + $0x160] sm:$0xff]
  %v7863 = vld [vmem:[#allocation3 + $0x168] sm:$0xff]
  %v7864 = vld [vmem:[#allocation3 + $0x170] sm:$0xff]
  %v7865 = vld [vmem:[#allocation3 + $0x178] sm:$0xff]
  %v7866 = vld [vmem:[#allocation3 + $0x180] sm:$0xff]
  %v7867 = vld [vmem:[#allocation3 + $0x188] sm:$0xff]
  %v7868 = vld [vmem:[#allocation3 + $0x190] sm:$0xff]
  %v7869 = vld [vmem:[#allocation3 + $0x198] sm:$0xff]
  %v7870 = vld [vmem:[#allocation3 + $0x1a0] sm:$0xff]
  %v7871 = vld [vmem:[#allocation3 + $0x1a8] sm:$0xff]
  %v7872 = vld [vmem:[#allocation3 + $0x1b0] sm:$0xff]
  %v7873 = vld [vmem:[#allocation3 + $0x1b8] sm:$0xff]
  %v7874 = vld [vmem:[#allocation3 + $0x1c0] sm:$0xff]
  %v7875 = vld [vmem:[#allocation3 + $0x1c8] sm:$0xff]
  %v7876 = vld [vmem:[#allocation3 + $0x1d0] sm:$0xff]
  %v7877 = vld [vmem:[#allocation3 + $0x1d8] sm:$0xff]
  %v7878 = vld [vmem:[#allocation3 + $0x1e0] sm:$0xff]
  %v7879 = vld [vmem:[#allocation3 + $0x1e8] sm:$0xff]
  %v7880 = vld [vmem:[#allocation3 + $0x1f0] sm:$0xff]
  %v7881 = vld [vmem:[#allocation3 + $0x1f8] sm:$0xff]
  %v7882 = vld [vmem:[#allocation3 + $0x200] sm:$0xff]
  %v7883 = vld [vmem:[#allocation3 + $0x208] sm:$0xff]
  %v7884 = vld [vmem:[#allocation3 + $0x210] sm:$0xff]
  %v7885 = vld [vmem:[#allocation3 + $0x218] sm:$0xff]
  %v7886 = vld [vmem:[#allocation3 + $0x220] sm:$0xff]
  %v7887 = vld [vmem:[#allocation3 + $0x228] sm:$0xff]
  %v7888 = vpack.c.bf16 %v7821, %v7821
  %v7889 = vpack.c.bf16 %v7822, %v7822
  %v7890 = vpack.c.bf16 %v7823, %v7823
  %v7891 = vpack.c.bf16 %v7824, %v7824
  %v7892 = vpack.c.bf16 %v7825, %v7825
  %v7893 = vpack.c.bf16 %v7826, %v7826
  %v7894 = vpack.c.bf16 %v7827, %v7827
  %v7895 = vpack.c.bf16 %v7828, %v7828
  %v7896 = vpack.c.bf16 %v7829, %v7829
  %v7897 = vpack.c.bf16 %v7830, %v7830
  %v7898 = vpack.c.bf16 %v7831, %v7831
  %v7899 = vpack.c.bf16 %v7832, %v7832
  %v7900 = vpack.c.bf16 %v7833, %v7833
  %v7901 = vpack.c.bf16 %v7834, %v7834
  %v7902 = vpack.c.bf16 %v7835, %v7835
  %v7903 = vpack.c.bf16 %v7836, %v7836
  %v7904 = vpack.c.bf16 %v7837, %v7837
  %v7905 = vpack.c.bf16 %v7838, %v7838
  %v7906 = vpack.c.bf16 %v7839, %v7839
  %v7907 = vpack.c.bf16 %v7840, %v7840
  %v7908 = vpack.c.bf16 %v7841, %v7841
  %v7909 = vpack.c.bf16 %v7842, %v7842
  %v7910 = vpack.c.bf16 %v7843, %v7843
  %v7911 = vpack.c.bf16 %v7844, %v7844
  %v7912 = vpack.c.bf16 %v7845, %v7845
  %v7913 = vpack.c.bf16 %v7846, %v7846
  %v7914 = vpack.c.bf16 %v7847, %v7847
  %v7915 = vpack.c.bf16 %v7848, %v7848
  %v7916 = vpack.c.bf16 %v7849, %v7849
  %v7917 = vpack.c.bf16 %v7850, %v7850
  %v7918 = vpack.c.bf16 %v7851, %v7851
  %v7919 = vpack.c.bf16 %v7852, %v7852
  %v7920 = vpack.c.bf16 %v7853, %v7853
  %v7921 = vpack.c.bf16 %v7854, %v7854
  %v7922 = vpack.c.bf16 %v7855, %v7855
  %v7923 = vpack.c.bf16 %v7856, %v7856
  %v7924 = vpack.c.bf16 %v7857, %v7857
  %v7925 = vpack.c.bf16 %v7858, %v7858
  %v7926 = vpack.c.bf16 %v7859, %v7859
  %v7927 = vpack.c.bf16 %v7860, %v7860
  %v7928 = vpack.c.bf16 %v7861, %v7861
  %v7929 = vpack.c.bf16 %v7862, %v7862
  %v7930 = vpack.c.bf16 %v7863, %v7863
  %v7931 = vpack.c.bf16 %v7864, %v7864
  %v7932 = vpack.c.bf16 %v7865, %v7865
  %v7933 = vpack.c.bf16 %v7866, %v7866
  %v7934 = vpack.c.bf16 %v7867, %v7867
  %v7935 = vpack.c.bf16 %v7868, %v7868
  %v7936 = vpack.c.bf16 %v7869, %v7869
  %v7937 = vpack.c.bf16 %v7870, %v7870
  %v7938 = vpack.c.bf16 %v7871, %v7871
  %v7939 = vpack.c.bf16 %v7872, %v7872
  %v7940 = vpack.c.bf16 %v7873, %v7873
  %v7941 = vpack.c.bf16 %v7874, %v7874
  %v7942 = vpack.c.bf16 %v7875, %v7875
  %v7943 = vpack.c.bf16 %v7876, %v7876
  %v7944 = vpack.c.bf16 %v7877, %v7877
  %v7945 = vpack.c.bf16 %v7878, %v7878
  %v7946 = vpack.c.bf16 %v7879, %v7879
  %v7947 = vpack.c.bf16 %v7880, %v7880
  %v7948 = vpack.c.bf16 %v7881, %v7881
  %v7949 = vpack.c.bf16 %v7882, %v7882
  %v7950 = vpack.c.bf16 %v7883, %v7883
  %v7951 = vpack.c.bf16 %v7884, %v7884
  %v7952 = vpack.c.bf16 %v7885, %v7885
  %v7953 = vpack.c.bf16 %v7886, %v7886
  %v7954 = vpack.c.bf16 %v7887, %v7887
  %8022 = vrot.lane.b32.xlu0 %v7888, 16
  %v8023 = vpop.permute.xlu0 %8022
  %8024 = vrot.lane.b32.xlu0 %v7889, 16
  %v8025 = vpop.permute.xlu0 %8024
  %8026 = vrot.lane.b32.xlu0 %v7890, 16
  %v8027 = vpop.permute.xlu0 %8026
  %8028 = vrot.lane.b32.xlu0 %v7891, 16
  %v8029 = vpop.permute.xlu0 %8028
  %8030 = vrot.lane.b32.xlu0 %v7892, 16
  %v8031 = vpop.permute.xlu0 %8030
  %8032 = vrot.lane.b32.xlu0 %v7893, 16
  %v8033 = vpop.permute.xlu0 %8032
  %8034 = vrot.lane.b32.xlu0 %v7894, 16
  %v8035 = vpop.permute.xlu0 %8034
  %8036 = vrot.lane.b32.xlu0 %v7895, 16
  %v8037 = vpop.permute.xlu0 %8036
  %8038 = vrot.lane.b32.xlu0 %v7896, 16
  %v8039 = vpop.permute.xlu0 %8038
  %8040 = vrot.lane.b32.xlu0 %v7897, 16
  %v8041 = vpop.permute.xlu0 %8040
  %8042 = vrot.lane.b32.xlu0 %v7898, 16
  %v8043 = vpop.permute.xlu0 %8042
  %8044 = vrot.lane.b32.xlu0 %v7899, 16
  %v8045 = vpop.permute.xlu0 %8044
  %8046 = vrot.lane.b32.xlu0 %v7900, 16
  %v8047 = vpop.permute.xlu0 %8046
  %8048 = vrot.lane.b32.xlu0 %v7901, 16
  %v8049 = vpop.permute.xlu0 %8048
  %8050 = vrot.lane.b32.xlu0 %v7902, 16
  %v8051 = vpop.permute.xlu0 %8050
  %8052 = vrot.lane.b32.xlu0 %v7903, 16
  %v8053 = vpop.permute.xlu0 %8052
  %8054 = vrot.lane.b32.xlu0 %v7904, 16
  %v8055 = vpop.permute.xlu0 %8054
  %8056 = vrot.lane.b32.xlu0 %v7905, 16
  %v8057 = vpop.permute.xlu0 %8056
  %8058 = vrot.lane.b32.xlu0 %v7906, 16
  %v8059 = vpop.permute.xlu0 %8058
  %8060 = vrot.lane.b32.xlu0 %v7907, 16
  %v8061 = vpop.permute.xlu0 %8060
  %8062 = vrot.lane.b32.xlu0 %v7908, 16
  %v8063 = vpop.permute.xlu0 %8062
  %8064 = vrot.lane.b32.xlu0 %v7909, 16
  %v8065 = vpop.permute.xlu0 %8064
  %8066 = vrot.lane.b32.xlu0 %v7910, 16
  %v8067 = vpop.permute.xlu0 %8066
  %8068 = vrot.lane.b32.xlu0 %v7911, 16
  %v8069 = vpop.permute.xlu0 %8068
  %8070 = vrot.lane.b32.xlu0 %v7912, 16
  %v8071 = vpop.permute.xlu0 %8070
  %8072 = vrot.lane.b32.xlu0 %v7913, 16
  %v8073 = vpop.permute.xlu0 %8072
  %8074 = vrot.lane.b32.xlu0 %v7914, 16
  %v8075 = vpop.permute.xlu0 %8074
  %8076 = vrot.lane.b32.xlu0 %v7915, 16
  %v8077 = vpop.permute.xlu0 %8076
  %8078 = vrot.lane.b32.xlu0 %v7916, 16
  %v8079 = vpop.permute.xlu0 %8078
  %8080 = vrot.lane.b32.xlu0 %v7917, 16
  %v8081 = vpop.permute.xlu0 %8080
  %8082 = vrot.lane.b32.xlu0 %v7918, 16
  %v8083 = vpop.permute.xlu0 %8082
  %8084 = vrot.lane.b32.xlu0 %v7919, 16
  %v8085 = vpop.permute.xlu0 %8084
  %8086 = vrot.lane.b32.xlu0 %v7920, 16
  %v8087 = vpop.permute.xlu0 %8086
  %8088 = vrot.lane.b32.xlu0 %v7921, 16
  %v8089 = vpop.permute.xlu0 %8088
  %8090 = vrot.lane.b32.xlu0 %v7922, 16
  %v8091 = vpop.permute.xlu0 %8090
  %8092 = vrot.lane.b32.xlu0 %v7923, 16
  %v8093 = vpop.permute.xlu0 %8092
  %8094 = vrot.lane.b32.xlu0 %v7924, 16
  %v8095 = vpop.permute.xlu0 %8094
  %8096 = vrot.lane.b32.xlu0 %v7925, 16
  %v8097 = vpop.permute.xlu0 %8096
  %8098 = vrot.lane.b32.xlu0 %v7926, 16
  %v8099 = vpop.permute.xlu0 %8098
  %8100 = vrot.lane.b32.xlu0 %v7927, 16
  %v8101 = vpop.permute.xlu0 %8100
  %8102 = vrot.lane.b32.xlu0 %v7928, 16
  %v8103 = vpop.permute.xlu0 %8102
  %8104 = vrot.lane.b32.xlu0 %v7929, 16
  %v8105 = vpop.permute.xlu0 %8104
  %8106 = vrot.lane.b32.xlu0 %v7930, 16
  %v8107 = vpop.permute.xlu0 %8106
  %8108 = vrot.lane.b32.xlu0 %v7931, 16
  %v8109 = vpop.permute.xlu0 %8108
  %8110 = vrot.lane.b32.xlu0 %v7932, 16
  %v8111 = vpop.permute.xlu0 %8110
  %8112 = vrot.lane.b32.xlu0 %v7933, 16
  %v8113 = vpop.permute.xlu0 %8112
  %8114 = vrot.lane.b32.xlu0 %v7934, 16
  %v8115 = vpop.permute.xlu0 %8114
  %8116 = vrot.lane.b32.xlu0 %v7935, 16
  %v8117 = vpop.permute.xlu0 %8116
  %8118 = vrot.lane.b32.xlu0 %v7936, 16
  %v8119 = vpop.permute.xlu0 %8118
  %8120 = vrot.lane.b32.xlu0 %v7937, 16
  %v8121 = vpop.permute.xlu0 %8120
  %8122 = vrot.lane.b32.xlu0 %v7938, 16
  %v8123 = vpop.permute.xlu0 %8122
  %8124 = vrot.lane.b32.xlu0 %v7939, 16
  %v8125 = vpop.permute.xlu0 %8124
  %8126 = vrot.lane.b32.xlu0 %v7940, 16
  %v8127 = vpop.permute.xlu0 %8126
  %8128 = vrot.lane.b32.xlu0 %v7941, 16
  %v8129 = vpop.permute.xlu0 %8128
  %8130 = vrot.lane.b32.xlu0 %v7942, 16
  %v8131 = vpop.permute.xlu0 %8130
  %8132 = vrot.lane.b32.xlu0 %v7943, 16
  %v8133 = vpop.permute.xlu0 %8132
  %8134 = vrot.lane.b32.xlu0 %v7944, 16
  %v8135 = vpop.permute.xlu0 %8134
  %8136 = vrot.lane.b32.xlu0 %v7945, 16
  %v8137 = vpop.permute.xlu0 %8136
  %8138 = vrot.lane.b32.xlu0 %v7946, 16
  %v8139 = vpop.permute.xlu0 %8138
  %8140 = vrot.lane.b32.xlu0 %v7947, 16
  %v8141 = vpop.permute.xlu0 %8140
  %8142 = vrot.lane.b32.xlu0 %v7948, 16
  %v8143 = vpop.permute.xlu0 %8142
  %8144 = vrot.lane.b32.xlu0 %v7949, 16
  %v8145 = vpop.permute.xlu0 %8144
  %8146 = vrot.lane.b32.xlu0 %v7950, 16
  %v8147 = vpop.permute.xlu0 %8146
  %8148 = vrot.lane.b32.xlu0 %v7951, 16
  %v8149 = vpop.permute.xlu0 %8148
  %8150 = vrot.lane.b32.xlu0 %v7952, 16
  %v8151 = vpop.permute.xlu0 %8150
  %8152 = vrot.lane.b32.xlu0 %v7953, 16
  %v8153 = vpop.permute.xlu0 %8152
  %8154 = vrot.lane.b32.xlu0 %v7954, 16
  %v8155 = vpop.permute.xlu0 %8154
  %8223 = vst.msk [vmem:[#allocation5] sm:$0xf] %vm3062, %v8023
  %8224 = vst.msk [vmem:[#allocation5 + $0x4] sm:$0xf] %vm3062, %v8025
  %8225 = vst.msk [vmem:[#allocation5 + $0x8] sm:$0xf] %vm3062, %v8027
  %8226 = vst.msk [vmem:[#allocation5 + $0xc] sm:$0xf] %vm3062, %v8029
  %8227 = vst.msk [vmem:[#allocation5 + $0x10] sm:$0xf] %vm3062, %v8031
  %8228 = vst.msk [vmem:[#allocation5 + $0x14] sm:$0xf] %vm3062, %v8033
  %8229 = vst.msk [vmem:[#allocation5 + $0x18] sm:$0xf] %vm3062, %v8035
  %8230 = vst.msk [vmem:[#allocation5 + $0x1c] sm:$0xf] %vm3062, %v8037
  %8231 = vst.msk [vmem:[#allocation5 + $0x20] sm:$0xf] %vm3062, %v8039
  %8232 = vst.msk [vmem:[#allocation5 + $0x24] sm:$0xf] %vm3062, %v8041
  %8233 = vst.msk [vmem:[#allocation5 + $0x28] sm:$0xf] %vm3062, %v8043
  %8234 = vst.msk [vmem:[#allocation5 + $0x2c] sm:$0xf] %vm3062, %v8045
  %8235 = vst.msk [vmem:[#allocation5 + $0x30] sm:$0xf] %vm3062, %v8047
  %8236 = vst.msk [vmem:[#allocation5 + $0x34] sm:$0xf] %vm3062, %v8049
  %8237 = vst.msk [vmem:[#allocation5 + $0x38] sm:$0xf] %vm3062, %v8051
  %8238 = vst.msk [vmem:[#allocation5 + $0x3c] sm:$0xf] %vm3062, %v8053
  %8239 = vst.msk [vmem:[#allocation5 + $0x40] sm:$0xf] %vm3062, %v8055
  %8240 = vst.msk [vmem:[#allocation5 + $0x44] sm:$0xf] %vm3062, %v8057
  %8241 = vst.msk [vmem:[#allocation5 + $0x48] sm:$0xf] %vm3062, %v8059
  %8242 = vst.msk [vmem:[#allocation5 + $0x4c] sm:$0xf] %vm3062, %v8061
  %8243 = vst.msk [vmem:[#allocation5 + $0x50] sm:$0xf] %vm3062, %v8063
  %8244 = vst.msk [vmem:[#allocation5 + $0x54] sm:$0xf] %vm3062, %v8065
  %8245 = vst.msk [vmem:[#allocation5 + $0x58] sm:$0xf] %vm3062, %v8067
  %8246 = vst.msk [vmem:[#allocation5 + $0x5c] sm:$0xf] %vm3062, %v8069
  %8247 = vst.msk [vmem:[#allocation5 + $0x60] sm:$0xf] %vm3062, %v8071
  %8248 = vst.msk [vmem:[#allocation5 + $0x64] sm:$0xf] %vm3062, %v8073
  %8249 = vst.msk [vmem:[#allocation5 + $0x68] sm:$0xf] %vm3062, %v8075
  %8250 = vst.msk [vmem:[#allocation5 + $0x6c] sm:$0xf] %vm3062, %v8077
  %8251 = vst.msk [vmem:[#allocation5 + $0x70] sm:$0xf] %vm3062, %v8079
  %8252 = vst.msk [vmem:[#allocation5 + $0x74] sm:$0xf] %vm3062, %v8081
  %8253 = vst.msk [vmem:[#allocation5 + $0x78] sm:$0xf] %vm3062, %v8083
  %8254 = vst.msk [vmem:[#allocation5 + $0x7c] sm:$0xf] %vm3062, %v8085
  %8255 = vst.msk [vmem:[#allocation5 + $0x80] sm:$0xf] %vm3062, %v8087
  %8256 = vst.msk [vmem:[#allocation5 + $0x84] sm:$0xf] %vm3062, %v8089
  %8257 = vst.msk [vmem:[#allocation5 + $0x88] sm:$0xf] %vm3062, %v8091
  %8258 = vst.msk [vmem:[#allocation5 + $0x8c] sm:$0xf] %vm3062, %v8093
  %8259 = vst.msk [vmem:[#allocation5 + $0x90] sm:$0xf] %vm3062, %v8095
  %8260 = vst.msk [vmem:[#allocation5 + $0x94] sm:$0xf] %vm3062, %v8097
  %8261 = vst.msk [vmem:[#allocation5 + $0x98] sm:$0xf] %vm3062, %v8099
  %8262 = vst.msk [vmem:[#allocation5 + $0x9c] sm:$0xf] %vm3062, %v8101
  %8263 = vst.msk [vmem:[#allocation5 + $0xa0] sm:$0xf] %vm3062, %v8103
  %8264 = vst.msk [vmem:[#allocation5 + $0xa4] sm:$0xf] %vm3062, %v8105
  %8265 = vst.msk [vmem:[#allocation5 + $0xa8] sm:$0xf] %vm3062, %v8107
  %8266 = vst.msk [vmem:[#allocation5 + $0xac] sm:$0xf] %vm3062, %v8109
  %8267 = vst.msk [vmem:[#allocation5 + $0xb0] sm:$0xf] %vm3062, %v8111
  %8268 = vst.msk [vmem:[#allocation5 + $0xb4] sm:$0xf] %vm3062, %v8113
  %8269 = vst.msk [vmem:[#allocation5 + $0xb8] sm:$0xf] %vm3062, %v8115
  %8270 = vst.msk [vmem:[#allocation5 + $0xbc] sm:$0xf] %vm3062, %v8117
  %8271 = vst.msk [vmem:[#allocation5 + $0xc0] sm:$0xf] %vm3062, %v8119
  %8272 = vst.msk [vmem:[#allocation5 + $0xc4] sm:$0xf] %vm3062, %v8121
  %8273 = vst.msk [vmem:[#allocation5 + $0xc8] sm:$0xf] %vm3062, %v8123
  %8274 = vst.msk [vmem:[#allocation5 + $0xcc] sm:$0xf] %vm3062, %v8125
  %8275 = vst.msk [vmem:[#allocation5 + $0xd0] sm:$0xf] %vm3062, %v8127
  %8276 = vst.msk [vmem:[#allocation5 + $0xd4] sm:$0xf] %vm3062, %v8129
  %8277 = vst.msk [vmem:[#allocation5 + $0xd8] sm:$0xf] %vm3062, %v8131
  %8278 = vst.msk [vmem:[#allocation5 + $0xdc] sm:$0xf] %vm3062, %v8133
  %8279 = vst.msk [vmem:[#allocation5 + $0xe0] sm:$0xf] %vm3062, %v8135
  %8280 = vst.msk [vmem:[#allocation5 + $0xe4] sm:$0xf] %vm3062, %v8137
  %8281 = vst.msk [vmem:[#allocation5 + $0xe8] sm:$0xf] %vm3062, %v8139
  %8282 = vst.msk [vmem:[#allocation5 + $0xec] sm:$0xf] %vm3062, %v8141
  %8283 = vst.msk [vmem:[#allocation5 + $0xf0] sm:$0xf] %vm3062, %v8143
  %8284 = vst.msk [vmem:[#allocation5 + $0xf4] sm:$0xf] %vm3062, %v8145
  %8285 = vst.msk [vmem:[#allocation5 + $0xf8] sm:$0xf] %vm3062, %v8147
  %8286 = vst.msk [vmem:[#allocation5 + $0xfc] sm:$0xf] %vm3062, %v8149
  %8287 = vst.msk [vmem:[#allocation5 + $0x100] sm:$0xf] %vm3062, %v8151
  %8288 = vst.msk [vmem:[#allocation5 + $0x104] sm:$0xf] %vm3062, %v8153
  %8289 = vst.msk [vmem:[#allocation5 + $0x108] sm:$0xf] %vm3062, %v8155
  %v8290 = vld [vmem:[#allocation3 + $0x19] sm:$0xff]
  %v8291 = vld [vmem:[#allocation3 + $0x21] sm:$0xff]
  %v8292 = vld [vmem:[#allocation3 + $0x29] sm:$0xff]
  %v8293 = vld [vmem:[#allocation3 + $0x31] sm:$0xff]
  %v8294 = vld [vmem:[#allocation3 + $0x39] sm:$0xff]
  %v8295 = vld [vmem:[#allocation3 + $0x41] sm:$0xff]
  %v8296 = vld [vmem:[#allocation3 + $0x49] sm:$0xff]
  %v8297 = vld [vmem:[#allocation3 + $0x51] sm:$0xff]
  %v8298 = vld [vmem:[#allocation3 + $0x59] sm:$0xff]
  %v8299 = vld [vmem:[#allocation3 + $0x61] sm:$0xff]
  %v8300 = vld [vmem:[#allocation3 + $0x69] sm:$0xff]
  %v8301 = vld [vmem:[#allocation3 + $0x71] sm:$0xff]
  %v8302 = vld [vmem:[#allocation3 + $0x79] sm:$0xff]
  %v8303 = vld [vmem:[#allocation3 + $0x81] sm:$0xff]
  %v8304 = vld [vmem:[#allocation3 + $0x89] sm:$0xff]
  %v8305 = vld [vmem:[#allocation3 + $0x91] sm:$0xff]
  %v8306 = vld [vmem:[#allocation3 + $0x99] sm:$0xff]
  %v8307 = vld [vmem:[#allocation3 + $0xa1] sm:$0xff]
  %v8308 = vld [vmem:[#allocation3 + $0xa9] sm:$0xff]
  %v8309 = vld [vmem:[#allocation3 + $0xb1] sm:$0xff]
  %v8310 = vld [vmem:[#allocation3 + $0xb9] sm:$0xff]
  %v8311 = vld [vmem:[#allocation3 + $0xc1] sm:$0xff]
  %v8312 = vld [vmem:[#allocation3 + $0xc9] sm:$0xff]
  %v8313 = vld [vmem:[#allocation3 + $0xd1] sm:$0xff]
  %v8314 = vld [vmem:[#allocation3 + $0xd9] sm:$0xff]
  %v8315 = vld [vmem:[#allocation3 + $0xe1] sm:$0xff]
  %v8316 = vld [vmem:[#allocation3 + $0xe9] sm:$0xff]
  %v8317 = vld [vmem:[#allocation3 + $0xf1] sm:$0xff]
  %v8318 = vld [vmem:[#allocation3 + $0xf9] sm:$0xff]
  %v8319 = vld [vmem:[#allocation3 + $0x101] sm:$0xff]
  %v8320 = vld [vmem:[#allocation3 + $0x109] sm:$0xff]
  %v8321 = vld [vmem:[#allocation3 + $0x111] sm:$0xff]
  %v8322 = vld [vmem:[#allocation3 + $0x119] sm:$0xff]
  %v8323 = vld [vmem:[#allocation3 + $0x121] sm:$0xff]
  %v8324 = vld [vmem:[#allocation3 + $0x129] sm:$0xff]
  %v8325 = vld [vmem:[#allocation3 + $0x131] sm:$0xff]
  %v8326 = vld [vmem:[#allocation3 + $0x139] sm:$0xff]
  %v8327 = vld [vmem:[#allocation3 + $0x141] sm:$0xff]
  %v8328 = vld [vmem:[#allocation3 + $0x149] sm:$0xff]
  %v8329 = vld [vmem:[#allocation3 + $0x151] sm:$0xff]
  %v8330 = vld [vmem:[#allocation3 + $0x159] sm:$0xff]
  %v8331 = vld [vmem:[#allocation3 + $0x161] sm:$0xff]
  %v8332 = vld [vmem:[#allocation3 + $0x169] sm:$0xff]
  %v8333 = vld [vmem:[#allocation3 + $0x171] sm:$0xff]
  %v8334 = vld [vmem:[#allocation3 + $0x179] sm:$0xff]
  %v8335 = vld [vmem:[#allocation3 + $0x181] sm:$0xff]
  %v8336 = vld [vmem:[#allocation3 + $0x189] sm:$0xff]
  %v8337 = vld [vmem:[#allocation3 + $0x191] sm:$0xff]
  %v8338 = vld [vmem:[#allocation3 + $0x199] sm:$0xff]
  %v8339 = vld [vmem:[#allocation3 + $0x1a1] sm:$0xff]
  %v8340 = vld [vmem:[#allocation3 + $0x1a9] sm:$0xff]
  %v8341 = vld [vmem:[#allocation3 + $0x1b1] sm:$0xff]
  %v8342 = vld [vmem:[#allocation3 + $0x1b9] sm:$0xff]
  %v8343 = vld [vmem:[#allocation3 + $0x1c1] sm:$0xff]
  %v8344 = vld [vmem:[#allocation3 + $0x1c9] sm:$0xff]
  %v8345 = vld [vmem:[#allocation3 + $0x1d1] sm:$0xff]
  %v8346 = vld [vmem:[#allocation3 + $0x1d9] sm:$0xff]
  %v8347 = vld [vmem:[#allocation3 + $0x1e1] sm:$0xff]
  %v8348 = vld [vmem:[#allocation3 + $0x1e9] sm:$0xff]
  %v8349 = vld [vmem:[#allocation3 + $0x1f1] sm:$0xff]
  %v8350 = vld [vmem:[#allocation3 + $0x1f9] sm:$0xff]
  %v8351 = vld [vmem:[#allocation3 + $0x201] sm:$0xff]
  %v8352 = vld [vmem:[#allocation3 + $0x209] sm:$0xff]
  %v8353 = vld [vmem:[#allocation3 + $0x211] sm:$0xff]
  %v8354 = vld [vmem:[#allocation3 + $0x219] sm:$0xff]
  %v8355 = vld [vmem:[#allocation3 + $0x221] sm:$0xff]
  %v8356 = vld [vmem:[#allocation3 + $0x229] sm:$0xff]
  %v8357 = vmul.f32 %v8290, %v1387
  %v8358 = vmul.f32 %v8291, %v1391
  %v8359 = vmul.f32 %v8292, %v1395
  %v8360 = vmul.f32 %v8293, %v1399
  %v8361 = vmul.f32 %v8294, %v1403
  %v8362 = vmul.f32 %v8295, %v1407
  %v8363 = vmul.f32 %v8296, %v1411
  %v8364 = vmul.f32 %v8297, %v1415
  %v8365 = vmul.f32 %v8298, %v1419
  %v8366 = vmul.f32 %v8299, %v1423
  %v8367 = vmul.f32 %v8300, %v1427
  %v8368 = vmul.f32 %v8301, %v1431
  %v8369 = vmul.f32 %v8302, %v1435
  %v8370 = vmul.f32 %v8303, %v1439
  %v8371 = vmul.f32 %v8304, %v1443
  %v8372 = vmul.f32 %v8305, %v1447
  %v8373 = vmul.f32 %v8306, %v1451
  %v8374 = vmul.f32 %v8307, %v1455
  %v8375 = vmul.f32 %v8308, %v1459
  %v8376 = vmul.f32 %v8309, %v1463
  %v8377 = vmul.f32 %v8310, %v1467
  %v8378 = vmul.f32 %v8311, %v1471
  %v8379 = vmul.f32 %v8312, %v1475
  %v8380 = vmul.f32 %v8313, %v1479
  %v8381 = vmul.f32 %v8314, %v1483
  %v8382 = vmul.f32 %v8315, %v1487
  %v8383 = vmul.f32 %v8316, %v1491
  %v8384 = vmul.f32 %v8317, %v1495
  %v8385 = vmul.f32 %v8318, %v1499
  %v8386 = vmul.f32 %v8319, %v1503
  %v8387 = vmul.f32 %v8320, %v1507
  %v8388 = vmul.f32 %v8321, %v1511
  %v8389 = vmul.f32 %v8322, %v1515
  %v8390 = vmul.f32 %v8323, %v1519
  %v8391 = vmul.f32 %v8324, %v1523
  %v8392 = vmul.f32 %v8325, %v1527
  %v8393 = vmul.f32 %v8326, %v1531
  %v8394 = vmul.f32 %v8327, %v1535
  %v8395 = vmul.f32 %v8328, %v1539
  %v8396 = vmul.f32 %v8329, %v1543
  %v8397 = vmul.f32 %v8330, %v1547
  %v8398 = vmul.f32 %v8331, %v1551
  %v8399 = vmul.f32 %v8332, %v1555
  %v8400 = vmul.f32 %v8333, %v1559
  %v8401 = vmul.f32 %v8334, %v1563
  %v8402 = vmul.f32 %v8335, %v1567
  %v8403 = vmul.f32 %v8336, %v1571
  %v8404 = vmul.f32 %v8337, %v1575
  %v8405 = vmul.f32 %v8338, %v1579
  %v8406 = vmul.f32 %v8339, %v1583
  %v8407 = vmul.f32 %v8340, %v1587
  %v8408 = vmul.f32 %v8341, %v1591
  %v8409 = vmul.f32 %v8342, %v1595
  %v8410 = vmul.f32 %v8343, %v1599
  %v8411 = vmul.f32 %v8344, %v1603
  %v8412 = vmul.f32 %v8345, %v1607
  %v8413 = vmul.f32 %v8346, %v1611
  %v8414 = vmul.f32 %v8347, %v1615
  %v8415 = vmul.f32 %v8348, %v1619
  %v8416 = vmul.f32 %v8349, %v1623
  %v8417 = vmul.f32 %v8350, %v1627
  %v8418 = vmul.f32 %v8351, %v1631
  %v8419 = vmul.f32 %v8352, %v1635
  %v8420 = vmul.f32 %v8353, %v1639
  %v8421 = vmul.f32 %v8354, %v1643
  %v8422 = vmul.f32 %v8355, %v1647
  %v8423 = vmul.f32 %v8356, %v1651
  %v8424 = vpack.c.bf16 %v8357, %v8357
  %v8425 = vpack.c.bf16 %v8358, %v8358
  %v8426 = vpack.c.bf16 %v8359, %v8359
  %v8427 = vpack.c.bf16 %v8360, %v8360
  %v8428 = vpack.c.bf16 %v8361, %v8361
  %v8429 = vpack.c.bf16 %v8362, %v8362
  %v8430 = vpack.c.bf16 %v8363, %v8363
  %v8431 = vpack.c.bf16 %v8364, %v8364
  %v8432 = vpack.c.bf16 %v8365, %v8365
  %v8433 = vpack.c.bf16 %v8366, %v8366
  %v8434 = vpack.c.bf16 %v8367, %v8367
  %v8435 = vpack.c.bf16 %v8368, %v8368
  %v8436 = vpack.c.bf16 %v8369, %v8369
  %v8437 = vpack.c.bf16 %v8370, %v8370
  %v8438 = vpack.c.bf16 %v8371, %v8371
  %v8439 = vpack.c.bf16 %v8372, %v8372
  %v8440 = vpack.c.bf16 %v8373, %v8373
  %v8441 = vpack.c.bf16 %v8374, %v8374
  %v8442 = vpack.c.bf16 %v8375, %v8375
  %v8443 = vpack.c.bf16 %v8376, %v8376
  %v8444 = vpack.c.bf16 %v8377, %v8377
  %v8445 = vpack.c.bf16 %v8378, %v8378
  %v8446 = vpack.c.bf16 %v8379, %v8379
  %v8447 = vpack.c.bf16 %v8380, %v8380
  %v8448 = vpack.c.bf16 %v8381, %v8381
  %v8449 = vpack.c.bf16 %v8382, %v8382
  %v8450 = vpack.c.bf16 %v8383, %v8383
  %v8451 = vpack.c.bf16 %v8384, %v8384
  %v8452 = vpack.c.bf16 %v8385, %v8385
  %v8453 = vpack.c.bf16 %v8386, %v8386
  %v8454 = vpack.c.bf16 %v8387, %v8387
  %v8455 = vpack.c.bf16 %v8388, %v8388
  %v8456 = vpack.c.bf16 %v8389, %v8389
  %v8457 = vpack.c.bf16 %v8390, %v8390
  %v8458 = vpack.c.bf16 %v8391, %v8391
  %v8459 = vpack.c.bf16 %v8392, %v8392
  %v8460 = vpack.c.bf16 %v8393, %v8393
  %v8461 = vpack.c.bf16 %v8394, %v8394
  %v8462 = vpack.c.bf16 %v8395, %v8395
  %v8463 = vpack.c.bf16 %v8396, %v8396
  %v8464 = vpack.c.bf16 %v8397, %v8397
  %v8465 = vpack.c.bf16 %v8398, %v8398
  %v8466 = vpack.c.bf16 %v8399, %v8399
  %v8467 = vpack.c.bf16 %v8400, %v8400
  %v8468 = vpack.c.bf16 %v8401, %v8401
  %v8469 = vpack.c.bf16 %v8402, %v8402
  %v8470 = vpack.c.bf16 %v8403, %v8403
  %v8471 = vpack.c.bf16 %v8404, %v8404
  %v8472 = vpack.c.bf16 %v8405, %v8405
  %v8473 = vpack.c.bf16 %v8406, %v8406
  %v8474 = vpack.c.bf16 %v8407, %v8407
  %v8475 = vpack.c.bf16 %v8408, %v8408
  %v8476 = vpack.c.bf16 %v8409, %v8409
  %v8477 = vpack.c.bf16 %v8410, %v8410
  %v8478 = vpack.c.bf16 %v8411, %v8411
  %v8479 = vpack.c.bf16 %v8412, %v8412
  %v8480 = vpack.c.bf16 %v8413, %v8413
  %v8481 = vpack.c.bf16 %v8414, %v8414
  %v8482 = vpack.c.bf16 %v8415, %v8415
  %v8483 = vpack.c.bf16 %v8416, %v8416
  %v8484 = vpack.c.bf16 %v8417, %v8417
  %v8485 = vpack.c.bf16 %v8418, %v8418
  %v8486 = vpack.c.bf16 %v8419, %v8419
  %v8487 = vpack.c.bf16 %v8420, %v8420
  %v8488 = vpack.c.bf16 %v8421, %v8421
  %v8489 = vpack.c.bf16 %v8422, %v8422
  %v8490 = vpack.c.bf16 %v8423, %v8423
  %8558 = vrot.lane.b32.xlu0 %v8424, 20
  %v8559 = vpop.permute.xlu0 %8558
  %8560 = vrot.lane.b32.xlu0 %v8425, 20
  %v8561 = vpop.permute.xlu0 %8560
  %8562 = vrot.lane.b32.xlu0 %v8426, 20
  %v8563 = vpop.permute.xlu0 %8562
  %8564 = vrot.lane.b32.xlu0 %v8427, 20
  %v8565 = vpop.permute.xlu0 %8564
  %8566 = vrot.lane.b32.xlu0 %v8428, 20
  %v8567 = vpop.permute.xlu0 %8566
  %8568 = vrot.lane.b32.xlu0 %v8429, 20
  %v8569 = vpop.permute.xlu0 %8568
  %8570 = vrot.lane.b32.xlu0 %v8430, 20
  %v8571 = vpop.permute.xlu0 %8570
  %8572 = vrot.lane.b32.xlu0 %v8431, 20
  %v8573 = vpop.permute.xlu0 %8572
  %8574 = vrot.lane.b32.xlu0 %v8432, 20
  %v8575 = vpop.permute.xlu0 %8574
  %8576 = vrot.lane.b32.xlu0 %v8433, 20
  %v8577 = vpop.permute.xlu0 %8576
  %8578 = vrot.lane.b32.xlu0 %v8434, 20
  %v8579 = vpop.permute.xlu0 %8578
  %8580 = vrot.lane.b32.xlu0 %v8435, 20
  %v8581 = vpop.permute.xlu0 %8580
  %8582 = vrot.lane.b32.xlu0 %v8436, 20
  %v8583 = vpop.permute.xlu0 %8582
  %8584 = vrot.lane.b32.xlu0 %v8437, 20
  %v8585 = vpop.permute.xlu0 %8584
  %8586 = vrot.lane.b32.xlu0 %v8438, 20
  %v8587 = vpop.permute.xlu0 %8586
  %8588 = vrot.lane.b32.xlu0 %v8439, 20
  %v8589 = vpop.permute.xlu0 %8588
  %8590 = vrot.lane.b32.xlu0 %v8440, 20
  %v8591 = vpop.permute.xlu0 %8590
  %8592 = vrot.lane.b32.xlu0 %v8441, 20
  %v8593 = vpop.permute.xlu0 %8592
  %8594 = vrot.lane.b32.xlu0 %v8442, 20
  %v8595 = vpop.permute.xlu0 %8594
  %8596 = vrot.lane.b32.xlu0 %v8443, 20
  %v8597 = vpop.permute.xlu0 %8596
  %8598 = vrot.lane.b32.xlu0 %v8444, 20
  %v8599 = vpop.permute.xlu0 %8598
  %8600 = vrot.lane.b32.xlu0 %v8445, 20
  %v8601 = vpop.permute.xlu0 %8600
  %8602 = vrot.lane.b32.xlu0 %v8446, 20
  %v8603 = vpop.permute.xlu0 %8602
  %8604 = vrot.lane.b32.xlu0 %v8447, 20
  %v8605 = vpop.permute.xlu0 %8604
  %8606 = vrot.lane.b32.xlu0 %v8448, 20
  %v8607 = vpop.permute.xlu0 %8606
  %8608 = vrot.lane.b32.xlu0 %v8449, 20
  %v8609 = vpop.permute.xlu0 %8608
  %8610 = vrot.lane.b32.xlu0 %v8450, 20
  %v8611 = vpop.permute.xlu0 %8610
  %8612 = vrot.lane.b32.xlu0 %v8451, 20
  %v8613 = vpop.permute.xlu0 %8612
  %8614 = vrot.lane.b32.xlu0 %v8452, 20
  %v8615 = vpop.permute.xlu0 %8614
  %8616 = vrot.lane.b32.xlu0 %v8453, 20
  %v8617 = vpop.permute.xlu0 %8616
  %8618 = vrot.lane.b32.xlu0 %v8454, 20
  %v8619 = vpop.permute.xlu0 %8618
  %8620 = vrot.lane.b32.xlu0 %v8455, 20
  %v8621 = vpop.permute.xlu0 %8620
  %8622 = vrot.lane.b32.xlu0 %v8456, 20
  %v8623 = vpop.permute.xlu0 %8622
  %8624 = vrot.lane.b32.xlu0 %v8457, 20
  %v8625 = vpop.permute.xlu0 %8624
  %8626 = vrot.lane.b32.xlu0 %v8458, 20
  %v8627 = vpop.permute.xlu0 %8626
  %8628 = vrot.lane.b32.xlu0 %v8459, 20
  %v8629 = vpop.permute.xlu0 %8628
  %8630 = vrot.lane.b32.xlu0 %v8460, 20
  %v8631 = vpop.permute.xlu0 %8630
  %8632 = vrot.lane.b32.xlu0 %v8461, 20
  %v8633 = vpop.permute.xlu0 %8632
  %8634 = vrot.lane.b32.xlu0 %v8462, 20
  %v8635 = vpop.permute.xlu0 %8634
  %8636 = vrot.lane.b32.xlu0 %v8463, 20
  %v8637 = vpop.permute.xlu0 %8636
  %8638 = vrot.lane.b32.xlu0 %v8464, 20
  %v8639 = vpop.permute.xlu0 %8638
  %8640 = vrot.lane.b32.xlu0 %v8465, 20
  %v8641 = vpop.permute.xlu0 %8640
  %8642 = vrot.lane.b32.xlu0 %v8466, 20
  %v8643 = vpop.permute.xlu0 %8642
  %8644 = vrot.lane.b32.xlu0 %v8467, 20
  %v8645 = vpop.permute.xlu0 %8644
  %8646 = vrot.lane.b32.xlu0 %v8468, 20
  %v8647 = vpop.permute.xlu0 %8646
  %8648 = vrot.lane.b32.xlu0 %v8469, 20
  %v8649 = vpop.permute.xlu0 %8648
  %8650 = vrot.lane.b32.xlu0 %v8470, 20
  %v8651 = vpop.permute.xlu0 %8650
  %8652 = vrot.lane.b32.xlu0 %v8471, 20
  %v8653 = vpop.permute.xlu0 %8652
  %8654 = vrot.lane.b32.xlu0 %v8472, 20
  %v8655 = vpop.permute.xlu0 %8654
  %8656 = vrot.lane.b32.xlu0 %v8473, 20
  %v8657 = vpop.permute.xlu0 %8656
  %8658 = vrot.lane.b32.xlu0 %v8474, 20
  %v8659 = vpop.permute.xlu0 %8658
  %8660 = vrot.lane.b32.xlu0 %v8475, 20
  %v8661 = vpop.permute.xlu0 %8660
  %8662 = vrot.lane.b32.xlu0 %v8476, 20
  %v8663 = vpop.permute.xlu0 %8662
  %8664 = vrot.lane.b32.xlu0 %v8477, 20
  %v8665 = vpop.permute.xlu0 %8664
  %8666 = vrot.lane.b32.xlu0 %v8478, 20
  %v8667 = vpop.permute.xlu0 %8666
  %8668 = vrot.lane.b32.xlu0 %v8479, 20
  %v8669 = vpop.permute.xlu0 %8668
  %8670 = vrot.lane.b32.xlu0 %v8480, 20
  %v8671 = vpop.permute.xlu0 %8670
  %8672 = vrot.lane.b32.xlu0 %v8481, 20
  %v8673 = vpop.permute.xlu0 %8672
  %8674 = vrot.lane.b32.xlu0 %v8482, 20
  %v8675 = vpop.permute.xlu0 %8674
  %8676 = vrot.lane.b32.xlu0 %v8483, 20
  %v8677 = vpop.permute.xlu0 %8676
  %8678 = vrot.lane.b32.xlu0 %v8484, 20
  %v8679 = vpop.permute.xlu0 %8678
  %8680 = vrot.lane.b32.xlu0 %v8485, 20
  %v8681 = vpop.permute.xlu0 %8680
  %8682 = vrot.lane.b32.xlu0 %v8486, 20
  %v8683 = vpop.permute.xlu0 %8682
  %8684 = vrot.lane.b32.xlu0 %v8487, 20
  %v8685 = vpop.permute.xlu0 %8684
  %8686 = vrot.lane.b32.xlu0 %v8488, 20
  %v8687 = vpop.permute.xlu0 %8686
  %8688 = vrot.lane.b32.xlu0 %v8489, 20
  %v8689 = vpop.permute.xlu0 %8688
  %8690 = vrot.lane.b32.xlu0 %v8490, 20
  %v8691 = vpop.permute.xlu0 %8690
  %8759 = vst.msk [vmem:[#allocation5] sm:$0xf] %vm3599, %v8559
  %8760 = vst.msk [vmem:[#allocation5 + $0x4] sm:$0xf] %vm3599, %v8561
  %8761 = vst.msk [vmem:[#allocation5 + $0x8] sm:$0xf] %vm3599, %v8563
  %8762 = vst.msk [vmem:[#allocation5 + $0xc] sm:$0xf] %vm3599, %v8565
  %8763 = vst.msk [vmem:[#allocation5 + $0x10] sm:$0xf] %vm3599, %v8567
  %8764 = vst.msk [vmem:[#allocation5 + $0x14] sm:$0xf] %vm3599, %v8569
  %8765 = vst.msk [vmem:[#allocation5 + $0x18] sm:$0xf] %vm3599, %v8571
  %8766 = vst.msk [vmem:[#allocation5 + $0x1c] sm:$0xf] %vm3599, %v8573
  %8767 = vst.msk [vmem:[#allocation5 + $0x20] sm:$0xf] %vm3599, %v8575
  %8768 = vst.msk [vmem:[#allocation5 + $0x24] sm:$0xf] %vm3599, %v8577
  %8769 = vst.msk [vmem:[#allocation5 + $0x28] sm:$0xf] %vm3599, %v8579
  %8770 = vst.msk [vmem:[#allocation5 + $0x2c] sm:$0xf] %vm3599, %v8581
  %8771 = vst.msk [vmem:[#allocation5 + $0x30] sm:$0xf] %vm3599, %v8583
  %8772 = vst.msk [vmem:[#allocation5 + $0x34] sm:$0xf] %vm3599, %v8585
  %8773 = vst.msk [vmem:[#allocation5 + $0x38] sm:$0xf] %vm3599, %v8587
  %8774 = vst.msk [vmem:[#allocation5 + $0x3c] sm:$0xf] %vm3599, %v8589
  %8775 = vst.msk [vmem:[#allocation5 + $0x40] sm:$0xf] %vm3599, %v8591
  %8776 = vst.msk [vmem:[#allocation5 + $0x44] sm:$0xf] %vm3599, %v8593
  %8777 = vst.msk [vmem:[#allocation5 + $0x48] sm:$0xf] %vm3599, %v8595
  %8778 = vst.msk [vmem:[#allocation5 + $0x4c] sm:$0xf] %vm3599, %v8597
  %8779 = vst.msk [vmem:[#allocation5 + $0x50] sm:$0xf] %vm3599, %v8599
  %8780 = vst.msk [vmem:[#allocation5 + $0x54] sm:$0xf] %vm3599, %v8601
  %8781 = vst.msk [vmem:[#allocation5 + $0x58] sm:$0xf] %vm3599, %v8603
  %8782 = vst.msk [vmem:[#allocation5 + $0x5c] sm:$0xf] %vm3599, %v8605
  %8783 = vst.msk [vmem:[#allocation5 + $0x60] sm:$0xf] %vm3599, %v8607
  %8784 = vst.msk [vmem:[#allocation5 + $0x64] sm:$0xf] %vm3599, %v8609
  %8785 = vst.msk [vmem:[#allocation5 + $0x68] sm:$0xf] %vm3599, %v8611
  %8786 = vst.msk [vmem:[#allocation5 + $0x6c] sm:$0xf] %vm3599, %v8613
  %8787 = vst.msk [vmem:[#allocation5 + $0x70] sm:$0xf] %vm3599, %v8615
  %8788 = vst.msk [vmem:[#allocation5 + $0x74] sm:$0xf] %vm3599, %v8617
  %8789 = vst.msk [vmem:[#allocation5 + $0x78] sm:$0xf] %vm3599, %v8619
  %8790 = vst.msk [vmem:[#allocation5 + $0x7c] sm:$0xf] %vm3599, %v8621
  %8791 = vst.msk [vmem:[#allocation5 + $0x80] sm:$0xf] %vm3599, %v8623
  %8792 = vst.msk [vmem:[#allocation5 + $0x84] sm:$0xf] %vm3599, %v8625
  %8793 = vst.msk [vmem:[#allocation5 + $0x88] sm:$0xf] %vm3599, %v8627
  %8794 = vst.msk [vmem:[#allocation5 + $0x8c] sm:$0xf] %vm3599, %v8629
  %8795 = vst.msk [vmem:[#allocation5 + $0x90] sm:$0xf] %vm3599, %v8631
  %8796 = vst.msk [vmem:[#allocation5 + $0x94] sm:$0xf] %vm3599, %v8633
  %8797 = vst.msk [vmem:[#allocation5 + $0x98] sm:$0xf] %vm3599, %v8635
  %8798 = vst.msk [vmem:[#allocation5 + $0x9c] sm:$0xf] %vm3599, %v8637
  %8799 = vst.msk [vmem:[#allocation5 + $0xa0] sm:$0xf] %vm3599, %v8639
  %8800 = vst.msk [vmem:[#allocation5 + $0xa4] sm:$0xf] %vm3599, %v8641
  %8801 = vst.msk [vmem:[#allocation5 + $0xa8] sm:$0xf] %vm3599, %v8643
  %8802 = vst.msk [vmem:[#allocation5 + $0xac] sm:$0xf] %vm3599, %v8645
  %8803 = vst.msk [vmem:[#allocation5 + $0xb0] sm:$0xf] %vm3599, %v8647
  %8804 = vst.msk [vmem:[#allocation5 + $0xb4] sm:$0xf] %vm3599, %v8649
  %8805 = vst.msk [vmem:[#allocation5 + $0xb8] sm:$0xf] %vm3599, %v8651
  %8806 = vst.msk [vmem:[#allocation5 + $0xbc] sm:$0xf] %vm3599, %v8653
  %8807 = vst.msk [vmem:[#allocation5 + $0xc0] sm:$0xf] %vm3599, %v8655
  %8808 = vst.msk [vmem:[#allocation5 + $0xc4] sm:$0xf] %vm3599, %v8657
  %8809 = vst.msk [vmem:[#allocation5 + $0xc8] sm:$0xf] %vm3599, %v8659
  %8810 = vst.msk [vmem:[#allocation5 + $0xcc] sm:$0xf] %vm3599, %v8661
  %8811 = vst.msk [vmem:[#allocation5 + $0xd0] sm:$0xf] %vm3599, %v8663
  %8812 = vst.msk [vmem:[#allocation5 + $0xd4] sm:$0xf] %vm3599, %v8665
  %8813 = vst.msk [vmem:[#allocation5 + $0xd8] sm:$0xf] %vm3599, %v8667
  %8814 = vst.msk [vmem:[#allocation5 + $0xdc] sm:$0xf] %vm3599, %v8669
  %8815 = vst.msk [vmem:[#allocation5 + $0xe0] sm:$0xf] %vm3599, %v8671
  %8816 = vst.msk [vmem:[#allocation5 + $0xe4] sm:$0xf] %vm3599, %v8673
  %8817 = vst.msk [vmem:[#allocation5 + $0xe8] sm:$0xf] %vm3599, %v8675
  %8818 = vst.msk [vmem:[#allocation5 + $0xec] sm:$0xf] %vm3599, %v8677
  %8819 = vst.msk [vmem:[#allocation5 + $0xf0] sm:$0xf] %vm3599, %v8679
  %8820 = vst.msk [vmem:[#allocation5 + $0xf4] sm:$0xf] %vm3599, %v8681
  %8821 = vst.msk [vmem:[#allocation5 + $0xf8] sm:$0xf] %vm3599, %v8683
  %8822 = vst.msk [vmem:[#allocation5 + $0xfc] sm:$0xf] %vm3599, %v8685
  %8823 = vst.msk [vmem:[#allocation5 + $0x100] sm:$0xf] %vm3599, %v8687
  %8824 = vst.msk [vmem:[#allocation5 + $0x104] sm:$0xf] %vm3599, %v8689
  %8825 = vst.msk [vmem:[#allocation5 + $0x108] sm:$0xf] %vm3599, %v8691
  %v8826 = vld [vmem:[#allocation3 + $0x27] sm:$0xff]
  %v8827 = vld [vmem:[#allocation3 + $0x2f] sm:$0xff]
  %v8828 = vld [vmem:[#allocation3 + $0x37] sm:$0xff]
  %v8829 = vld [vmem:[#allocation3 + $0x3f] sm:$0xff]
  %v8830 = vld [vmem:[#allocation3 + $0x47] sm:$0xff]
  %v8831 = vld [vmem:[#allocation3 + $0x4f] sm:$0xff]
  %v8832 = vld [vmem:[#allocation3 + $0x57] sm:$0xff]
  %v8833 = vld [vmem:[#allocation3 + $0x5f] sm:$0xff]
  %v8834 = vld [vmem:[#allocation3 + $0x67] sm:$0xff]
  %v8835 = vld [vmem:[#allocation3 + $0x6f] sm:$0xff]
  %v8836 = vld [vmem:[#allocation3 + $0x77] sm:$0xff]
  %v8837 = vld [vmem:[#allocation3 + $0x7f] sm:$0xff]
  %v8838 = vld [vmem:[#allocation3 + $0x87] sm:$0xff]
  %v8839 = vld [vmem:[#allocation3 + $0x8f] sm:$0xff]
  %v8840 = vld [vmem:[#allocation3 + $0x97] sm:$0xff]
  %v8841 = vld [vmem:[#allocation3 + $0x9f] sm:$0xff]
  %v8842 = vld [vmem:[#allocation3 + $0xa7] sm:$0xff]
  %v8843 = vld [vmem:[#allocation3 + $0xaf] sm:$0xff]
  %v8844 = vld [vmem:[#allocation3 + $0xb7] sm:$0xff]
  %v8845 = vld [vmem:[#allocation3 + $0xbf] sm:$0xff]
  %v8846 = vld [vmem:[#allocation3 + $0xc7] sm:$0xff]
  %v8847 = vld [vmem:[#allocation3 + $0xcf] sm:$0xff]
  %v8848 = vld [vmem:[#allocation3 + $0xd7] sm:$0xff]
  %v8849 = vld [vmem:[#allocation3 + $0xdf] sm:$0xff]
  %v8850 = vld [vmem:[#allocation3 + $0xe7] sm:$0xff]
  %v8851 = vld [vmem:[#allocation3 + $0xef] sm:$0xff]
  %v8852 = vld [vmem:[#allocation3 + $0xf7] sm:$0xff]
  %v8853 = vld [vmem:[#allocation3 + $0xff] sm:$0xff]
  %v8854 = vld [vmem:[#allocation3 + $0x107] sm:$0xff]
  %v8855 = vld [vmem:[#allocation3 + $0x10f] sm:$0xff]
  %v8856 = vld [vmem:[#allocation3 + $0x117] sm:$0xff]
  %v8857 = vld [vmem:[#allocation3 + $0x11f] sm:$0xff]
  %v8858 = vld [vmem:[#allocation3 + $0x127] sm:$0xff]
  %v8859 = vld [vmem:[#allocation3 + $0x12f] sm:$0xff]
  %v8860 = vld [vmem:[#allocation3 + $0x137] sm:$0xff]
  %v8861 = vld [vmem:[#allocation3 + $0x13f] sm:$0xff]
  %v8862 = vld [vmem:[#allocation3 + $0x147] sm:$0xff]
  %v8863 = vld [vmem:[#allocation3 + $0x14f] sm:$0xff]
  %v8864 = vld [vmem:[#allocation3 + $0x157] sm:$0xff]
  %v8865 = vld [vmem:[#allocation3 + $0x15f] sm:$0xff]
  %v8866 = vld [vmem:[#allocation3 + $0x167] sm:$0xff]
  %v8867 = vld [vmem:[#allocation3 + $0x16f] sm:$0xff]
  %v8868 = vld [vmem:[#allocation3 + $0x177] sm:$0xff]
  %v8869 = vld [vmem:[#allocation3 + $0x17f] sm:$0xff]
  %v8870 = vld [vmem:[#allocation3 + $0x187] sm:$0xff]
  %v8871 = vld [vmem:[#allocation3 + $0x18f] sm:$0xff]
  %v8872 = vld [vmem:[#allocation3 + $0x197] sm:$0xff]
  %v8873 = vld [vmem:[#allocation3 + $0x19f] sm:$0xff]
  %v8874 = vld [vmem:[#allocation3 + $0x1a7] sm:$0xff]
  %v8875 = vld [vmem:[#allocation3 + $0x1af] sm:$0xff]
  %v8876 = vld [vmem:[#allocation3 + $0x1b7] sm:$0xff]
  %v8877 = vld [vmem:[#allocation3 + $0x1bf] sm:$0xff]
  %v8878 = vld [vmem:[#allocation3 + $0x1c7] sm:$0xff]
  %v8879 = vld [vmem:[#allocation3 + $0x1cf] sm:$0xff]
  %v8880 = vld [vmem:[#allocation3 + $0x1d7] sm:$0xff]
  %v8881 = vld [vmem:[#allocation3 + $0x1df] sm:$0xff]
  %v8882 = vld [vmem:[#allocation3 + $0x1e7] sm:$0xff]
  %v8883 = vld [vmem:[#allocation3 + $0x1ef] sm:$0xff]
  %v8884 = vld [vmem:[#allocation3 + $0x1f7] sm:$0xff]
  %v8885 = vld [vmem:[#allocation3 + $0x1ff] sm:$0xff]
  %v8886 = vld [vmem:[#allocation3 + $0x207] sm:$0xff]
  %v8887 = vld [vmem:[#allocation3 + $0x20f] sm:$0xff]
  %v8888 = vld [vmem:[#allocation3 + $0x217] sm:$0xff]
  %v8889 = vld [vmem:[#allocation3 + $0x21f] sm:$0xff]
  %v8890 = vld [vmem:[#allocation3 + $0x227] sm:$0xff]
  %v8891 = vld [vmem:[#allocation3 + $0x22f] sm:$0xff]
  %v8892 = vld [vmem:[#allocation3 + $0x237] sm:$0xff]
  %v8893 = vmul.f32 %v8826, %v314
  %v8894 = vmul.f32 %v8827, %v319
  %v8895 = vmul.f32 %v8828, %v324
  %v8896 = vmul.f32 %v8829, %v329
  %v8897 = vmul.f32 %v8830, %v334
  %v8898 = vmul.f32 %v8831, %v339
  %v8899 = vmul.f32 %v8832, %v344
  %v8900 = vmul.f32 %v8833, %v349
  %v8901 = vmul.f32 %v8834, %v354
  %v8902 = vmul.f32 %v8835, %v359
  %v8903 = vmul.f32 %v8836, %v364
  %v8904 = vmul.f32 %v8837, %v369
  %v8905 = vmul.f32 %v8838, %v374
  %v8906 = vmul.f32 %v8839, %v379
  %v8907 = vmul.f32 %v8840, %v384
  %v8908 = vmul.f32 %v8841, %v389
  %v8909 = vmul.f32 %v8842, %v394
  %v8910 = vmul.f32 %v8843, %v399
  %v8911 = vmul.f32 %v8844, %v404
  %v8912 = vmul.f32 %v8845, %v409
  %v8913 = vmul.f32 %v8846, %v414
  %v8914 = vmul.f32 %v8847, %v419
  %v8915 = vmul.f32 %v8848, %v424
  %v8916 = vmul.f32 %v8849, %v429
  %v8917 = vmul.f32 %v8850, %v434
  %v8918 = vmul.f32 %v8851, %v439
  %v8919 = vmul.f32 %v8852, %v444
  %v8920 = vmul.f32 %v8853, %v449
  %v8921 = vmul.f32 %v8854, %v454
  %v8922 = vmul.f32 %v8855, %v459
  %v8923 = vmul.f32 %v8856, %v464
  %v8924 = vmul.f32 %v8857, %v469
  %v8925 = vmul.f32 %v8858, %v474
  %v8926 = vmul.f32 %v8859, %v479
  %v8927 = vmul.f32 %v8860, %v484
  %v8928 = vmul.f32 %v8861, %v489
  %v8929 = vmul.f32 %v8862, %v494
  %v8930 = vmul.f32 %v8863, %v499
  %v8931 = vmul.f32 %v8864, %v504
  %v8932 = vmul.f32 %v8865, %v509
  %v8933 = vmul.f32 %v8866, %v514
  %v8934 = vmul.f32 %v8867, %v519
  %v8935 = vmul.f32 %v8868, %v524
  %v8936 = vmul.f32 %v8869, %v529
  %v8937 = vmul.f32 %v8870, %v534
  %v8938 = vmul.f32 %v8871, %v539
  %v8939 = vmul.f32 %v8872, %v544
  %v8940 = vmul.f32 %v8873, %v549
  %v8941 = vmul.f32 %v8874, %v554
  %v8942 = vmul.f32 %v8875, %v559
  %v8943 = vmul.f32 %v8876, %v564
  %v8944 = vmul.f32 %v8877, %v569
  %v8945 = vmul.f32 %v8878, %v574
  %v8946 = vmul.f32 %v8879, %v579
  %v8947 = vmul.f32 %v8880, %v584
  %v8948 = vmul.f32 %v8881, %v589
  %v8949 = vmul.f32 %v8882, %v594
  %v8950 = vmul.f32 %v8883, %v599
  %v8951 = vmul.f32 %v8884, %v604
  %v8952 = vmul.f32 %v8885, %v609
  %v8953 = vmul.f32 %v8886, %v614
  %v8954 = vmul.f32 %v8887, %v619
  %v8955 = vmul.f32 %v8888, %v624
  %v8956 = vmul.f32 %v8889, %v629
  %v8957 = vmul.f32 %v8890, %v634
  %v8958 = vmul.f32 %v8891, %v639
  %v8959 = vmul.f32 %v8892, %v644
  %v8960 = vpack.c.bf16 %v8893, %v8893
  %v8961 = vpack.c.bf16 %v8894, %v8894
  %v8962 = vpack.c.bf16 %v8895, %v8895
  %v8963 = vpack.c.bf16 %v8896, %v8896
  %v8964 = vpack.c.bf16 %v8897, %v8897
  %v8965 = vpack.c.bf16 %v8898, %v8898
  %v8966 = vpack.c.bf16 %v8899, %v8899
  %v8967 = vpack.c.bf16 %v8900, %v8900
  %v8968 = vpack.c.bf16 %v8901, %v8901
  %v8969 = vpack.c.bf16 %v8902, %v8902
  %v8970 = vpack.c.bf16 %v8903, %v8903
  %v8971 = vpack.c.bf16 %v8904, %v8904
  %v8972 = vpack.c.bf16 %v8905, %v8905
  %v8973 = vpack.c.bf16 %v8906, %v8906
  %v8974 = vpack.c.bf16 %v8907, %v8907
  %v8975 = vpack.c.bf16 %v8908, %v8908
  %v8976 = vpack.c.bf16 %v8909, %v8909
  %v8977 = vpack.c.bf16 %v8910, %v8910
  %v8978 = vpack.c.bf16 %v8911, %v8911
  %v8979 = vpack.c.bf16 %v8912, %v8912
  %v8980 = vpack.c.bf16 %v8913, %v8913
  %v8981 = vpack.c.bf16 %v8914, %v8914
  %v8982 = vpack.c.bf16 %v8915, %v8915
  %v8983 = vpack.c.bf16 %v8916, %v8916
  %v8984 = vpack.c.bf16 %v8917, %v8917
  %v8985 = vpack.c.bf16 %v8918, %v8918
  %v8986 = vpack.c.bf16 %v8919, %v8919
  %v8987 = vpack.c.bf16 %v8920, %v8920
  %v8988 = vpack.c.bf16 %v8921, %v8921
  %v8989 = vpack.c.bf16 %v8922, %v8922
  %v8990 = vpack.c.bf16 %v8923, %v8923
  %v8991 = vpack.c.bf16 %v8924, %v8924
  %v8992 = vpack.c.bf16 %v8925, %v8925
  %v8993 = vpack.c.bf16 %v8926, %v8926
  %v8994 = vpack.c.bf16 %v8927, %v8927
  %v8995 = vpack.c.bf16 %v8928, %v8928
  %v8996 = vpack.c.bf16 %v8929, %v8929
  %v8997 = vpack.c.bf16 %v8930, %v8930
  %v8998 = vpack.c.bf16 %v8931, %v8931
  %v8999 = vpack.c.bf16 %v8932, %v8932
  %v9000 = vpack.c.bf16 %v8933, %v8933
  %v9001 = vpack.c.bf16 %v8934, %v8934
  %v9002 = vpack.c.bf16 %v8935, %v8935
  %v9003 = vpack.c.bf16 %v8936, %v8936
  %v9004 = vpack.c.bf16 %v8937, %v8937
  %v9005 = vpack.c.bf16 %v8938, %v8938
  %v9006 = vpack.c.bf16 %v8939, %v8939
  %v9007 = vpack.c.bf16 %v8940, %v8940
  %v9008 = vpack.c.bf16 %v8941, %v8941
  %v9009 = vpack.c.bf16 %v8942, %v8942
  %v9010 = vpack.c.bf16 %v8943, %v8943
  %v9011 = vpack.c.bf16 %v8944, %v8944
  %v9012 = vpack.c.bf16 %v8945, %v8945
  %v9013 = vpack.c.bf16 %v8946, %v8946
  %v9014 = vpack.c.bf16 %v8947, %v8947
  %v9015 = vpack.c.bf16 %v8948, %v8948
  %v9016 = vpack.c.bf16 %v8949, %v8949
  %v9017 = vpack.c.bf16 %v8950, %v8950
  %v9018 = vpack.c.bf16 %v8951, %v8951
  %v9019 = vpack.c.bf16 %v8952, %v8952
  %v9020 = vpack.c.bf16 %v8953, %v8953
  %v9021 = vpack.c.bf16 %v8954, %v8954
  %v9022 = vpack.c.bf16 %v8955, %v8955
  %v9023 = vpack.c.bf16 %v8956, %v8956
  %v9024 = vpack.c.bf16 %v8957, %v8957
  %v9025 = vpack.c.bf16 %v8958, %v8958
  %v9026 = vpack.c.bf16 %v8959, %v8959
  %9094 = vrot.lane.b32.xlu0 %v8960, 24
  %v9095 = vpop.permute.xlu0 %9094
  %9096 = vrot.lane.b32.xlu0 %v8961, 24
  %v9097 = vpop.permute.xlu0 %9096
  %9098 = vrot.lane.b32.xlu0 %v8962, 24
  %v9099 = vpop.permute.xlu0 %9098
  %9100 = vrot.lane.b32.xlu0 %v8963, 24
  %v9101 = vpop.permute.xlu0 %9100
  %9102 = vrot.lane.b32.xlu0 %v8964, 24
  %v9103 = vpop.permute.xlu0 %9102
  %9104 = vrot.lane.b32.xlu0 %v8965, 24
  %v9105 = vpop.permute.xlu0 %9104
  %9106 = vrot.lane.b32.xlu0 %v8966, 24
  %v9107 = vpop.permute.xlu0 %9106
  %9108 = vrot.lane.b32.xlu0 %v8967, 24
  %v9109 = vpop.permute.xlu0 %9108
  %9110 = vrot.lane.b32.xlu0 %v8968, 24
  %v9111 = vpop.permute.xlu0 %9110
  %9112 = vrot.lane.b32.xlu0 %v8969, 24
  %v9113 = vpop.permute.xlu0 %9112
  %9114 = vrot.lane.b32.xlu0 %v8970, 24
  %v9115 = vpop.permute.xlu0 %9114
  %9116 = vrot.lane.b32.xlu0 %v8971, 24
  %v9117 = vpop.permute.xlu0 %9116
  %9118 = vrot.lane.b32.xlu0 %v8972, 24
  %v9119 = vpop.permute.xlu0 %9118
  %9120 = vrot.lane.b32.xlu0 %v8973, 24
  %v9121 = vpop.permute.xlu0 %9120
  %9122 = vrot.lane.b32.xlu0 %v8974, 24
  %v9123 = vpop.permute.xlu0 %9122
  %9124 = vrot.lane.b32.xlu0 %v8975, 24
  %v9125 = vpop.permute.xlu0 %9124
  %9126 = vrot.lane.b32.xlu0 %v8976, 24
  %v9127 = vpop.permute.xlu0 %9126
  %9128 = vrot.lane.b32.xlu0 %v8977, 24
  %v9129 = vpop.permute.xlu0 %9128
  %9130 = vrot.lane.b32.xlu0 %v8978, 24
  %v9131 = vpop.permute.xlu0 %9130
  %9132 = vrot.lane.b32.xlu0 %v8979, 24
  %v9133 = vpop.permute.xlu0 %9132
  %9134 = vrot.lane.b32.xlu0 %v8980, 24
  %v9135 = vpop.permute.xlu0 %9134
  %9136 = vrot.lane.b32.xlu0 %v8981, 24
  %v9137 = vpop.permute.xlu0 %9136
  %9138 = vrot.lane.b32.xlu0 %v8982, 24
  %v9139 = vpop.permute.xlu0 %9138
  %9140 = vrot.lane.b32.xlu0 %v8983, 24
  %v9141 = vpop.permute.xlu0 %9140
  %9142 = vrot.lane.b32.xlu0 %v8984, 24
  %v9143 = vpop.permute.xlu0 %9142
  %9144 = vrot.lane.b32.xlu0 %v8985, 24
  %v9145 = vpop.permute.xlu0 %9144
  %9146 = vrot.lane.b32.xlu0 %v8986, 24
  %v9147 = vpop.permute.xlu0 %9146
  %9148 = vrot.lane.b32.xlu0 %v8987, 24
  %v9149 = vpop.permute.xlu0 %9148
  %9150 = vrot.lane.b32.xlu0 %v8988, 24
  %v9151 = vpop.permute.xlu0 %9150
  %9152 = vrot.lane.b32.xlu0 %v8989, 24
  %v9153 = vpop.permute.xlu0 %9152
  %9154 = vrot.lane.b32.xlu0 %v8990, 24
  %v9155 = vpop.permute.xlu0 %9154
  %9156 = vrot.lane.b32.xlu0 %v8991, 24
  %v9157 = vpop.permute.xlu0 %9156
  %9158 = vrot.lane.b32.xlu0 %v8992, 24
  %v9159 = vpop.permute.xlu0 %9158
  %9160 = vrot.lane.b32.xlu0 %v8993, 24
  %v9161 = vpop.permute.xlu0 %9160
  %9162 = vrot.lane.b32.xlu0 %v8994, 24
  %v9163 = vpop.permute.xlu0 %9162
  %9164 = vrot.lane.b32.xlu0 %v8995, 24
  %v9165 = vpop.permute.xlu0 %9164
  %9166 = vrot.lane.b32.xlu0 %v8996, 24
  %v9167 = vpop.permute.xlu0 %9166
  %9168 = vrot.lane.b32.xlu0 %v8997, 24
  %v9169 = vpop.permute.xlu0 %9168
  %9170 = vrot.lane.b32.xlu0 %v8998, 24
  %v9171 = vpop.permute.xlu0 %9170
  %9172 = vrot.lane.b32.xlu0 %v8999, 24
  %v9173 = vpop.permute.xlu0 %9172
  %9174 = vrot.lane.b32.xlu0 %v9000, 24
  %v9175 = vpop.permute.xlu0 %9174
  %9176 = vrot.lane.b32.xlu0 %v9001, 24
  %v9177 = vpop.permute.xlu0 %9176
  %9178 = vrot.lane.b32.xlu0 %v9002, 24
  %v9179 = vpop.permute.xlu0 %9178
  %9180 = vrot.lane.b32.xlu0 %v9003, 24
  %v9181 = vpop.permute.xlu0 %9180
  %9182 = vrot.lane.b32.xlu0 %v9004, 24
  %v9183 = vpop.permute.xlu0 %9182
  %9184 = vrot.lane.b32.xlu0 %v9005, 24
  %v9185 = vpop.permute.xlu0 %9184
  %9186 = vrot.lane.b32.xlu0 %v9006, 24
  %v9187 = vpop.permute.xlu0 %9186
  %9188 = vrot.lane.b32.xlu0 %v9007, 24
  %v9189 = vpop.permute.xlu0 %9188
  %9190 = vrot.lane.b32.xlu0 %v9008, 24
  %v9191 = vpop.permute.xlu0 %9190
  %9192 = vrot.lane.b32.xlu0 %v9009, 24
  %v9193 = vpop.permute.xlu0 %9192
  %9194 = vrot.lane.b32.xlu0 %v9010, 24
  %v9195 = vpop.permute.xlu0 %9194
  %9196 = vrot.lane.b32.xlu0 %v9011, 24
  %v9197 = vpop.permute.xlu0 %9196
  %9198 = vrot.lane.b32.xlu0 %v9012, 24
  %v9199 = vpop.permute.xlu0 %9198
  %9200 = vrot.lane.b32.xlu0 %v9013, 24
  %v9201 = vpop.permute.xlu0 %9200
  %9202 = vrot.lane.b32.xlu0 %v9014, 24
  %v9203 = vpop.permute.xlu0 %9202
  %9204 = vrot.lane.b32.xlu0 %v9015, 24
  %v9205 = vpop.permute.xlu0 %9204
  %9206 = vrot.lane.b32.xlu0 %v9016, 24
  %v9207 = vpop.permute.xlu0 %9206
  %9208 = vrot.lane.b32.xlu0 %v9017, 24
  %v9209 = vpop.permute.xlu0 %9208
  %9210 = vrot.lane.b32.xlu0 %v9018, 24
  %v9211 = vpop.permute.xlu0 %9210
  %9212 = vrot.lane.b32.xlu0 %v9019, 24
  %v9213 = vpop.permute.xlu0 %9212
  %9214 = vrot.lane.b32.xlu0 %v9020, 24
  %v9215 = vpop.permute.xlu0 %9214
  %9216 = vrot.lane.b32.xlu0 %v9021, 24
  %v9217 = vpop.permute.xlu0 %9216
  %9218 = vrot.lane.b32.xlu0 %v9022, 24
  %v9219 = vpop.permute.xlu0 %9218
  %9220 = vrot.lane.b32.xlu0 %v9023, 24
  %v9221 = vpop.permute.xlu0 %9220
  %9222 = vrot.lane.b32.xlu0 %v9024, 24
  %v9223 = vpop.permute.xlu0 %9222
  %9224 = vrot.lane.b32.xlu0 %v9025, 24
  %v9225 = vpop.permute.xlu0 %9224
  %9226 = vrot.lane.b32.xlu0 %v9026, 24
  %v9227 = vpop.permute.xlu0 %9226
  %9295 = vst.msk [vmem:[#allocation5] sm:$0xf] %vm4136, %v9095
  %9296 = vst.msk [vmem:[#allocation5 + $0x4] sm:$0xf] %vm4136, %v9097
  %9297 = vst.msk [vmem:[#allocation5 + $0x8] sm:$0xf] %vm4136, %v9099
  %9298 = vst.msk [vmem:[#allocation5 + $0xc] sm:$0xf] %vm4136, %v9101
  %9299 = vst.msk [vmem:[#allocation5 + $0x10] sm:$0xf] %vm4136, %v9103
  %9300 = vst.msk [vmem:[#allocation5 + $0x14] sm:$0xf] %vm4136, %v9105
  %9301 = vst.msk [vmem:[#allocation5 + $0x18] sm:$0xf] %vm4136, %v9107
  %9302 = vst.msk [vmem:[#allocation5 + $0x1c] sm:$0xf] %vm4136, %v9109
  %9303 = vst.msk [vmem:[#allocation5 + $0x20] sm:$0xf] %vm4136, %v9111
  %9304 = vst.msk [vmem:[#allocation5 + $0x24] sm:$0xf] %vm4136, %v9113
  %9305 = vst.msk [vmem:[#allocation5 + $0x28] sm:$0xf] %vm4136, %v9115
  %9306 = vst.msk [vmem:[#allocation5 + $0x2c] sm:$0xf] %vm4136, %v9117
  %9307 = vst.msk [vmem:[#allocation5 + $0x30] sm:$0xf] %vm4136, %v9119
  %9308 = vst.msk [vmem:[#allocation5 + $0x34] sm:$0xf] %vm4136, %v9121
  %9309 = vst.msk [vmem:[#allocation5 + $0x38] sm:$0xf] %vm4136, %v9123
  %9310 = vst.msk [vmem:[#allocation5 + $0x3c] sm:$0xf] %vm4136, %v9125
  %9311 = vst.msk [vmem:[#allocation5 + $0x40] sm:$0xf] %vm4136, %v9127
  %9312 = vst.msk [vmem:[#allocation5 + $0x44] sm:$0xf] %vm4136, %v9129
  %9313 = vst.msk [vmem:[#allocation5 + $0x48] sm:$0xf] %vm4136, %v9131
  %9314 = vst.msk [vmem:[#allocation5 + $0x4c] sm:$0xf] %vm4136, %v9133
  %9315 = vst.msk [vmem:[#allocation5 + $0x50] sm:$0xf] %vm4136, %v9135
  %9316 = vst.msk [vmem:[#allocation5 + $0x54] sm:$0xf] %vm4136, %v9137
  %9317 = vst.msk [vmem:[#allocation5 + $0x58] sm:$0xf] %vm4136, %v9139
  %9318 = vst.msk [vmem:[#allocation5 + $0x5c] sm:$0xf] %vm4136, %v9141
  %9319 = vst.msk [vmem:[#allocation5 + $0x60] sm:$0xf] %vm4136, %v9143
  %9320 = vst.msk [vmem:[#allocation5 + $0x64] sm:$0xf] %vm4136, %v9145
  %9321 = vst.msk [vmem:[#allocation5 + $0x68] sm:$0xf] %vm4136, %v9147
  %9322 = vst.msk [vmem:[#allocation5 + $0x6c] sm:$0xf] %vm4136, %v9149
  %9323 = vst.msk [vmem:[#allocation5 + $0x70] sm:$0xf] %vm4136, %v9151
  %9324 = vst.msk [vmem:[#allocation5 + $0x74] sm:$0xf] %vm4136, %v9153
  %9325 = vst.msk [vmem:[#allocation5 + $0x78] sm:$0xf] %vm4136, %v9155
  %9326 = vst.msk [vmem:[#allocation5 + $0x7c] sm:$0xf] %vm4136, %v9157
  %9327 = vst.msk [vmem:[#allocation5 + $0x80] sm:$0xf] %vm4136, %v9159
  %9328 = vst.msk [vmem:[#allocation5 + $0x84] sm:$0xf] %vm4136, %v9161
  %9329 = vst.msk [vmem:[#allocation5 + $0x88] sm:$0xf] %vm4136, %v9163
  %9330 = vst.msk [vmem:[#allocation5 + $0x8c] sm:$0xf] %vm4136, %v9165
  %9331 = vst.msk [vmem:[#allocation5 + $0x90] sm:$0xf] %vm4136, %v9167
  %9332 = vst.msk [vmem:[#allocation5 + $0x94] sm:$0xf] %vm4136, %v9169
  %9333 = vst.msk [vmem:[#allocation5 + $0x98] sm:$0xf] %vm4136, %v9171
  %9334 = vst.msk [vmem:[#allocation5 + $0x9c] sm:$0xf] %vm4136, %v9173
  %9335 = vst.msk [vmem:[#allocation5 + $0xa0] sm:$0xf] %vm4136, %v9175
  %9336 = vst.msk [vmem:[#allocation5 + $0xa4] sm:$0xf] %vm4136, %v9177
  %9337 = vst.msk [vmem:[#allocation5 + $0xa8] sm:$0xf] %vm4136, %v9179
  %9338 = vst.msk [vmem:[#allocation5 + $0xac] sm:$0xf] %vm4136, %v9181
  %9339 = vst.msk [vmem:[#allocation5 + $0xb0] sm:$0xf] %vm4136, %v9183
  %9340 = vst.msk [vmem:[#allocation5 + $0xb4] sm:$0xf] %vm4136, %v9185
  %9341 = vst.msk [vmem:[#allocation5 + $0xb8] sm:$0xf] %vm4136, %v9187
  %9342 = vst.msk [vmem:[#allocation5 + $0xbc] sm:$0xf] %vm4136, %v9189
  %9343 = vst.msk [vmem:[#allocation5 + $0xc0] sm:$0xf] %vm4136, %v9191
  %9344 = vst.msk [vmem:[#allocation5 + $0xc4] sm:$0xf] %vm4136, %v9193
  %9345 = vst.msk [vmem:[#allocation5 + $0xc8] sm:$0xf] %vm4136, %v9195
  %9346 = vst.msk [vmem:[#allocation5 + $0xcc] sm:$0xf] %vm4136, %v9197
  %9347 = vst.msk [vmem:[#allocation5 + $0xd0] sm:$0xf] %vm4136, %v9199
  %9348 = vst.msk [vmem:[#allocation5 + $0xd4] sm:$0xf] %vm4136, %v9201
  %9349 = vst.msk [vmem:[#allocation5 + $0xd8] sm:$0xf] %vm4136, %v9203
  %9350 = vst.msk [vmem:[#allocation5 + $0xdc] sm:$0xf] %vm4136, %v9205
  %9351 = vst.msk [vmem:[#allocation5 + $0xe0] sm:$0xf] %vm4136, %v9207
  %9352 = vst.msk [vmem:[#allocation5 + $0xe4] sm:$0xf] %vm4136, %v9209
  %9353 = vst.msk [vmem:[#allocation5 + $0xe8] sm:$0xf] %vm4136, %v9211
  %9354 = vst.msk [vmem:[#allocation5 + $0xec] sm:$0xf] %vm4136, %v9213
  %9355 = vst.msk [vmem:[#allocation5 + $0xf0] sm:$0xf] %vm4136, %v9215
  %9356 = vst.msk [vmem:[#allocation5 + $0xf4] sm:$0xf] %vm4136, %v9217
  %9357 = vst.msk [vmem:[#allocation5 + $0xf8] sm:$0xf] %vm4136, %v9219
  %9358 = vst.msk [vmem:[#allocation5 + $0xfc] sm:$0xf] %vm4136, %v9221
  %9359 = vst.msk [vmem:[#allocation5 + $0x100] sm:$0xf] %vm4136, %v9223
  %9360 = vst.msk [vmem:[#allocation5 + $0x104] sm:$0xf] %vm4136, %v9225
  %9361 = vst.msk [vmem:[#allocation5 + $0x108] sm:$0xf] %vm4136, %v9227
  %v9362 = vld [vmem:[#allocation3 + $0x28] sm:$0xff]
  %v9363 = vld [vmem:[#allocation3 + $0x30] sm:$0xff]
  %v9364 = vld [vmem:[#allocation3 + $0x38] sm:$0xff]
  %v9365 = vld [vmem:[#allocation3 + $0x40] sm:$0xff]
  %v9366 = vld [vmem:[#allocation3 + $0x48] sm:$0xff]
  %v9367 = vld [vmem:[#allocation3 + $0x50] sm:$0xff]
  %v9368 = vld [vmem:[#allocation3 + $0x58] sm:$0xff]
  %v9369 = vld [vmem:[#allocation3 + $0x60] sm:$0xff]
  %v9370 = vld [vmem:[#allocation3 + $0x68] sm:$0xff]
  %v9371 = vld [vmem:[#allocation3 + $0x70] sm:$0xff]
  %v9372 = vld [vmem:[#allocation3 + $0x78] sm:$0xff]
  %v9373 = vld [vmem:[#allocation3 + $0x80] sm:$0xff]
  %v9374 = vld [vmem:[#allocation3 + $0x88] sm:$0xff]
  %v9375 = vld [vmem:[#allocation3 + $0x90] sm:$0xff]
  %v9376 = vld [vmem:[#allocation3 + $0x98] sm:$0xff]
  %v9377 = vld [vmem:[#allocation3 + $0xa0] sm:$0xff]
  %v9378 = vld [vmem:[#allocation3 + $0xa8] sm:$0xff]
  %v9379 = vld [vmem:[#allocation3 + $0xb0] sm:$0xff]
  %v9380 = vld [vmem:[#allocation3 + $0xb8] sm:$0xff]
  %v9381 = vld [vmem:[#allocation3 + $0xc0] sm:$0xff]
  %v9382 = vld [vmem:[#allocation3 + $0xc8] sm:$0xff]
  %v9383 = vld [vmem:[#allocation3 + $0xd0] sm:$0xff]
  %v9384 = vld [vmem:[#allocation3 + $0xd8] sm:$0xff]
  %v9385 = vld [vmem:[#allocation3 + $0xe0] sm:$0xff]
  %v9386 = vld [vmem:[#allocation3 + $0xe8] sm:$0xff]
  %v9387 = vld [vmem:[#allocation3 + $0xf0] sm:$0xff]
  %v9388 = vld [vmem:[#allocation3 + $0xf8] sm:$0xff]
  %v9389 = vld [vmem:[#allocation3 + $0x100] sm:$0xff]
  %v9390 = vld [vmem:[#allocation3 + $0x108] sm:$0xff]
  %v9391 = vld [vmem:[#allocation3 + $0x110] sm:$0xff]
  %v9392 = vld [vmem:[#allocation3 + $0x118] sm:$0xff]
  %v9393 = vld [vmem:[#allocation3 + $0x120] sm:$0xff]
  %v9394 = vld [vmem:[#allocation3 + $0x128] sm:$0xff]
  %v9395 = vld [vmem:[#allocation3 + $0x130] sm:$0xff]
  %v9396 = vld [vmem:[#allocation3 + $0x138] sm:$0xff]
  %v9397 = vld [vmem:[#allocation3 + $0x140] sm:$0xff]
  %v9398 = vld [vmem:[#allocation3 + $0x148] sm:$0xff]
  %v9399 = vld [vmem:[#allocation3 + $0x150] sm:$0xff]
  %v9400 = vld [vmem:[#allocation3 + $0x158] sm:$0xff]
  %v9401 = vld [vmem:[#allocation3 + $0x160] sm:$0xff]
  %v9402 = vld [vmem:[#allocation3 + $0x168] sm:$0xff]
  %v9403 = vld [vmem:[#allocation3 + $0x170] sm:$0xff]
  %v9404 = vld [vmem:[#allocation3 + $0x178] sm:$0xff]
  %v9405 = vld [vmem:[#allocation3 + $0x180] sm:$0xff]
  %v9406 = vld [vmem:[#allocation3 + $0x188] sm:$0xff]
  %v9407 = vld [vmem:[#allocation3 + $0x190] sm:$0xff]
  %v9408 = vld [vmem:[#allocation3 + $0x198] sm:$0xff]
  %v9409 = vld [vmem:[#allocation3 + $0x1a0] sm:$0xff]
  %v9410 = vld [vmem:[#allocation3 + $0x1a8] sm:$0xff]
  %v9411 = vld [vmem:[#allocation3 + $0x1b0] sm:$0xff]
  %v9412 = vld [vmem:[#allocation3 + $0x1b8] sm:$0xff]
  %v9413 = vld [vmem:[#allocation3 + $0x1c0] sm:$0xff]
  %v9414 = vld [vmem:[#allocation3 + $0x1c8] sm:$0xff]
  %v9415 = vld [vmem:[#allocation3 + $0x1d0] sm:$0xff]
  %v9416 = vld [vmem:[#allocation3 + $0x1d8] sm:$0xff]
  %v9417 = vld [vmem:[#allocation3 + $0x1e0] sm:$0xff]
  %v9418 = vld [vmem:[#allocation3 + $0x1e8] sm:$0xff]
  %v9419 = vld [vmem:[#allocation3 + $0x1f0] sm:$0xff]
  %v9420 = vld [vmem:[#allocation3 + $0x1f8] sm:$0xff]
  %v9421 = vld [vmem:[#allocation3 + $0x200] sm:$0xff]
  %v9422 = vld [vmem:[#allocation3 + $0x208] sm:$0xff]
  %v9423 = vld [vmem:[#allocation3 + $0x210] sm:$0xff]
  %v9424 = vld [vmem:[#allocation3 + $0x218] sm:$0xff]
  %v9425 = vld [vmem:[#allocation3 + $0x220] sm:$0xff]
  %v9426 = vld [vmem:[#allocation3 + $0x228] sm:$0xff]
  %v9427 = vld [vmem:[#allocation3 + $0x230] sm:$0xff]
  %v9428 = vld [vmem:[#allocation3 + $0x238] sm:$0xff]
  %v9429 = vpack.c.bf16 %v9362, %v9362
  %v9430 = vpack.c.bf16 %v9363, %v9363
  %v9431 = vpack.c.bf16 %v9364, %v9364
  %v9432 = vpack.c.bf16 %v9365, %v9365
  %v9433 = vpack.c.bf16 %v9366, %v9366
  %v9434 = vpack.c.bf16 %v9367, %v9367
  %v9435 = vpack.c.bf16 %v9368, %v9368
  %v9436 = vpack.c.bf16 %v9369, %v9369
  %v9437 = vpack.c.bf16 %v9370, %v9370
  %v9438 = vpack.c.bf16 %v9371, %v9371
  %v9439 = vpack.c.bf16 %v9372, %v9372
  %v9440 = vpack.c.bf16 %v9373, %v9373
  %v9441 = vpack.c.bf16 %v9374, %v9374
  %v9442 = vpack.c.bf16 %v9375, %v9375
  %v9443 = vpack.c.bf16 %v9376, %v9376
  %v9444 = vpack.c.bf16 %v9377, %v9377
  %v9445 = vpack.c.bf16 %v9378, %v9378
  %v9446 = vpack.c.bf16 %v9379, %v9379
  %v9447 = vpack.c.bf16 %v9380, %v9380
  %v9448 = vpack.c.bf16 %v9381, %v9381
  %v9449 = vpack.c.bf16 %v9382, %v9382
  %v9450 = vpack.c.bf16 %v9383, %v9383
  %v9451 = vpack.c.bf16 %v9384, %v9384
  %v9452 = vpack.c.bf16 %v9385, %v9385
  %v9453 = vpack.c.bf16 %v9386, %v9386
  %v9454 = vpack.c.bf16 %v9387, %v9387
  %v9455 = vpack.c.bf16 %v9388, %v9388
  %v9456 = vpack.c.bf16 %v9389, %v9389
  %v9457 = vpack.c.bf16 %v9390, %v9390
  %v9458 = vpack.c.bf16 %v9391, %v9391
  %v9459 = vpack.c.bf16 %v9392, %v9392
  %v9460 = vpack.c.bf16 %v9393, %v9393
  %v9461 = vpack.c.bf16 %v9394, %v9394
  %v9462 = vpack.c.bf16 %v9395, %v9395
  %v9463 = vpack.c.bf16 %v9396, %v9396
  %v9464 = vpack.c.bf16 %v9397, %v9397
  %v9465 = vpack.c.bf16 %v9398, %v9398
  %v9466 = vpack.c.bf16 %v9399, %v9399
  %v9467 = vpack.c.bf16 %v9400, %v9400
  %v9468 = vpack.c.bf16 %v9401, %v9401
  %v9469 = vpack.c.bf16 %v9402, %v9402
  %v9470 = vpack.c.bf16 %v9403, %v9403
  %v9471 = vpack.c.bf16 %v9404, %v9404
  %v9472 = vpack.c.bf16 %v9405, %v9405
  %v9473 = vpack.c.bf16 %v9406, %v9406
  %v9474 = vpack.c.bf16 %v9407, %v9407
  %v9475 = vpack.c.bf16 %v9408, %v9408
  %v9476 = vpack.c.bf16 %v9409, %v9409
  %v9477 = vpack.c.bf16 %v9410, %v9410
  %v9478 = vpack.c.bf16 %v9411, %v9411
  %v9479 = vpack.c.bf16 %v9412, %v9412
  %v9480 = vpack.c.bf16 %v9413, %v9413
  %v9481 = vpack.c.bf16 %v9414, %v9414
  %v9482 = vpack.c.bf16 %v9415, %v9415
  %v9483 = vpack.c.bf16 %v9416, %v9416
  %v9484 = vpack.c.bf16 %v9417, %v9417
  %v9485 = vpack.c.bf16 %v9418, %v9418
  %v9486 = vpack.c.bf16 %v9419, %v9419
  %v9487 = vpack.c.bf16 %v9420, %v9420
  %v9488 = vpack.c.bf16 %v9421, %v9421
  %v9489 = vpack.c.bf16 %v9422, %v9422
  %v9490 = vpack.c.bf16 %v9423, %v9423
  %v9491 = vpack.c.bf16 %v9424, %v9424
  %v9492 = vpack.c.bf16 %v9425, %v9425
  %v9493 = vpack.c.bf16 %v9426, %v9426
  %v9494 = vpack.c.bf16 %v9427, %v9427
  %v9495 = vpack.c.bf16 %v9428, %v9428
  %9563 = vrot.lane.b32.xlu0 %v9429, 28
  %v9564 = vpop.permute.xlu0 %9563
  %9565 = vrot.lane.b32.xlu0 %v9430, 28
  %v9566 = vpop.permute.xlu0 %9565
  %9567 = vrot.lane.b32.xlu0 %v9431, 28
  %v9568 = vpop.permute.xlu0 %9567
  %9569 = vrot.lane.b32.xlu0 %v9432, 28
  %v9570 = vpop.permute.xlu0 %9569
  %9571 = vrot.lane.b32.xlu0 %v9433, 28
  %v9572 = vpop.permute.xlu0 %9571
  %9573 = vrot.lane.b32.xlu0 %v9434, 28
  %v9574 = vpop.permute.xlu0 %9573
  %9575 = vrot.lane.b32.xlu0 %v9435, 28
  %v9576 = vpop.permute.xlu0 %9575
  %9577 = vrot.lane.b32.xlu0 %v9436, 28
  %v9578 = vpop.permute.xlu0 %9577
  %9579 = vrot.lane.b32.xlu0 %v9437, 28
  %v9580 = vpop.permute.xlu0 %9579
  %9581 = vrot.lane.b32.xlu0 %v9438, 28
  %v9582 = vpop.permute.xlu0 %9581
  %9583 = vrot.lane.b32.xlu0 %v9439, 28
  %v9584 = vpop.permute.xlu0 %9583
  %9585 = vrot.lane.b32.xlu0 %v9440, 28
  %v9586 = vpop.permute.xlu0 %9585
  %9587 = vrot.lane.b32.xlu0 %v9441, 28
  %v9588 = vpop.permute.xlu0 %9587
  %9589 = vrot.lane.b32.xlu0 %v9442, 28
  %v9590 = vpop.permute.xlu0 %9589
  %9591 = vrot.lane.b32.xlu0 %v9443, 28
  %v9592 = vpop.permute.xlu0 %9591
  %9593 = vrot.lane.b32.xlu0 %v9444, 28
  %v9594 = vpop.permute.xlu0 %9593
  %9595 = vrot.lane.b32.xlu0 %v9445, 28
  %v9596 = vpop.permute.xlu0 %9595
  %9597 = vrot.lane.b32.xlu0 %v9446, 28
  %v9598 = vpop.permute.xlu0 %9597
  %9599 = vrot.lane.b32.xlu0 %v9447, 28
  %v9600 = vpop.permute.xlu0 %9599
  %9601 = vrot.lane.b32.xlu0 %v9448, 28
  %v9602 = vpop.permute.xlu0 %9601
  %9603 = vrot.lane.b32.xlu0 %v9449, 28
  %v9604 = vpop.permute.xlu0 %9603
  %9605 = vrot.lane.b32.xlu0 %v9450, 28
  %v9606 = vpop.permute.xlu0 %9605
  %9607 = vrot.lane.b32.xlu0 %v9451, 28
  %v9608 = vpop.permute.xlu0 %9607
  %9609 = vrot.lane.b32.xlu0 %v9452, 28
  %v9610 = vpop.permute.xlu0 %9609
  %9611 = vrot.lane.b32.xlu0 %v9453, 28
  %v9612 = vpop.permute.xlu0 %9611
  %9613 = vrot.lane.b32.xlu0 %v9454, 28
  %v9614 = vpop.permute.xlu0 %9613
  %9615 = vrot.lane.b32.xlu0 %v9455, 28
  %v9616 = vpop.permute.xlu0 %9615
  %9617 = vrot.lane.b32.xlu0 %v9456, 28
  %v9618 = vpop.permute.xlu0 %9617
  %9619 = vrot.lane.b32.xlu0 %v9457, 28
  %v9620 = vpop.permute.xlu0 %9619
  %9621 = vrot.lane.b32.xlu0 %v9458, 28
  %v9622 = vpop.permute.xlu0 %9621
  %9623 = vrot.lane.b32.xlu0 %v9459, 28
  %v9624 = vpop.permute.xlu0 %9623
  %9625 = vrot.lane.b32.xlu0 %v9460, 28
  %v9626 = vpop.permute.xlu0 %9625
  %9627 = vrot.lane.b32.xlu0 %v9461, 28
  %v9628 = vpop.permute.xlu0 %9627
  %9629 = vrot.lane.b32.xlu0 %v9462, 28
  %v9630 = vpop.permute.xlu0 %9629
  %9631 = vrot.lane.b32.xlu0 %v9463, 28
  %v9632 = vpop.permute.xlu0 %9631
  %9633 = vrot.lane.b32.xlu0 %v9464, 28
  %v9634 = vpop.permute.xlu0 %9633
  %9635 = vrot.lane.b32.xlu0 %v9465, 28
  %v9636 = vpop.permute.xlu0 %9635
  %9637 = vrot.lane.b32.xlu0 %v9466, 28
  %v9638 = vpop.permute.xlu0 %9637
  %9639 = vrot.lane.b32.xlu0 %v9467, 28
  %v9640 = vpop.permute.xlu0 %9639
  %9641 = vrot.lane.b32.xlu0 %v9468, 28
  %v9642 = vpop.permute.xlu0 %9641
  %9643 = vrot.lane.b32.xlu0 %v9469, 28
  %v9644 = vpop.permute.xlu0 %9643
  %9645 = vrot.lane.b32.xlu0 %v9470, 28
  %v9646 = vpop.permute.xlu0 %9645
  %9647 = vrot.lane.b32.xlu0 %v9471, 28
  %v9648 = vpop.permute.xlu0 %9647
  %9649 = vrot.lane.b32.xlu0 %v9472, 28
  %v9650 = vpop.permute.xlu0 %9649
  %9651 = vrot.lane.b32.xlu0 %v9473, 28
  %v9652 = vpop.permute.xlu0 %9651
  %9653 = vrot.lane.b32.xlu0 %v9474, 28
  %v9654 = vpop.permute.xlu0 %9653
  %9655 = vrot.lane.b32.xlu0 %v9475, 28
  %v9656 = vpop.permute.xlu0 %9655
  %9657 = vrot.lane.b32.xlu0 %v9476, 28
  %v9658 = vpop.permute.xlu0 %9657
  %9659 = vrot.lane.b32.xlu0 %v9477, 28
  %v9660 = vpop.permute.xlu0 %9659
  %9661 = vrot.lane.b32.xlu0 %v9478, 28
  %v9662 = vpop.permute.xlu0 %9661
  %9663 = vrot.lane.b32.xlu0 %v9479, 28
  %v9664 = vpop.permute.xlu0 %9663
  %9665 = vrot.lane.b32.xlu0 %v9480, 28
  %v9666 = vpop.permute.xlu0 %9665
  %9667 = vrot.lane.b32.xlu0 %v9481, 28
  %v9668 = vpop.permute.xlu0 %9667
  %9669 = vrot.lane.b32.xlu0 %v9482, 28
  %v9670 = vpop.permute.xlu0 %9669
  %9671 = vrot.lane.b32.xlu0 %v9483, 28
  %v9672 = vpop.permute.xlu0 %9671
  %9673 = vrot.lane.b32.xlu0 %v9484, 28
  %v9674 = vpop.permute.xlu0 %9673
  %9675 = vrot.lane.b32.xlu0 %v9485, 28
  %v9676 = vpop.permute.xlu0 %9675
  %9677 = vrot.lane.b32.xlu0 %v9486, 28
  %v9678 = vpop.permute.xlu0 %9677
  %9679 = vrot.lane.b32.xlu0 %v9487, 28
  %v9680 = vpop.permute.xlu0 %9679
  %9681 = vrot.lane.b32.xlu0 %v9488, 28
  %v9682 = vpop.permute.xlu0 %9681
  %9683 = vrot.lane.b32.xlu0 %v9489, 28
  %v9684 = vpop.permute.xlu0 %9683
  %9685 = vrot.lane.b32.xlu0 %v9490, 28
  %v9686 = vpop.permute.xlu0 %9685
  %9687 = vrot.lane.b32.xlu0 %v9491, 28
  %v9688 = vpop.permute.xlu0 %9687
  %9689 = vrot.lane.b32.xlu0 %v9492, 28
  %v9690 = vpop.permute.xlu0 %9689
  %9691 = vrot.lane.b32.xlu0 %v9493, 28
  %v9692 = vpop.permute.xlu0 %9691
  %9693 = vrot.lane.b32.xlu0 %v9494, 28
  %v9694 = vpop.permute.xlu0 %9693
  %9695 = vrot.lane.b32.xlu0 %v9495, 28
  %v9696 = vpop.permute.xlu0 %9695
  %9764 = vst.msk [vmem:[#allocation5] sm:$0xf] %vm4606, %v9564
  %9765 = vst.msk [vmem:[#allocation5 + $0x4] sm:$0xf] %vm4606, %v9566
  %9766 = vst.msk [vmem:[#allocation5 + $0x8] sm:$0xf] %vm4606, %v9568
  %9767 = vst.msk [vmem:[#allocation5 + $0xc] sm:$0xf] %vm4606, %v9570
  %9768 = vst.msk [vmem:[#allocation5 + $0x10] sm:$0xf] %vm4606, %v9572
  %9769 = vst.msk [vmem:[#allocation5 + $0x14] sm:$0xf] %vm4606, %v9574
  %9770 = vst.msk [vmem:[#allocation5 + $0x18] sm:$0xf] %vm4606, %v9576
  %9771 = vst.msk [vmem:[#allocation5 + $0x1c] sm:$0xf] %vm4606, %v9578
  %9772 = vst.msk [vmem:[#allocation5 + $0x20] sm:$0xf] %vm4606, %v9580
  %9773 = vst.msk [vmem:[#allocation5 + $0x24] sm:$0xf] %vm4606, %v9582
  %9774 = vst.msk [vmem:[#allocation5 + $0x28] sm:$0xf] %vm4606, %v9584
  %9775 = vst.msk [vmem:[#allocation5 + $0x2c] sm:$0xf] %vm4606, %v9586
  %9776 = vst.msk [vmem:[#allocation5 + $0x30] sm:$0xf] %vm4606, %v9588
  %9777 = vst.msk [vmem:[#allocation5 + $0x34] sm:$0xf] %vm4606, %v9590
  %9778 = vst.msk [vmem:[#allocation5 + $0x38] sm:$0xf] %vm4606, %v9592
  %9779 = vst.msk [vmem:[#allocation5 + $0x3c] sm:$0xf] %vm4606, %v9594
  %9780 = vst.msk [vmem:[#allocation5 + $0x40] sm:$0xf] %vm4606, %v9596
  %9781 = vst.msk [vmem:[#allocation5 + $0x44] sm:$0xf] %vm4606, %v9598
  %9782 = vst.msk [vmem:[#allocation5 + $0x48] sm:$0xf] %vm4606, %v9600
  %9783 = vst.msk [vmem:[#allocation5 + $0x4c] sm:$0xf] %vm4606, %v9602
  %9784 = vst.msk [vmem:[#allocation5 + $0x50] sm:$0xf] %vm4606, %v9604
  %9785 = vst.msk [vmem:[#allocation5 + $0x54] sm:$0xf] %vm4606, %v9606
  %9786 = vst.msk [vmem:[#allocation5 + $0x58] sm:$0xf] %vm4606, %v9608
  %9787 = vst.msk [vmem:[#allocation5 + $0x5c] sm:$0xf] %vm4606, %v9610
  %9788 = vst.msk [vmem:[#allocation5 + $0x60] sm:$0xf] %vm4606, %v9612
  %9789 = vst.msk [vmem:[#allocation5 + $0x64] sm:$0xf] %vm4606, %v9614
  %9790 = vst.msk [vmem:[#allocation5 + $0x68] sm:$0xf] %vm4606, %v9616
  %9791 = vst.msk [vmem:[#allocation5 + $0x6c] sm:$0xf] %vm4606, %v9618
  %9792 = vst.msk [vmem:[#allocation5 + $0x70] sm:$0xf] %vm4606, %v9620
  %9793 = vst.msk [vmem:[#allocation5 + $0x74] sm:$0xf] %vm4606, %v9622
  %9794 = vst.msk [vmem:[#allocation5 + $0x78] sm:$0xf] %vm4606, %v9624
  %9795 = vst.msk [vmem:[#allocation5 + $0x7c] sm:$0xf] %vm4606, %v9626
  %9796 = vst.msk [vmem:[#allocation5 + $0x80] sm:$0xf] %vm4606, %v9628
  %9797 = vst.msk [vmem:[#allocation5 + $0x84] sm:$0xf] %vm4606, %v9630
  %9798 = vst.msk [vmem:[#allocation5 + $0x88] sm:$0xf] %vm4606, %v9632
  %9799 = vst.msk [vmem:[#allocation5 + $0x8c] sm:$0xf] %vm4606, %v9634
  %9800 = vst.msk [vmem:[#allocation5 + $0x90] sm:$0xf] %vm4606, %v9636
  %9801 = vst.msk [vmem:[#allocation5 + $0x94] sm:$0xf] %vm4606, %v9638
  %9802 = vst.msk [vmem:[#allocation5 + $0x98] sm:$0xf] %vm4606, %v9640
  %9803 = vst.msk [vmem:[#allocation5 + $0x9c] sm:$0xf] %vm4606, %v9642
  %9804 = vst.msk [vmem:[#allocation5 + $0xa0] sm:$0xf] %vm4606, %v9644
  %9805 = vst.msk [vmem:[#allocation5 + $0xa4] sm:$0xf] %vm4606, %v9646
  %9806 = vst.msk [vmem:[#allocation5 + $0xa8] sm:$0xf] %vm4606, %v9648
  %9807 = vst.msk [vmem:[#allocation5 + $0xac] sm:$0xf] %vm4606, %v9650
  %9808 = vst.msk [vmem:[#allocation5 + $0xb0] sm:$0xf] %vm4606, %v9652
  %9809 = vst.msk [vmem:[#allocation5 + $0xb4] sm:$0xf] %vm4606, %v9654
  %9810 = vst.msk [vmem:[#allocation5 + $0xb8] sm:$0xf] %vm4606, %v9656
  %9811 = vst.msk [vmem:[#allocation5 + $0xbc] sm:$0xf] %vm4606, %v9658
  %9812 = vst.msk [vmem:[#allocation5 + $0xc0] sm:$0xf] %vm4606, %v9660
  %9813 = vst.msk [vmem:[#allocation5 + $0xc4] sm:$0xf] %vm4606, %v9662
  %9814 = vst.msk [vmem:[#allocation5 + $0xc8] sm:$0xf] %vm4606, %v9664
  %9815 = vst.msk [vmem:[#allocation5 + $0xcc] sm:$0xf] %vm4606, %v9666
  %9816 = vst.msk [vmem:[#allocation5 + $0xd0] sm:$0xf] %vm4606, %v9668
  %9817 = vst.msk [vmem:[#allocation5 + $0xd4] sm:$0xf] %vm4606, %v9670
  %9818 = vst.msk [vmem:[#allocation5 + $0xd8] sm:$0xf] %vm4606, %v9672
  %9819 = vst.msk [vmem:[#allocation5 + $0xdc] sm:$0xf] %vm4606, %v9674
  %9820 = vst.msk [vmem:[#allocation5 + $0xe0] sm:$0xf] %vm4606, %v9676
  %9821 = vst.msk [vmem:[#allocation5 + $0xe4] sm:$0xf] %vm4606, %v9678
  %9822 = vst.msk [vmem:[#allocation5 + $0xe8] sm:$0xf] %vm4606, %v9680
  %9823 = vst.msk [vmem:[#allocation5 + $0xec] sm:$0xf] %vm4606, %v9682
  %9824 = vst.msk [vmem:[#allocation5 + $0xf0] sm:$0xf] %vm4606, %v9684
  %9825 = vst.msk [vmem:[#allocation5 + $0xf4] sm:$0xf] %vm4606, %v9686
  %9826 = vst.msk [vmem:[#allocation5 + $0xf8] sm:$0xf] %vm4606, %v9688
  %9827 = vst.msk [vmem:[#allocation5 + $0xfc] sm:$0xf] %vm4606, %v9690
  %9828 = vst.msk [vmem:[#allocation5 + $0x100] sm:$0xf] %vm4606, %v9692
  %9829 = vst.msk [vmem:[#allocation5 + $0x104] sm:$0xf] %vm4606, %v9694
  %9830 = vst.msk [vmem:[#allocation5 + $0x108] sm:$0xf] %vm4606, %v9696
  %v9831 = vld [vmem:[#allocation3 + $0x29] sm:$0xff]
  %v9832 = vld [vmem:[#allocation3 + $0x31] sm:$0xff]
  %v9833 = vld [vmem:[#allocation3 + $0x39] sm:$0xff]
  %v9834 = vld [vmem:[#allocation3 + $0x41] sm:$0xff]
  %v9835 = vld [vmem:[#allocation3 + $0x49] sm:$0xff]
  %v9836 = vld [vmem:[#allocation3 + $0x51] sm:$0xff]
  %v9837 = vld [vmem:[#allocation3 + $0x59] sm:$0xff]
  %v9838 = vld [vmem:[#allocation3 + $0x61] sm:$0xff]
  %v9839 = vld [vmem:[#allocation3 + $0x69] sm:$0xff]
  %v9840 = vld [vmem:[#allocation3 + $0x71] sm:$0xff]
  %v9841 = vld [vmem:[#allocation3 + $0x79] sm:$0xff]
  %v9842 = vld [vmem:[#allocation3 + $0x81] sm:$0xff]
  %v9843 = vld [vmem:[#allocation3 + $0x89] sm:$0xff]
  %v9844 = vld [vmem:[#allocation3 + $0x91] sm:$0xff]
  %v9845 = vld [vmem:[#allocation3 + $0x99] sm:$0xff]
  %v9846 = vld [vmem:[#allocation3 + $0xa1] sm:$0xff]
  %v9847 = vld [vmem:[#allocation3 + $0xa9] sm:$0xff]
  %v9848 = vld [vmem:[#allocation3 + $0xb1] sm:$0xff]
  %v9849 = vld [vmem:[#allocation3 + $0xb9] sm:$0xff]
  %v9850 = vld [vmem:[#allocation3 + $0xc1] sm:$0xff]
  %v9851 = vld [vmem:[#allocation3 + $0xc9] sm:$0xff]
  %v9852 = vld [vmem:[#allocation3 + $0xd1] sm:$0xff]
  %v9853 = vld [vmem:[#allocation3 + $0xd9] sm:$0xff]
  %v9854 = vld [vmem:[#allocation3 + $0xe1] sm:$0xff]
  %v9855 = vld [vmem:[#allocation3 + $0xe9] sm:$0xff]
  %v9856 = vld [vmem:[#allocation3 + $0xf1] sm:$0xff]
  %v9857 = vld [vmem:[#allocation3 + $0xf9] sm:$0xff]
  %v9858 = vld [vmem:[#allocation3 + $0x101] sm:$0xff]
  %v9859 = vld [vmem:[#allocation3 + $0x109] sm:$0xff]
  %v9860 = vld [vmem:[#allocation3 + $0x111] sm:$0xff]
  %v9861 = vld [vmem:[#allocation3 + $0x119] sm:$0xff]
  %v9862 = vld [vmem:[#allocation3 + $0x121] sm:$0xff]
  %v9863 = vld [vmem:[#allocation3 + $0x129] sm:$0xff]
  %v9864 = vld [vmem:[#allocation3 + $0x131] sm:$0xff]
  %v9865 = vld [vmem:[#allocation3 + $0x139] sm:$0xff]
  %v9866 = vld [vmem:[#allocation3 + $0x141] sm:$0xff]
  %v9867 = vld [vmem:[#allocation3 + $0x149] sm:$0xff]
  %v9868 = vld [vmem:[#allocation3 + $0x151] sm:$0xff]
  %v9869 = vld [vmem:[#allocation3 + $0x159] sm:$0xff]
  %v9870 = vld [vmem:[#allocation3 + $0x161] sm:$0xff]
  %v9871 = vld [vmem:[#allocation3 + $0x169] sm:$0xff]
  %v9872 = vld [vmem:[#allocation3 + $0x171] sm:$0xff]
  %v9873 = vld [vmem:[#allocation3 + $0x179] sm:$0xff]
  %v9874 = vld [vmem:[#allocation3 + $0x181] sm:$0xff]
  %v9875 = vld [vmem:[#allocation3 + $0x189] sm:$0xff]
  %v9876 = vld [vmem:[#allocation3 + $0x191] sm:$0xff]
  %v9877 = vld [vmem:[#allocation3 + $0x199] sm:$0xff]
  %v9878 = vld [vmem:[#allocation3 + $0x1a1] sm:$0xff]
  %v9879 = vld [vmem:[#allocation3 + $0x1a9] sm:$0xff]
  %v9880 = vld [vmem:[#allocation3 + $0x1b1] sm:$0xff]
  %v9881 = vld [vmem:[#allocation3 + $0x1b9] sm:$0xff]
  %v9882 = vld [vmem:[#allocation3 + $0x1c1] sm:$0xff]
  %v9883 = vld [vmem:[#allocation3 + $0x1c9] sm:$0xff]
  %v9884 = vld [vmem:[#allocation3 + $0x1d1] sm:$0xff]
  %v9885 = vld [vmem:[#allocation3 + $0x1d9] sm:$0xff]
  %v9886 = vld [vmem:[#allocation3 + $0x1e1] sm:$0xff]
  %v9887 = vld [vmem:[#allocation3 + $0x1e9] sm:$0xff]
  %v9888 = vld [vmem:[#allocation3 + $0x1f1] sm:$0xff]
  %v9889 = vld [vmem:[#allocation3 + $0x1f9] sm:$0xff]
  %v9890 = vld [vmem:[#allocation3 + $0x201] sm:$0xff]
  %v9891 = vld [vmem:[#allocation3 + $0x209] sm:$0xff]
  %v9892 = vld [vmem:[#allocation3 + $0x211] sm:$0xff]
  %v9893 = vld [vmem:[#allocation3 + $0x219] sm:$0xff]
  %v9894 = vld [vmem:[#allocation3 + $0x221] sm:$0xff]
  %v9895 = vld [vmem:[#allocation3 + $0x229] sm:$0xff]
  %v9896 = vld [vmem:[#allocation3 + $0x231] sm:$0xff]
  %v9897 = vld [vmem:[#allocation3 + $0x239] sm:$0xff]
  %v9898 = vmul.f32 %v9831, %v1387
  %v9899 = vmul.f32 %v9832, %v1391
  %v9900 = vmul.f32 %v9833, %v1395
  %v9901 = vmul.f32 %v9834, %v1399
  %v9902 = vmul.f32 %v9835, %v1403
  %v9903 = vmul.f32 %v9836, %v1407
  %v9904 = vmul.f32 %v9837, %v1411
  %v9905 = vmul.f32 %v9838, %v1415
  %v9906 = vmul.f32 %v9839, %v1419
  %v9907 = vmul.f32 %v9840, %v1423
  %v9908 = vmul.f32 %v9841, %v1427
  %v9909 = vmul.f32 %v9842, %v1431
  %v9910 = vmul.f32 %v9843, %v1435
  %v9911 = vmul.f32 %v9844, %v1439
  %v9912 = vmul.f32 %v9845, %v1443
  %v9913 = vmul.f32 %v9846, %v1447
  %v9914 = vmul.f32 %v9847, %v1451
  %v9915 = vmul.f32 %v9848, %v1455
  %v9916 = vmul.f32 %v9849, %v1459
  %v9917 = vmul.f32 %v9850, %v1463
  %v9918 = vmul.f32 %v9851, %v1467
  %v9919 = vmul.f32 %v9852, %v1471
  %v9920 = vmul.f32 %v9853, %v1475
  %v9921 = vmul.f32 %v9854, %v1479
  %v9922 = vmul.f32 %v9855, %v1483
  %v9923 = vmul.f32 %v9856, %v1487
  %v9924 = vmul.f32 %v9857, %v1491
  %v9925 = vmul.f32 %v9858, %v1495
  %v9926 = vmul.f32 %v9859, %v1499
  %v9927 = vmul.f32 %v9860, %v1503
  %v9928 = vmul.f32 %v9861, %v1507
  %v9929 = vmul.f32 %v9862, %v1511
  %v9930 = vmul.f32 %v9863, %v1515
  %v9931 = vmul.f32 %v9864, %v1519
  %v9932 = vmul.f32 %v9865, %v1523
  %v9933 = vmul.f32 %v9866, %v1527
  %v9934 = vmul.f32 %v9867, %v1531
  %v9935 = vmul.f32 %v9868, %v1535
  %v9936 = vmul.f32 %v9869, %v1539
  %v9937 = vmul.f32 %v9870, %v1543
  %v9938 = vmul.f32 %v9871, %v1547
  %v9939 = vmul.f32 %v9872, %v1551
  %v9940 = vmul.f32 %v9873, %v1555
  %v9941 = vmul.f32 %v9874, %v1559
  %v9942 = vmul.f32 %v9875, %v1563
  %v9943 = vmul.f32 %v9876, %v1567
  %v9944 = vmul.f32 %v9877, %v1571
  %v9945 = vmul.f32 %v9878, %v1575
  %v9946 = vmul.f32 %v9879, %v1579
  %v9947 = vmul.f32 %v9880, %v1583
  %v9948 = vmul.f32 %v9881, %v1587
  %v9949 = vmul.f32 %v9882, %v1591
  %v9950 = vmul.f32 %v9883, %v1595
  %v9951 = vmul.f32 %v9884, %v1599
  %v9952 = vmul.f32 %v9885, %v1603
  %v9953 = vmul.f32 %v9886, %v1607
  %v9954 = vmul.f32 %v9887, %v1611
  %v9955 = vmul.f32 %v9888, %v1615
  %v9956 = vmul.f32 %v9889, %v1619
  %v9957 = vmul.f32 %v9890, %v1623
  %v9958 = vmul.f32 %v9891, %v1627
  %v9959 = vmul.f32 %v9892, %v1631
  %v9960 = vmul.f32 %v9893, %v1635
  %v9961 = vmul.f32 %v9894, %v1639
  %v9962 = vmul.f32 %v9895, %v1643
  %v9963 = vmul.f32 %v9896, %v1647
  %v9964 = vmul.f32 %v9897, %v1651
  %v9965 = vpack.c.bf16 %v9898, %v9898
  %v9966 = vpack.c.bf16 %v9899, %v9899
  %v9967 = vpack.c.bf16 %v9900, %v9900
  %v9968 = vpack.c.bf16 %v9901, %v9901
  %v9969 = vpack.c.bf16 %v9902, %v9902
  %v9970 = vpack.c.bf16 %v9903, %v9903
  %v9971 = vpack.c.bf16 %v9904, %v9904
  %v9972 = vpack.c.bf16 %v9905, %v9905
  %v9973 = vpack.c.bf16 %v9906, %v9906
  %v9974 = vpack.c.bf16 %v9907, %v9907
  %v9975 = vpack.c.bf16 %v9908, %v9908
  %v9976 = vpack.c.bf16 %v9909, %v9909
  %v9977 = vpack.c.bf16 %v9910, %v9910
  %v9978 = vpack.c.bf16 %v9911, %v9911
  %v9979 = vpack.c.bf16 %v9912, %v9912
  %v9980 = vpack.c.bf16 %v9913, %v9913
  %v9981 = vpack.c.bf16 %v9914, %v9914
  %v9982 = vpack.c.bf16 %v9915, %v9915
  %v9983 = vpack.c.bf16 %v9916, %v9916
  %v9984 = vpack.c.bf16 %v9917, %v9917
  %v9985 = vpack.c.bf16 %v9918, %v9918
  %v9986 = vpack.c.bf16 %v9919, %v9919
  %v9987 = vpack.c.bf16 %v9920, %v9920
  %v9988 = vpack.c.bf16 %v9921, %v9921
  %v9989 = vpack.c.bf16 %v9922, %v9922
  %v9990 = vpack.c.bf16 %v9923, %v9923
  %v9991 = vpack.c.bf16 %v9924, %v9924
  %v9992 = vpack.c.bf16 %v9925, %v9925
  %v9993 = vpack.c.bf16 %v9926, %v9926
  %v9994 = vpack.c.bf16 %v9927, %v9927
  %v9995 = vpack.c.bf16 %v9928, %v9928
  %v9996 = vpack.c.bf16 %v9929, %v9929
  %v9997 = vpack.c.bf16 %v9930, %v9930
  %v9998 = vpack.c.bf16 %v9931, %v9931
  %v9999 = vpack.c.bf16 %v9932, %v9932
  %v10000 = vpack.c.bf16 %v9933, %v9933
  %v10001 = vpack.c.bf16 %v9934, %v9934
  %v10002 = vpack.c.bf16 %v9935, %v9935
  %v10003 = vpack.c.bf16 %v9936, %v9936
  %v10004 = vpack.c.bf16 %v9937, %v9937
  %v10005 = vpack.c.bf16 %v9938, %v9938
  %v10006 = vpack.c.bf16 %v9939, %v9939
  %v10007 = vpack.c.bf16 %v9940, %v9940
  %v10008 = vpack.c.bf16 %v9941, %v9941
  %v10009 = vpack.c.bf16 %v9942, %v9942
  %v10010 = vpack.c.bf16 %v9943, %v9943
  %v10011 = vpack.c.bf16 %v9944, %v9944
  %v10012 = vpack.c.bf16 %v9945, %v9945
  %v10013 = vpack.c.bf16 %v9946, %v9946
  %v10014 = vpack.c.bf16 %v9947, %v9947
  %v10015 = vpack.c.bf16 %v9948, %v9948
  %v10016 = vpack.c.bf16 %v9949, %v9949
  %v10017 = vpack.c.bf16 %v9950, %v9950
  %v10018 = vpack.c.bf16 %v9951, %v9951
  %v10019 = vpack.c.bf16 %v9952, %v9952
  %v10020 = vpack.c.bf16 %v9953, %v9953
  %v10021 = vpack.c.bf16 %v9954, %v9954
  %v10022 = vpack.c.bf16 %v9955, %v9955
  %v10023 = vpack.c.bf16 %v9956, %v9956
  %v10024 = vpack.c.bf16 %v9957, %v9957
  %v10025 = vpack.c.bf16 %v9958, %v9958
  %v10026 = vpack.c.bf16 %v9959, %v9959
  %v10027 = vpack.c.bf16 %v9960, %v9960
  %v10028 = vpack.c.bf16 %v9961, %v9961
  %v10029 = vpack.c.bf16 %v9962, %v9962
  %v10030 = vpack.c.bf16 %v9963, %v9963
  %v10031 = vpack.c.bf16 %v9964, %v9964
  %10099 = vrot.lane.b32.xlu0 %v9965, 32
  %v10100 = vpop.permute.xlu0 %10099
  %10101 = vrot.lane.b32.xlu0 %v9966, 32
  %v10102 = vpop.permute.xlu0 %10101
  %10103 = vrot.lane.b32.xlu0 %v9967, 32
  %v10104 = vpop.permute.xlu0 %10103
  %10105 = vrot.lane.b32.xlu0 %v9968, 32
  %v10106 = vpop.permute.xlu0 %10105
  %10107 = vrot.lane.b32.xlu0 %v9969, 32
  %v10108 = vpop.permute.xlu0 %10107
  %10109 = vrot.lane.b32.xlu0 %v9970, 32
  %v10110 = vpop.permute.xlu0 %10109
  %10111 = vrot.lane.b32.xlu0 %v9971, 32
  %v10112 = vpop.permute.xlu0 %10111
  %10113 = vrot.lane.b32.xlu0 %v9972, 32
  %v10114 = vpop.permute.xlu0 %10113
  %10115 = vrot.lane.b32.xlu0 %v9973, 32
  %v10116 = vpop.permute.xlu0 %10115
  %10117 = vrot.lane.b32.xlu0 %v9974, 32
  %v10118 = vpop.permute.xlu0 %10117
  %10119 = vrot.lane.b32.xlu0 %v9975, 32
  %v10120 = vpop.permute.xlu0 %10119
  %10121 = vrot.lane.b32.xlu0 %v9976, 32
  %v10122 = vpop.permute.xlu0 %10121
  %10123 = vrot.lane.b32.xlu0 %v9977, 32
  %v10124 = vpop.permute.xlu0 %10123
  %10125 = vrot.lane.b32.xlu0 %v9978, 32
  %v10126 = vpop.permute.xlu0 %10125
  %10127 = vrot.lane.b32.xlu0 %v9979, 32
  %v10128 = vpop.permute.xlu0 %10127
  %10129 = vrot.lane.b32.xlu0 %v9980, 32
  %v10130 = vpop.permute.xlu0 %10129
  %10131 = vrot.lane.b32.xlu0 %v9981, 32
  %v10132 = vpop.permute.xlu0 %10131
  %10133 = vrot.lane.b32.xlu0 %v9982, 32
  %v10134 = vpop.permute.xlu0 %10133
  %10135 = vrot.lane.b32.xlu0 %v9983, 32
  %v10136 = vpop.permute.xlu0 %10135
  %10137 = vrot.lane.b32.xlu0 %v9984, 32
  %v10138 = vpop.permute.xlu0 %10137
  %10139 = vrot.lane.b32.xlu0 %v9985, 32
  %v10140 = vpop.permute.xlu0 %10139
  %10141 = vrot.lane.b32.xlu0 %v9986, 32
  %v10142 = vpop.permute.xlu0 %10141
  %10143 = vrot.lane.b32.xlu0 %v9987, 32
  %v10144 = vpop.permute.xlu0 %10143
  %10145 = vrot.lane.b32.xlu0 %v9988, 32
  %v10146 = vpop.permute.xlu0 %10145
  %10147 = vrot.lane.b32.xlu0 %v9989, 32
  %v10148 = vpop.permute.xlu0 %10147
  %10149 = vrot.lane.b32.xlu0 %v9990, 32
  %v10150 = vpop.permute.xlu0 %10149
  %10151 = vrot.lane.b32.xlu0 %v9991, 32
  %v10152 = vpop.permute.xlu0 %10151
  %10153 = vrot.lane.b32.xlu0 %v9992, 32
  %v10154 = vpop.permute.xlu0 %10153
  %10155 = vrot.lane.b32.xlu0 %v9993, 32
  %v10156 = vpop.permute.xlu0 %10155
  %10157 = vrot.lane.b32.xlu0 %v9994, 32
  %v10158 = vpop.permute.xlu0 %10157
  %10159 = vrot.lane.b32.xlu0 %v9995, 32
  %v10160 = vpop.permute.xlu0 %10159
  %10161 = vrot.lane.b32.xlu0 %v9996, 32
  %v10162 = vpop.permute.xlu0 %10161
  %10163 = vrot.lane.b32.xlu0 %v9997, 32
  %v10164 = vpop.permute.xlu0 %10163
  %10165 = vrot.lane.b32.xlu0 %v9998, 32
  %v10166 = vpop.permute.xlu0 %10165
  %10167 = vrot.lane.b32.xlu0 %v9999, 32
  %v10168 = vpop.permute.xlu0 %10167
  %10169 = vrot.lane.b32.xlu0 %v10000, 32
  %v10170 = vpop.permute.xlu0 %10169
  %10171 = vrot.lane.b32.xlu0 %v10001, 32
  %v10172 = vpop.permute.xlu0 %10171
  %10173 = vrot.lane.b32.xlu0 %v10002, 32
  %v10174 = vpop.permute.xlu0 %10173
  %10175 = vrot.lane.b32.xlu0 %v10003, 32
  %v10176 = vpop.permute.xlu0 %10175
  %10177 = vrot.lane.b32.xlu0 %v10004, 32
  %v10178 = vpop.permute.xlu0 %10177
  %10179 = vrot.lane.b32.xlu0 %v10005, 32
  %v10180 = vpop.permute.xlu0 %10179
  %10181 = vrot.lane.b32.xlu0 %v10006, 32
  %v10182 = vpop.permute.xlu0 %10181
  %10183 = vrot.lane.b32.xlu0 %v10007, 32
  %v10184 = vpop.permute.xlu0 %10183
  %10185 = vrot.lane.b32.xlu0 %v10008, 32
  %v10186 = vpop.permute.xlu0 %10185
  %10187 = vrot.lane.b32.xlu0 %v10009, 32
  %v10188 = vpop.permute.xlu0 %10187
  %10189 = vrot.lane.b32.xlu0 %v10010, 32
  %v10190 = vpop.permute.xlu0 %10189
  %10191 = vrot.lane.b32.xlu0 %v10011, 32
  %v10192 = vpop.permute.xlu0 %10191
  %10193 = vrot.lane.b32.xlu0 %v10012, 32
  %v10194 = vpop.permute.xlu0 %10193
  %10195 = vrot.lane.b32.xlu0 %v10013, 32
  %v10196 = vpop.permute.xlu0 %10195
  %10197 = vrot.lane.b32.xlu0 %v10014, 32
  %v10198 = vpop.permute.xlu0 %10197
  %10199 = vrot.lane.b32.xlu0 %v10015, 32
  %v10200 = vpop.permute.xlu0 %10199
  %10201 = vrot.lane.b32.xlu0 %v10016, 32
  %v10202 = vpop.permute.xlu0 %10201
  %10203 = vrot.lane.b32.xlu0 %v10017, 32
  %v10204 = vpop.permute.xlu0 %10203
  %10205 = vrot.lane.b32.xlu0 %v10018, 32
  %v10206 = vpop.permute.xlu0 %10205
  %10207 = vrot.lane.b32.xlu0 %v10019, 32
  %v10208 = vpop.permute.xlu0 %10207
  %10209 = vrot.lane.b32.xlu0 %v10020, 32
  %v10210 = vpop.permute.xlu0 %10209
  %10211 = vrot.lane.b32.xlu0 %v10021, 32
  %v10212 = vpop.permute.xlu0 %10211
  %10213 = vrot.lane.b32.xlu0 %v10022, 32
  %v10214 = vpop.permute.xlu0 %10213
  %10215 = vrot.lane.b32.xlu0 %v10023, 32
  %v10216 = vpop.permute.xlu0 %10215
  %10217 = vrot.lane.b32.xlu0 %v10024, 32
  %v10218 = vpop.permute.xlu0 %10217
  %10219 = vrot.lane.b32.xlu0 %v10025, 32
  %v10220 = vpop.permute.xlu0 %10219
  %10221 = vrot.lane.b32.xlu0 %v10026, 32
  %v10222 = vpop.permute.xlu0 %10221
  %10223 = vrot.lane.b32.xlu0 %v10027, 32
  %v10224 = vpop.permute.xlu0 %10223
  %10225 = vrot.lane.b32.xlu0 %v10028, 32
  %v10226 = vpop.permute.xlu0 %10225
  %10227 = vrot.lane.b32.xlu0 %v10029, 32
  %v10228 = vpop.permute.xlu0 %10227
  %10229 = vrot.lane.b32.xlu0 %v10030, 32
  %v10230 = vpop.permute.xlu0 %10229
  %10231 = vrot.lane.b32.xlu0 %v10031, 32
  %v10232 = vpop.permute.xlu0 %10231
  %10300 = vst.msk [vmem:[#allocation5] sm:$0xf] %vm5143, %v10100
  %10301 = vst.msk [vmem:[#allocation5 + $0x4] sm:$0xf] %vm5143, %v10102
  %10302 = vst.msk [vmem:[#allocation5 + $0x8] sm:$0xf] %vm5143, %v10104
  %10303 = vst.msk [vmem:[#allocation5 + $0xc] sm:$0xf] %vm5143, %v10106
  %10304 = vst.msk [vmem:[#allocation5 + $0x10] sm:$0xf] %vm5143, %v10108
  %10305 = vst.msk [vmem:[#allocation5 + $0x14] sm:$0xf] %vm5143, %v10110
  %10306 = vst.msk [vmem:[#allocation5 + $0x18] sm:$0xf] %vm5143, %v10112
  %10307 = vst.msk [vmem:[#allocation5 + $0x1c] sm:$0xf] %vm5143, %v10114
  %10308 = vst.msk [vmem:[#allocation5 + $0x20] sm:$0xf] %vm5143, %v10116
  %10309 = vst.msk [vmem:[#allocation5 + $0x24] sm:$0xf] %vm5143, %v10118
  %10310 = vst.msk [vmem:[#allocation5 + $0x28] sm:$0xf] %vm5143, %v10120
  %10311 = vst.msk [vmem:[#allocation5 + $0x2c] sm:$0xf] %vm5143, %v10122
  %10312 = vst.msk [vmem:[#allocation5 + $0x30] sm:$0xf] %vm5143, %v10124
  %10313 = vst.msk [vmem:[#allocation5 + $0x34] sm:$0xf] %vm5143, %v10126
  %10314 = vst.msk [vmem:[#allocation5 + $0x38] sm:$0xf] %vm5143, %v10128
  %10315 = vst.msk [vmem:[#allocation5 + $0x3c] sm:$0xf] %vm5143, %v10130
  %10316 = vst.msk [vmem:[#allocation5 + $0x40] sm:$0xf] %vm5143, %v10132
  %10317 = vst.msk [vmem:[#allocation5 + $0x44] sm:$0xf] %vm5143, %v10134
  %10318 = vst.msk [vmem:[#allocation5 + $0x48] sm:$0xf] %vm5143, %v10136
  %10319 = vst.msk [vmem:[#allocation5 + $0x4c] sm:$0xf] %vm5143, %v10138
  %10320 = vst.msk [vmem:[#allocation5 + $0x50] sm:$0xf] %vm5143, %v10140
  %10321 = vst.msk [vmem:[#allocation5 + $0x54] sm:$0xf] %vm5143, %v10142
  %10322 = vst.msk [vmem:[#allocation5 + $0x58] sm:$0xf] %vm5143, %v10144
  %10323 = vst.msk [vmem:[#allocation5 + $0x5c] sm:$0xf] %vm5143, %v10146
  %10324 = vst.msk [vmem:[#allocation5 + $0x60] sm:$0xf] %vm5143, %v10148
  %10325 = vst.msk [vmem:[#allocation5 + $0x64] sm:$0xf] %vm5143, %v10150
  %10326 = vst.msk [vmem:[#allocation5 + $0x68] sm:$0xf] %vm5143, %v10152
  %10327 = vst.msk [vmem:[#allocation5 + $0x6c] sm:$0xf] %vm5143, %v10154
  %10328 = vst.msk [vmem:[#allocation5 + $0x70] sm:$0xf] %vm5143, %v10156
  %10329 = vst.msk [vmem:[#allocation5 + $0x74] sm:$0xf] %vm5143, %v10158
  %10330 = vst.msk [vmem:[#allocation5 + $0x78] sm:$0xf] %vm5143, %v10160
  %10331 = vst.msk [vmem:[#allocation5 + $0x7c] sm:$0xf] %vm5143, %v10162
  %10332 = vst.msk [vmem:[#allocation5 + $0x80] sm:$0xf] %vm5143, %v10164
  %10333 = vst.msk [vmem:[#allocation5 + $0x84] sm:$0xf] %vm5143, %v10166
  %10334 = vst.msk [vmem:[#allocation5 + $0x88] sm:$0xf] %vm5143, %v10168
  %10335 = vst.msk [vmem:[#allocation5 + $0x8c] sm:$0xf] %vm5143, %v10170
  %10336 = vst.msk [vmem:[#allocation5 + $0x90] sm:$0xf] %vm5143, %v10172
  %10337 = vst.msk [vmem:[#allocation5 + $0x94] sm:$0xf] %vm5143, %v10174
  %10338 = vst.msk [vmem:[#allocation5 + $0x98] sm:$0xf] %vm5143, %v10176
  %10339 = vst.msk [vmem:[#allocation5 + $0x9c] sm:$0xf] %vm5143, %v10178
  %10340 = vst.msk [vmem:[#allocation5 + $0xa0] sm:$0xf] %vm5143, %v10180
  %10341 = vst.msk [vmem:[#allocation5 + $0xa4] sm:$0xf] %vm5143, %v10182
  %10342 = vst.msk [vmem:[#allocation5 + $0xa8] sm:$0xf] %vm5143, %v10184
  %10343 = vst.msk [vmem:[#allocation5 + $0xac] sm:$0xf] %vm5143, %v10186
  %10344 = vst.msk [vmem:[#allocation5 + $0xb0] sm:$0xf] %vm5143, %v10188
  %10345 = vst.msk [vmem:[#allocation5 + $0xb4] sm:$0xf] %vm5143, %v10190
  %10346 = vst.msk [vmem:[#allocation5 + $0xb8] sm:$0xf] %vm5143, %v10192
  %10347 = vst.msk [vmem:[#allocation5 + $0xbc] sm:$0xf] %vm5143, %v10194
  %10348 = vst.msk [vmem:[#allocation5 + $0xc0] sm:$0xf] %vm5143, %v10196
  %10349 = vst.msk [vmem:[#allocation5 + $0xc4] sm:$0xf] %vm5143, %v10198
  %10350 = vst.msk [vmem:[#allocation5 + $0xc8] sm:$0xf] %vm5143, %v10200
  %10351 = vst.msk [vmem:[#allocation5 + $0xcc] sm:$0xf] %vm5143, %v10202
  %10352 = vst.msk [vmem:[#allocation5 + $0xd0] sm:$0xf] %vm5143, %v10204
  %10353 = vst.msk [vmem:[#allocation5 + $0xd4] sm:$0xf] %vm5143, %v10206
  %10354 = vst.msk [vmem:[#allocation5 + $0xd8] sm:$0xf] %vm5143, %v10208
  %10355 = vst.msk [vmem:[#allocation5 + $0xdc] sm:$0xf] %vm5143, %v10210
  %10356 = vst.msk [vmem:[#allocation5 + $0xe0] sm:$0xf] %vm5143, %v10212
  %10357 = vst.msk [vmem:[#allocation5 + $0xe4] sm:$0xf] %vm5143, %v10214
  %10358 = vst.msk [vmem:[#allocation5 + $0xe8] sm:$0xf] %vm5143, %v10216
  %10359 = vst.msk [vmem:[#allocation5 + $0xec] sm:$0xf] %vm5143, %v10218
  %10360 = vst.msk [vmem:[#allocation5 + $0xf0] sm:$0xf] %vm5143, %v10220
  %10361 = vst.msk [vmem:[#allocation5 + $0xf4] sm:$0xf] %vm5143, %v10222
  %10362 = vst.msk [vmem:[#allocation5 + $0xf8] sm:$0xf] %vm5143, %v10224
  %10363 = vst.msk [vmem:[#allocation5 + $0xfc] sm:$0xf] %vm5143, %v10226
  %10364 = vst.msk [vmem:[#allocation5 + $0x100] sm:$0xf] %vm5143, %v10228
  %10365 = vst.msk [vmem:[#allocation5 + $0x104] sm:$0xf] %vm5143, %v10230
  %10366 = vst.msk [vmem:[#allocation5 + $0x108] sm:$0xf] %vm5143, %v10232
  %v10367 = vld [vmem:[#allocation5] sm:$0xf]
  %v10368 = vld [vmem:[#allocation5 + $0x4] sm:$0xf]
  %v10369 = vld [vmem:[#allocation5 + $0x8] sm:$0xf]
  %v10370 = vld [vmem:[#allocation5 + $0xc] sm:$0xf]
  %v10371 = vld [vmem:[#allocation5 + $0x10] sm:$0xf]
  %v10372 = vld [vmem:[#allocation5 + $0x14] sm:$0xf]
  %v10373 = vld [vmem:[#allocation5 + $0x18] sm:$0xf]
  %v10374 = vld [vmem:[#allocation5 + $0x1c] sm:$0xf]
  %v10375 = vld [vmem:[#allocation5 + $0x20] sm:$0xf]
  %v10376 = vld [vmem:[#allocation5 + $0x24] sm:$0xf]
  %v10377 = vld [vmem:[#allocation5 + $0x28] sm:$0xf]
  %v10378 = vld [vmem:[#allocation5 + $0x2c] sm:$0xf]
  %v10379 = vld [vmem:[#allocation5 + $0x30] sm:$0xf]
  %v10380 = vld [vmem:[#allocation5 + $0x34] sm:$0xf]
  %v10381 = vld [vmem:[#allocation5 + $0x38] sm:$0xf]
  %v10382 = vld [vmem:[#allocation5 + $0x3c] sm:$0xf]
  %v10383 = vld [vmem:[#allocation5 + $0x40] sm:$0xf]
  %v10384 = vld [vmem:[#allocation5 + $0x44] sm:$0xf]
  %v10385 = vld [vmem:[#allocation5 + $0x48] sm:$0xf]
  %v10386 = vld [vmem:[#allocation5 + $0x4c] sm:$0xf]
  %v10387 = vld [vmem:[#allocation5 + $0x50] sm:$0xf]
  %v10388 = vld [vmem:[#allocation5 + $0x54] sm:$0xf]
  %v10389 = vld [vmem:[#allocation5 + $0x58] sm:$0xf]
  %v10390 = vld [vmem:[#allocation5 + $0x5c] sm:$0xf]
  %v10391 = vld [vmem:[#allocation5 + $0x60] sm:$0xf]
  %v10392 = vld [vmem:[#allocation5 + $0x64] sm:$0xf]
  %v10393 = vld [vmem:[#allocation5 + $0x68] sm:$0xf]
  %v10394 = vld [vmem:[#allocation5 + $0x6c] sm:$0xf]
  %v10395 = vld [vmem:[#allocation5 + $0x70] sm:$0xf]
  %v10396 = vld [vmem:[#allocation5 + $0x74] sm:$0xf]
  %v10397 = vld [vmem:[#allocation5 + $0x78] sm:$0xf]
  %v10398 = vld [vmem:[#allocation5 + $0x7c] sm:$0xf]
  %v10399 = vld [vmem:[#allocation5 + $0x80] sm:$0xf]
  %v10400 = vld [vmem:[#allocation5 + $0x84] sm:$0xf]
  %v10401 = vld [vmem:[#allocation5 + $0x88] sm:$0xf]
  %v10402 = vld [vmem:[#allocation5 + $0x8c] sm:$0xf]
  %v10403 = vld [vmem:[#allocation5 + $0x90] sm:$0xf]
  %v10404 = vld [vmem:[#allocation5 + $0x94] sm:$0xf]
  %v10405 = vld [vmem:[#allocation5 + $0x98] sm:$0xf]
  %v10406 = vld [vmem:[#allocation5 + $0x9c] sm:$0xf]
  %v10407 = vld [vmem:[#allocation5 + $0xa0] sm:$0xf]
  %v10408 = vld [vmem:[#allocation5 + $0xa4] sm:$0xf]
  %v10409 = vld [vmem:[#allocation5 + $0xa8] sm:$0xf]
  %v10410 = vld [vmem:[#allocation5 + $0xac] sm:$0xf]
  %v10411 = vld [vmem:[#allocation5 + $0xb0] sm:$0xf]
  %v10412 = vld [vmem:[#allocation5 + $0xb4] sm:$0xf]
  %v10413 = vld [vmem:[#allocation5 + $0xb8] sm:$0xf]
  %v10414 = vld [vmem:[#allocation5 + $0xbc] sm:$0xf]
  %v10415 = vld [vmem:[#allocation5 + $0xc0] sm:$0xf]
  %v10416 = vld [vmem:[#allocation5 + $0xc4] sm:$0xf]
  %v10417 = vld [vmem:[#allocation5 + $0xc8] sm:$0xf]
  %v10418 = vld [vmem:[#allocation5 + $0xcc] sm:$0xf]
  %v10419 = vld [vmem:[#allocation5 + $0xd0] sm:$0xf]
  %v10420 = vld [vmem:[#allocation5 + $0xd4] sm:$0xf]
  %v10421 = vld [vmem:[#allocation5 + $0xd8] sm:$0xf]
  %v10422 = vld [vmem:[#allocation5 + $0xdc] sm:$0xf]
  %v10423 = vld [vmem:[#allocation5 + $0xe0] sm:$0xf]
  %v10424 = vld [vmem:[#allocation5 + $0xe4] sm:$0xf]
  %v10425 = vld [vmem:[#allocation5 + $0xe8] sm:$0xf]
  %v10426 = vld [vmem:[#allocation5 + $0xec] sm:$0xf]
  %v10427 = vld [vmem:[#allocation5 + $0xf0] sm:$0xf]
  %v10428 = vld [vmem:[#allocation5 + $0xf4] sm:$0xf]
  %v10429 = vld [vmem:[#allocation5 + $0xf8] sm:$0xf]
  %v10430 = vld [vmem:[#allocation5 + $0xfc] sm:$0xf]
  %v10431 = vld [vmem:[#allocation5 + $0x100] sm:$0xf]
  %v10432 = vld [vmem:[#allocation5 + $0x104] sm:$0xf]
  %v10433 = vld [vmem:[#allocation5 + $0x108] sm:$0xf]
  %v10434 = vld [vmem:[%s5] sm:$0xf]
  %v10435 = vld [vmem:[%s5 + $0x4] sm:$0xf]
  %v10436 = vld [vmem:[%s5 + $0x8] sm:$0xf]
  %v10437 = vld [vmem:[%s5 + $0xc] sm:$0xf]
  %v10438 = vld [vmem:[%s5 + $0x10] sm:$0x3]
  %v10506 = vunpack.c.l.b16 %v10367
  %v10507 = vunpack.c.l.b16 %v10368
  %v10508 = vunpack.c.l.b16 %v10369
  %v10509 = vunpack.c.l.b16 %v10370
  %v10510 = vunpack.c.l.b16 %v10371
  %v10511 = vunpack.c.l.b16 %v10372
  %v10512 = vunpack.c.l.b16 %v10373
  %v10513 = vunpack.c.l.b16 %v10374
  %v10514 = vunpack.c.l.b16 %v10375
  %v10515 = vunpack.c.l.b16 %v10376
  %v10516 = vunpack.c.l.b16 %v10377
  %v10517 = vunpack.c.l.b16 %v10378
  %v10518 = vunpack.c.l.b16 %v10379
  %v10519 = vunpack.c.l.b16 %v10380
  %v10520 = vunpack.c.l.b16 %v10381
  %v10521 = vunpack.c.l.b16 %v10382
  %v10522 = vunpack.c.l.b16 %v10383
  %v10523 = vunpack.c.l.b16 %v10384
  %v10524 = vunpack.c.l.b16 %v10385
  %v10525 = vunpack.c.l.b16 %v10386
  %v10526 = vunpack.c.l.b16 %v10387
  %v10527 = vunpack.c.l.b16 %v10388
  %v10528 = vunpack.c.l.b16 %v10389
  %v10529 = vunpack.c.l.b16 %v10390
  %v10530 = vunpack.c.l.b16 %v10391
  %v10531 = vunpack.c.l.b16 %v10392
  %v10532 = vunpack.c.l.b16 %v10393
  %v10533 = vunpack.c.l.b16 %v10394
  %v10534 = vunpack.c.l.b16 %v10395
  %v10535 = vunpack.c.l.b16 %v10396
  %v10536 = vunpack.c.l.b16 %v10397
  %v10537 = vunpack.c.l.b16 %v10398
  %v10538 = vunpack.c.l.b16 %v10399
  %v10539 = vunpack.c.l.b16 %v10400
  %v10540 = vunpack.c.l.b16 %v10401
  %v10541 = vunpack.c.l.b16 %v10402
  %v10542 = vunpack.c.l.b16 %v10403
  %v10543 = vunpack.c.l.b16 %v10404
  %v10544 = vunpack.c.l.b16 %v10405
  %v10545 = vunpack.c.l.b16 %v10406
  %v10546 = vunpack.c.l.b16 %v10407
  %v10547 = vunpack.c.l.b16 %v10408
  %v10548 = vunpack.c.l.b16 %v10409
  %v10549 = vunpack.c.l.b16 %v10410
  %v10550 = vunpack.c.l.b16 %v10411
  %v10551 = vunpack.c.l.b16 %v10412
  %v10552 = vunpack.c.l.b16 %v10413
  %v10553 = vunpack.c.l.b16 %v10414
  %v10554 = vunpack.c.l.b16 %v10415
  %v10555 = vunpack.c.l.b16 %v10416
  %v10556 = vunpack.c.l.b16 %v10417
  %v10557 = vunpack.c.l.b16 %v10418
  %v10558 = vunpack.c.l.b16 %v10419
  %v10559 = vunpack.c.l.b16 %v10420
  %v10560 = vunpack.c.l.b16 %v10421
  %v10561 = vunpack.c.l.b16 %v10422
  %v10562 = vunpack.c.l.b16 %v10423
  %v10563 = vunpack.c.l.b16 %v10424
  %v10564 = vunpack.c.l.b16 %v10425
  %v10565 = vunpack.c.l.b16 %v10426
  %v10566 = vunpack.c.l.b16 %v10427
  %v10567 = vunpack.c.l.b16 %v10428
  %v10568 = vunpack.c.l.b16 %v10429
  %v10569 = vunpack.c.l.b16 %v10430
  %v10570 = vunpack.c.l.b16 %v10431
  %v10571 = vunpack.c.l.b16 %v10432
  %v10572 = vunpack.c.l.b16 %v10433
  %v10573 = vpack.c.b16 %v10507, %v10506
  %v10574 = vpack.c.b16 %v10509, %v10508
  %v10575 = vpack.c.b16 %v10511, %v10510
  %v10576 = vpack.c.b16 %v10513, %v10512
  %v10577 = vpack.c.b16 %v10515, %v10514
  %v10578 = vpack.c.b16 %v10517, %v10516
  %v10579 = vpack.c.b16 %v10519, %v10518
  %v10580 = vpack.c.b16 %v10521, %v10520
  %v10581 = vpack.c.b16 %v10523, %v10522
  %v10582 = vpack.c.b16 %v10525, %v10524
  %v10583 = vpack.c.b16 %v10527, %v10526
  %v10584 = vpack.c.b16 %v10529, %v10528
  %v10585 = vpack.c.b16 %v10531, %v10530
  %v10586 = vpack.c.b16 %v10533, %v10532
  %v10587 = vpack.c.b16 %v10535, %v10534
  %v10588 = vpack.c.b16 %v10537, %v10536
  %v10589 = vpack.c.b16 %v10539, %v10538
  %v10590 = vpack.c.b16 %v10541, %v10540
  %v10591 = vpack.c.b16 %v10543, %v10542
  %v10592 = vpack.c.b16 %v10545, %v10544
  %v10593 = vpack.c.b16 %v10547, %v10546
  %v10594 = vpack.c.b16 %v10549, %v10548
  %v10595 = vpack.c.b16 %v10551, %v10550
  %v10596 = vpack.c.b16 %v10553, %v10552
  %v10597 = vpack.c.b16 %v10555, %v10554
  %v10598 = vpack.c.b16 %v10557, %v10556
  %v10599 = vpack.c.b16 %v10559, %v10558
  %v10600 = vpack.c.b16 %v10561, %v10560
  %v10601 = vpack.c.b16 %v10563, %v10562
  %v10602 = vpack.c.b16 %v10565, %v10564
  %v10603 = vpack.c.b16 %v10567, %v10566
  %v10604 = vpack.c.b16 %v10569, %v10568
  %v10605 = vpack.c.b16 %v10571, %v10570
  %v10606 = vpack.c.b16 %v10572, %v10572
  %v10612 = vunpack.c.l.b16 %v10434
  %v10613 = vunpack.c.l.b16 %v10435
  %v10614 = vunpack.c.l.b16 %v10436
  %v10615 = vunpack.c.l.b16 %v10437
  %v10616 = vunpack.c.l.b16 %v10438
  %v10617 = vpack.c.b16 %v10613, %v10612
  %v10618 = vpack.c.b16 %v10615, %v10614
  %v10619 = vpack.c.b16 %v10616, %v10616
  %v10623 = vsel %vm5466, %v10573, 0
  %v10626 = vsel %vm5466, %v10574, 0
  %v10629 = vsel %vm5466, %v10575, 0
  %v10632 = vsel %vm5466, %v10576, 0
  %v10635 = vsel %vm5466, %v10577, 0
  %v10638 = vsel %vm5466, %v10578, 0
  %v10641 = vsel %vm5466, %v10579, 0
  %v10644 = vsel %vm5466, %v10580, 0
  %v10647 = vsel %vm5466, %v10581, 0
  %v10650 = vsel %vm5466, %v10582, 0
  %v10653 = vsel %vm5466, %v10583, 0
  %v10656 = vsel %vm5466, %v10584, 0
  %v10659 = vsel %vm5466, %v10585, 0
  %v10662 = vsel %vm5466, %v10586, 0
  %v10665 = vsel %vm5466, %v10587, 0
  %v10668 = vsel %vm5466, %v10588, 0
  %v10671 = vsel %vm5466, %v10589, 0
  %v10674 = vsel %vm5466, %v10590, 0
  %v10677 = vsel %vm5466, %v10591, 0
  %v10680 = vsel %vm5466, %v10592, 0
  %v10683 = vsel %vm5466, %v10593, 0
  %v10686 = vsel %vm5466, %v10594, 0
  %v10689 = vsel %vm5466, %v10595, 0
  %v10692 = vsel %vm5466, %v10596, 0
  %v10695 = vsel %vm5466, %v10597, 0
  %v10698 = vsel %vm5466, %v10598, 0
  %v10701 = vsel %vm5466, %v10599, 0
  %v10704 = vsel %vm5466, %v10600, 0
  %v10707 = vsel %vm5466, %v10601, 0
  %v10710 = vsel %vm5466, %v10602, 0
  %v10713 = vsel %vm5466, %v10603, 0
  %v10716 = vsel %vm5466, %v10604, 0
  %v10719 = vsel %vm5466, %v10605, 0
  %v10722 = vsel %vm5466, %v10606, 0
  %v10725 = vsel %vm5569, %v10619, 0
  %10727 = vmatpush.bf16.msra.mxu0 0
  %10728 = vmatpush.bf16.msra.mxu0 0
  %10729 = vmatpush.bf16.msra.mxu0 0
  %10730 = vmatpush.bf16.msra.mxu0 0
  %10731 = vmatpush.bf16.msra.mxu0 0
  %10732 = vmatpush.bf16.msra.mxu0 %v10725
  %10733 = vmatpush.bf16.msra.mxu0 %v10618
  %10734 = vmatpush.bf16.msra.mxu0 %v10617
  %10735 = vmatmul.bf16.gmra.mxu0 %v10623
  %v10736 = vpop.f32.mrf.mxu0
  %v10737 = vadd.f32 0.0, %v10736
  %v10738 = vpop.f32.mrf.mxu0
  %v10739 = vadd.f32 0.0, %v10738
  %10740 = vmatmul.bf16.gmra.mxu0 %v10626
  %v10741 = vpop.f32.mrf.mxu0
  %v10742 = vadd.f32 0.0, %v10741
  %v10743 = vpop.f32.mrf.mxu0
  %v10744 = vadd.f32 0.0, %v10743
  %10745 = vmatmul.bf16.gmra.mxu0 %v10629
  %v10746 = vpop.f32.mrf.mxu0
  %v10747 = vadd.f32 0.0, %v10746
  %v10748 = vpop.f32.mrf.mxu0
  %v10749 = vadd.f32 0.0, %v10748
  %10750 = vmatmul.bf16.gmra.mxu0 %v10632
  %v10751 = vpop.f32.mrf.mxu0
  %v10752 = vadd.f32 0.0, %v10751
  %v10753 = vpop.f32.mrf.mxu0
  %v10754 = vadd.f32 0.0, %v10753
  %10755 = vmatmul.bf16.gmra.mxu0 %v10635
  %v10756 = vpop.f32.mrf.mxu0
  %v10757 = vadd.f32 0.0, %v10756
  %v10758 = vpop.f32.mrf.mxu0
  %v10759 = vadd.f32 0.0, %v10758
  %10760 = vmatmul.bf16.gmra.mxu0 %v10638
  %v10761 = vpop.f32.mrf.mxu0
  %v10762 = vadd.f32 0.0, %v10761
  %v10763 = vpop.f32.mrf.mxu0
  %v10764 = vadd.f32 0.0, %v10763
  %10765 = vmatmul.bf16.gmra.mxu0 %v10641
  %v10766 = vpop.f32.mrf.mxu0
  %v10767 = vadd.f32 0.0, %v10766
  %v10768 = vpop.f32.mrf.mxu0
  %v10769 = vadd.f32 0.0, %v10768
  %10770 = vmatmul.bf16.gmra.mxu0 %v10644
  %v10771 = vpop.f32.mrf.mxu0
  %v10772 = vadd.f32 0.0, %v10771
  %v10773 = vpop.f32.mrf.mxu0
  %v10774 = vadd.f32 0.0, %v10773
  %10775 = vmatmul.bf16.gmra.mxu0 %v10647
  %v10776 = vpop.f32.mrf.mxu0
  %v10777 = vadd.f32 0.0, %v10776
  %v10778 = vpop.f32.mrf.mxu0
  %v10779 = vadd.f32 0.0, %v10778
  %10780 = vmatmul.bf16.gmra.mxu0 %v10650
  %v10781 = vpop.f32.mrf.mxu0
  %v10782 = vadd.f32 0.0, %v10781
  %v10783 = vpop.f32.mrf.mxu0
  %v10784 = vadd.f32 0.0, %v10783
  %10785 = vmatmul.bf16.gmra.mxu0 %v10653
  %v10786 = vpop.f32.mrf.mxu0
  %v10787 = vadd.f32 0.0, %v10786
  %v10788 = vpop.f32.mrf.mxu0
  %v10789 = vadd.f32 0.0, %v10788
  %10790 = vmatmul.bf16.gmra.mxu0 %v10656
  %v10791 = vpop.f32.mrf.mxu0
  %v10792 = vadd.f32 0.0, %v10791
  %v10793 = vpop.f32.mrf.mxu0
  %v10794 = vadd.f32 0.0, %v10793
  %10795 = vmatmul.bf16.gmra.mxu0 %v10659
  %v10796 = vpop.f32.mrf.mxu0
  %v10797 = vadd.f32 0.0, %v10796
  %v10798 = vpop.f32.mrf.mxu0
  %v10799 = vadd.f32 0.0, %v10798
  %10800 = vmatmul.bf16.gmra.mxu0 %v10662
  %v10801 = vpop.f32.mrf.mxu0
  %v10802 = vadd.f32 0.0, %v10801
  %v10803 = vpop.f32.mrf.mxu0
  %v10804 = vadd.f32 0.0, %v10803
  %10805 = vmatmul.bf16.gmra.mxu0 %v10665
  %v10806 = vpop.f32.mrf.mxu0
  %v10807 = vadd.f32 0.0, %v10806
  %v10808 = vpop.f32.mrf.mxu0
  %v10809 = vadd.f32 0.0, %v10808
  %10810 = vmatmul.bf16.gmra.mxu0 %v10668
  %v10811 = vpop.f32.mrf.mxu0
  %v10812 = vadd.f32 0.0, %v10811
  %v10813 = vpop.f32.mrf.mxu0
  %v10814 = vadd.f32 0.0, %v10813
  %10815 = vmatmul.bf16.gmra.mxu0 %v10671
  %v10816 = vpop.f32.mrf.mxu0
  %v10817 = vpop.f32.mrf.mxu0
  %10818 = vmatmul.bf16.gmra.mxu0 %v10674
  %v10819 = vpop.f32.mrf.mxu0
  %v10820 = vpop.f32.mrf.mxu0
  %v10821 = vadd.f32 0.0, %v10820
  %10822 = vmatmul.bf16.gmra.mxu0 %v10677
  %v10823 = vpop.f32.mrf.mxu0
  %v10824 = vadd.f32 0.0, %v10823
  %v10825 = vpop.f32.mrf.mxu0
  %v10826 = vadd.f32 0.0, %v10825
  %10827 = vmatmul.bf16.gmra.mxu0 %v10680
  %v10828 = vpop.f32.mrf.mxu0
  %v10829 = vadd.f32 0.0, %v10828
  %v10830 = vpop.f32.mrf.mxu0
  %v10831 = vadd.f32 0.0, %v10830
  %10832 = vmatmul.bf16.gmra.mxu0 %v10683
  %v10833 = vpop.f32.mrf.mxu0
  %v10834 = vadd.f32 0.0, %v10833
  %v10835 = vpop.f32.mrf.mxu0
  %v10836 = vadd.f32 0.0, %v10835
  %10837 = vmatmul.bf16.gmra.mxu0 %v10686
  %v10838 = vpop.f32.mrf.mxu0
  %v10839 = vadd.f32 0.0, %v10838
  %v10840 = vpop.f32.mrf.mxu0
  %v10841 = vadd.f32 0.0, %v10840
  %10842 = vmatmul.bf16.gmra.mxu0 %v10689
  %v10843 = vpop.f32.mrf.mxu0
  %v10844 = vadd.f32 0.0, %v10843
  %v10845 = vpop.f32.mrf.mxu0
  %v10846 = vadd.f32 0.0, %v10845
  %10847 = vmatmul.bf16.gmra.mxu0 %v10692
  %v10848 = vpop.f32.mrf.mxu0
  %v10849 = vadd.f32 0.0, %v10848
  %v10850 = vpop.f32.mrf.mxu0
  %v10851 = vadd.f32 0.0, %v10850
  %10852 = vmatmul.bf16.gmra.mxu0 %v10695
  %v10853 = vpop.f32.mrf.mxu0
  %v10854 = vadd.f32 0.0, %v10853
  %v10855 = vpop.f32.mrf.mxu0
  %v10856 = vadd.f32 0.0, %v10855
  %10857 = vmatmul.bf16.gmra.mxu0 %v10698
  %v10858 = vpop.f32.mrf.mxu0
  %v10859 = vadd.f32 0.0, %v10858
  %v10860 = vpop.f32.mrf.mxu0
  %v10861 = vadd.f32 0.0, %v10860
  %10862 = vmatmul.bf16.gmra.mxu0 %v10701
  %v10863 = vpop.f32.mrf.mxu0
  %v10864 = vadd.f32 0.0, %v10863
  %v10865 = vpop.f32.mrf.mxu0
  %v10866 = vadd.f32 0.0, %v10865
  %10867 = vmatmul.bf16.gmra.mxu0 %v10704
  %v10868 = vpop.f32.mrf.mxu0
  %v10869 = vadd.f32 0.0, %v10868
  %v10870 = vpop.f32.mrf.mxu0
  %v10871 = vadd.f32 0.0, %v10870
  %10872 = vmatmul.bf16.gmra.mxu0 %v10707
  %v10873 = vpop.f32.mrf.mxu0
  %v10874 = vadd.f32 0.0, %v10873
  %v10875 = vpop.f32.mrf.mxu0
  %v10876 = vadd.f32 0.0, %v10875
  %10877 = vmatmul.bf16.gmra.mxu0 %v10710
  %v10878 = vpop.f32.mrf.mxu0
  %v10879 = vadd.f32 0.0, %v10878
  %v10880 = vpop.f32.mrf.mxu0
  %v10881 = vadd.f32 0.0, %v10880
  %10882 = vmatmul.bf16.gmra.mxu0 %v10713
  %v10883 = vpop.f32.mrf.mxu0
  %v10884 = vadd.f32 0.0, %v10883
  %v10885 = vpop.f32.mrf.mxu0
  %v10886 = vadd.f32 0.0, %v10885
  %10887 = vmatmul.bf16.gmra.mxu0 %v10716
  %v10888 = vpop.f32.mrf.mxu0
  %v10889 = vadd.f32 0.0, %v10888
  %v10890 = vpop.f32.mrf.mxu0
  %v10891 = vadd.f32 0.0, %v10890
  %10892 = vmatmul.bf16.gmra.mxu0 %v10719
  %v10893 = vpop.f32.mrf.mxu0
  %v10894 = vadd.f32 0.0, %v10893
  %v10895 = vpop.f32.mrf.mxu0
  %v10896 = vadd.f32 0.0, %v10895
  %10897 = vmatmul.bf16.gmra.mxu0 %v10722
  %v10898 = vpop.f32.mrf.mxu0
  %v10899 = vadd.f32 0.0, %v10898
  %v10900 = vpop.f32.mrf.mxu0
  %10901 = vdwg.mxu0
  %v10902 = vld [vmem:[#allocation2 + $0x18] sm:$0xff]
  %v10903 = vld [vmem:[#allocation2 + $0x20] sm:$0xff]
  %v10904 = vld [vmem:[#allocation2 + $0x28] sm:$0xff]
  %v10905 = vld [vmem:[#allocation2 + $0x30] sm:$0xff]
  %v10906 = vld [vmem:[#allocation2 + $0x38] sm:$0xff]
  %v10907 = vld [vmem:[#allocation2 + $0x40] sm:$0xff]
  %v10908 = vld [vmem:[#allocation2 + $0x48] sm:$0xff]
  %v10909 = vld [vmem:[#allocation2 + $0x50] sm:$0xff]
  %v10910 = vld [vmem:[#allocation2 + $0x58] sm:$0xff]
  %v10911 = vld [vmem:[#allocation2 + $0x60] sm:$0xff]
  %v10912 = vld [vmem:[#allocation2 + $0x68] sm:$0xff]
  %v10913 = vld [vmem:[#allocation2 + $0x70] sm:$0xff]
  %v10914 = vld [vmem:[#allocation2 + $0x78] sm:$0xff]
  %v10915 = vld [vmem:[#allocation2 + $0x80] sm:$0xff]
  %v10916 = vld [vmem:[#allocation2 + $0x88] sm:$0xff]
  %v10917 = vld [vmem:[#allocation2 + $0x90] sm:$0xff]
  %v10918 = vld [vmem:[#allocation2 + $0x98] sm:$0xff]
  %v10919 = vld [vmem:[#allocation2 + $0xa0] sm:$0xff]
  %v10920 = vld [vmem:[#allocation2 + $0xa8] sm:$0xff]
  %v10921 = vld [vmem:[#allocation2 + $0xb0] sm:$0xff]
  %v10922 = vld [vmem:[#allocation2 + $0xb8] sm:$0xff]
  %v10923 = vld [vmem:[#allocation2 + $0xc0] sm:$0xff]
  %v10924 = vld [vmem:[#allocation2 + $0xc8] sm:$0xff]
  %v10925 = vld [vmem:[#allocation2 + $0xd0] sm:$0xff]
  %v10926 = vld [vmem:[#allocation2 + $0xd8] sm:$0xff]
  %v10927 = vld [vmem:[#allocation2 + $0xe0] sm:$0xff]
  %v10928 = vld [vmem:[#allocation2 + $0xe8] sm:$0xff]
  %v10929 = vld [vmem:[#allocation2 + $0xf0] sm:$0xff]
  %v10930 = vld [vmem:[#allocation2 + $0xf8] sm:$0xff]
  %v10931 = vld [vmem:[#allocation2 + $0x100] sm:$0xff]
  %v10932 = vld [vmem:[#allocation2 + $0x108] sm:$0xff]
  %v10933 = vld [vmem:[#allocation2 + $0x110] sm:$0xff]
  %v10934 = vld [vmem:[#allocation2 + $0x130] sm:$0xff]
  %v10935 = vld [vmem:[#allocation2 + $0x138] sm:$0xff]
  %v10936 = vld [vmem:[#allocation2 + $0x140] sm:$0xff]
  %v10937 = vld [vmem:[#allocation2 + $0x148] sm:$0xff]
  %v10938 = vld [vmem:[#allocation2 + $0x150] sm:$0xff]
  %v10939 = vld [vmem:[#allocation2 + $0x158] sm:$0xff]
  %v10940 = vld [vmem:[#allocation2 + $0x160] sm:$0xff]
  %v10941 = vld [vmem:[#allocation2 + $0x168] sm:$0xff]
  %v10942 = vld [vmem:[#allocation2 + $0x170] sm:$0xff]
  %v10943 = vld [vmem:[#allocation2 + $0x178] sm:$0xff]
  %v10944 = vld [vmem:[#allocation2 + $0x180] sm:$0xff]
  %v10945 = vld [vmem:[#allocation2 + $0x188] sm:$0xff]
  %v10946 = vld [vmem:[#allocation2 + $0x190] sm:$0xff]
  %v10947 = vld [vmem:[#allocation2 + $0x198] sm:$0xff]
  %v10948 = vld [vmem:[#allocation2 + $0x1a0] sm:$0xff]
  %v10949 = vld [vmem:[#allocation2 + $0x1a8] sm:$0xff]
  %v10950 = vld [vmem:[#allocation2 + $0x1b0] sm:$0xff]
  %v10951 = vld [vmem:[#allocation2 + $0x1b8] sm:$0xff]
  %v10952 = vld [vmem:[#allocation2 + $0x1c0] sm:$0xff]
  %v10953 = vld [vmem:[#allocation2 + $0x1c8] sm:$0xff]
  %v10954 = vld [vmem:[#allocation2 + $0x1d0] sm:$0xff]
  %v10955 = vld [vmem:[#allocation2 + $0x1d8] sm:$0xff]
  %v10956 = vld [vmem:[#allocation2 + $0x1e0] sm:$0xff]
  %v10957 = vld [vmem:[#allocation2 + $0x1e8] sm:$0xff]
  %v10958 = vld [vmem:[#allocation2 + $0x1f0] sm:$0xff]
  %v10959 = vld [vmem:[#allocation2 + $0x1f8] sm:$0xff]
  %v10960 = vld [vmem:[#allocation2 + $0x200] sm:$0xff]
  %v10961 = vld [vmem:[#allocation2 + $0x208] sm:$0xff]
  %v10962 = vld [vmem:[#allocation2 + $0x210] sm:$0xff]
  %v10963 = vld [vmem:[#allocation2 + $0x218] sm:$0xff]
  %v10964 = vld [vmem:[#allocation2 + $0x220] sm:$0xff]
  %v10965 = vld [vmem:[#allocation2 + $0x228] sm:$0xff]
  %v10966 = vld [vmem:[%s6] sm:$0x1]
  %v10968 = vperm.slane %v10966, 0
  %v10970 = vmul.f32 %v10737, %v10968
  %v10971 = vmul.f32 %v10739, %v10968
  %v10972 = vmul.f32 %v10742, %v10968
  %v10973 = vmul.f32 %v10744, %v10968
  %v10974 = vmul.f32 %v10747, %v10968
  %v10975 = vmul.f32 %v10749, %v10968
  %v10976 = vmul.f32 %v10752, %v10968
  %v10977 = vmul.f32 %v10754, %v10968
  %v10978 = vmul.f32 %v10757, %v10968
  %v10979 = vmul.f32 %v10759, %v10968
  %v10980 = vmul.f32 %v10762, %v10968
  %v10981 = vmul.f32 %v10764, %v10968
  %v10982 = vmul.f32 %v10767, %v10968
  %v10983 = vmul.f32 %v10769, %v10968
  %v10984 = vmul.f32 %v10772, %v10968
  %v10985 = vmul.f32 %v10774, %v10968
  %v10986 = vmul.f32 %v10777, %v10968
  %v10987 = vmul.f32 %v10779, %v10968
  %v10988 = vmul.f32 %v10782, %v10968
  %v10989 = vmul.f32 %v10784, %v10968
  %v10990 = vmul.f32 %v10787, %v10968
  %v10991 = vmul.f32 %v10789, %v10968
  %v10992 = vmul.f32 %v10792, %v10968
  %v10993 = vmul.f32 %v10794, %v10968
  %v10994 = vmul.f32 %v10797, %v10968
  %v10995 = vmul.f32 %v10799, %v10968
  %v10996 = vmul.f32 %v10802, %v10968
  %v10997 = vmul.f32 %v10804, %v10968
  %v10998 = vmul.f32 %v10807, %v10968
  %v10999 = vmul.f32 %v10809, %v10968
  %v11000 = vmul.f32 %v10812, %v10968
  %v11001 = vmul.f32 %v10814, %v10968
  %v11002 = vmul.f32 %v10821, %v10968
  %v11003 = vmul.f32 %v10824, %v10968
  %v11004 = vmul.f32 %v10826, %v10968
  %v11005 = vmul.f32 %v10829, %v10968
  %v11006 = vmul.f32 %v10831, %v10968
  %v11007 = vmul.f32 %v10834, %v10968
  %v11008 = vmul.f32 %v10836, %v10968
  %v11009 = vmul.f32 %v10839, %v10968
  %v11010 = vmul.f32 %v10841, %v10968
  %v11011 = vmul.f32 %v10844, %v10968
  %v11012 = vmul.f32 %v10846, %v10968
  %v11013 = vmul.f32 %v10849, %v10968
  %v11014 = vmul.f32 %v10851, %v10968
  %v11015 = vmul.f32 %v10854, %v10968
  %v11016 = vmul.f32 %v10856, %v10968
  %v11017 = vmul.f32 %v10859, %v10968
  %v11018 = vmul.f32 %v10861, %v10968
  %v11019 = vmul.f32 %v10864, %v10968
  %v11020 = vmul.f32 %v10866, %v10968
  %v11021 = vmul.f32 %v10869, %v10968
  %v11022 = vmul.f32 %v10871, %v10968
  %v11023 = vmul.f32 %v10874, %v10968
  %v11024 = vmul.f32 %v10876, %v10968
  %v11025 = vmul.f32 %v10879, %v10968
  %v11026 = vmul.f32 %v10881, %v10968
  %v11027 = vmul.f32 %v10884, %v10968
  %v11028 = vmul.f32 %v10886, %v10968
  %v11029 = vmul.f32 %v10889, %v10968
  %v11030 = vmul.f32 %v10891, %v10968
  %v11031 = vmul.f32 %v10894, %v10968
  %v11032 = vmul.f32 %v10896, %v10968
  %v11033 = vmul.f32 %v10899, %v10968
  %v11034 = vld [vmem:[%s7] sm:$0x1]
  %v11036 = vperm.slane %v11034, 0
  %v11038 = vadd.f32 %v10970, %v11036
  %v11039 = vadd.f32 %v10971, %v11036
  %v11040 = vadd.f32 %v10972, %v11036
  %v11041 = vadd.f32 %v10973, %v11036
  %v11042 = vadd.f32 %v10974, %v11036
  %v11043 = vadd.f32 %v10975, %v11036
  %v11044 = vadd.f32 %v10976, %v11036
  %v11045 = vadd.f32 %v10977, %v11036
  %v11046 = vadd.f32 %v10978, %v11036
  %v11047 = vadd.f32 %v10979, %v11036
  %v11048 = vadd.f32 %v10980, %v11036
  %v11049 = vadd.f32 %v10981, %v11036
  %v11050 = vadd.f32 %v10982, %v11036
  %v11051 = vadd.f32 %v10983, %v11036
  %v11052 = vadd.f32 %v10984, %v11036
  %v11053 = vadd.f32 %v10985, %v11036
  %v11054 = vadd.f32 %v10986, %v11036
  %v11055 = vadd.f32 %v10987, %v11036
  %v11056 = vadd.f32 %v10988, %v11036
  %v11057 = vadd.f32 %v10989, %v11036
  %v11058 = vadd.f32 %v10990, %v11036
  %v11059 = vadd.f32 %v10991, %v11036
  %v11060 = vadd.f32 %v10992, %v11036
  %v11061 = vadd.f32 %v10993, %v11036
  %v11062 = vadd.f32 %v10994, %v11036
  %v11063 = vadd.f32 %v10995, %v11036
  %v11064 = vadd.f32 %v10996, %v11036
  %v11065 = vadd.f32 %v10997, %v11036
  %v11066 = vadd.f32 %v10998, %v11036
  %v11067 = vadd.f32 %v10999, %v11036
  %v11068 = vadd.f32 %v11000, %v11036
  %v11069 = vadd.f32 %v11001, %v11036
  %v11070 = vadd.f32 %v11002, %v11036
  %v11071 = vadd.f32 %v11003, %v11036
  %v11072 = vadd.f32 %v11004, %v11036
  %v11073 = vadd.f32 %v11005, %v11036
  %v11074 = vadd.f32 %v11006, %v11036
  %v11075 = vadd.f32 %v11007, %v11036
  %v11076 = vadd.f32 %v11008, %v11036
  %v11077 = vadd.f32 %v11009, %v11036
  %v11078 = vadd.f32 %v11010, %v11036
  %v11079 = vadd.f32 %v11011, %v11036
  %v11080 = vadd.f32 %v11012, %v11036
  %v11081 = vadd.f32 %v11013, %v11036
  %v11082 = vadd.f32 %v11014, %v11036
  %v11083 = vadd.f32 %v11015, %v11036
  %v11084 = vadd.f32 %v11016, %v11036
  %v11085 = vadd.f32 %v11017, %v11036
  %v11086 = vadd.f32 %v11018, %v11036
  %v11087 = vadd.f32 %v11019, %v11036
  %v11088 = vadd.f32 %v11020, %v11036
  %v11089 = vadd.f32 %v11021, %v11036
  %v11090 = vadd.f32 %v11022, %v11036
  %v11091 = vadd.f32 %v11023, %v11036
  %v11092 = vadd.f32 %v11024, %v11036
  %v11093 = vadd.f32 %v11025, %v11036
  %v11094 = vadd.f32 %v11026, %v11036
  %v11095 = vadd.f32 %v11027, %v11036
  %v11096 = vadd.f32 %v11028, %v11036
  %v11097 = vadd.f32 %v11029, %v11036
  %v11098 = vadd.f32 %v11030, %v11036
  %v11099 = vadd.f32 %v11031, %v11036
  %v11100 = vadd.f32 %v11032, %v11036
  %v11101 = vadd.f32 %v11033, %v11036
  %v11102 = vadd.f32 %v11038, %v10902
  %v11103 = vadd.f32 %v11039, %v10903
  %v11104 = vadd.f32 %v11040, %v10904
  %v11105 = vadd.f32 %v11041, %v10905
  %v11106 = vadd.f32 %v11042, %v10906
  %v11107 = vadd.f32 %v11043, %v10907
  %v11108 = vadd.f32 %v11044, %v10908
  %v11109 = vadd.f32 %v11045, %v10909
  %v11110 = vadd.f32 %v11046, %v10910
  %v11111 = vadd.f32 %v11047, %v10911
  %v11112 = vadd.f32 %v11048, %v10912
  %v11113 = vadd.f32 %v11049, %v10913
  %v11114 = vadd.f32 %v11050, %v10914
  %v11115 = vadd.f32 %v11051, %v10915
  %v11116 = vadd.f32 %v11052, %v10916
  %v11117 = vadd.f32 %v11053, %v10917
  %v11118 = vadd.f32 %v11054, %v10918
  %v11119 = vadd.f32 %v11055, %v10919
  %v11120 = vadd.f32 %v11056, %v10920
  %v11121 = vadd.f32 %v11057, %v10921
  %v11122 = vadd.f32 %v11058, %v10922
  %v11123 = vadd.f32 %v11059, %v10923
  %v11124 = vadd.f32 %v11060, %v10924
  %v11125 = vadd.f32 %v11061, %v10925
  %v11126 = vadd.f32 %v11062, %v10926
  %v11127 = vadd.f32 %v11063, %v10927
  %v11128 = vadd.f32 %v11064, %v10928
  %v11129 = vadd.f32 %v11065, %v10929
  %v11130 = vadd.f32 %v11066, %v10930
  %v11131 = vadd.f32 %v11067, %v10931
  %v11132 = vadd.f32 %v11068, %v10932
  %v11133 = vadd.f32 %v11069, %v10933
  %v11134 = vadd.f32 %v11070, %v10934
  %v11135 = vadd.f32 %v11071, %v10935
  %v11136 = vadd.f32 %v11072, %v10936
  %v11137 = vadd.f32 %v11073, %v10937
  %v11138 = vadd.f32 %v11074, %v10938
  %v11139 = vadd.f32 %v11075, %v10939
  %v11140 = vadd.f32 %v11076, %v10940
  %v11141 = vadd.f32 %v11077, %v10941
  %v11142 = vadd.f32 %v11078, %v10942
  %v11143 = vadd.f32 %v11079, %v10943
  %v11144 = vadd.f32 %v11080, %v10944
  %v11145 = vadd.f32 %v11081, %v10945
  %v11146 = vadd.f32 %v11082, %v10946
  %v11147 = vadd.f32 %v11083, %v10947
  %v11148 = vadd.f32 %v11084, %v10948
  %v11149 = vadd.f32 %v11085, %v10949
  %v11150 = vadd.f32 %v11086, %v10950
  %v11151 = vadd.f32 %v11087, %v10951
  %v11152 = vadd.f32 %v11088, %v10952
  %v11153 = vadd.f32 %v11089, %v10953
  %v11154 = vadd.f32 %v11090, %v10954
  %v11155 = vadd.f32 %v11091, %v10955
  %v11156 = vadd.f32 %v11092, %v10956
  %v11157 = vadd.f32 %v11093, %v10957
  %v11158 = vadd.f32 %v11094, %v10958
  %v11159 = vadd.f32 %v11095, %v10959
  %v11160 = vadd.f32 %v11096, %v10960
  %v11161 = vadd.f32 %v11097, %v10961
  %v11162 = vadd.f32 %v11098, %v10962
  %v11163 = vadd.f32 %v11099, %v10963
  %v11164 = vadd.f32 %v11100, %v10964
  %v11165 = vadd.f32 %v11101, %v10965
  %v11166 = vmax.f32 %v11102, 0.0
  %v11167 = vmax.f32 %v11103, 0.0
  %v11168 = vmax.f32 %v11104, 0.0
  %v11169 = vmax.f32 %v11105, 0.0
  %v11170 = vmax.f32 %v11106, 0.0
  %v11171 = vmax.f32 %v11107, 0.0
  %v11172 = vmax.f32 %v11108, 0.0
  %v11173 = vmax.f32 %v11109, 0.0
  %v11174 = vmax.f32 %v11110, 0.0
  %v11175 = vmax.f32 %v11111, 0.0
  %v11176 = vmax.f32 %v11112, 0.0
  %v11177 = vmax.f32 %v11113, 0.0
  %v11178 = vmax.f32 %v11114, 0.0
  %v11179 = vmax.f32 %v11115, 0.0
  %v11180 = vmax.f32 %v11116, 0.0
  %v11181 = vmax.f32 %v11117, 0.0
  %v11182 = vmax.f32 %v11118, 0.0
  %v11183 = vmax.f32 %v11119, 0.0
  %v11184 = vmax.f32 %v11120, 0.0
  %v11185 = vmax.f32 %v11121, 0.0
  %v11186 = vmax.f32 %v11122, 0.0
  %v11187 = vmax.f32 %v11123, 0.0
  %v11188 = vmax.f32 %v11124, 0.0
  %v11189 = vmax.f32 %v11125, 0.0
  %v11190 = vmax.f32 %v11126, 0.0
  %v11191 = vmax.f32 %v11127, 0.0
  %v11192 = vmax.f32 %v11128, 0.0
  %v11193 = vmax.f32 %v11129, 0.0
  %v11194 = vmax.f32 %v11130, 0.0
  %v11195 = vmax.f32 %v11131, 0.0
  %v11196 = vmax.f32 %v11132, 0.0
  %v11197 = vmax.f32 %v11133, 0.0
  %v11198 = vmax.f32 %v11134, 0.0
  %v11199 = vmax.f32 %v11135, 0.0
  %v11200 = vmax.f32 %v11136, 0.0
  %v11201 = vmax.f32 %v11137, 0.0
  %v11202 = vmax.f32 %v11138, 0.0
  %v11203 = vmax.f32 %v11139, 0.0
  %v11204 = vmax.f32 %v11140, 0.0
  %v11205 = vmax.f32 %v11141, 0.0
  %v11206 = vmax.f32 %v11142, 0.0
  %v11207 = vmax.f32 %v11143, 0.0
  %v11208 = vmax.f32 %v11144, 0.0
  %v11209 = vmax.f32 %v11145, 0.0
  %v11210 = vmax.f32 %v11146, 0.0
  %v11211 = vmax.f32 %v11147, 0.0
  %v11212 = vmax.f32 %v11148, 0.0
  %v11213 = vmax.f32 %v11149, 0.0
  %v11214 = vmax.f32 %v11150, 0.0
  %v11215 = vmax.f32 %v11151, 0.0
  %v11216 = vmax.f32 %v11152, 0.0
  %v11217 = vmax.f32 %v11153, 0.0
  %v11218 = vmax.f32 %v11154, 0.0
  %v11219 = vmax.f32 %v11155, 0.0
  %v11220 = vmax.f32 %v11156, 0.0
  %v11221 = vmax.f32 %v11157, 0.0
  %v11222 = vmax.f32 %v11158, 0.0
  %v11223 = vmax.f32 %v11159, 0.0
  %v11224 = vmax.f32 %v11160, 0.0
  %v11225 = vmax.f32 %v11161, 0.0
  %v11226 = vmax.f32 %v11162, 0.0
  %v11227 = vmax.f32 %v11163, 0.0
  %v11228 = vmax.f32 %v11164, 0.0
  %v11229 = vmax.f32 %v11165, 0.0
  %11230 = vst.msk [vmem:[%s8] sm:$0xff] %vm30, %v11166
  %11231 = vst.msk [vmem:[%s8 + $0x8] sm:$0xff] %vm30, %v11167
  %11232 = vst.msk [vmem:[%s8 + $0x10] sm:$0xff] %vm30, %v11168
  %11233 = vst.msk [vmem:[%s8 + $0x18] sm:$0xff] %vm30, %v11169
  %11234 = vst.msk [vmem:[%s8 + $0x20] sm:$0xff] %vm30, %v11170
  %11235 = vst.msk [vmem:[%s8 + $0x28] sm:$0xff] %vm30, %v11171
  %11236 = vst.msk [vmem:[%s8 + $0x30] sm:$0xff] %vm30, %v11172
  %11237 = vst.msk [vmem:[%s8 + $0x38] sm:$0xff] %vm30, %v11173
  %11238 = vst.msk [vmem:[%s8 + $0x40] sm:$0xff] %vm30, %v11174
  %11239 = vst.msk [vmem:[%s8 + $0x48] sm:$0xff] %vm30, %v11175
  %11240 = vst.msk [vmem:[%s8 + $0x50] sm:$0xff] %vm30, %v11176
  %11241 = vst.msk [vmem:[%s8 + $0x58] sm:$0xff] %vm30, %v11177
  %11242 = vst.msk [vmem:[%s8 + $0x60] sm:$0xff] %vm30, %v11178
  %11243 = vst.msk [vmem:[%s8 + $0x68] sm:$0xff] %vm30, %v11179
  %11244 = vst.msk [vmem:[%s8 + $0x70] sm:$0xff] %vm30, %v11180
  %11245 = vst.msk [vmem:[%s8 + $0x78] sm:$0xff] %vm30, %v11181
  %11246 = vst.msk [vmem:[%s8 + $0x80] sm:$0xff] %vm30, %v11182
  %11247 = vst.msk [vmem:[%s8 + $0x88] sm:$0xff] %vm30, %v11183
  %11248 = vst.msk [vmem:[%s8 + $0x90] sm:$0xff] %vm30, %v11184
  %11249 = vst.msk [vmem:[%s8 + $0x98] sm:$0xff] %vm30, %v11185
  %11250 = vst.msk [vmem:[%s8 + $0xa0] sm:$0xff] %vm30, %v11186
  %11251 = vst.msk [vmem:[%s8 + $0xa8] sm:$0xff] %vm30, %v11187
  %11252 = vst.msk [vmem:[%s8 + $0xb0] sm:$0xff] %vm30, %v11188
  %11253 = vst.msk [vmem:[%s8 + $0xb8] sm:$0xff] %vm30, %v11189
  %11254 = vst.msk [vmem:[%s8 + $0xc0] sm:$0xff] %vm30, %v11190
  %11255 = vst.msk [vmem:[%s8 + $0xc8] sm:$0xff] %vm30, %v11191
  %11256 = vst.msk [vmem:[%s8 + $0xd0] sm:$0xff] %vm30, %v11192
  %11257 = vst.msk [vmem:[%s8 + $0xd8] sm:$0xff] %vm30, %v11193
  %11258 = vst.msk [vmem:[%s8 + $0xe0] sm:$0xff] %vm30, %v11194
  %11259 = vst.msk [vmem:[%s8 + $0xe8] sm:$0xff] %vm30, %v11195
  %11260 = vst.msk [vmem:[%s8 + $0xf0] sm:$0xff] %vm30, %v11196
  %11261 = vst.msk [vmem:[%s8 + $0xf8] sm:$0xff] %vm30, %v11197
  %11262 = vst.msk [vmem:[%s8 + $0x100] sm:$0xff] %vm30, %v11198
  %11263 = vst.msk [vmem:[%s8 + $0x108] sm:$0xff] %vm30, %v11199
  %11264 = vst.msk [vmem:[%s8 + $0x110] sm:$0xff] %vm30, %v11200
  %11265 = vst.msk [vmem:[%s8 + $0x118] sm:$0xff] %vm30, %v11201
  %11266 = vst.msk [vmem:[%s8 + $0x120] sm:$0xff] %vm30, %v11202
  %11267 = vst.msk [vmem:[%s8 + $0x128] sm:$0xff] %vm30, %v11203
  %11268 = vst.msk [vmem:[%s8 + $0x130] sm:$0xff] %vm30, %v11204
  %11269 = vst.msk [vmem:[%s8 + $0x138] sm:$0xff] %vm30, %v11205
  %11270 = vst.msk [vmem:[%s8 + $0x140] sm:$0xff] %vm30, %v11206
  %11271 = vst.msk [vmem:[%s8 + $0x148] sm:$0xff] %vm30, %v11207
  %11272 = vst.msk [vmem:[%s8 + $0x150] sm:$0xff] %vm30, %v11208
  %11273 = vst.msk [vmem:[%s8 + $0x158] sm:$0xff] %vm30, %v11209
  %11274 = vst.msk [vmem:[%s8 + $0x160] sm:$0xff] %vm30, %v11210
  %11275 = vst.msk [vmem:[%s8 + $0x168] sm:$0xff] %vm30, %v11211
  %11276 = vst.msk [vmem:[%s8 + $0x170] sm:$0xff] %vm30, %v11212
  %11277 = vst.msk [vmem:[%s8 + $0x178] sm:$0xff] %vm30, %v11213
  %11278 = vst.msk [vmem:[%s8 + $0x180] sm:$0xff] %vm30, %v11214
  %11279 = vst.msk [vmem:[%s8 + $0x188] sm:$0xff] %vm30, %v11215
  %11280 = vst.msk [vmem:[%s8 + $0x190] sm:$0xff] %vm30, %v11216
  %11281 = vst.msk [vmem:[%s8 + $0x198] sm:$0xff] %vm30, %v11217
  %11282 = vst.msk [vmem:[%s8 + $0x1a0] sm:$0xff] %vm30, %v11218
  %11283 = vst.msk [vmem:[%s8 + $0x1a8] sm:$0xff] %vm30, %v11219
  %11284 = vst.msk [vmem:[%s8 + $0x1b0] sm:$0xff] %vm30, %v11220
  %11285 = vst.msk [vmem:[%s8 + $0x1b8] sm:$0xff] %vm30, %v11221
  %11286 = vst.msk [vmem:[%s8 + $0x1c0] sm:$0xff] %vm30, %v11222
  %11287 = vst.msk [vmem:[%s8 + $0x1c8] sm:$0xff] %vm30, %v11223
  %11288 = vst.msk [vmem:[%s8 + $0x1d0] sm:$0xff] %vm30, %v11224
  %11289 = vst.msk [vmem:[%s8 + $0x1d8] sm:$0xff] %vm30, %v11225
  %11290 = vst.msk [vmem:[%s8 + $0x1e0] sm:$0xff] %vm30, %v11226
  %11291 = vst.msk [vmem:[%s8 + $0x1e8] sm:$0xff] %vm30, %v11227
  %11292 = vst.msk [vmem:[%s8 + $0x1f0] sm:$0xff] %vm30, %v11228
  %11293 = vst.msk [vmem:[%s8 + $0x1f8] sm:$0xff] %vm30, %v11229
  // Predicated region
  $region34: #{tpu_custom_call.1} parent=0 // pred_check
    _
  $region35: #{tpu_custom_call.1} parent=0 // pred_check_branch
    %11295 = sbr.rel (0) target = $region37
  $region36: #{tpu_custom_call.1} parent=0 // pred_region
    _
  $region37: #{tpu_custom_call.1} parent=0 // pred_fallthru
    _
  // Predicated region
  $region38: #{tpu_custom_call.1} parent=0 // pred_check
    _
  $region39: #{tpu_custom_call.1} parent=0 // pred_check_branch
    %11297 = sbr.rel (0) target = $region41
  $region40: #{tpu_custom_call.1} parent=0 // pred_region
    _
  $region41: #{tpu_custom_call.1} parent=0 // pred_fallthru
    _

</llo_original>
